<compile_context>
chip_gen: v5e
topology: v5e:2x2
jax: 0.10.0
libtpu: 0.0.40
codegen_flags: <defaults>
</compile_context>

<pallas_src>
import functools
import math

import jax
import jax.numpy as jnp
from jax.experimental import pallas as pl
from jax.experimental.pallas import tpu as pltpu

_LANE = 128                          # channel padding quantum (vreg lane width)
_BN_EPS = 1e-5
_VMEM_LIMIT_BYTES = 48 * 1024 * 1024  # <= v7x 64 MiB physical, plenty on v5e/v6e


def _round_up(x, m):
    return (x + m - 1) // m * m


# ----------------------------------------------------------------------------
# Kernel 1: per-image BatchNorm batch statistics (partial sum / sum-of-squares)
# ----------------------------------------------------------------------------
def _bn_stats_kernel(x_ref, o_ref):
    x = x_ref[0].astype(jnp.float32)                        # (H, W, C)
    c = x.shape[-1]
    s = jnp.sum(x, axis=(0, 1))[None, :]                    # (1, C)
    q = jnp.sum(x * x, axis=(0, 1))[None, :]                # (1, C)
    # full 8-sublane store (rows 2..7 are zero) to avoid masked partial stores
    o_ref[0] = jnp.concatenate([s, q, jnp.zeros((6, c), jnp.float32)], axis=0)


def bn_stats(x4d):
    n, h, w, c = x4d.shape
    return pl.pallas_call(
        _bn_stats_kernel,
        grid=(n,),
        out_shape=jax.ShapeDtypeStruct((n, 8, c), jnp.float32),
        in_specs=[pl.BlockSpec((1, h, w, c), lambda i: (i, 0, 0, 0))],
        out_specs=pl.BlockSpec((1, 8, c), lambda i: (i, 0, 0)),
        compiler_params=pltpu.CompilerParams(
            dimension_semantics=("parallel",),
            vmem_limit_bytes=_VMEM_LIMIT_BYTES),
    )(x4d)


def _bn_scale_shift(stats, count, gamma, beta, eps=_BN_EPS):
    """(N, 8, C) partials -> per-channel affine (scale, shift), each shaped (1, 1, C)."""
    sums = jnp.sum(stats, axis=0)                           # (8, C)
    mean = sums[0] / count
    var = jnp.maximum(sums[1] / count - mean * mean, 0.0)   # biased var (BN training mode)
    scale = gamma * jax.lax.rsqrt(var + eps)
    shift = beta - mean * scale
    return (scale.reshape(1, 1, -1).astype(jnp.float32),
            shift.reshape(1, 1, -1).astype(jnp.float32))


# ----------------------------------------------------------------------------
# Kernel 2: fused BN+SiLU prologue -> direct 3x3 conv (9 tap matmuls) -> epilogue
#   mode == "first":           outputs bf16 h1 and per-image BN2 stats partials
#   mode == "second_identity": fused  out = conv + bias + x            (f32 out)
#   mode == "second_nin":      fused  out = conv + bias + x @ nin_w + nin_b
# ----------------------------------------------------------------------------
def _conv3x3_kernel(*refs, H, W, mode):
    if mode == "first":
        x_ref, s_ref, t_ref, w_ref, bias_ref, h_ref, stats_ref = refs
        res_ref = nw_ref = nb_ref = out_ref = None
    elif mode == "second_identity":
        x_ref, s_ref, t_ref, w_ref, bias_ref, res_ref, out_ref = refs
        nw_ref = nb_ref = None
    else:  # "second_nin"
        x_ref, s_ref, t_ref, w_ref, bias_ref, res_ref, nw_ref, nb_ref, out_ref = refs

    # ---- prologue: BatchNorm (precomputed scale/shift) + SiLU, bf16, then build the
    #      1-pixel zero halo in VMEM (zero-padding must follow the nonlinearity) ----
    x = x_ref[0].astype(jnp.float32)                        # (H, W, Cin)
    y = x * s_ref[0] + t_ref[0]
    act = (y * jax.nn.sigmoid(y)).astype(jnp.bfloat16)      # SiLU
    c_in = act.shape[-1]
    zrow = jnp.zeros((1, W, c_in), jnp.bfloat16)
    a = jnp.concatenate([zrow, act, zrow], axis=0)          # (H+2, W,   Cin)
    zcol = jnp.zeros((H + 2, 1, c_in), jnp.bfloat16)
    a = jnp.concatenate([zcol, a, zcol], axis=1)            # (H+2, W+2, Cin)

    # ---- 9 shifted-window tap matmuls on the MXU, f32 accumulation ----
    acc = None
    for ky in range(3):
        for kx in range(3):
            win = a[ky:ky + H, kx:kx + W, :].reshape(H * W, c_in)
            part = jnp.dot(win, w_ref[ky * 3 + kx],
                           preferred_element_type=jnp.float32)
            acc = part if acc is None else acc + part
    out = acc + bias_ref[...]                               # (H*W, tn) f32

    if mode == "first":
        # fused per-image partial batch statistics for the second BatchNorm
        s = jnp.sum(out, axis=0, keepdims=True)
        q = jnp.sum(out * out, axis=0, keepdims=True)
        stats_ref[0] = jnp.concatenate(
            [s, q, jnp.zeros((6, out.shape[-1]), jnp.float32)], axis=0)
        h_ref[0] = out.reshape(H, W, -1).astype(h_ref.dtype)
    else:
        res = res_ref[0].reshape(H * W, -1)                 # bf16 residual rows
        if mode == "second_identity":
            out = out + res.astype(jnp.float32)
        else:
            out = out + jnp.dot(res, nw_ref[...],
                                preferred_element_type=jnp.float32) + nb_ref[...]
        out_ref[0] = out.reshape(H, W, -1).astype(out_ref.dtype)


def conv3x3(x4d, scale, shift, w9, bias, *, mode,
            residual=None, nin_w=None, nin_b=None):
    n, h, w, cin_p = x4d.shape
    cout_p = w9.shape[-1]
    tn = 256 if cout_p % 256 == 0 else _LANE
    grid = (n, cout_p // tn)

    in_specs = [
        pl.BlockSpec((1, h, w, cin_p), lambda i, j: (i, 0, 0, 0)),
        pl.BlockSpec((1, 1, cin_p), lambda i, j: (0, 0, 0)),
        pl.BlockSpec((1, 1, cin_p), lambda i, j: (0, 0, 0)),
        pl.BlockSpec((9, cin_p, tn), lambda i, j: (0, 0, j)),
        pl.BlockSpec((1, tn), lambda i, j: (0, j)),
    ]
    inputs = [x4d, scale, shift, w9, bias]

    if mode == "first":
        out_shape = (jax.ShapeDtypeStruct((n, h, w, cout_p), jnp.bfloat16),
                     jax.ShapeDtypeStruct((n, 8, cout_p), jnp.float32))
        out_specs = (pl.BlockSpec((1, h, w, tn), lambda i, j: (i, 0, 0, j)),
                     pl.BlockSpec((1, 8, tn), lambda i, j: (i, 0, j)))
    else:
        if mode == "second_identity":
            in_specs.append(pl.BlockSpec((1, h, w, tn), lambda i, j: (i, 0, 0, j)))
            inputs.append(residual)
        else:
            c_res = residual.shape[-1]
            in_specs += [pl.BlockSpec((1, h, w, c_res), lambda i, j: (i, 0, 0, 0)),
                         pl.BlockSpec((c_res, tn), lambda i, j: (0, j)),
                         pl.BlockSpec((1, tn), lambda i, j: (0, j))]
            inputs += [residual, nin_w, nin_b]
        out_shape = jax.ShapeDtypeStruct((n, h, w, cout_p), jnp.float32)
        out_specs = pl.BlockSpec((1, h, w, tn), lambda i, j: (i, 0, 0, j))

    flops = 2 * n * h * w * 9 * cin_p * cout_p
    bytes_accessed = int(x4d.size * x4d.dtype.itemsize
                         + w9.size * w9.dtype.itemsize
                         + n * h * w * cout_p * 4)
    kernel = functools.partial(_conv3x3_kernel, H=h, W=w, mode=mode)
    return pl.pallas_call(
        kernel,
        grid=grid,
        out_shape=out_shape,
        in_specs=in_specs,
        out_specs=out_specs,
        compiler_params=pltpu.CompilerParams(
            dimension_semantics=("parallel", "parallel"),
            vmem_limit_bytes=_VMEM_LIMIT_BYTES),
        cost_estimate=pl.CostEstimate(flops=flops, transcendentals=0,
                                      bytes_accessed=bytes_accessed),
    )(*inputs)


# ----------------------------------------------------------------------------
# JAX glue: weight / vector packing
# ----------------------------------------------------------------------------
def _pack_conv_weight(wt, cin_p, cout_p):
    """(3,3,Cin,Cout) HWIO -> (9, Cin_p, Cout_p) bf16, tap-major (matches kernel taps)."""
    kh, kw, cin, cout = wt.shape
    wp = jnp.pad(wt, ((0, 0), (0, 0), (0, cin_p - cin), (0, cout_p - cout)))
    return wp.reshape(kh * kw, cin_p, cout_p).astype(jnp.bfloat16)


def _pack_vec(v, c_p):
    return jnp.pad(v, (0, c_p - v.shape[0])).reshape(1, c_p).astype(jnp.float32)


# ----------------------------------------------------------------------------
# ResnetBlock forward (NCHW in / NCHW out, like the PyTorch module)
# ----------------------------------------------------------------------------
def resnet_block_forward(x, params):
    n, cin, h, w = x.shape
    cout = params["conv1_w"].shape[-1]
    cin_p = _round_up(cin, _LANE)
    cout_p = _round_up(cout, _LANE)
    m = float(n * h * w)

    # single bf16 NHWC copy of the input (used for stats, conv1 and the residual)
    x4d = jnp.pad(jnp.transpose(x, (0, 2, 3, 1)),
                  ((0, 0), (0, 0), (0, 0), (0, cin_p - cin))).astype(jnp.bfloat16)

    # ---- BN1 batch statistics (training-mode) -> per-channel scale/shift ----
    g1 = jnp.pad(params["bn1_gamma"], (0, cin_p - cin))
    b1 = jnp.pad(params["bn1_beta"], (0, cin_p - cin))
    scale1, shift1 = _bn_scale_shift(bn_stats(x4d), m, g1, b1)

    # ---- conv1: fused BN1+SiLU prologue, fused BN2-stats epilogue ----
    w1 = _pack_conv_weight(params["conv1_w"], cin_p, cout_p)
    bias1 = _pack_vec(params["conv1_b"], cout_p)
    h1, stats2 = conv3x3(x4d, scale1, shift1, w1, bias1, mode="first")

    g2 = jnp.pad(params["bn2_gamma"], (0, cout_p - cout))
    b2 = jnp.pad(params["bn2_beta"], (0, cout_p - cout))
    scale2, shift2 = _bn_scale_shift(stats2, m, g2, b2)

    # ---- conv2: fused BN2+SiLU prologue, fused residual / 1x1-shortcut epilogue ----
    w2 = _pack_conv_weight(params["conv2_w"], cout_p, cout_p)
    bias2 = _pack_vec(params["conv2_b"], cout_p)
    if cin == cout:
        out4d = conv3x3(h1, scale2, shift2, w2, bias2,
                        mode="second_identity", residual=x4d)
    else:
        nin_w = jnp.pad(params["nin_w"],
                        ((0, cin_p - cin), (0, cout_p - cout))).astype(jnp.bfloat16)
        nin_b = _pack_vec(params["nin_b"], cout_p)
        out4d = conv3x3(h1, scale2, shift2, w2, bias2,
                        mode="second_nin", residual=x4d, nin_w=nin_w, nin_b=nin_b)

    return jnp.transpose(out4d[..., :cout], (0, 3, 1, 2))


# ----------------------------------------------------------------------------
# Pure-JAX f32 reference (mirrors the PyTorch module in .train() mode)
# ----------------------------------------------------------------------------
def resnet_block_reference(x, params, eps=_BN_EPS):
    def bn_silu_ref(t, gamma, beta):
        mean = jnp.mean(t, axis=(0, 2, 3), keepdims=True)
        var = jnp.mean((t - mean) ** 2, axis=(0, 2, 3), keepdims=True)
        y = (t - mean) * jax.lax.rsqrt(var + eps) * gamma[None, :, None, None] \
            + beta[None, :, None, None]
        return y * jax.nn.sigmoid(y)

    def conv3x3_ref(t, wt, b):
        y = jax.lax.conv_general_dilated(
            t, wt, window_strides=(1, 1), padding=((1, 1), (1, 1)),
            dimension_numbers=("NCHW", "HWIO", "NCHW"),
            precision=jax.lax.Precision.HIGHEST)
        return y + b[None, :, None, None]

    h = bn_silu_ref(x, params["bn1_gamma"], params["bn1_beta"])
    h = conv3x3_ref(h, params["conv1_w"], params["conv1_b"])
    h = bn_silu_ref(h, params["bn2_gamma"], params["bn2_beta"])
    h = conv3x3_ref(h, params["conv2_w"], params["conv2_b"])
    if "nin_w" in params:
        sc = jnp.einsum("nchw,co->nohw", x, params["nin_w"],
                        precision=jax.lax.Precision.HIGHEST) \
             + params["nin_b"][None, :, None, None]
    else:
        sc = x
    return sc + h


# ----------------------------------------------------------------------------
# Deterministic synthetic parameters
# ----------------------------------------------------------------------------
def init_resnet_block_params(key, in_channels, out_channels):
    ks = jax.random.split(key, 8)
    s1 = 1.0 / math.sqrt(9 * in_channels)
    s2 = 1.0 / math.sqrt(9 * out_channels)
    p = {
        "bn1_gamma": 1.0 + 0.1 * jax.random.normal(ks[0], (in_channels,), jnp.float32),
        "bn1_beta": 0.1 * jax.random.normal(ks[1], (in_channels,), jnp.float32),
        "conv1_w": jax.random.normal(ks[2], (3, 3, in_channels, out_channels), jnp.float32) * s1,
        "conv1_b": 0.01 * jax.random.normal(ks[3], (out_channels,), jnp.float32),
        "bn2_gamma": 1.0 + 0.1 * jax.random.normal(ks[4], (out_channels,), jnp.float32),
        "bn2_beta": 0.1 * jax.random.normal(ks[5], (out_channels,), jnp.float32),
        "conv2_w": jax.random.normal(ks[6], (3, 3, out_channels, out_channels), jnp.float32) * s2,
        "conv2_b": 0.01 * jax.random.normal(ks[7], (out_channels,), jnp.float32),
    }
    if in_channels != out_channels:
        kn = jax.random.split(ks[0], 2)
        p["nin_w"] = jax.random.normal(kn[0], (in_channels, out_channels), jnp.float32) \
                     * (1.0 / math.sqrt(in_channels))
        p["nin_b"] = 0.01 * jax.random.normal(kn[1], (out_channels,), jnp.float32)
    return p


# ----------------------------------------------------------------------------
if __name__ == "__main__":
    key = jax.random.PRNGKey(0)
    kp_a, kp_b, kx_a, kx_b = jax.random.split(key, 4)

    # Case A: in == out -> identity shortcut fused as residual add in the conv2 epilogue.
    params_a = init_resnet_block_params(kp_a, 64, 64)
    x_a = jax.random.normal(kx_a, (2, 64, 16, 16), jnp.float32)

    # Case B: in != out -> 1x1 nin_shortcut matmul fused into the conv2 epilogue.
    params_b = init_resnet_block_params(kp_b, 32, 64)
    x_b = jax.random.normal(kx_b, (2, 32, 16, 16), jnp.float32)

    fwd = jax.jit(resnet_block_forward)
    for x, params in ((x_a, params_a), (x_b, params_b)):
        out = jax.block_until_ready(fwd(x, params))
        ref = jax.block_until_ready(resnet_block_reference(x, params))
        assert out.shape == ref.shape, (out.shape, ref.shape)
        assert out.dtype == jnp.float32
        assert bool(jnp.all(jnp.isfinite(out)))
        err = float(jnp.max(jnp.abs(out - ref)))
        assert err < 1e-1, f"max abs error vs f32 reference too large: {err}"

    print("KERNEL_OK")
</pallas_src>

<mosaic_0001>
module attributes {stable_mosaic.version = 11 : i64} {
  func.func @_bn_stats_kernel(%arg0: i32, %arg1: memref<1x16x16x128xbf16, #tpu.memory_space<vmem>>, %arg2: memref<1x8x128xf32, #tpu.memory_space<vmem>>) attributes {dimension_semantics = [#tpu.dimension_semantics<parallel>], iteration_bounds = array<i64: 2>, scalar_prefetch = 0 : i64, scratch_operands = 0 : i64, tpu.core_type = #tpu.core_type<tc>, window_params = [{transform_indices = @transform_0, window_bounds = array<i64: 1, 16, 16, 128>}, {transform_indices = @transform_1, window_bounds = array<i64: 1, 8, 128>}]} {
    %c0 = arith.constant 0 : index
    %c0_0 = arith.constant 0 : index
    %c0_1 = arith.constant 0 : index
    %c0_2 = arith.constant 0 : index
    %0 = vector.load %arg1[%c0, %c0_0, %c0_1, %c0_2] : memref<1x16x16x128xbf16, #tpu.memory_space<vmem>>, vector<1x16x16x128xbf16>
    %1 = vector.shape_cast %0 : vector<1x16x16x128xbf16> to vector<16x16x128xbf16>
    %2 = arith.extf %1 : vector<16x16x128xbf16> to vector<16x16x128xf32>
    %cst = arith.constant dense<0.000000e+00> : vector<128xf32>
    %3 = vector.multi_reduction <add>, %2, %cst [0, 1] : vector<16x16x128xf32> to vector<128xf32>
    %4 = vector.shape_cast %3 : vector<128xf32> to vector<1x128xf32>
    %5 = arith.mulf %2, %2 : vector<16x16x128xf32>
    %cst_3 = arith.constant dense<0.000000e+00> : vector<128xf32>
    %6 = vector.multi_reduction <add>, %5, %cst_3 [0, 1] : vector<16x16x128xf32> to vector<128xf32>
    %7 = vector.shape_cast %6 : vector<128xf32> to vector<1x128xf32>
    %cst_4 = arith.constant 0.000000e+00 : f32
    %8 = vector.broadcast %cst_4 : f32 to vector<6x128xf32>
    %9 = tpu.concatenate %4, %7, %8 in 0 : vector<1x128xf32>, vector<1x128xf32>, vector<6x128xf32> -> vector<8x128xf32>
    %c0_5 = arith.constant 0 : index
    %c0_6 = arith.constant 0 : index
    %c0_7 = arith.constant 0 : index
    %10 = vector.load %arg2[%c0_5, %c0_6, %c0_7] : memref<1x8x128xf32, #tpu.memory_space<vmem>>, vector<1x8x128xf32>
    %11 = vector.shape_cast %10 : vector<1x8x128xf32> to vector<8x128xf32>
    %12 = vector.shape_cast %9 : vector<8x128xf32> to vector<1x8x128xf32>
    tpu.vector_store %arg2[%c0_5, %c0_6, %c0_7], %12 {strides = array<i32>} : memref<1x8x128xf32, #tpu.memory_space<vmem>>, vector<1x8x128xf32>,
    return
  }
  func.func @transform_0(%arg0: i32) -> (i32, i32, i32, i32) {
    %c0_i32 = arith.constant 0 : i32
    %c0_i32_0 = arith.constant 0 : i32
    %c0_i32_1 = arith.constant 0 : i32
    %c0_i32_2 = arith.constant 0 : i32
    return %arg0, %c0_i32, %c0_i32_0, %c0_i32_1 : i32, i32, i32, i32
  }
  func.func @transform_1(%arg0: i32) -> (i32, i32, i32) {
    %c0_i32 = arith.constant 0 : i32
    %c0_i32_0 = arith.constant 0 : i32
    %c0_i32_1 = arith.constant 0 : i32
    return %arg0, %c0_i32, %c0_i32_0 : i32, i32, i32
  }
}

module attributes {stable_mosaic.version = 11 : i64} {
  func.func @_conv3x3_kernel(%arg0: i32, %arg1: i32, %arg2: memref<1x16x16x128xbf16, #tpu.memory_space<vmem>>, %arg3: memref<1x1x128xf32, #tpu.memory_space<vmem>>, %arg4: memref<1x1x128xf32, #tpu.memory_space<vmem>>, %arg5: memref<9x128x128xbf16, #tpu.memory_space<vmem>>, %arg6: memref<1x128xf32, #tpu.memory_space<vmem>>, %arg7: memref<1x16x16x128xbf16, #tpu.memory_space<vmem>>, %arg8: memref<1x8x128xf32, #tpu.memory_space<vmem>>) attributes {dimension_semantics = [#tpu.dimension_semantics<parallel>, #tpu.dimension_semantics<parallel>], iteration_bounds = array<i64: 2, 1>, scalar_prefetch = 0 : i64, scratch_operands = 0 : i64, tpu.core_type = #tpu.core_type<tc>, window_params = [{transform_indices = @transform_0, window_bounds = array<i64: 1, 16, 16, 128>}, {pipeline_mode = #tpu.pipeline_mode<synchronous>, transform_indices = @transform_1, window_bounds = array<i64: 1, 1, 128>}, {pipeline_mode = #tpu.pipeline_mode<synchronous>, transform_indices = @transform_2, window_bounds = array<i64: 1, 1, 128>}, {transform_indices = @transform_3, window_bounds = array<i64: 9, 128, 128>}, {transform_indices = @transform_4, window_bounds = array<i64: 1, 128>}, {transform_indices = @transform_5, window_bounds = array<i64: 1, 16, 16, 128>}, {transform_indices = @transform_6, window_bounds = array<i64: 1, 8, 128>}]} {
    %c0 = arith.constant 0 : index
    %c0_0 = arith.constant 0 : index
    %c0_1 = arith.constant 0 : index
    %c0_2 = arith.constant 0 : index
    %0 = vector.load %arg2[%c0, %c0_0, %c0_1, %c0_2] : memref<1x16x16x128xbf16, #tpu.memory_space<vmem>>, vector<1x16x16x128xbf16>
    %1 = vector.shape_cast %0 : vector<1x16x16x128xbf16> to vector<16x16x128xbf16>
    %2 = arith.extf %1 : vector<16x16x128xbf16> to vector<16x16x128xf32>
    %c0_3 = arith.constant 0 : index
    %c0_4 = arith.constant 0 : index
    %c0_5 = arith.constant 0 : index
    %3 = vector.load %arg3[%c0_3, %c0_4, %c0_5] : memref<1x1x128xf32, #tpu.memory_space<vmem>>, vector<1x1x128xf32>
    %4 = vector.shape_cast %3 : vector<1x1x128xf32> to vector<1x128xf32>
    %5 = vector.shape_cast %4 : vector<1x128xf32> to vector<1x1x128xf32>
    %6 = vector.broadcast %5 : vector<1x1x128xf32> to vector<16x16x128xf32>
    %7 = arith.mulf %2, %6 : vector<16x16x128xf32>
    %c0_6 = arith.constant 0 : index
    %c0_7 = arith.constant 0 : index
    %c0_8 = arith.constant 0 : index
    %8 = vector.load %arg4[%c0_6, %c0_7, %c0_8] : memref<1x1x128xf32, #tpu.memory_space<vmem>>, vector<1x1x128xf32>
    %9 = vector.shape_cast %8 : vector<1x1x128xf32> to vector<1x128xf32>
    %10 = vector.shape_cast %9 : vector<1x128xf32> to vector<1x1x128xf32>
    %11 = vector.broadcast %10 : vector<1x1x128xf32> to vector<16x16x128xf32>
    %12 = arith.addf %7, %11 : vector<16x16x128xf32>
    %13 = arith.negf %12 : vector<16x16x128xf32>
    %14 = math.exp %13 : vector<16x16x128xf32>
    %cst = arith.constant 1.000000e+00 : f32
    %15 = vector.broadcast %cst : f32 to vector<16x16x128xf32>
    %16 = arith.addf %15, %14 : vector<16x16x128xf32>
    %17 = arith.divf %15, %16 : vector<16x16x128xf32>
    %18 = arith.mulf %12, %17 : vector<16x16x128xf32>
    %19 = arith.truncf %18 : vector<16x16x128xf32> to vector<16x16x128xbf16>
    %cst_9 = arith.constant 0.000000e+00 : bf16
    %20 = vector.broadcast %cst_9 : bf16 to vector<1x16x128xbf16>
    %21 = tpu.concatenate %20, %19, %20 in 0 : vector<1x16x128xbf16>, vector<16x16x128xbf16>, vector<1x16x128xbf16> -> vector<18x16x128xbf16>
    %cst_10 = arith.constant 0.000000e+00 : bf16
    %22 = vector.broadcast %cst_10 : bf16 to vector<18x1x128xbf16>
    %23 = tpu.concatenate %22, %21, %22 in 1 : vector<18x1x128xbf16>, vector<18x16x128xbf16>, vector<18x1x128xbf16> -> vector<18x18x128xbf16>
    %24 = vector.extract_strided_slice %23 {offsets = [0, 0, 0], sizes = [16, 16, 128], strides = [1, 1, 1]} : vector<18x18x128xbf16> to vector<16x16x128xbf16>
    %25 = vector.shape_cast %24 : vector<16x16x128xbf16> to vector<256x128xbf16>
    %c0_11 = arith.constant 0 : index
    %c0_12 = arith.constant 0 : index
    %c0_13 = arith.constant 0 : index
    %26 = vector.load %arg5[%c0_11, %c0_12, %c0_13] : memref<9x128x128xbf16, #tpu.memory_space<vmem>>, vector<1x128x128xbf16>
    %27 = vector.shape_cast %26 : vector<1x128x128xbf16> to vector<128x128xbf16>
    %cst_14 = arith.constant dense<0.000000e+00> : vector<256x128xf32>
    %28 = tpu.matmul %25, %27, %cst_14 {dimension_numbers = #tpu.dot_dimension_numbers<[1], [0], [0], [1], [0, 0, 1, 1], [], []>} : vector<256x128xbf16>, vector<128x128xbf16>, vector<256x128xf32> -> vector<256x128xf32>
    %29 = vector.extract_strided_slice %23 {offsets = [0, 1, 0], sizes = [16, 16, 128], strides = [1, 1, 1]} : vector<18x18x128xbf16> to vector<16x16x128xbf16>
    %30 = vector.shape_cast %29 : vector<16x16x128xbf16> to vector<256x128xbf16>
    %c1 = arith.constant 1 : index
    %c0_15 = arith.constant 0 : index
    %c0_16 = arith.constant 0 : index
    %31 = vector.load %arg5[%c1, %c0_15, %c0_16] : memref<9x128x128xbf16, #tpu.memory_space<vmem>>, vector<1x128x128xbf16>
    %32 = vector.shape_cast %31 : vector<1x128x128xbf16> to vector<128x128xbf16>
    %cst_17 = arith.constant dense<0.000000e+00> : vector<256x128xf32>
    %33 = tpu.matmul %30, %32, %cst_17 {dimension_numbers = #tpu.dot_dimension_numbers<[1], [0], [0], [1], [0, 0, 1, 1], [], []>} : vector<256x128xbf16>, vector<128x128xbf16>, vector<256x128xf32> -> vector<256x128xf32>
    %34 = arith.addf %28, %33 : vector<256x128xf32>
    %35 = vector.extract_strided_slice %23 {offsets = [0, 2, 0], sizes = [16, 16, 128], strides = [1, 1, 1]} : vector<18x18x128xbf16> to vector<16x16x128xbf16>
    %36 = vector.shape_cast %35 : vector<16x16x128xbf16> to vector<256x128xbf16>
    %c2 = arith.constant 2 : index
    %c0_18 = arith.constant 0 : index
    %c0_19 = arith.constant 0 : index
    %37 = vector.load %arg5[%c2, %c0_18, %c0_19] : memref<9x128x128xbf16, #tpu.memory_space<vmem>>, vector<1x128x128xbf16>
    %38 = vector.shape_cast %37 : vector<1x128x128xbf16> to vector<128x128xbf16>
    %cst_20 = arith.constant dense<0.000000e+00> : vector<256x128xf32>
    %39 = tpu.matmul %36, %38, %cst_20 {dimension_numbers = #tpu.dot_dimension_numbers<[1], [0], [0], [1], [0, 0, 1, 1], [], []>} : vector<256x128xbf16>, vector<128x128xbf16>, vector<256x128xf32> -> vector<256x128xf32>
    %40 = arith.addf %34, %39 : vector<256x128xf32>
    %41 = vector.extract_strided_slice %23 {offsets = [1, 0, 0], sizes = [16, 16, 128], strides = [1, 1, 1]} : vector<18x18x128xbf16> to vector<16x16x128xbf16>
    %42 = vector.shape_cast %41 : vector<16x16x128xbf16> to vector<256x128xbf16>
    %c3 = arith.constant 3 : index
    %c0_21 = arith.constant 0 : index
    %c0_22 = arith.constant 0 : index
    %43 = vector.load %arg5[%c3, %c0_21, %c0_22] : memref<9x128x128xbf16, #tpu.memory_space<vmem>>, vector<1x128x128xbf16>
    %44 = vector.shape_cast %43 : vector<1x128x128xbf16> to vector<128x128xbf16>
    %cst_23 = arith.constant dense<0.000000e+00> : vector<256x128xf32>
    %45 = tpu.matmul %42, %44, %cst_23 {dimension_numbers = #tpu.dot_dimension_numbers<[1], [0], [0], [1], [0, 0, 1, 1], [], []>} : vector<256x128xbf16>, vector<128x128xbf16>, vector<256x128xf32> -> vector<256x128xf32>
    %46 = arith.addf %40, %45 : vector<256x128xf32>
    %47 = vector.extract_strided_slice %23 {offsets = [1, 1, 0], sizes = [16, 16, 128], strides = [1, 1, 1]} : vector<18x18x128xbf16> to vector<16x16x128xbf16>
    %48 = vector.shape_cast %47 : vector<16x16x128xbf16> to vector<256x128xbf16>
    %c4 = arith.constant 4 : index
    %c0_24 = arith.constant 0 : index
    %c0_25 = arith.constant 0 : index
    %49 = vector.load %arg5[%c4, %c0_24, %c0_25] : memref<9x128x128xbf16, #tpu.memory_space<vmem>>, vector<1x128x128xbf16>
    %50 = vector.shape_cast %49 : vector<1x128x128xbf16> to vector<128x128xbf16>
    %cst_26 = arith.constant dense<0.000000e+00> : vector<256x128xf32>
    %51 = tpu.matmul %48, %50, %cst_26 {dimension_numbers = #tpu.dot_dimension_numbers<[1], [0], [0], [1], [0, 0, 1, 1], [], []>} : vector<256x128xbf16>, vector<128x128xbf16>, vector<256x128xf32> -> vector<256x128xf32>
    %52 = arith.addf %46, %51 : vector<256x128xf32>
    %53 = vector.extract_strided_slice %23 {offsets = [1, 2, 0], sizes = [16, 16, 128], strides = [1, 1, 1]} : vector<18x18x128xbf16> to vector<16x16x128xbf16>
    %54 = vector.shape_cast %53 : vector<16x16x128xbf16> to vector<256x128xbf16>
    %c5 = arith.constant 5 : index
    %c0_27 = arith.constant 0 : index
    %c0_28 = arith.constant 0 : index
    %55 = vector.load %arg5[%c5, %c0_27, %c0_28] : memref<9x128x128xbf16, #tpu.memory_space<vmem>>, vector<1x128x128xbf16>
    %56 = vector.shape_cast %55 : vector<1x128x128xbf16> to vector<128x128xbf16>
    %cst_29 = arith.constant dense<0.000000e+00> : vector<256x128xf32>
    %57 = tpu.matmul %54, %56, %cst_29 {dimension_numbers = #tpu.dot_dimension_numbers<[1], [0], [0], [1], [0, 0, 1, 1], [], []>} : vector<256x128xbf16>, vector<128x128xbf16>, vector<256x128xf32> -> vector<256x128xf32>
    %58 = arith.addf %52, %57 : vector<256x128xf32>
    %59 = vector.extract_strided_slice %23 {offsets = [2, 0, 0], sizes = [16, 16, 128], strides = [1, 1, 1]} : vector<18x18x128xbf16> to vector<16x16x128xbf16>
    %60 = vector.shape_cast %59 : vector<16x16x128xbf16> to vector<256x128xbf16>
    %c6 = arith.constant 6 : index
    %c0_30 = arith.constant 0 : index
    %c0_31 = arith.constant 0 : index
    %61 = vector.load %arg5[%c6, %c0_30, %c0_31] : memref<9x128x128xbf16, #tpu.memory_space<vmem>>, vector<1x128x128xbf16>
    %62 = vector.shape_cast %61 : vector<1x128x128xbf16> to vector<128x128xbf16>
    %cst_32 = arith.constant dense<0.000000e+00> : vector<256x128xf32>
    %63 = tpu.matmul %60, %62, %cst_32 {dimension_numbers = #tpu.dot_dimension_numbers<[1], [0], [0], [1], [0, 0, 1, 1], [], []>} : vector<256x128xbf16>, vector<128x128xbf16>, vector<256x128xf32> -> vector<256x128xf32>
    %64 = arith.addf %58, %63 : vector<256x128xf32>
    %65 = vector.extract_strided_slice %23 {offsets = [2, 1, 0], sizes = [16, 16, 128], strides = [1, 1, 1]} : vector<18x18x128xbf16> to vector<16x16x128xbf16>
    %66 = vector.shape_cast %65 : vector<16x16x128xbf16> to vector<256x128xbf16>
    %c7 = arith.constant 7 : index
    %c0_33 = arith.constant 0 : index
    %c0_34 = arith.constant 0 : index
    %67 = vector.load %arg5[%c7, %c0_33, %c0_34] : memref<9x128x128xbf16, #tpu.memory_space<vmem>>, vector<1x128x128xbf16>
    %68 = vector.shape_cast %67 : vector<1x128x128xbf16> to vector<128x128xbf16>
    %cst_35 = arith.constant dense<0.000000e+00> : vector<256x128xf32>
    %69 = tpu.matmul %66, %68, %cst_35 {dimension_numbers = #tpu.dot_dimension_numbers<[1], [0], [0], [1], [0, 0, 1, 1], [], []>} : vector<256x128xbf16>, vector<128x128xbf16>, vector<256x128xf32> -> vector<256x128xf32>
    %70 = arith.addf %64, %69 : vector<256x128xf32>
    %71 = vector.extract_strided_slice %23 {offsets = [2, 2, 0], sizes = [16, 16, 128], strides = [1, 1, 1]} : vector<18x18x128xbf16> to vector<16x16x128xbf16>
    %72 = vector.shape_cast %71 : vector<16x16x128xbf16> to vector<256x128xbf16>
    %c8 = arith.constant 8 : index
    %c0_36 = arith.constant 0 : index
    %c0_37 = arith.constant 0 : index
    %73 = vector.load %arg5[%c8, %c0_36, %c0_37] : memref<9x128x128xbf16, #tpu.memory_space<vmem>>, vector<1x128x128xbf16>
    %74 = vector.shape_cast %73 : vector<1x128x128xbf16> to vector<128x128xbf16>
    %cst_38 = arith.constant dense<0.000000e+00> : vector<256x128xf32>
    %75 = tpu.matmul %72, %74, %cst_38 {dimension_numbers = #tpu.dot_dimension_numbers<[1], [0], [0], [1], [0, 0, 1, 1], [], []>} : vector<256x128xbf16>, vector<128x128xbf16>, vector<256x128xf32> -> vector<256x128xf32>
    %76 = arith.addf %70, %75 : vector<256x128xf32>
    %c0_39 = arith.constant 0 : index
    %c0_40 = arith.constant 0 : index
    %77 = vector.load %arg6[%c0_39, %c0_40] : memref<1x128xf32, #tpu.memory_space<vmem>>, vector<1x128xf32>
    %78 = vector.broadcast %77 : vector<1x128xf32> to vector<256x128xf32>
    %79 = arith.addf %76, %78 : vector<256x128xf32>
    %cst_41 = arith.constant dense<0.000000e+00> : vector<128xf32>
    %80 = vector.multi_reduction <add>, %79, %cst_41 [0] : vector<256x128xf32> to vector<128xf32>
    %81 = vector.shape_cast %80 : vector<128xf32> to vector<1x128xf32>
    %82 = arith.mulf %79, %79 : vector<256x128xf32>
    %cst_42 = arith.constant dense<0.000000e+00> : vector<128xf32>
    %83 = vector.multi_reduction <add>, %82, %cst_42 [0] : vector<256x128xf32> to vector<128xf32>
    %84 = vector.shape_cast %83 : vector<128xf32> to vector<1x128xf32>
    %cst_43 = arith.constant 0.000000e+00 : f32
    %85 = vector.broadcast %cst_43 : f32 to vector<6x128xf32>
    %86 = tpu.concatenate %81, %84, %85 in 0 : vector<1x128xf32>, vector<1x128xf32>, vector<6x128xf32> -> vector<8x128xf32>
    %c0_44 = arith.constant 0 : index
    %c0_45 = arith.constant 0 : index
    %c0_46 = arith.constant 0 : index
    %87 = vector.load %arg8[%c0_44, %c0_45, %c0_46] : memref<1x8x128xf32, #tpu.memory_space<vmem>>, vector<1x8x128xf32>
    %88 = vector.shape_cast %87 : vector<1x8x128xf32> to vector<8x128xf32>
    %89 = vector.shape_cast %86 : vector<8x128xf32> to vector<1x8x128xf32>
    tpu.vector_store %arg8[%c0_44, %c0_45, %c0_46], %89 {strides = array<i32>} : memref<1x8x128xf32, #tpu.memory_space<vmem>>, vector<1x8x128xf32>,
    %90 = vector.shape_cast %79 : vector<256x128xf32> to vector<16x16x128xf32>
    %91 = arith.truncf %90 : vector<16x16x128xf32> to vector<16x16x128xbf16>
    %c0_47 = arith.constant 0 : index
    %c0_48 = arith.constant 0 : index
    %c0_49 = arith.constant 0 : index
    %c0_50 = arith.constant 0 : index
    %92 = vector.load %arg7[%c0_47, %c0_48, %c0_49, %c0_50] : memref<1x16x16x128xbf16, #tpu.memory_space<vmem>>, vector<1x16x16x128xbf16>
    %93 = vector.shape_cast %92 : vector<1x16x16x128xbf16> to vector<16x16x128xbf16>
    %94 = vector.shape_cast %91 : vector<16x16x128xbf16> to vector<1x16x16x128xbf16>
    tpu.vector_store %arg7[%c0_47, %c0_48, %c0_49, %c0_50], %94 {strides = array<i32>} : memref<1x16x16x128xbf16, #tpu.memory_space<vmem>>, vector<1x16x16x128xbf16>,
    return
  }
  func.func @transform_0(%arg0: i32, %arg1: i32) -> (i32, i32, i32, i32) {
    %c0_i32 = arith.constant 0 : i32
    %c0_i32_0 = arith.constant 0 : i32
    %c0_i32_1 = arith.constant 0 : i32
    %c0_i32_2 = arith.constant 0 : i32
    return %arg0, %c0_i32, %c0_i32_0, %c0_i32_1 : i32, i32, i32, i32
  }
  func.func @transform_1(%arg0: i32, %arg1: i32) -> (i32, i32, i32) {
    %c0_i32 = arith.constant 0 : i32
    %c0_i32_0 = arith.constant 0 : i32
    %c0_i32_1 = arith.constant 0 : i32
    %c0_i32_2 = arith.constant 0 : i32
    return %c0_i32, %c0_i32_0, %c0_i32_1 : i32, i32, i32
  }
  func.func @transform_2(%arg0: i32, %arg1: i32) -> (i32, i32, i32) {
    %c0_i32 = arith.constant 0 : i32
    %c0_i32_0 = arith.constant 0 : i32
    %c0_i32_1 = arith.constant 0 : i32
    %c0_i32_2 = arith.constant 0 : i32
    return %c0_i32, %c0_i32_0, %c0_i32_1 : i32, i32, i32
  }
  func.func @transform_3(%arg0: i32, %arg1: i32) -> (i32, i32, i32) {
    %c0_i32 = arith.constant 0 : i32
    %c0_i32_0 = arith.constant 0 : i32
    %c0_i32_1 = arith.constant 0 : i32
    return %c0_i32, %c0_i32_0, %arg1 : i32, i32, i32
  }
  func.func @transform_4(%arg0: i32, %arg1: i32) -> (i32, i32) {
    %c0_i32 = arith.constant 0 : i32
    %c0_i32_0 = arith.constant 0 : i32
    return %c0_i32, %arg1 : i32, i32
  }
  func.func @transform_5(%arg0: i32, %arg1: i32) -> (i32, i32, i32, i32) {
    %c0_i32 = arith.constant 0 : i32
    %c0_i32_0 = arith.constant 0 : i32
    %c0_i32_1 = arith.constant 0 : i32
    return %arg0, %c0_i32, %c0_i32_0, %arg1 : i32, i32, i32, i32
  }
  func.func @transform_6(%arg0: i32, %arg1: i32) -> (i32, i32, i32) {
    %c0_i32 = arith.constant 0 : i32
    %c0_i32_0 = arith.constant 0 : i32
    return %arg0, %c0_i32, %arg1 : i32, i32, i32
  }
}

module attributes {stable_mosaic.version = 11 : i64} {
  func.func @_conv3x3_kernel(%arg0: i32, %arg1: i32, %arg2: memref<1x16x16x128xbf16, #tpu.memory_space<vmem>>, %arg3: memref<1x1x128xf32, #tpu.memory_space<vmem>>, %arg4: memref<1x1x128xf32, #tpu.memory_space<vmem>>, %arg5: memref<9x128x128xbf16, #tpu.memory_space<vmem>>, %arg6: memref<1x128xf32, #tpu.memory_space<vmem>>, %arg7: memref<1x16x16x128xbf16, #tpu.memory_space<vmem>>, %arg8: memref<1x16x16x128xf32, #tpu.memory_space<vmem>>) attributes {dimension_semantics = [#tpu.dimension_semantics<parallel>, #tpu.dimension_semantics<parallel>], iteration_bounds = array<i64: 2, 1>, scalar_prefetch = 0 : i64, scratch_operands = 0 : i64, tpu.core_type = #tpu.core_type<tc>, window_params = [{transform_indices = @transform_0, window_bounds = array<i64: 1, 16, 16, 128>}, {pipeline_mode = #tpu.pipeline_mode<synchronous>, transform_indices = @transform_1, window_bounds = array<i64: 1, 1, 128>}, {pipeline_mode = #tpu.pipeline_mode<synchronous>, transform_indices = @transform_2, window_bounds = array<i64: 1, 1, 128>}, {transform_indices = @transform_3, window_bounds = array<i64: 9, 128, 128>}, {transform_indices = @transform_4, window_bounds = array<i64: 1, 128>}, {transform_indices = @transform_5, window_bounds = array<i64: 1, 16, 16, 128>}, {transform_indices = @transform_6, window_bounds = array<i64: 1, 16, 16, 128>}]} {
    %c0 = arith.constant 0 : index
    %c0_0 = arith.constant 0 : index
    %c0_1 = arith.constant 0 : index
    %c0_2 = arith.constant 0 : index
    %0 = vector.load %arg2[%c0, %c0_0, %c0_1, %c0_2] : memref<1x16x16x128xbf16, #tpu.memory_space<vmem>>, vector<1x16x16x128xbf16>
    %1 = vector.shape_cast %0 : vector<1x16x16x128xbf16> to vector<16x16x128xbf16>
    %2 = arith.extf %1 : vector<16x16x128xbf16> to vector<16x16x128xf32>
    %c0_3 = arith.constant 0 : index
    %c0_4 = arith.constant 0 : index
    %c0_5 = arith.constant 0 : index
    %3 = vector.load %arg3[%c0_3, %c0_4, %c0_5] : memref<1x1x128xf32, #tpu.memory_space<vmem>>, vector<1x1x128xf32>
    %4 = vector.shape_cast %3 : vector<1x1x128xf32> to vector<1x128xf32>
    %5 = vector.shape_cast %4 : vector<1x128xf32> to vector<1x1x128xf32>
    %6 = vector.broadcast %5 : vector<1x1x128xf32> to vector<16x16x128xf32>
    %7 = arith.mulf %2, %6 : vector<16x16x128xf32>
    %c0_6 = arith.constant 0 : index
    %c0_7 = arith.constant 0 : index
    %c0_8 = arith.constant 0 : index
    %8 = vector.load %arg4[%c0_6, %c0_7, %c0_8] : memref<1x1x128xf32, #tpu.memory_space<vmem>>, vector<1x1x128xf32>
    %9 = vector.shape_cast %8 : vector<1x1x128xf32> to vector<1x128xf32>
    %10 = vector.shape_cast %9 : vector<1x128xf32> to vector<1x1x128xf32>
    %11 = vector.broadcast %10 : vector<1x1x128xf32> to vector<16x16x128xf32>
    %12 = arith.addf %7, %11 : vector<16x16x128xf32>
    %13 = arith.negf %12 : vector<16x16x128xf32>
    %14 = math.exp %13 : vector<16x16x128xf32>
    %cst = arith.constant 1.000000e+00 : f32
    %15 = vector.broadcast %cst : f32 to vector<16x16x128xf32>
    %16 = arith.addf %15, %14 : vector<16x16x128xf32>
    %17 = arith.divf %15, %16 : vector<16x16x128xf32>
    %18 = arith.mulf %12, %17 : vector<16x16x128xf32>
    %19 = arith.truncf %18 : vector<16x16x128xf32> to vector<16x16x128xbf16>
    %cst_9 = arith.constant 0.000000e+00 : bf16
    %20 = vector.broadcast %cst_9 : bf16 to vector<1x16x128xbf16>
    %21 = tpu.concatenate %20, %19, %20 in 0 : vector<1x16x128xbf16>, vector<16x16x128xbf16>, vector<1x16x128xbf16> -> vector<18x16x128xbf16>
    %cst_10 = arith.constant 0.000000e+00 : bf16
    %22 = vector.broadcast %cst_10 : bf16 to vector<18x1x128xbf16>
    %23 = tpu.concatenate %22, %21, %22 in 1 : vector<18x1x128xbf16>, vector<18x16x128xbf16>, vector<18x1x128xbf16> -> vector<18x18x128xbf16>
    %24 = vector.extract_strided_slice %23 {offsets = [0, 0, 0], sizes = [16, 16, 128], strides = [1, 1, 1]} : vector<18x18x128xbf16> to vector<16x16x128xbf16>
    %25 = vector.shape_cast %24 : vector<16x16x128xbf16> to vector<256x128xbf16>
    %c0_11 = arith.constant 0 : index
    %c0_12 = arith.constant 0 : index
    %c0_13 = arith.constant 0 : index
    %26 = vector.load %arg5[%c0_11, %c0_12, %c0_13] : memref<9x128x128xbf16, #tpu.memory_space<vmem>>, vector<1x128x128xbf16>
    %27 = vector.shape_cast %26 : vector<1x128x128xbf16> to vector<128x128xbf16>
    %cst_14 = arith.constant dense<0.000000e+00> : vector<256x128xf32>
    %28 = tpu.matmul %25, %27, %cst_14 {dimension_numbers = #tpu.dot_dimension_numbers<[1], [0], [0], [1], [0, 0, 1, 1], [], []>} : vector<256x128xbf16>, vector<128x128xbf16>, vector<256x128xf32> -> vector<256x128xf32>
    %29 = vector.extract_strided_slice %23 {offsets = [0, 1, 0], sizes = [16, 16, 128], strides = [1, 1, 1]} : vector<18x18x128xbf16> to vector<16x16x128xbf16>
    %30 = vector.shape_cast %29 : vector<16x16x128xbf16> to vector<256x128xbf16>
    %c1 = arith.constant 1 : index
    %c0_15 = arith.constant 0 : index
    %c0_16 = arith.constant 0 : index
    %31 = vector.load %arg5[%c1, %c0_15, %c0_16] : memref<9x128x128xbf16, #tpu.memory_space<vmem>>, vector<1x128x128xbf16>
    %32 = vector.shape_cast %31 : vector<1x128x128xbf16> to vector<128x128xbf16>
    %cst_17 = arith.constant dense<0.000000e+00> : vector<256x128xf32>
    %33 = tpu.matmul %30, %32, %cst_17 {dimension_numbers = #tpu.dot_dimension_numbers<[1], [0], [0], [1], [0, 0, 1, 1], [], []>} : vector<256x128xbf16>, vector<128x128xbf16>, vector<256x128xf32> -> vector<256x128xf32>
    %34 = arith.addf %28, %33 : vector<256x128xf32>
    %35 = vector.extract_strided_slice %23 {offsets = [0, 2, 0], sizes = [16, 16, 128], strides = [1, 1, 1]} : vector<18x18x128xbf16> to vector<16x16x128xbf16>
    %36 = vector.shape_cast %35 : vector<16x16x128xbf16> to vector<256x128xbf16>
    %c2 = arith.constant 2 : index
    %c0_18 = arith.constant 0 : index
    %c0_19 = arith.constant 0 : index
    %37 = vector.load %arg5[%c2, %c0_18, %c0_19] : memref<9x128x128xbf16, #tpu.memory_space<vmem>>, vector<1x128x128xbf16>
    %38 = vector.shape_cast %37 : vector<1x128x128xbf16> to vector<128x128xbf16>
    %cst_20 = arith.constant dense<0.000000e+00> : vector<256x128xf32>
    %39 = tpu.matmul %36, %38, %cst_20 {dimension_numbers = #tpu.dot_dimension_numbers<[1], [0], [0], [1], [0, 0, 1, 1], [], []>} : vector<256x128xbf16>, vector<128x128xbf16>, vector<256x128xf32> -> vector<256x128xf32>
    %40 = arith.addf %34, %39 : vector<256x128xf32>
    %41 = vector.extract_strided_slice %23 {offsets = [1, 0, 0], sizes = [16, 16, 128], strides = [1, 1, 1]} : vector<18x18x128xbf16> to vector<16x16x128xbf16>
    %42 = vector.shape_cast %41 : vector<16x16x128xbf16> to vector<256x128xbf16>
    %c3 = arith.constant 3 : index
    %c0_21 = arith.constant 0 : index
    %c0_22 = arith.constant 0 : index
    %43 = vector.load %arg5[%c3, %c0_21, %c0_22] : memref<9x128x128xbf16, #tpu.memory_space<vmem>>, vector<1x128x128xbf16>
    %44 = vector.shape_cast %43 : vector<1x128x128xbf16> to vector<128x128xbf16>
    %cst_23 = arith.constant dense<0.000000e+00> : vector<256x128xf32>
    %45 = tpu.matmul %42, %44, %cst_23 {dimension_numbers = #tpu.dot_dimension_numbers<[1], [0], [0], [1], [0, 0, 1, 1], [], []>} : vector<256x128xbf16>, vector<128x128xbf16>, vector<256x128xf32> -> vector<256x128xf32>
    %46 = arith.addf %40, %45 : vector<256x128xf32>
    %47 = vector.extract_strided_slice %23 {offsets = [1, 1, 0], sizes = [16, 16, 128], strides = [1, 1, 1]} : vector<18x18x128xbf16> to vector<16x16x128xbf16>
    %48 = vector.shape_cast %47 : vector<16x16x128xbf16> to vector<256x128xbf16>
    %c4 = arith.constant 4 : index
    %c0_24 = arith.constant 0 : index
    %c0_25 = arith.constant 0 : index
    %49 = vector.load %arg5[%c4, %c0_24, %c0_25] : memref<9x128x128xbf16, #tpu.memory_space<vmem>>, vector<1x128x128xbf16>
    %50 = vector.shape_cast %49 : vector<1x128x128xbf16> to vector<128x128xbf16>
    %cst_26 = arith.constant dense<0.000000e+00> : vector<256x128xf32>
    %51 = tpu.matmul %48, %50, %cst_26 {dimension_numbers = #tpu.dot_dimension_numbers<[1], [0], [0], [1], [0, 0, 1, 1], [], []>} : vector<256x128xbf16>, vector<128x128xbf16>, vector<256x128xf32> -> vector<256x128xf32>
    %52 = arith.addf %46, %51 : vector<256x128xf32>
    %53 = vector.extract_strided_slice %23 {offsets = [1, 2, 0], sizes = [16, 16, 128], strides = [1, 1, 1]} : vector<18x18x128xbf16> to vector<16x16x128xbf16>
    %54 = vector.shape_cast %53 : vector<16x16x128xbf16> to vector<256x128xbf16>
    %c5 = arith.constant 5 : index
    %c0_27 = arith.constant 0 : index
    %c0_28 = arith.constant 0 : index
    %55 = vector.load %arg5[%c5, %c0_27, %c0_28] : memref<9x128x128xbf16, #tpu.memory_space<vmem>>, vector<1x128x128xbf16>
    %56 = vector.shape_cast %55 : vector<1x128x128xbf16> to vector<128x128xbf16>
    %cst_29 = arith.constant dense<0.000000e+00> : vector<256x128xf32>
    %57 = tpu.matmul %54, %56, %cst_29 {dimension_numbers = #tpu.dot_dimension_numbers<[1], [0], [0], [1], [0, 0, 1, 1], [], []>} : vector<256x128xbf16>, vector<128x128xbf16>, vector<256x128xf32> -> vector<256x128xf32>
    %58 = arith.addf %52, %57 : vector<256x128xf32>
    %59 = vector.extract_strided_slice %23 {offsets = [2, 0, 0], sizes = [16, 16, 128], strides = [1, 1, 1]} : vector<18x18x128xbf16> to vector<16x16x128xbf16>
    %60 = vector.shape_cast %59 : vector<16x16x128xbf16> to vector<256x128xbf16>
    %c6 = arith.constant 6 : index
    %c0_30 = arith.constant 0 : index
    %c0_31 = arith.constant 0 : index
    %61 = vector.load %arg5[%c6, %c0_30, %c0_31] : memref<9x128x128xbf16, #tpu.memory_space<vmem>>, vector<1x128x128xbf16>
    %62 = vector.shape_cast %61 : vector<1x128x128xbf16> to vector<128x128xbf16>
    %cst_32 = arith.constant dense<0.000000e+00> : vector<256x128xf32>
    %63 = tpu.matmul %60, %62, %cst_32 {dimension_numbers = #tpu.dot_dimension_numbers<[1], [0], [0], [1], [0, 0, 1, 1], [], []>} : vector<256x128xbf16>, vector<128x128xbf16>, vector<256x128xf32> -> vector<256x128xf32>
    %64 = arith.addf %58, %63 : vector<256x128xf32>
    %65 = vector.extract_strided_slice %23 {offsets = [2, 1, 0], sizes = [16, 16, 128], strides = [1, 1, 1]} : vector<18x18x128xbf16> to vector<16x16x128xbf16>
    %66 = vector.shape_cast %65 : vector<16x16x128xbf16> to vector<256x128xbf16>
    %c7 = arith.constant 7 : index
    %c0_33 = arith.constant 0 : index
    %c0_34 = arith.constant 0 : index
    %67 = vector.load %arg5[%c7, %c0_33, %c0_34] : memref<9x128x128xbf16, #tpu.memory_space<vmem>>, vector<1x128x128xbf16>
    %68 = vector.shape_cast %67 : vector<1x128x128xbf16> to vector<128x128xbf16>
    %cst_35 = arith.constant dense<0.000000e+00> : vector<256x128xf32>
    %69 = tpu.matmul %66, %68, %cst_35 {dimension_numbers = #tpu.dot_dimension_numbers<[1], [0], [0], [1], [0, 0, 1, 1], [], []>} : vector<256x128xbf16>, vector<128x128xbf16>, vector<256x128xf32> -> vector<256x128xf32>
    %70 = arith.addf %64, %69 : vector<256x128xf32>
    %71 = vector.extract_strided_slice %23 {offsets = [2, 2, 0], sizes = [16, 16, 128], strides = [1, 1, 1]} : vector<18x18x128xbf16> to vector<16x16x128xbf16>
    %72 = vector.shape_cast %71 : vector<16x16x128xbf16> to vector<256x128xbf16>
    %c8 = arith.constant 8 : index
    %c0_36 = arith.constant 0 : index
    %c0_37 = arith.constant 0 : index
    %73 = vector.load %arg5[%c8, %c0_36, %c0_37] : memref<9x128x128xbf16, #tpu.memory_space<vmem>>, vector<1x128x128xbf16>
    %74 = vector.shape_cast %73 : vector<1x128x128xbf16> to vector<128x128xbf16>
    %cst_38 = arith.constant dense<0.000000e+00> : vector<256x128xf32>
    %75 = tpu.matmul %72, %74, %cst_38 {dimension_numbers = #tpu.dot_dimension_numbers<[1], [0], [0], [1], [0, 0, 1, 1], [], []>} : vector<256x128xbf16>, vector<128x128xbf16>, vector<256x128xf32> -> vector<256x128xf32>
    %76 = arith.addf %70, %75 : vector<256x128xf32>
    %c0_39 = arith.constant 0 : index
    %c0_40 = arith.constant 0 : index
    %77 = vector.load %arg6[%c0_39, %c0_40] : memref<1x128xf32, #tpu.memory_space<vmem>>, vector<1x128xf32>
    %78 = vector.broadcast %77 : vector<1x128xf32> to vector<256x128xf32>
    %79 = arith.addf %76, %78 : vector<256x128xf32>
    %c0_41 = arith.constant 0 : index
    %c0_42 = arith.constant 0 : index
    %c0_43 = arith.constant 0 : index
    %c0_44 = arith.constant 0 : index
    %80 = vector.load %arg7[%c0_41, %c0_42, %c0_43, %c0_44] : memref<1x16x16x128xbf16, #tpu.memory_space<vmem>>, vector<1x16x16x128xbf16>
    %81 = vector.shape_cast %80 : vector<1x16x16x128xbf16> to vector<16x16x128xbf16>
    %82 = vector.shape_cast %81 : vector<16x16x128xbf16> to vector<256x128xbf16>
    %83 = arith.extf %82 : vector<256x128xbf16> to vector<256x128xf32>
    %84 = arith.addf %79, %83 : vector<256x128xf32>
    %85 = vector.shape_cast %84 : vector<256x128xf32> to vector<16x16x128xf32>
    %c0_45 = arith.constant 0 : index
    %c0_46 = arith.constant 0 : index
    %c0_47 = arith.constant 0 : index
    %c0_48 = arith.constant 0 : index
    %86 = vector.load %arg8[%c0_45, %c0_46, %c0_47, %c0_48] : memref<1x16x16x128xf32, #tpu.memory_space<vmem>>, vector<1x16x16x128xf32>
    %87 = vector.shape_cast %86 : vector<1x16x16x128xf32> to vector<16x16x128xf32>
    %88 = vector.shape_cast %85 : vector<16x16x128xf32> to vector<1x16x16x128xf32>
    tpu.vector_store %arg8[%c0_45, %c0_46, %c0_47, %c0_48], %88 {strides = array<i32>} : memref<1x16x16x128xf32, #tpu.memory_space<vmem>>, vector<1x16x16x128xf32>,
    return
  }
  func.func @transform_0(%arg0: i32, %arg1: i32) -> (i32, i32, i32, i32) {
    %c0_i32 = arith.constant 0 : i32
    %c0_i32_0 = arith.constant 0 : i32
    %c0_i32_1 = arith.constant 0 : i32
    %c0_i32_2 = arith.constant 0 : i32
    return %arg0, %c0_i32, %c0_i32_0, %c0_i32_1 : i32, i32, i32, i32
  }
  func.func @transform_1(%arg0: i32, %arg1: i32) -> (i32, i32, i32) {
    %c0_i32 = arith.constant 0 : i32
    %c0_i32_0 = arith.constant 0 : i32
    %c0_i32_1 = arith.constant 0 : i32
    %c0_i32_2 = arith.constant 0 : i32
    return %c0_i32, %c0_i32_0, %c0_i32_1 : i32, i32, i32
  }
  func.func @transform_2(%arg0: i32, %arg1: i32) -> (i32, i32, i32) {
    %c0_i32 = arith.constant 0 : i32
    %c0_i32_0 = arith.constant 0 : i32
    %c0_i32_1 = arith.constant 0 : i32
    %c0_i32_2 = arith.constant 0 : i32
    return %c0_i32, %c0_i32_0, %c0_i32_1 : i32, i32, i32
  }
  func.func @transform_3(%arg0: i32, %arg1: i32) -> (i32, i32, i32) {
    %c0_i32 = arith.constant 0 : i32
    %c0_i32_0 = arith.constant 0 : i32
    %c0_i32_1 = arith.constant 0 : i32
    return %c0_i32, %c0_i32_0, %arg1 : i32, i32, i32
  }
  func.func @transform_4(%arg0: i32, %arg1: i32) -> (i32, i32) {
    %c0_i32 = arith.constant 0 : i32
    %c0_i32_0 = arith.constant 0 : i32
    return %c0_i32, %arg1 : i32, i32
  }
  func.func @transform_5(%arg0: i32, %arg1: i32) -> (i32, i32, i32, i32) {
    %c0_i32 = arith.constant 0 : i32
    %c0_i32_0 = arith.constant 0 : i32
    %c0_i32_1 = arith.constant 0 : i32
    return %arg0, %c0_i32, %c0_i32_0, %arg1 : i32, i32, i32, i32
  }
  func.func @transform_6(%arg0: i32, %arg1: i32) -> (i32, i32, i32, i32) {
    %c0_i32 = arith.constant 0 : i32
    %c0_i32_0 = arith.constant 0 : i32
    %c0_i32_1 = arith.constant 0 : i32
    return %arg0, %c0_i32, %c0_i32_0, %arg1 : i32, i32, i32, i32
  }
}

</mosaic_0001>

<llo_original>
// kernel: resnet_block_forward.3
$region0: #{resnet_block_forward.3}
  #allocation0 [shape = 'u32[]', space=smem, size = 0x4, offset = 0x4, fixed_abs, tag = 'smem constant byte address 0x4 - core index']
  #allocation1 [shape = 'u32[72,128]{1,0:T(1,128)}', space=vmem, size = 0x9000, scoped, tag = 'internal scratch']
  %s0 = inlined_call_operand.vmem [shape: bf16[2,16,16,128], index: 0, kind: input, shape index: {}]
  %s1 = inlined_call_operand.vmem [shape: f32[2,8,128], index: 1, kind: output, shape index: {}]
  %s2 = sld [smem:[#allocation0]]
  $region37: #{resnet_block_forward.3} parent=0
    _
  %s4 = ssub.s32 1, %s2
  %s5 = scalar_select 0, %s4, %s2
  loop: start=0, step=1, limit=4
  $region2: #{resnet_block_forward.3} parent=0 // loop_pre_header
    _
  $region3: #{resnet_block_forward.3} parent=0 // loop_header
    %s7 = sphi 0, %s11
    %p8 = scmp.ge.s32.totalorder %s7, 4
    %s17 = sphi 0, %s19
    %s20 = sphi 0, %s17
    %s21 = sphi 0, %s20
    %s37 = sphi 0, %s21
    %s43 = sphi 0, %s45
    %s46 = sphi 0, %s43
    %s47 = sphi 0, %s46
    %s63 = sphi 0, %s47
  $region4: #{resnet_block_forward.3} parent=0 // loop_header_branch
    %10 = sbr.rel (%p8) target = $region8
  $region5: #{resnet_block_forward.3} parent=0 // loop_body
    %s12 = ssub.s32 %s7, 1
    %s13 = ssub.s32 %s7, 2
    %s14 = sadd.s32 %s7, 1
    %s15 = ssub.s32 %s7, %s14
    %p16 = scmp.eq.s32.totalorder %s15, 0
    %s18 = sadd.s32 %s17, 1
    %s19 = scalar_select %p16, %s17, %s18
    %p22 = pneg %p16
    %p23 = scmp.eq.s32.totalorder %s7, 1
    %p24 = por %p22, %p23
    %p25 = scmp.ne.s32.totalorder %s17, %s20
    %p26 = scmp.eq.s32.totalorder %s7, 0
    %p27 = por %p25, %p26
    %p28 = scmp.ne.s32.totalorder %s17, %s20
    %p29 = scmp.eq.s32.totalorder %s12, 1
    %p30 = por %p28, %p29
    %p31 = scmp.ne.s32.totalorder %s20, %s21
    %p32 = scmp.eq.s32.totalorder %s12, 0
    %p33 = por %p31, %p32
    %p34 = scmp.ne.s32.totalorder %s20, %s21
    %p35 = scmp.eq.s32.totalorder %s13, 1
    %p36 = por %p34, %p35
    %p38 = scmp.ne.s32.totalorder %s21, %s37
    %p39 = scmp.eq.s32.totalorder %s13, 0
    %p40 = por %p38, %p39
    %s41 = ssub.s32 %s7, %s14
    %p42 = scmp.eq.s32.totalorder %s41, 0
    %s44 = sadd.s32 %s43, 1
    %s45 = scalar_select %p42, %s43, %s44
    %p48 = pneg %p42
    %p49 = scmp.eq.s32.totalorder %s7, 1
    %p50 = por %p48, %p49
    %p51 = scmp.ne.s32.totalorder %s43, %s46
    %p52 = scmp.eq.s32.totalorder %s7, 0
    %p53 = por %p51, %p52
    %p54 = scmp.ne.s32.totalorder %s43, %s46
    %p55 = scmp.eq.s32.totalorder %s12, 1
    %p56 = por %p54, %p55
    %p57 = scmp.ne.s32.totalorder %s46, %s47
    %p58 = scmp.eq.s32.totalorder %s12, 0
    %p59 = por %p57, %p58
    %p60 = scmp.ne.s32.totalorder %s46, %s47
    %p61 = scmp.eq.s32.totalorder %s13, 1
    %p62 = por %p60, %p61
    %p64 = scmp.ne.s32.totalorder %s47, %s63
    %p65 = scmp.eq.s32.totalorder %s13, 0
    %p66 = por %p64, %p65
    %p67 = scmp.le.s32.totalorder 1, %s7
    %p68 = scmp.lt.s32.totalorder %s7, 3
    %p69 = pnand %p67, %p68
    %p70 = pneg %p69
    // Predicated region
    $region9: #{resnet_block_forward.3} parent=5 // pred_check
      _
    $region10: #{resnet_block_forward.3} parent=5 // pred_check_branch
      %72 = sbr.rel (%p69) target = $region12
    $region11: #{resnet_block_forward.3} parent=5 // pred_region
      %s73 = ssub.s32 %s7, 1
    $region12: #{resnet_block_forward.3} parent=5 // pred_fallthru
      _
    %p74 = scmp.lt.s32.totalorder %s7, 2
    // Predicated region
    $region13: #{resnet_block_forward.3} parent=5 // pred_check
      %p75 = pneg %p74
    $region14: #{resnet_block_forward.3} parent=5 // pred_check_branch
      %77 = sbr.rel (%p75) target = $region16
    $region15: #{resnet_block_forward.3} parent=5 // pred_region
      // Predicated region
      $region17: #{resnet_block_forward.3} parent=15 // pred_check
        %p78 = pneg %p27
      $region18: #{resnet_block_forward.3} parent=15 // pred_check_branch
        %80 = sbr.rel (%p78) target = $region20
      $region19: #{resnet_block_forward.3} parent=15 // pred_region
        %p81 = scmp.lt.s32.totalorder %s7, 1
        %s82 = scalar_select %p81, %s7, 1
        %s83 = smul.addr %s82, 32
        %s84 = smul.addr %s83, 4
        %s85 = scalar_lea.vmem %s0, %s84
      $region20: #{resnet_block_forward.3} parent=15 // pred_fallthru
        _
    $region16: #{resnet_block_forward.3} parent=5 // pred_fallthru
      _
    %p86 = scmp.le.s32.totalorder 1, %s7
    %p87 = scmp.lt.s32.totalorder %s7, 3
    %p88 = pnand %p86, %p87
    %p89 = pneg %p88
    // Predicated region
    $region21: #{resnet_block_forward.3} parent=5 // pred_check
      _
    $region22: #{resnet_block_forward.3} parent=5 // pred_check_branch
      %91 = sbr.rel (%p88) target = $region24
    $region23: #{resnet_block_forward.3} parent=5 // pred_region
      %s92 = ssub.s32 %s7, 1
      %p93 = scmp.lt.s32.totalorder %s12, 1
      %s94 = scalar_select %p93, %s12, 1
      %s95 = smul.addr %s94, 32
      %s96 = smul.addr %s95, 4
      %s97 = scalar_lea.vmem %s0, %s96
      %p98 = pneg %p33
      %p99 = pneg %p30
      %p100 = pneg %p59
      %p101 = pneg %p56
      %p102 = scmp.lt.s32.totalorder %s12, 1
      %s103 = scalar_select %p102, %s12, 1
      %s104 = smul.addr %s103, 8
      %s105 = scalar_lea.vmem %s1, %s104
      %p106 = scmp.lt.s32.totalorder %s12, 1
      %s107 = scalar_select %p106, %s12, 1
      %s108 = smul.addr %s107, 32
      %s109 = smul.addr %s108, 4
      %s110 = scalar_lea.vmem %s0, %s109
      %p111 = scmp.lt.s32.totalorder %s12, 1
      %s112 = scalar_select %p111, %s12, 1
      %s113 = smul.addr %s112, 8
      %s114 = scalar_lea.vmem %s1, %s113
      %v115 = vld [vmem:[%s110] sm:$0xf]
      %v116 = vld [vmem:[%s110 + $0x4] sm:$0xf]
      %v117 = vld [vmem:[%s110 + $0x8] sm:$0xf]
      %v118 = vld [vmem:[%s110 + $0xc] sm:$0xf]
      %v119 = vld [vmem:[%s110 + $0x10] sm:$0xf]
      %v120 = vld [vmem:[%s110 + $0x14] sm:$0xf]
      %v121 = vld [vmem:[%s110 + $0x18] sm:$0xf]
      %v122 = vld [vmem:[%s110 + $0x1c] sm:$0xf]
      %v123 = vld [vmem:[%s110 + $0x20] sm:$0xf]
      %v124 = vld [vmem:[%s110 + $0x24] sm:$0xf]
      %v125 = vld [vmem:[%s110 + $0x28] sm:$0xf]
      %v126 = vld [vmem:[%s110 + $0x2c] sm:$0xf]
      %v127 = vld [vmem:[%s110 + $0x30] sm:$0xf]
      %v128 = vld [vmem:[%s110 + $0x34] sm:$0xf]
      %v129 = vld [vmem:[%s110 + $0x38] sm:$0xf]
      %v130 = vld [vmem:[%s110 + $0x3c] sm:$0xf]
      %v131 = vld [vmem:[%s110 + $0x40] sm:$0xf]
      %v132 = vld [vmem:[%s110 + $0x44] sm:$0xf]
      %v133 = vld [vmem:[%s110 + $0x48] sm:$0xf]
      %v134 = vld [vmem:[%s110 + $0x4c] sm:$0xf]
      %v135 = vld [vmem:[%s110 + $0x50] sm:$0xf]
      %v136 = vld [vmem:[%s110 + $0x54] sm:$0xf]
      %v137 = vld [vmem:[%s110 + $0x58] sm:$0xf]
      %v138 = vld [vmem:[%s110 + $0x5c] sm:$0xf]
      %v139 = vld [vmem:[%s110 + $0x60] sm:$0xf]
      %v140 = vld [vmem:[%s110 + $0x64] sm:$0xf]
      %v141 = vld [vmem:[%s110 + $0x68] sm:$0xf]
      %v142 = vld [vmem:[%s110 + $0x6c] sm:$0xf]
      %v143 = vld [vmem:[%s110 + $0x70] sm:$0xf]
      %v144 = vld [vmem:[%s110 + $0x74] sm:$0xf]
      %v145 = vld [vmem:[%s110 + $0x78] sm:$0xf]
      %v146 = vld [vmem:[%s110 + $0x7c] sm:$0xf]
      %v147 = vunpack.c.l.bf16 %v115
      %v148 = vunpack.c.l.bf16 %v116
      %v149 = vunpack.c.l.bf16 %v117
      %v150 = vunpack.c.l.bf16 %v118
      %v151 = vunpack.c.l.bf16 %v119
      %v152 = vunpack.c.l.bf16 %v120
      %v153 = vunpack.c.l.bf16 %v121
      %v154 = vunpack.c.l.bf16 %v122
      %v155 = vunpack.c.l.bf16 %v123
      %v156 = vunpack.c.l.bf16 %v124
      %v157 = vunpack.c.l.bf16 %v125
      %v158 = vunpack.c.l.bf16 %v126
      %v159 = vunpack.c.l.bf16 %v127
      %v160 = vunpack.c.l.bf16 %v128
      %v161 = vunpack.c.l.bf16 %v129
      %v162 = vunpack.c.l.bf16 %v130
      %v163 = vunpack.c.l.bf16 %v131
      %v164 = vunpack.c.l.bf16 %v132
      %v165 = vunpack.c.l.bf16 %v133
      %v166 = vunpack.c.l.bf16 %v134
      %v167 = vunpack.c.l.bf16 %v135
      %v168 = vunpack.c.l.bf16 %v136
      %v169 = vunpack.c.l.bf16 %v137
      %v170 = vunpack.c.l.bf16 %v138
      %v171 = vunpack.c.l.bf16 %v139
      %v172 = vunpack.c.l.bf16 %v140
      %v173 = vunpack.c.l.bf16 %v141
      %v174 = vunpack.c.l.bf16 %v142
      %v175 = vunpack.c.l.bf16 %v143
      %v176 = vunpack.c.l.bf16 %v144
      %v177 = vunpack.c.l.bf16 %v145
      %v178 = vunpack.c.l.bf16 %v146
      %v179 = vadd.f32 %v147, %v148
      %v180 = vadd.f32 %v179, %v149
      %v181 = vadd.f32 %v180, %v150
      %v182 = vadd.f32 %v181, %v151
      %v183 = vadd.f32 %v182, %v152
      %v184 = vadd.f32 %v183, %v153
      %v185 = vadd.f32 %v184, %v154
      %v186 = vadd.f32 %v185, %v155
      %v187 = vadd.f32 %v186, %v156
      %v188 = vadd.f32 %v187, %v157
      %v189 = vadd.f32 %v188, %v158
      %v190 = vadd.f32 %v189, %v159
      %v191 = vadd.f32 %v190, %v160
      %v192 = vadd.f32 %v191, %v161
      %v193 = vadd.f32 %v192, %v162
      %v194 = vadd.f32 %v193, %v163
      %v195 = vadd.f32 %v194, %v164
      %v196 = vadd.f32 %v195, %v165
      %v197 = vadd.f32 %v196, %v166
      %v198 = vadd.f32 %v197, %v167
      %v199 = vadd.f32 %v198, %v168
      %v200 = vadd.f32 %v199, %v169
      %v201 = vadd.f32 %v200, %v170
      %v202 = vadd.f32 %v201, %v171
      %v203 = vadd.f32 %v202, %v172
      %v204 = vadd.f32 %v203, %v173
      %v205 = vadd.f32 %v204, %v174
      %v206 = vadd.f32 %v205, %v175
      %v207 = vadd.f32 %v206, %v176
      %v208 = vadd.f32 %v207, %v177
      %v209 = vadd.f32 %v208, %v178
      %v210 = vrot.slane %v209, 4
      %v211 = vadd.f32 %v209, %v210
      %v212 = vrot.slane %v211, 2
      %v213 = vadd.f32 %v211, %v212
      %v214 = vrot.slane %v213, 1
      %v215 = vadd.f32 %v213, %v214
      %v216 = vmul.f32 %v147, %v147
      %v217 = vmul.f32 %v148, %v148
      %v218 = vmul.f32 %v149, %v149
      %v219 = vmul.f32 %v150, %v150
      %v220 = vmul.f32 %v151, %v151
      %v221 = vmul.f32 %v152, %v152
      %v222 = vmul.f32 %v153, %v153
      %v223 = vmul.f32 %v154, %v154
      %v224 = vmul.f32 %v155, %v155
      %v225 = vmul.f32 %v156, %v156
      %v226 = vmul.f32 %v157, %v157
      %v227 = vmul.f32 %v158, %v158
      %v228 = vmul.f32 %v159, %v159
      %v229 = vmul.f32 %v160, %v160
      %v230 = vmul.f32 %v161, %v161
      %v231 = vmul.f32 %v162, %v162
      %v232 = vmul.f32 %v163, %v163
      %v233 = vmul.f32 %v164, %v164
      %v234 = vmul.f32 %v165, %v165
      %v235 = vmul.f32 %v166, %v166
      %v236 = vmul.f32 %v167, %v167
      %v237 = vmul.f32 %v168, %v168
      %v238 = vmul.f32 %v169, %v169
      %v239 = vmul.f32 %v170, %v170
      %v240 = vmul.f32 %v171, %v171
      %v241 = vmul.f32 %v172, %v172
      %v242 = vmul.f32 %v173, %v173
      %v243 = vmul.f32 %v174, %v174
      %v244 = vmul.f32 %v175, %v175
      %v245 = vmul.f32 %v176, %v176
      %v246 = vmul.f32 %v177, %v177
      %v247 = vmul.f32 %v178, %v178
      %v248 = vadd.f32 %v216, %v217
      %v249 = vadd.f32 %v248, %v218
      %v250 = vadd.f32 %v249, %v219
      %v251 = vadd.f32 %v250, %v220
      %v252 = vadd.f32 %v251, %v221
      %v253 = vadd.f32 %v252, %v222
      %v254 = vadd.f32 %v253, %v223
      %v255 = vadd.f32 %v254, %v224
      %v256 = vadd.f32 %v255, %v225
      %v257 = vadd.f32 %v256, %v226
      %v258 = vadd.f32 %v257, %v227
      %v259 = vadd.f32 %v258, %v228
      %v260 = vadd.f32 %v259, %v229
      %v261 = vadd.f32 %v260, %v230
      %v262 = vadd.f32 %v261, %v231
      %v263 = vadd.f32 %v262, %v232
      %v264 = vadd.f32 %v263, %v233
      %v265 = vadd.f32 %v264, %v234
      %v266 = vadd.f32 %v265, %v235
      %v267 = vadd.f32 %v266, %v236
      %v268 = vadd.f32 %v267, %v237
      %v269 = vadd.f32 %v268, %v238
      %v270 = vadd.f32 %v269, %v239
      %v271 = vadd.f32 %v270, %v240
      %v272 = vadd.f32 %v271, %v241
      %v273 = vadd.f32 %v272, %v242
      %v274 = vadd.f32 %v273, %v243
      %v275 = vadd.f32 %v274, %v244
      %v276 = vadd.f32 %v275, %v245
      %v277 = vadd.f32 %v276, %v246
      %v278 = vadd.f32 %v277, %v247
      %v279 = vrot.slane %v278, 4
      %v280 = vadd.f32 %v278, %v279
      %v281 = vrot.slane %v280, 2
      %v282 = vadd.f32 %v280, %v281
      %v283 = vrot.slane %v282, 1
      %v284 = vadd.f32 %v282, %v283
      %vm285 = vcmask 1040384
      %v286 = vsel %vm285, %v215, %v284
      %vm287 = vcmask 1041408
      %v288 = vsel %vm287, %v286, 0.0
      %289 = vst [vmem:[%s114] sm:$0xff] %v288
      %p290 = scmp.lt.s32.totalorder %s12, 1
      %s291 = scalar_select %p290, %s12, 1
      %s292 = smul.addr %s291, 8
      %s293 = scalar_lea.vmem %s1, %s292
      // Predicated region
      $region25: #{resnet_block_forward.3} parent=23 // pred_check
        %p294 = pneg %p56
      $region26: #{resnet_block_forward.3} parent=23 // pred_check_branch
        %296 = sbr.rel (%p294) target = $region28
      $region27: #{resnet_block_forward.3} parent=23 // pred_region
        _
      $region28: #{resnet_block_forward.3} parent=23 // pred_fallthru
        _
    $region24: #{resnet_block_forward.3} parent=5 // pred_fallthru
      _
    %p297 = scmp.le.s32.totalorder 2, %s7
    // Predicated region
    $region29: #{resnet_block_forward.3} parent=5 // pred_check
      %p298 = pneg %p297
    $region30: #{resnet_block_forward.3} parent=5 // pred_check_branch
      %300 = sbr.rel (%p298) target = $region32
    $region31: #{resnet_block_forward.3} parent=5 // pred_region
      %s301 = ssub.s32 %s7, 2
      // Predicated region
      $region33: #{resnet_block_forward.3} parent=31 // pred_check
        %p302 = pneg %p62
      $region34: #{resnet_block_forward.3} parent=31 // pred_check_branch
        %304 = sbr.rel (%p302) target = $region36
      $region35: #{resnet_block_forward.3} parent=31 // pred_region
        %p305 = scmp.lt.s32.totalorder %s13, 1
        %s306 = scalar_select %p305, %s13, 1
        %s307 = smul.addr %s306, 8
        %s308 = scalar_lea.vmem %s1, %s307
      $region36: #{resnet_block_forward.3} parent=31 // pred_fallthru
        _
    $region32: #{resnet_block_forward.3} parent=5 // pred_fallthru
      _
  $region6: #{resnet_block_forward.3} parent=0 // loop_footer
    %s11 = sadd.s32 1, %s7
  $region7: #{resnet_block_forward.3} parent=0 // loop_footer_branch
    %6 = sbr.rel target = $region3
  $region8: #{resnet_block_forward.3} parent=0 // loop_exit
    _

// kernel: resnet_block_forward.4
$region0: #{resnet_block_forward.4}
  #allocation0 [shape = 'u32[]', space=smem, size = 0x4, offset = 0x4, fixed_abs, tag = 'smem constant byte address 0x4 - core index']
  #allocation1 [shape = 'u32[72,128]{1,0:T(1,128)}', space=vmem, size = 0x9000, scoped, tag = 'internal scratch']
  %s0 = inlined_call_operand.vmem [shape: bf16[2,16,16,128], index: 0, kind: input, shape index: {}]
  %s1 = inlined_call_operand.vmem [shape: f32[1,1,128], index: 1, kind: input, shape index: {}]
  %s2 = inlined_call_operand.vmem [shape: f32[1,1,128], index: 2, kind: input, shape index: {}]
  %s3 = inlined_call_operand.vmem [shape: bf16[9,128,128], index: 3, kind: input, shape index: {}]
  %s4 = inlined_call_operand.vmem [shape: f32[1,128], index: 4, kind: input, shape index: {}]
  %s5 = inlined_call_operand.vmem [shape: bf16[2,16,16,128], index: 5, kind: output, shape index: {0}]
  %s6 = inlined_call_operand.vmem [shape: f32[2,8,128], index: 6, kind: output, shape index: {1}]
  %7 = xla_tuple %s5, %s6
  %s8 = sld [smem:[#allocation0]]
  $region61: #{resnet_block_forward.4} parent=0
    _
  %s10 = ssub.s32 1, %s8
  %s11 = scalar_select 0, %s10, %s8
  loop: start=0, step=1, limit=4
  $region2: #{resnet_block_forward.4} parent=0 // loop_pre_header
    _
  $region3: #{resnet_block_forward.4} parent=0 // loop_header
    %s13 = sphi 0, %s17
    %p14 = scmp.ge.s32.totalorder %s13, 4
    %s20 = sphi 0, %s32
    %s21 = sphi 0, %s28
    %s22 = sphi 0, %s20
    %s23 = sphi 0, %s21
    %s24 = sphi 0, %s22
    %s25 = sphi 0, %s23
    %s35 = sphi 0, %s37
    %s38 = sphi 0, %s35
    %s39 = sphi 0, %s38
    %s55 = sphi 0, %s39
    %s59 = sphi 0, %s59
    %s61 = sphi 0, %s59
    %s62 = sphi 0, %s61
    %s76 = sphi 0, %s62
    %s80 = sphi 0, %s80
    %s82 = sphi 0, %s80
    %s83 = sphi 0, %s82
    %s97 = sphi 0, %s83
    %s103 = sphi 0, %s105
    %s106 = sphi 0, %s103
    %s107 = sphi 0, %s106
    %s123 = sphi 0, %s107
    %s129 = sphi 0, %s131
    %s132 = sphi 0, %s129
    %s133 = sphi 0, %s132
    %s149 = sphi 0, %s133
    %s157 = sphi 0, %s159
    %s160 = sphi 0, %s157
    %s161 = sphi 0, %s160
    %s177 = sphi 0, %s161
    %s185 = sphi 0, %s187
    %s188 = sphi 0, %s185
    %s189 = sphi 0, %s188
    %s205 = sphi 0, %s189
  $region4: #{resnet_block_forward.4} parent=0 // loop_header_branch
    %16 = sbr.rel (%p14) target = $region8
  $region5: #{resnet_block_forward.4} parent=0 // loop_body
    %s18 = ssub.s32 %s13, 1
    %s19 = ssub.s32 %s13, 2
    %s26 = sadd.s32 1, %s21
    %p27 = scmp.ge.s32.totalorder %s26, 1
    %s28 = scalar_select %p27, 0, %s26
    %s29 = sadd.s32 1, %s20
    %s30 = scalar_select %p27, %s29, %s20
    %p31 = scmp.ge.s32.totalorder %s30, 2
    %s32 = scalar_select %p31, 0, %s30
    %s33 = ssub.s32 %s20, %s32
    %p34 = scmp.eq.s32.totalorder %s33, 0
    %s36 = sadd.s32 %s35, 1
    %s37 = scalar_select %p34, %s35, %s36
    %p40 = pneg %p34
    %p41 = scmp.eq.s32.totalorder %s13, 1
    %p42 = por %p40, %p41
    %p43 = scmp.ne.s32.totalorder %s35, %s38
    %p44 = scmp.eq.s32.totalorder %s13, 0
    %p45 = por %p43, %p44
    %p46 = scmp.ne.s32.totalorder %s35, %s38
    %p47 = scmp.eq.s32.totalorder %s18, 1
    %p48 = por %p46, %p47
    %p49 = scmp.ne.s32.totalorder %s38, %s39
    %p50 = scmp.eq.s32.totalorder %s18, 0
    %p51 = por %p49, %p50
    %p52 = scmp.ne.s32.totalorder %s38, %s39
    %p53 = scmp.eq.s32.totalorder %s19, 1
    %p54 = por %p52, %p53
    %p56 = scmp.ne.s32.totalorder %s39, %s55
    %p57 = scmp.eq.s32.totalorder %s19, 0
    %p58 = por %p56, %p57
    %s60 = sadd.s32 %s59, 1
    %p63 = scmp.eq.s32.totalorder %s13, 1
    %p64 = scmp.ne.s32.totalorder %s59, %s61
    %p65 = scmp.eq.s32.totalorder %s13, 0
    %p66 = por %p64, %p65
    %p67 = scmp.ne.s32.totalorder %s59, %s61
    %p68 = scmp.eq.s32.totalorder %s18, 1
    %p69 = por %p67, %p68
    %p70 = scmp.ne.s32.totalorder %s61, %s62
    %p71 = scmp.eq.s32.totalorder %s18, 0
    %p72 = por %p70, %p71
    %p73 = scmp.ne.s32.totalorder %s61, %s62
    %p74 = scmp.eq.s32.totalorder %s19, 1
    %p75 = por %p73, %p74
    %p77 = scmp.ne.s32.totalorder %s62, %s76
    %p78 = scmp.eq.s32.totalorder %s19, 0
    %p79 = por %p77, %p78
    %s81 = sadd.s32 %s80, 1
    %p84 = scmp.eq.s32.totalorder %s13, 1
    %p85 = scmp.ne.s32.totalorder %s80, %s82
    %p86 = scmp.eq.s32.totalorder %s13, 0
    %p87 = por %p85, %p86
    %p88 = scmp.ne.s32.totalorder %s80, %s82
    %p89 = scmp.eq.s32.totalorder %s18, 1
    %p90 = por %p88, %p89
    %p91 = scmp.ne.s32.totalorder %s82, %s83
    %p92 = scmp.eq.s32.totalorder %s18, 0
    %p93 = por %p91, %p92
    %p94 = scmp.ne.s32.totalorder %s82, %s83
    %p95 = scmp.eq.s32.totalorder %s19, 1
    %p96 = por %p94, %p95
    %p98 = scmp.ne.s32.totalorder %s83, %s97
    %p99 = scmp.eq.s32.totalorder %s19, 0
    %p100 = por %p98, %p99
    %s101 = ssub.s32 %s21, %s28
    %p102 = scmp.eq.s32.totalorder %s101, 0
    %s104 = sadd.s32 %s103, 1
    %s105 = scalar_select %p102, %s103, %s104
    %p108 = pneg %p102
    %p109 = scmp.eq.s32.totalorder %s13, 1
    %p110 = por %p108, %p109
    %p111 = scmp.ne.s32.totalorder %s103, %s106
    %p112 = scmp.eq.s32.totalorder %s13, 0
    %p113 = por %p111, %p112
    %p114 = scmp.ne.s32.totalorder %s103, %s106
    %p115 = scmp.eq.s32.totalorder %s18, 1
    %p116 = por %p114, %p115
    %p117 = scmp.ne.s32.totalorder %s106, %s107
    %p118 = scmp.eq.s32.totalorder %s18, 0
    %p119 = por %p117, %p118
    %p120 = scmp.ne.s32.totalorder %s106, %s107
    %p121 = scmp.eq.s32.totalorder %s19, 1
    %p122 = por %p120, %p121
    %p124 = scmp.ne.s32.totalorder %s107, %s123
    %p125 = scmp.eq.s32.totalorder %s19, 0
    %p126 = por %p124, %p125
    %s127 = ssub.s32 %s21, %s28
    %p128 = scmp.eq.s32.totalorder %s127, 0
    %s130 = sadd.s32 %s129, 1
    %s131 = scalar_select %p128, %s129, %s130
    %p134 = pneg %p128
    %p135 = scmp.eq.s32.totalorder %s13, 1
    %p136 = por %p134, %p135
    %p137 = scmp.ne.s32.totalorder %s129, %s132
    %p138 = scmp.eq.s32.totalorder %s13, 0
    %p139 = por %p137, %p138
    %p140 = scmp.ne.s32.totalorder %s129, %s132
    %p141 = scmp.eq.s32.totalorder %s18, 1
    %p142 = por %p140, %p141
    %p143 = scmp.ne.s32.totalorder %s132, %s133
    %p144 = scmp.eq.s32.totalorder %s18, 0
    %p145 = por %p143, %p144
    %p146 = scmp.ne.s32.totalorder %s132, %s133
    %p147 = scmp.eq.s32.totalorder %s19, 1
    %p148 = por %p146, %p147
    %p150 = scmp.ne.s32.totalorder %s133, %s149
    %p151 = scmp.eq.s32.totalorder %s19, 0
    %p152 = por %p150, %p151
    %s153 = ssub.s32 %s20, %s32
    %s154 = ssub.s32 %s21, %s28
    %s155 = sor.u32 %s153, %s154
    %p156 = scmp.eq.s32.totalorder %s155, 0
    %s158 = sadd.s32 %s157, 1
    %s159 = scalar_select %p156, %s157, %s158
    %p162 = pneg %p156
    %p163 = scmp.eq.s32.totalorder %s13, 1
    %p164 = por %p162, %p163
    %p165 = scmp.ne.s32.totalorder %s157, %s160
    %p166 = scmp.eq.s32.totalorder %s13, 0
    %p167 = por %p165, %p166
    %p168 = scmp.ne.s32.totalorder %s157, %s160
    %p169 = scmp.eq.s32.totalorder %s18, 1
    %p170 = por %p168, %p169
    %p171 = scmp.ne.s32.totalorder %s160, %s161
    %p172 = scmp.eq.s32.totalorder %s18, 0
    %p173 = por %p171, %p172
    %p174 = scmp.ne.s32.totalorder %s160, %s161
    %p175 = scmp.eq.s32.totalorder %s19, 1
    %p176 = por %p174, %p175
    %p178 = scmp.ne.s32.totalorder %s161, %s177
    %p179 = scmp.eq.s32.totalorder %s19, 0
    %p180 = por %p178, %p179
    %s181 = ssub.s32 %s20, %s32
    %s182 = ssub.s32 %s21, %s28
    %s183 = sor.u32 %s181, %s182
    %p184 = scmp.eq.s32.totalorder %s183, 0
    %s186 = sadd.s32 %s185, 1
    %s187 = scalar_select %p184, %s185, %s186
    %p190 = pneg %p184
    %p191 = scmp.eq.s32.totalorder %s13, 1
    %p192 = por %p190, %p191
    %p193 = scmp.ne.s32.totalorder %s185, %s188
    %p194 = scmp.eq.s32.totalorder %s13, 0
    %p195 = por %p193, %p194
    %p196 = scmp.ne.s32.totalorder %s185, %s188
    %p197 = scmp.eq.s32.totalorder %s18, 1
    %p198 = por %p196, %p197
    %p199 = scmp.ne.s32.totalorder %s188, %s189
    %p200 = scmp.eq.s32.totalorder %s18, 0
    %p201 = por %p199, %p200
    %p202 = scmp.ne.s32.totalorder %s188, %s189
    %p203 = scmp.eq.s32.totalorder %s19, 1
    %p204 = por %p202, %p203
    %p206 = scmp.ne.s32.totalorder %s189, %s205
    %p207 = scmp.eq.s32.totalorder %s19, 0
    %p208 = por %p206, %p207
    %p209 = scmp.le.s32.totalorder 1, %s13
    %p210 = scmp.lt.s32.totalorder %s13, 3
    %p211 = pnand %p209, %p210
    %p212 = pneg %p211
    // Predicated region
    $region9: #{resnet_block_forward.4} parent=5 // pred_check
      _
    $region10: #{resnet_block_forward.4} parent=5 // pred_check_branch
      %214 = sbr.rel (%p211) target = $region12
    $region11: #{resnet_block_forward.4} parent=5 // pred_region
      %s215 = ssub.s32 %s13, 1
      // Predicated region
      $region13: #{resnet_block_forward.4} parent=11 // pred_check
        %p216 = pneg %p72
      $region14: #{resnet_block_forward.4} parent=11 // pred_check_branch
        %218 = sbr.rel (%p216) target = $region16
      $region15: #{resnet_block_forward.4} parent=11 // pred_region
        _
      $region16: #{resnet_block_forward.4} parent=11 // pred_fallthru
        _
      // Predicated region
      $region17: #{resnet_block_forward.4} parent=11 // pred_check
        %p219 = pneg %p93
      $region18: #{resnet_block_forward.4} parent=11 // pred_check_branch
        %221 = sbr.rel (%p219) target = $region20
      $region19: #{resnet_block_forward.4} parent=11 // pred_region
        _
      $region20: #{resnet_block_forward.4} parent=11 // pred_fallthru
        _
      // Predicated region
      $region21: #{resnet_block_forward.4} parent=11 // pred_check
        %p222 = pneg %p119
      $region22: #{resnet_block_forward.4} parent=11 // pred_check_branch
        %224 = sbr.rel (%p222) target = $region24
      $region23: #{resnet_block_forward.4} parent=11 // pred_region
        %p225 = scmp.lt.s32.totalorder %s23, 0
        %s226 = scalar_select %p225, %s23, 0
        %s227 = smul.addr %s226, 4
        %s228 = scalar_lea.vmem %s3, %s227
      $region24: #{resnet_block_forward.4} parent=11 // pred_fallthru
        _
      // Predicated region
      $region25: #{resnet_block_forward.4} parent=11 // pred_check
        %p229 = pneg %p145
      $region26: #{resnet_block_forward.4} parent=11 // pred_check_branch
        %231 = sbr.rel (%p229) target = $region28
      $region27: #{resnet_block_forward.4} parent=11 // pred_region
        %p232 = scmp.lt.s32.totalorder %s23, 0
        %s233 = scalar_select %p232, %s23, 0
        %s234 = scalar_lea.vmem %s4, %s233
      $region28: #{resnet_block_forward.4} parent=11 // pred_fallthru
        _
    $region12: #{resnet_block_forward.4} parent=5 // pred_fallthru
      _
    %p235 = scmp.lt.s32.totalorder %s13, 2
    // Predicated region
    $region29: #{resnet_block_forward.4} parent=5 // pred_check
      %p236 = pneg %p235
    $region30: #{resnet_block_forward.4} parent=5 // pred_check_branch
      %238 = sbr.rel (%p236) target = $region32
    $region31: #{resnet_block_forward.4} parent=5 // pred_region
      // Predicated region
      $region33: #{resnet_block_forward.4} parent=31 // pred_check
        %p239 = pneg %p45
      $region34: #{resnet_block_forward.4} parent=31 // pred_check_branch
        %241 = sbr.rel (%p239) target = $region36
      $region35: #{resnet_block_forward.4} parent=31 // pred_region
        %p242 = scmp.lt.s32.totalorder %s20, 1
        %s243 = scalar_select %p242, %s20, 1
        %s244 = smul.addr %s243, 32
        %s245 = smul.addr %s244, 4
        %s246 = scalar_lea.vmem %s0, %s245
      $region36: #{resnet_block_forward.4} parent=31 // pred_fallthru
        _
    $region32: #{resnet_block_forward.4} parent=5 // pred_fallthru
      _
    %p247 = scmp.le.s32.totalorder 1, %s13
    %p248 = scmp.lt.s32.totalorder %s13, 3
    %p249 = pnand %p247, %p248
    %p250 = pneg %p249
    // Predicated region
    $region37: #{resnet_block_forward.4} parent=5 // pred_check
      _
    $region38: #{resnet_block_forward.4} parent=5 // pred_check_branch
      %252 = sbr.rel (%p249) target = $region40
    $region39: #{resnet_block_forward.4} parent=5 // pred_region
      %s253 = ssub.s32 %s13, 1
      %p254 = scmp.lt.s32.totalorder %s22, 1
      %s255 = scalar_select %p254, %s22, 1
      %s256 = smul.addr %s255, 32
      %s257 = smul.addr %s256, 4
      %s258 = scalar_lea.vmem %s0, %s257
      %p259 = pneg %p51
      %p260 = pneg %p48
      %p261 = pneg %p72
      %p262 = pneg %p69
      %p263 = pneg %p93
      %p264 = pneg %p90
      %p265 = scmp.lt.s32.totalorder %s23, 0
      %s266 = scalar_select %p265, %s23, 0
      %s267 = smul.addr %s266, 4
      %s268 = scalar_lea.vmem %s3, %s267
      %p269 = pneg %p119
      %p270 = pneg %p116
      %p271 = scmp.lt.s32.totalorder %s23, 0
      %s272 = scalar_select %p271, %s23, 0
      %s273 = scalar_lea.vmem %s4, %s272
      %p274 = pneg %p145
      %p275 = pneg %p142
      %p276 = pneg %p173
      %p277 = pneg %p170
      %p278 = scmp.lt.s32.totalorder %s22, 1
      %s279 = scalar_select %p278, %s22, 1
      %p280 = scmp.lt.s32.totalorder %s23, 0
      %s281 = scalar_select %p280, %s23, 0
      %s282 = smul.addr %s279, 32
      %s283 = sadd.s32 %s281, %s282
      %s284 = smul.addr %s283, 4
      %s285 = scalar_lea.vmem %s5, %s284
      %p286 = pneg %p201
      %p287 = pneg %p198
      %p288 = scmp.lt.s32.totalorder %s22, 1
      %s289 = scalar_select %p288, %s22, 1
      %p290 = scmp.lt.s32.totalorder %s23, 0
      %s291 = scalar_select %p290, %s23, 0
      %s292 = sadd.s32 %s291, %s289
      %s293 = smul.addr %s292, 8
      %s294 = scalar_lea.vmem %s6, %s293
      %p295 = scmp.lt.s32.totalorder %s22, 1
      %s296 = scalar_select %p295, %s22, 1
      %s297 = smul.addr %s296, 32
      %s298 = smul.addr %s297, 4
      %s299 = scalar_lea.vmem %s0, %s298
      %p300 = scmp.lt.s32.totalorder %s23, 0
      %s301 = scalar_select %p300, %s23, 0
      %s302 = smul.addr %s301, 4
      %s303 = scalar_lea.vmem %s3, %s302
      %p304 = scmp.lt.s32.totalorder %s23, 0
      %s305 = scalar_select %p304, %s23, 0
      %s306 = scalar_lea.vmem %s4, %s305
      %p307 = scmp.lt.s32.totalorder %s22, 1
      %s308 = scalar_select %p307, %s22, 1
      %p309 = scmp.lt.s32.totalorder %s23, 0
      %s310 = scalar_select %p309, %s23, 0
      %s311 = smul.addr %s308, 32
      %s312 = sadd.s32 %s310, %s311
      %s313 = smul.addr %s312, 4
      %s314 = scalar_lea.vmem %s5, %s313
      %p315 = scmp.lt.s32.totalorder %s22, 1
      %s316 = scalar_select %p315, %s22, 1
      %p317 = scmp.lt.s32.totalorder %s23, 0
      %s318 = scalar_select %p317, %s23, 0
      %s319 = sadd.s32 %s318, %s316
      %s320 = smul.addr %s319, 8
      %s321 = scalar_lea.vmem %s6, %s320
      %v323 = vld [vmem:[%s299] sm:$0xf]
      %v324 = vld [vmem:[%s299 + $0x4] sm:$0xf]
      %v325 = vld [vmem:[%s299 + $0x8] sm:$0xf]
      %v326 = vld [vmem:[%s299 + $0xc] sm:$0xf]
      %v327 = vld [vmem:[%s299 + $0x10] sm:$0xf]
      %v328 = vld [vmem:[%s299 + $0x14] sm:$0xf]
      %v329 = vld [vmem:[%s299 + $0x18] sm:$0xf]
      %v330 = vld [vmem:[%s299 + $0x1c] sm:$0xf]
      %v331 = vld [vmem:[%s299 + $0x20] sm:$0xf]
      %v332 = vld [vmem:[%s299 + $0x24] sm:$0xf]
      %v333 = vld [vmem:[%s299 + $0x28] sm:$0xf]
      %v334 = vld [vmem:[%s299 + $0x2c] sm:$0xf]
      %v335 = vld [vmem:[%s299 + $0x30] sm:$0xf]
      %v336 = vld [vmem:[%s299 + $0x34] sm:$0xf]
      %v337 = vld [vmem:[%s299 + $0x38] sm:$0xf]
      %v338 = vld [vmem:[%s299 + $0x3c] sm:$0xf]
      %v339 = vld [vmem:[%s299 + $0x40] sm:$0xf]
      %v340 = vld [vmem:[%s299 + $0x44] sm:$0xf]
      %v341 = vld [vmem:[%s299 + $0x48] sm:$0xf]
      %v342 = vld [vmem:[%s299 + $0x4c] sm:$0xf]
      %v343 = vld [vmem:[%s299 + $0x50] sm:$0xf]
      %v344 = vld [vmem:[%s299 + $0x54] sm:$0xf]
      %v345 = vld [vmem:[%s299 + $0x58] sm:$0xf]
      %v346 = vld [vmem:[%s299 + $0x5c] sm:$0xf]
      %v347 = vld [vmem:[%s299 + $0x60] sm:$0xf]
      %v348 = vld [vmem:[%s299 + $0x64] sm:$0xf]
      %v349 = vld [vmem:[%s299 + $0x68] sm:$0xf]
      %v350 = vld [vmem:[%s299 + $0x6c] sm:$0xf]
      %v351 = vld [vmem:[%s299 + $0x70] sm:$0xf]
      %v352 = vld [vmem:[%s299 + $0x74] sm:$0xf]
      %v353 = vld [vmem:[%s299 + $0x78] sm:$0xf]
      %v354 = vld [vmem:[%s299 + $0x7c] sm:$0xf]
      %v355 = vunpack.c.l.bf16 %v323
      %v356 = vunpack.c.l.bf16 %v324
      %v357 = vunpack.c.l.bf16 %v325
      %v358 = vunpack.c.l.bf16 %v326
      %v359 = vunpack.c.l.bf16 %v327
      %v360 = vunpack.c.l.bf16 %v328
      %v361 = vunpack.c.l.bf16 %v329
      %v362 = vunpack.c.l.bf16 %v330
      %v363 = vunpack.c.l.bf16 %v331
      %v364 = vunpack.c.l.bf16 %v332
      %v365 = vunpack.c.l.bf16 %v333
      %v366 = vunpack.c.l.bf16 %v334
      %v367 = vunpack.c.l.bf16 %v335
      %v368 = vunpack.c.l.bf16 %v336
      %v369 = vunpack.c.l.bf16 %v337
      %v370 = vunpack.c.l.bf16 %v338
      %v371 = vunpack.c.l.bf16 %v339
      %v372 = vunpack.c.l.bf16 %v340
      %v373 = vunpack.c.l.bf16 %v341
      %v374 = vunpack.c.l.bf16 %v342
      %v375 = vunpack.c.l.bf16 %v343
      %v376 = vunpack.c.l.bf16 %v344
      %v377 = vunpack.c.l.bf16 %v345
      %v378 = vunpack.c.l.bf16 %v346
      %v379 = vunpack.c.l.bf16 %v347
      %v380 = vunpack.c.l.bf16 %v348
      %v381 = vunpack.c.l.bf16 %v349
      %v382 = vunpack.c.l.bf16 %v350
      %v383 = vunpack.c.l.bf16 %v351
      %v384 = vunpack.c.l.bf16 %v352
      %v385 = vunpack.c.l.bf16 %v353
      %v386 = vunpack.c.l.bf16 %v354
      %v387 = vld [vmem:[%s1] sm:$0x1]
      %v389 = vperm.slane %v387, 0
      %v391 = vmul.f32 %v355, %v389
      %v392 = vmul.f32 %v356, %v389
      %v393 = vmul.f32 %v357, %v389
      %v394 = vmul.f32 %v358, %v389
      %v395 = vmul.f32 %v359, %v389
      %v396 = vmul.f32 %v360, %v389
      %v397 = vmul.f32 %v361, %v389
      %v398 = vmul.f32 %v362, %v389
      %v399 = vmul.f32 %v363, %v389
      %v400 = vmul.f32 %v364, %v389
      %v401 = vmul.f32 %v365, %v389
      %v402 = vmul.f32 %v366, %v389
      %v403 = vmul.f32 %v367, %v389
      %v404 = vmul.f32 %v368, %v389
      %v405 = vmul.f32 %v369, %v389
      %v406 = vmul.f32 %v370, %v389
      %v407 = vmul.f32 %v371, %v389
      %v408 = vmul.f32 %v372, %v389
      %v409 = vmul.f32 %v373, %v389
      %v410 = vmul.f32 %v374, %v389
      %v411 = vmul.f32 %v375, %v389
      %v412 = vmul.f32 %v376, %v389
      %v413 = vmul.f32 %v377, %v389
      %v414 = vmul.f32 %v378, %v389
      %v415 = vmul.f32 %v379, %v389
      %v416 = vmul.f32 %v380, %v389
      %v417 = vmul.f32 %v381, %v389
      %v418 = vmul.f32 %v382, %v389
      %v419 = vmul.f32 %v383, %v389
      %v420 = vmul.f32 %v384, %v389
      %v421 = vmul.f32 %v385, %v389
      %v422 = vmul.f32 %v386, %v389
      %v423 = vld [vmem:[%s2] sm:$0x1]
      %v425 = vperm.slane %v423, 0
      %v427 = vadd.f32 %v391, %v425
      %v428 = vadd.f32 %v392, %v425
      %v429 = vadd.f32 %v393, %v425
      %v430 = vadd.f32 %v394, %v425
      %v431 = vadd.f32 %v395, %v425
      %v432 = vadd.f32 %v396, %v425
      %v433 = vadd.f32 %v397, %v425
      %v434 = vadd.f32 %v398, %v425
      %v435 = vadd.f32 %v399, %v425
      %v436 = vadd.f32 %v400, %v425
      %v437 = vadd.f32 %v401, %v425
      %v438 = vadd.f32 %v402, %v425
      %v439 = vadd.f32 %v403, %v425
      %v440 = vadd.f32 %v404, %v425
      %v441 = vadd.f32 %v405, %v425
      %v442 = vadd.f32 %v406, %v425
      %v443 = vadd.f32 %v407, %v425
      %v444 = vadd.f32 %v408, %v425
      %v445 = vadd.f32 %v409, %v425
      %v446 = vadd.f32 %v410, %v425
      %v447 = vadd.f32 %v411, %v425
      %v448 = vadd.f32 %v412, %v425
      %v449 = vadd.f32 %v413, %v425
      %v450 = vadd.f32 %v414, %v425
      %v451 = vadd.f32 %v415, %v425
      %v452 = vadd.f32 %v416, %v425
      %v453 = vadd.f32 %v417, %v425
      %v454 = vadd.f32 %v418, %v425
      %v455 = vadd.f32 %v419, %v425
      %v456 = vadd.f32 %v420, %v425
      %v457 = vadd.f32 %v421, %v425
      %v458 = vadd.f32 %v422, %v425
      %v459 = vxor.u32 %v427, 2147483648
      %v460 = vxor.u32 %v428, 2147483648
      %v461 = vxor.u32 %v429, 2147483648
      %v462 = vxor.u32 %v430, 2147483648
      %v463 = vxor.u32 %v431, 2147483648
      %v464 = vxor.u32 %v432, 2147483648
      %v465 = vxor.u32 %v433, 2147483648
      %v466 = vxor.u32 %v434, 2147483648
      %v467 = vxor.u32 %v435, 2147483648
      %v468 = vxor.u32 %v436, 2147483648
      %v469 = vxor.u32 %v437, 2147483648
      %v470 = vxor.u32 %v438, 2147483648
      %v471 = vxor.u32 %v439, 2147483648
      %v472 = vxor.u32 %v440, 2147483648
      %v473 = vxor.u32 %v441, 2147483648
      %v474 = vxor.u32 %v442, 2147483648
      %v475 = vxor.u32 %v443, 2147483648
      %v476 = vxor.u32 %v444, 2147483648
      %v477 = vxor.u32 %v445, 2147483648
      %v478 = vxor.u32 %v446, 2147483648
      %v479 = vxor.u32 %v447, 2147483648
      %v480 = vxor.u32 %v448, 2147483648
      %v481 = vxor.u32 %v449, 2147483648
      %v482 = vxor.u32 %v450, 2147483648
      %v483 = vxor.u32 %v451, 2147483648
      %v484 = vxor.u32 %v452, 2147483648
      %v485 = vxor.u32 %v453, 2147483648
      %v486 = vxor.u32 %v454, 2147483648
      %v487 = vxor.u32 %v455, 2147483648
      %v488 = vxor.u32 %v456, 2147483648
      %v489 = vxor.u32 %v457, 2147483648
      %v490 = vxor.u32 %v458, 2147483648
      %v491 = vmul.f32 %v459, 1.442695
      %v492 = vpow.pop %v491
      %v493 = vmul.f32 %v460, 1.442695
      %v494 = vpow.pop %v493
      %v495 = vmul.f32 %v461, 1.442695
      %v496 = vpow.pop %v495
      %v497 = vmul.f32 %v462, 1.442695
      %v498 = vpow.pop %v497
      %v499 = vmul.f32 %v463, 1.442695
      %v500 = vpow.pop %v499
      %v501 = vmul.f32 %v464, 1.442695
      %v502 = vpow.pop %v501
      %v503 = vmul.f32 %v465, 1.442695
      %v504 = vpow.pop %v503
      %v505 = vmul.f32 %v466, 1.442695
      %v506 = vpow.pop %v505
      %v507 = vmul.f32 %v467, 1.442695
      %v508 = vpow.pop %v507
      %v509 = vmul.f32 %v468, 1.442695
      %v510 = vpow.pop %v509
      %v511 = vmul.f32 %v469, 1.442695
      %v512 = vpow.pop %v511
      %v513 = vmul.f32 %v470, 1.442695
      %v514 = vpow.pop %v513
      %v515 = vmul.f32 %v471, 1.442695
      %v516 = vpow.pop %v515
      %v517 = vmul.f32 %v472, 1.442695
      %v518 = vpow.pop %v517
      %v519 = vmul.f32 %v473, 1.442695
      %v520 = vpow.pop %v519
      %v521 = vmul.f32 %v474, 1.442695
      %v522 = vpow.pop %v521
      %v523 = vmul.f32 %v475, 1.442695
      %v524 = vpow.pop %v523
      %v525 = vmul.f32 %v476, 1.442695
      %v526 = vpow.pop %v525
      %v527 = vmul.f32 %v477, 1.442695
      %v528 = vpow.pop %v527
      %v529 = vmul.f32 %v478, 1.442695
      %v530 = vpow.pop %v529
      %v531 = vmul.f32 %v479, 1.442695
      %v532 = vpow.pop %v531
      %v533 = vmul.f32 %v480, 1.442695
      %v534 = vpow.pop %v533
      %v535 = vmul.f32 %v481, 1.442695
      %v536 = vpow.pop %v535
      %v537 = vmul.f32 %v482, 1.442695
      %v538 = vpow.pop %v537
      %v539 = vmul.f32 %v483, 1.442695
      %v540 = vpow.pop %v539
      %v541 = vmul.f32 %v484, 1.442695
      %v542 = vpow.pop %v541
      %v543 = vmul.f32 %v485, 1.442695
      %v544 = vpow.pop %v543
      %v545 = vmul.f32 %v486, 1.442695
      %v546 = vpow.pop %v545
      %v547 = vmul.f32 %v487, 1.442695
      %v548 = vpow.pop %v547
      %v549 = vmul.f32 %v488, 1.442695
      %v550 = vpow.pop %v549
      %v551 = vmul.f32 %v489, 1.442695
      %v552 = vpow.pop %v551
      %v553 = vmul.f32 %v490, 1.442695
      %v554 = vpow.pop %v553
      %v555 = vadd.f32 %v492, 1.0
      %v556 = vadd.f32 %v494, 1.0
      %v557 = vadd.f32 %v496, 1.0
      %v558 = vadd.f32 %v498, 1.0
      %v559 = vadd.f32 %v500, 1.0
      %v560 = vadd.f32 %v502, 1.0
      %v561 = vadd.f32 %v504, 1.0
      %v562 = vadd.f32 %v506, 1.0
      %v563 = vadd.f32 %v508, 1.0
      %v564 = vadd.f32 %v510, 1.0
      %v565 = vadd.f32 %v512, 1.0
      %v566 = vadd.f32 %v514, 1.0
      %v567 = vadd.f32 %v516, 1.0
      %v568 = vadd.f32 %v518, 1.0
      %v569 = vadd.f32 %v520, 1.0
      %v570 = vadd.f32 %v522, 1.0
      %v571 = vadd.f32 %v524, 1.0
      %v572 = vadd.f32 %v526, 1.0
      %v573 = vadd.f32 %v528, 1.0
      %v574 = vadd.f32 %v530, 1.0
      %v575 = vadd.f32 %v532, 1.0
      %v576 = vadd.f32 %v534, 1.0
      %v577 = vadd.f32 %v536, 1.0
      %v578 = vadd.f32 %v538, 1.0
      %v579 = vadd.f32 %v540, 1.0
      %v580 = vadd.f32 %v542, 1.0
      %v581 = vadd.f32 %v544, 1.0
      %v582 = vadd.f32 %v546, 1.0
      %v583 = vadd.f32 %v548, 1.0
      %v584 = vadd.f32 %v550, 1.0
      %v585 = vadd.f32 %v552, 1.0
      %v586 = vadd.f32 %v554, 1.0
      %v587 = vrcp.pop %v555
      %v588 = vmul.f32 %v555, %v587
      %v589 = vsub.f32 1.0, %v588
      %v590 = vmul.f32 %v587, %v589
      %v591 = vadd.f32 %v587, %v590
      %vm592 = vweird.f32 %v555
      %vm593 = vweird.f32 %v587
      %vm594 = vmor %vm592, %vm593
      %v595 = vsel %vm594, %v587, %v591
      %v596 = vand.u32 2147483647, %v555
      %vm597 = vcmp.eq.f32.partialorder %v596, 8.507059e+37
      %v598 = vand.u32 %v555, 2147483648
      %v599 = vor.u32 1.1754944e-38, %v598
      %v600 = vsel %vm597, %v599, %v595
      %v601 = vmul.f32 1.0, %v600
      %v602 = vrcp.pop %v556
      %v603 = vmul.f32 %v556, %v602
      %v604 = vsub.f32 1.0, %v603
      %v605 = vmul.f32 %v602, %v604
      %v606 = vadd.f32 %v602, %v605
      %vm607 = vweird.f32 %v556
      %vm608 = vweird.f32 %v602
      %vm609 = vmor %vm607, %vm608
      %v610 = vsel %vm609, %v602, %v606
      %v611 = vand.u32 2147483647, %v556
      %vm612 = vcmp.eq.f32.partialorder %v611, 8.507059e+37
      %v613 = vand.u32 %v556, 2147483648
      %v614 = vor.u32 1.1754944e-38, %v613
      %v615 = vsel %vm612, %v614, %v610
      %v616 = vmul.f32 1.0, %v615
      %v617 = vrcp.pop %v557
      %v618 = vmul.f32 %v557, %v617
      %v619 = vsub.f32 1.0, %v618
      %v620 = vmul.f32 %v617, %v619
      %v621 = vadd.f32 %v617, %v620
      %vm622 = vweird.f32 %v557
      %vm623 = vweird.f32 %v617
      %vm624 = vmor %vm622, %vm623
      %v625 = vsel %vm624, %v617, %v621
      %v626 = vand.u32 2147483647, %v557
      %vm627 = vcmp.eq.f32.partialorder %v626, 8.507059e+37
      %v628 = vand.u32 %v557, 2147483648
      %v629 = vor.u32 1.1754944e-38, %v628
      %v630 = vsel %vm627, %v629, %v625
      %v631 = vmul.f32 1.0, %v630
      %v632 = vrcp.pop %v558
      %v633 = vmul.f32 %v558, %v632
      %v634 = vsub.f32 1.0, %v633
      %v635 = vmul.f32 %v632, %v634
      %v636 = vadd.f32 %v632, %v635
      %vm637 = vweird.f32 %v558
      %vm638 = vweird.f32 %v632
      %vm639 = vmor %vm637, %vm638
      %v640 = vsel %vm639, %v632, %v636
      %v641 = vand.u32 2147483647, %v558
      %vm642 = vcmp.eq.f32.partialorder %v641, 8.507059e+37
      %v643 = vand.u32 %v558, 2147483648
      %v644 = vor.u32 1.1754944e-38, %v643
      %v645 = vsel %vm642, %v644, %v640
      %v646 = vmul.f32 1.0, %v645
      %v647 = vrcp.pop %v559
      %v648 = vmul.f32 %v559, %v647
      %v649 = vsub.f32 1.0, %v648
      %v650 = vmul.f32 %v647, %v649
      %v651 = vadd.f32 %v647, %v650
      %vm652 = vweird.f32 %v559
      %vm653 = vweird.f32 %v647
      %vm654 = vmor %vm652, %vm653
      %v655 = vsel %vm654, %v647, %v651
      %v656 = vand.u32 2147483647, %v559
      %vm657 = vcmp.eq.f32.partialorder %v656, 8.507059e+37
      %v658 = vand.u32 %v559, 2147483648
      %v659 = vor.u32 1.1754944e-38, %v658
      %v660 = vsel %vm657, %v659, %v655
      %v661 = vmul.f32 1.0, %v660
      %v662 = vrcp.pop %v560
      %v663 = vmul.f32 %v560, %v662
      %v664 = vsub.f32 1.0, %v663
      %v665 = vmul.f32 %v662, %v664
      %v666 = vadd.f32 %v662, %v665
      %vm667 = vweird.f32 %v560
      %vm668 = vweird.f32 %v662
      %vm669 = vmor %vm667, %vm668
      %v670 = vsel %vm669, %v662, %v666
      %v671 = vand.u32 2147483647, %v560
      %vm672 = vcmp.eq.f32.partialorder %v671, 8.507059e+37
      %v673 = vand.u32 %v560, 2147483648
      %v674 = vor.u32 1.1754944e-38, %v673
      %v675 = vsel %vm672, %v674, %v670
      %v676 = vmul.f32 1.0, %v675
      %v677 = vrcp.pop %v561
      %v678 = vmul.f32 %v561, %v677
      %v679 = vsub.f32 1.0, %v678
      %v680 = vmul.f32 %v677, %v679
      %v681 = vadd.f32 %v677, %v680
      %vm682 = vweird.f32 %v561
      %vm683 = vweird.f32 %v677
      %vm684 = vmor %vm682, %vm683
      %v685 = vsel %vm684, %v677, %v681
      %v686 = vand.u32 2147483647, %v561
      %vm687 = vcmp.eq.f32.partialorder %v686, 8.507059e+37
      %v688 = vand.u32 %v561, 2147483648
      %v689 = vor.u32 1.1754944e-38, %v688
      %v690 = vsel %vm687, %v689, %v685
      %v691 = vmul.f32 1.0, %v690
      %v692 = vrcp.pop %v562
      %v693 = vmul.f32 %v562, %v692
      %v694 = vsub.f32 1.0, %v693
      %v695 = vmul.f32 %v692, %v694
      %v696 = vadd.f32 %v692, %v695
      %vm697 = vweird.f32 %v562
      %vm698 = vweird.f32 %v692
      %vm699 = vmor %vm697, %vm698
      %v700 = vsel %vm699, %v692, %v696
      %v701 = vand.u32 2147483647, %v562
      %vm702 = vcmp.eq.f32.partialorder %v701, 8.507059e+37
      %v703 = vand.u32 %v562, 2147483648
      %v704 = vor.u32 1.1754944e-38, %v703
      %v705 = vsel %vm702, %v704, %v700
      %v706 = vmul.f32 1.0, %v705
      %v707 = vrcp.pop %v563
      %v708 = vmul.f32 %v563, %v707
      %v709 = vsub.f32 1.0, %v708
      %v710 = vmul.f32 %v707, %v709
      %v711 = vadd.f32 %v707, %v710
      %vm712 = vweird.f32 %v563
      %vm713 = vweird.f32 %v707
      %vm714 = vmor %vm712, %vm713
      %v715 = vsel %vm714, %v707, %v711
      %v716 = vand.u32 2147483647, %v563
      %vm717 = vcmp.eq.f32.partialorder %v716, 8.507059e+37
      %v718 = vand.u32 %v563, 2147483648
      %v719 = vor.u32 1.1754944e-38, %v718
      %v720 = vsel %vm717, %v719, %v715
      %v721 = vmul.f32 1.0, %v720
      %v722 = vrcp.pop %v564
      %v723 = vmul.f32 %v564, %v722
      %v724 = vsub.f32 1.0, %v723
      %v725 = vmul.f32 %v722, %v724
      %v726 = vadd.f32 %v722, %v725
      %vm727 = vweird.f32 %v564
      %vm728 = vweird.f32 %v722
      %vm729 = vmor %vm727, %vm728
      %v730 = vsel %vm729, %v722, %v726
      %v731 = vand.u32 2147483647, %v564
      %vm732 = vcmp.eq.f32.partialorder %v731, 8.507059e+37
      %v733 = vand.u32 %v564, 2147483648
      %v734 = vor.u32 1.1754944e-38, %v733
      %v735 = vsel %vm732, %v734, %v730
      %v736 = vmul.f32 1.0, %v735
      %v737 = vrcp.pop %v565
      %v738 = vmul.f32 %v565, %v737
      %v739 = vsub.f32 1.0, %v738
      %v740 = vmul.f32 %v737, %v739
      %v741 = vadd.f32 %v737, %v740
      %vm742 = vweird.f32 %v565
      %vm743 = vweird.f32 %v737
      %vm744 = vmor %vm742, %vm743
      %v745 = vsel %vm744, %v737, %v741
      %v746 = vand.u32 2147483647, %v565
      %vm747 = vcmp.eq.f32.partialorder %v746, 8.507059e+37
      %v748 = vand.u32 %v565, 2147483648
      %v749 = vor.u32 1.1754944e-38, %v748
      %v750 = vsel %vm747, %v749, %v745
      %v751 = vmul.f32 1.0, %v750
      %v752 = vrcp.pop %v566
      %v753 = vmul.f32 %v566, %v752
      %v754 = vsub.f32 1.0, %v753
      %v755 = vmul.f32 %v752, %v754
      %v756 = vadd.f32 %v752, %v755
      %vm757 = vweird.f32 %v566
      %vm758 = vweird.f32 %v752
      %vm759 = vmor %vm757, %vm758
      %v760 = vsel %vm759, %v752, %v756
      %v761 = vand.u32 2147483647, %v566
      %vm762 = vcmp.eq.f32.partialorder %v761, 8.507059e+37
      %v763 = vand.u32 %v566, 2147483648
      %v764 = vor.u32 1.1754944e-38, %v763
      %v765 = vsel %vm762, %v764, %v760
      %v766 = vmul.f32 1.0, %v765
      %v767 = vrcp.pop %v567
      %v768 = vmul.f32 %v567, %v767
      %v769 = vsub.f32 1.0, %v768
      %v770 = vmul.f32 %v767, %v769
      %v771 = vadd.f32 %v767, %v770
      %vm772 = vweird.f32 %v567
      %vm773 = vweird.f32 %v767
      %vm774 = vmor %vm772, %vm773
      %v775 = vsel %vm774, %v767, %v771
      %v776 = vand.u32 2147483647, %v567
      %vm777 = vcmp.eq.f32.partialorder %v776, 8.507059e+37
      %v778 = vand.u32 %v567, 2147483648
      %v779 = vor.u32 1.1754944e-38, %v778
      %v780 = vsel %vm777, %v779, %v775
      %v781 = vmul.f32 1.0, %v780
      %v782 = vrcp.pop %v568
      %v783 = vmul.f32 %v568, %v782
      %v784 = vsub.f32 1.0, %v783
      %v785 = vmul.f32 %v782, %v784
      %v786 = vadd.f32 %v782, %v785
      %vm787 = vweird.f32 %v568
      %vm788 = vweird.f32 %v782
      %vm789 = vmor %vm787, %vm788
      %v790 = vsel %vm789, %v782, %v786
      %v791 = vand.u32 2147483647, %v568
      %vm792 = vcmp.eq.f32.partialorder %v791, 8.507059e+37
      %v793 = vand.u32 %v568, 2147483648
      %v794 = vor.u32 1.1754944e-38, %v793
      %v795 = vsel %vm792, %v794, %v790
      %v796 = vmul.f32 1.0, %v795
      %v797 = vrcp.pop %v569
      %v798 = vmul.f32 %v569, %v797
      %v799 = vsub.f32 1.0, %v798
      %v800 = vmul.f32 %v797, %v799
      %v801 = vadd.f32 %v797, %v800
      %vm802 = vweird.f32 %v569
      %vm803 = vweird.f32 %v797
      %vm804 = vmor %vm802, %vm803
      %v805 = vsel %vm804, %v797, %v801
      %v806 = vand.u32 2147483647, %v569
      %vm807 = vcmp.eq.f32.partialorder %v806, 8.507059e+37
      %v808 = vand.u32 %v569, 2147483648
      %v809 = vor.u32 1.1754944e-38, %v808
      %v810 = vsel %vm807, %v809, %v805
      %v811 = vmul.f32 1.0, %v810
      %v812 = vrcp.pop %v570
      %v813 = vmul.f32 %v570, %v812
      %v814 = vsub.f32 1.0, %v813
      %v815 = vmul.f32 %v812, %v814
      %v816 = vadd.f32 %v812, %v815
      %vm817 = vweird.f32 %v570
      %vm818 = vweird.f32 %v812
      %vm819 = vmor %vm817, %vm818
      %v820 = vsel %vm819, %v812, %v816
      %v821 = vand.u32 2147483647, %v570
      %vm822 = vcmp.eq.f32.partialorder %v821, 8.507059e+37
      %v823 = vand.u32 %v570, 2147483648
      %v824 = vor.u32 1.1754944e-38, %v823
      %v825 = vsel %vm822, %v824, %v820
      %v826 = vmul.f32 1.0, %v825
      %v827 = vrcp.pop %v571
      %v828 = vmul.f32 %v571, %v827
      %v829 = vsub.f32 1.0, %v828
      %v830 = vmul.f32 %v827, %v829
      %v831 = vadd.f32 %v827, %v830
      %vm832 = vweird.f32 %v571
      %vm833 = vweird.f32 %v827
      %vm834 = vmor %vm832, %vm833
      %v835 = vsel %vm834, %v827, %v831
      %v836 = vand.u32 2147483647, %v571
      %vm837 = vcmp.eq.f32.partialorder %v836, 8.507059e+37
      %v838 = vand.u32 %v571, 2147483648
      %v839 = vor.u32 1.1754944e-38, %v838
      %v840 = vsel %vm837, %v839, %v835
      %v841 = vmul.f32 1.0, %v840
      %v842 = vrcp.pop %v572
      %v843 = vmul.f32 %v572, %v842
      %v844 = vsub.f32 1.0, %v843
      %v845 = vmul.f32 %v842, %v844
      %v846 = vadd.f32 %v842, %v845
      %vm847 = vweird.f32 %v572
      %vm848 = vweird.f32 %v842
      %vm849 = vmor %vm847, %vm848
      %v850 = vsel %vm849, %v842, %v846
      %v851 = vand.u32 2147483647, %v572
      %vm852 = vcmp.eq.f32.partialorder %v851, 8.507059e+37
      %v853 = vand.u32 %v572, 2147483648
      %v854 = vor.u32 1.1754944e-38, %v853
      %v855 = vsel %vm852, %v854, %v850
      %v856 = vmul.f32 1.0, %v855
      %v857 = vrcp.pop %v573
      %v858 = vmul.f32 %v573, %v857
      %v859 = vsub.f32 1.0, %v858
      %v860 = vmul.f32 %v857, %v859
      %v861 = vadd.f32 %v857, %v860
      %vm862 = vweird.f32 %v573
      %vm863 = vweird.f32 %v857
      %vm864 = vmor %vm862, %vm863
      %v865 = vsel %vm864, %v857, %v861
      %v866 = vand.u32 2147483647, %v573
      %vm867 = vcmp.eq.f32.partialorder %v866, 8.507059e+37
      %v868 = vand.u32 %v573, 2147483648
      %v869 = vor.u32 1.1754944e-38, %v868
      %v870 = vsel %vm867, %v869, %v865
      %v871 = vmul.f32 1.0, %v870
      %v872 = vrcp.pop %v574
      %v873 = vmul.f32 %v574, %v872
      %v874 = vsub.f32 1.0, %v873
      %v875 = vmul.f32 %v872, %v874
      %v876 = vadd.f32 %v872, %v875
      %vm877 = vweird.f32 %v574
      %vm878 = vweird.f32 %v872
      %vm879 = vmor %vm877, %vm878
      %v880 = vsel %vm879, %v872, %v876
      %v881 = vand.u32 2147483647, %v574
      %vm882 = vcmp.eq.f32.partialorder %v881, 8.507059e+37
      %v883 = vand.u32 %v574, 2147483648
      %v884 = vor.u32 1.1754944e-38, %v883
      %v885 = vsel %vm882, %v884, %v880
      %v886 = vmul.f32 1.0, %v885
      %v887 = vrcp.pop %v575
      %v888 = vmul.f32 %v575, %v887
      %v889 = vsub.f32 1.0, %v888
      %v890 = vmul.f32 %v887, %v889
      %v891 = vadd.f32 %v887, %v890
      %vm892 = vweird.f32 %v575
      %vm893 = vweird.f32 %v887
      %vm894 = vmor %vm892, %vm893
      %v895 = vsel %vm894, %v887, %v891
      %v896 = vand.u32 2147483647, %v575
      %vm897 = vcmp.eq.f32.partialorder %v896, 8.507059e+37
      %v898 = vand.u32 %v575, 2147483648
      %v899 = vor.u32 1.1754944e-38, %v898
      %v900 = vsel %vm897, %v899, %v895
      %v901 = vmul.f32 1.0, %v900
      %v902 = vrcp.pop %v576
      %v903 = vmul.f32 %v576, %v902
      %v904 = vsub.f32 1.0, %v903
      %v905 = vmul.f32 %v902, %v904
      %v906 = vadd.f32 %v902, %v905
      %vm907 = vweird.f32 %v576
      %vm908 = vweird.f32 %v902
      %vm909 = vmor %vm907, %vm908
      %v910 = vsel %vm909, %v902, %v906
      %v911 = vand.u32 2147483647, %v576
      %vm912 = vcmp.eq.f32.partialorder %v911, 8.507059e+37
      %v913 = vand.u32 %v576, 2147483648
      %v914 = vor.u32 1.1754944e-38, %v913
      %v915 = vsel %vm912, %v914, %v910
      %v916 = vmul.f32 1.0, %v915
      %v917 = vrcp.pop %v577
      %v918 = vmul.f32 %v577, %v917
      %v919 = vsub.f32 1.0, %v918
      %v920 = vmul.f32 %v917, %v919
      %v921 = vadd.f32 %v917, %v920
      %vm922 = vweird.f32 %v577
      %vm923 = vweird.f32 %v917
      %vm924 = vmor %vm922, %vm923
      %v925 = vsel %vm924, %v917, %v921
      %v926 = vand.u32 2147483647, %v577
      %vm927 = vcmp.eq.f32.partialorder %v926, 8.507059e+37
      %v928 = vand.u32 %v577, 2147483648
      %v929 = vor.u32 1.1754944e-38, %v928
      %v930 = vsel %vm927, %v929, %v925
      %v931 = vmul.f32 1.0, %v930
      %v932 = vrcp.pop %v578
      %v933 = vmul.f32 %v578, %v932
      %v934 = vsub.f32 1.0, %v933
      %v935 = vmul.f32 %v932, %v934
      %v936 = vadd.f32 %v932, %v935
      %vm937 = vweird.f32 %v578
      %vm938 = vweird.f32 %v932
      %vm939 = vmor %vm937, %vm938
      %v940 = vsel %vm939, %v932, %v936
      %v941 = vand.u32 2147483647, %v578
      %vm942 = vcmp.eq.f32.partialorder %v941, 8.507059e+37
      %v943 = vand.u32 %v578, 2147483648
      %v944 = vor.u32 1.1754944e-38, %v943
      %v945 = vsel %vm942, %v944, %v940
      %v946 = vmul.f32 1.0, %v945
      %v947 = vrcp.pop %v579
      %v948 = vmul.f32 %v579, %v947
      %v949 = vsub.f32 1.0, %v948
      %v950 = vmul.f32 %v947, %v949
      %v951 = vadd.f32 %v947, %v950
      %vm952 = vweird.f32 %v579
      %vm953 = vweird.f32 %v947
      %vm954 = vmor %vm952, %vm953
      %v955 = vsel %vm954, %v947, %v951
      %v956 = vand.u32 2147483647, %v579
      %vm957 = vcmp.eq.f32.partialorder %v956, 8.507059e+37
      %v958 = vand.u32 %v579, 2147483648
      %v959 = vor.u32 1.1754944e-38, %v958
      %v960 = vsel %vm957, %v959, %v955
      %v961 = vmul.f32 1.0, %v960
      %v962 = vrcp.pop %v580
      %v963 = vmul.f32 %v580, %v962
      %v964 = vsub.f32 1.0, %v963
      %v965 = vmul.f32 %v962, %v964
      %v966 = vadd.f32 %v962, %v965
      %vm967 = vweird.f32 %v580
      %vm968 = vweird.f32 %v962
      %vm969 = vmor %vm967, %vm968
      %v970 = vsel %vm969, %v962, %v966
      %v971 = vand.u32 2147483647, %v580
      %vm972 = vcmp.eq.f32.partialorder %v971, 8.507059e+37
      %v973 = vand.u32 %v580, 2147483648
      %v974 = vor.u32 1.1754944e-38, %v973
      %v975 = vsel %vm972, %v974, %v970
      %v976 = vmul.f32 1.0, %v975
      %v977 = vrcp.pop %v581
      %v978 = vmul.f32 %v581, %v977
      %v979 = vsub.f32 1.0, %v978
      %v980 = vmul.f32 %v977, %v979
      %v981 = vadd.f32 %v977, %v980
      %vm982 = vweird.f32 %v581
      %vm983 = vweird.f32 %v977
      %vm984 = vmor %vm982, %vm983
      %v985 = vsel %vm984, %v977, %v981
      %v986 = vand.u32 2147483647, %v581
      %vm987 = vcmp.eq.f32.partialorder %v986, 8.507059e+37
      %v988 = vand.u32 %v581, 2147483648
      %v989 = vor.u32 1.1754944e-38, %v988
      %v990 = vsel %vm987, %v989, %v985
      %v991 = vmul.f32 1.0, %v990
      %v992 = vrcp.pop %v582
      %v993 = vmul.f32 %v582, %v992
      %v994 = vsub.f32 1.0, %v993
      %v995 = vmul.f32 %v992, %v994
      %v996 = vadd.f32 %v992, %v995
      %vm997 = vweird.f32 %v582
      %vm998 = vweird.f32 %v992
      %vm999 = vmor %vm997, %vm998
      %v1000 = vsel %vm999, %v992, %v996
      %v1001 = vand.u32 2147483647, %v582
      %vm1002 = vcmp.eq.f32.partialorder %v1001, 8.507059e+37
      %v1003 = vand.u32 %v582, 2147483648
      %v1004 = vor.u32 1.1754944e-38, %v1003
      %v1005 = vsel %vm1002, %v1004, %v1000
      %v1006 = vmul.f32 1.0, %v1005
      %v1007 = vrcp.pop %v583
      %v1008 = vmul.f32 %v583, %v1007
      %v1009 = vsub.f32 1.0, %v1008
      %v1010 = vmul.f32 %v1007, %v1009
      %v1011 = vadd.f32 %v1007, %v1010
      %vm1012 = vweird.f32 %v583
      %vm1013 = vweird.f32 %v1007
      %vm1014 = vmor %vm1012, %vm1013
      %v1015 = vsel %vm1014, %v1007, %v1011
      %v1016 = vand.u32 2147483647, %v583
      %vm1017 = vcmp.eq.f32.partialorder %v1016, 8.507059e+37
      %v1018 = vand.u32 %v583, 2147483648
      %v1019 = vor.u32 1.1754944e-38, %v1018
      %v1020 = vsel %vm1017, %v1019, %v1015
      %v1021 = vmul.f32 1.0, %v1020
      %v1022 = vrcp.pop %v584
      %v1023 = vmul.f32 %v584, %v1022
      %v1024 = vsub.f32 1.0, %v1023
      %v1025 = vmul.f32 %v1022, %v1024
      %v1026 = vadd.f32 %v1022, %v1025
      %vm1027 = vweird.f32 %v584
      %vm1028 = vweird.f32 %v1022
      %vm1029 = vmor %vm1027, %vm1028
      %v1030 = vsel %vm1029, %v1022, %v1026
      %v1031 = vand.u32 2147483647, %v584
      %vm1032 = vcmp.eq.f32.partialorder %v1031, 8.507059e+37
      %v1033 = vand.u32 %v584, 2147483648
      %v1034 = vor.u32 1.1754944e-38, %v1033
      %v1035 = vsel %vm1032, %v1034, %v1030
      %v1036 = vmul.f32 1.0, %v1035
      %v1037 = vrcp.pop %v585
      %v1038 = vmul.f32 %v585, %v1037
      %v1039 = vsub.f32 1.0, %v1038
      %v1040 = vmul.f32 %v1037, %v1039
      %v1041 = vadd.f32 %v1037, %v1040
      %vm1042 = vweird.f32 %v585
      %vm1043 = vweird.f32 %v1037
      %vm1044 = vmor %vm1042, %vm1043
      %v1045 = vsel %vm1044, %v1037, %v1041
      %v1046 = vand.u32 2147483647, %v585
      %vm1047 = vcmp.eq.f32.partialorder %v1046, 8.507059e+37
      %v1048 = vand.u32 %v585, 2147483648
      %v1049 = vor.u32 1.1754944e-38, %v1048
      %v1050 = vsel %vm1047, %v1049, %v1045
      %v1051 = vmul.f32 1.0, %v1050
      %v1052 = vrcp.pop %v586
      %v1053 = vmul.f32 %v586, %v1052
      %v1054 = vsub.f32 1.0, %v1053
      %v1055 = vmul.f32 %v1052, %v1054
      %v1056 = vadd.f32 %v1052, %v1055
      %vm1057 = vweird.f32 %v586
      %vm1058 = vweird.f32 %v1052
      %vm1059 = vmor %vm1057, %vm1058
      %v1060 = vsel %vm1059, %v1052, %v1056
      %v1061 = vand.u32 2147483647, %v586
      %vm1062 = vcmp.eq.f32.partialorder %v1061, 8.507059e+37
      %v1063 = vand.u32 %v586, 2147483648
      %v1064 = vor.u32 1.1754944e-38, %v1063
      %v1065 = vsel %vm1062, %v1064, %v1060
      %v1066 = vmul.f32 1.0, %v1065
      %v1067 = vmul.f32 %v427, %v601
      %v1068 = vmul.f32 %v428, %v616
      %v1069 = vmul.f32 %v429, %v631
      %v1070 = vmul.f32 %v430, %v646
      %v1071 = vmul.f32 %v431, %v661
      %v1072 = vmul.f32 %v432, %v676
      %v1073 = vmul.f32 %v433, %v691
      %v1074 = vmul.f32 %v434, %v706
      %v1075 = vmul.f32 %v435, %v721
      %v1076 = vmul.f32 %v436, %v736
      %v1077 = vmul.f32 %v437, %v751
      %v1078 = vmul.f32 %v438, %v766
      %v1079 = vmul.f32 %v439, %v781
      %v1080 = vmul.f32 %v440, %v796
      %v1081 = vmul.f32 %v441, %v811
      %v1082 = vmul.f32 %v442, %v826
      %v1083 = vmul.f32 %v443, %v841
      %v1084 = vmul.f32 %v444, %v856
      %v1085 = vmul.f32 %v445, %v871
      %v1086 = vmul.f32 %v446, %v886
      %v1087 = vmul.f32 %v447, %v901
      %v1088 = vmul.f32 %v448, %v916
      %v1089 = vmul.f32 %v449, %v931
      %v1090 = vmul.f32 %v450, %v946
      %v1091 = vmul.f32 %v451, %v961
      %v1092 = vmul.f32 %v452, %v976
      %v1093 = vmul.f32 %v453, %v991
      %v1094 = vmul.f32 %v454, %v1006
      %v1095 = vmul.f32 %v455, %v1021
      %v1096 = vmul.f32 %v456, %v1036
      %v1097 = vmul.f32 %v457, %v1051
      %v1098 = vmul.f32 %v458, %v1066
      %v1099 = vpack.c.bf16 %v1067, %v1067
      %v1100 = vpack.c.bf16 %v1068, %v1068
      %v1101 = vpack.c.bf16 %v1069, %v1069
      %v1102 = vpack.c.bf16 %v1070, %v1070
      %v1103 = vpack.c.bf16 %v1071, %v1071
      %v1104 = vpack.c.bf16 %v1072, %v1072
      %v1105 = vpack.c.bf16 %v1073, %v1073
      %v1106 = vpack.c.bf16 %v1074, %v1074
      %v1107 = vpack.c.bf16 %v1075, %v1075
      %v1108 = vpack.c.bf16 %v1076, %v1076
      %v1109 = vpack.c.bf16 %v1077, %v1077
      %v1110 = vpack.c.bf16 %v1078, %v1078
      %v1111 = vpack.c.bf16 %v1079, %v1079
      %v1112 = vpack.c.bf16 %v1080, %v1080
      %v1113 = vpack.c.bf16 %v1081, %v1081
      %v1114 = vpack.c.bf16 %v1082, %v1082
      %v1115 = vpack.c.bf16 %v1083, %v1083
      %v1116 = vpack.c.bf16 %v1084, %v1084
      %v1117 = vpack.c.bf16 %v1085, %v1085
      %v1118 = vpack.c.bf16 %v1086, %v1086
      %v1119 = vpack.c.bf16 %v1087, %v1087
      %v1120 = vpack.c.bf16 %v1088, %v1088
      %v1121 = vpack.c.bf16 %v1089, %v1089
      %v1122 = vpack.c.bf16 %v1090, %v1090
      %v1123 = vpack.c.bf16 %v1091, %v1091
      %v1124 = vpack.c.bf16 %v1092, %v1092
      %v1125 = vpack.c.bf16 %v1093, %v1093
      %v1126 = vpack.c.bf16 %v1094, %v1094
      %v1127 = vpack.c.bf16 %v1095, %v1095
      %v1128 = vpack.c.bf16 %v1096, %v1096
      %v1129 = vpack.c.bf16 %v1097, %v1097
      %v1130 = vpack.c.bf16 %v1098, %v1098
      %v1163 = vunpack.c.l.b16 %v1099
      %v1164 = vunpack.c.l.b16 %v1100
      %v1165 = vunpack.c.l.b16 %v1101
      %v1166 = vunpack.c.l.b16 %v1102
      %v1167 = vunpack.c.l.b16 %v1103
      %v1168 = vunpack.c.l.b16 %v1104
      %v1169 = vunpack.c.l.b16 %v1105
      %v1170 = vunpack.c.l.b16 %v1106
      %v1171 = vunpack.c.l.b16 %v1107
      %v1172 = vunpack.c.l.b16 %v1108
      %v1173 = vunpack.c.l.b16 %v1109
      %v1174 = vunpack.c.l.b16 %v1110
      %v1175 = vunpack.c.l.b16 %v1111
      %v1176 = vunpack.c.l.b16 %v1112
      %v1177 = vunpack.c.l.b16 %v1113
      %v1178 = vunpack.c.l.b16 %v1114
      %v1179 = vunpack.c.l.b16 %v1115
      %v1180 = vunpack.c.l.b16 %v1116
      %v1181 = vunpack.c.l.b16 %v1117
      %v1182 = vunpack.c.l.b16 %v1118
      %v1183 = vunpack.c.l.b16 %v1119
      %v1184 = vunpack.c.l.b16 %v1120
      %v1185 = vunpack.c.l.b16 %v1121
      %v1186 = vunpack.c.l.b16 %v1122
      %v1187 = vunpack.c.l.b16 %v1123
      %v1188 = vunpack.c.l.b16 %v1124
      %v1189 = vunpack.c.l.b16 %v1125
      %v1190 = vunpack.c.l.b16 %v1126
      %v1191 = vunpack.c.l.b16 %v1127
      %v1192 = vunpack.c.l.b16 %v1128
      %v1193 = vunpack.c.l.b16 %v1129
      %v1194 = vunpack.c.l.b16 %v1130
      %v1195 = vpack.c.b16 %v1164, %v1163
      %v1196 = vpack.c.b16 %v1166, %v1165
      %v1197 = vpack.c.b16 %v1168, %v1167
      %v1198 = vpack.c.b16 %v1170, %v1169
      %v1199 = vpack.c.b16 %v1172, %v1171
      %v1200 = vpack.c.b16 %v1174, %v1173
      %v1201 = vpack.c.b16 %v1176, %v1175
      %v1202 = vpack.c.b16 %v1178, %v1177
      %v1203 = vpack.c.b16 %v1180, %v1179
      %v1204 = vpack.c.b16 %v1182, %v1181
      %v1205 = vpack.c.b16 %v1184, %v1183
      %v1206 = vpack.c.b16 %v1186, %v1185
      %v1207 = vpack.c.b16 %v1188, %v1187
      %v1208 = vpack.c.b16 %v1190, %v1189
      %v1209 = vpack.c.b16 %v1192, %v1191
      %v1210 = vpack.c.b16 %v1194, %v1193
      %v1212 = vshrl.u32 0, 16
      %v1214 = vrot.slane %v1212, 7
      %v1215 = vshll.u32 0, 16
      %v1217 = vor.u32 %v1214, %v1215
      %v1219 = vshrl.u32 %v1195, 16
      %v1221 = vrot.slane %v1219, 7
      %v1222 = vshll.u32 %v1195, 16
      %v1224 = vor.u32 %v1221, %v1222
      %v1226 = vshrl.u32 %v1196, 16
      %v1228 = vrot.slane %v1226, 7
      %v1229 = vshll.u32 %v1196, 16
      %v1231 = vor.u32 %v1228, %v1229
      %v1233 = vshrl.u32 %v1197, 16
      %v1235 = vrot.slane %v1233, 7
      %v1236 = vshll.u32 %v1197, 16
      %v1238 = vor.u32 %v1235, %v1236
      %v1240 = vshrl.u32 %v1198, 16
      %v1242 = vrot.slane %v1240, 7
      %v1243 = vshll.u32 %v1198, 16
      %v1245 = vor.u32 %v1242, %v1243
      %v1247 = vshrl.u32 %v1199, 16
      %v1249 = vrot.slane %v1247, 7
      %v1250 = vshll.u32 %v1199, 16
      %v1252 = vor.u32 %v1249, %v1250
      %v1254 = vshrl.u32 %v1200, 16
      %v1256 = vrot.slane %v1254, 7
      %v1257 = vshll.u32 %v1200, 16
      %v1259 = vor.u32 %v1256, %v1257
      %v1261 = vshrl.u32 %v1201, 16
      %v1263 = vrot.slane %v1261, 7
      %v1264 = vshll.u32 %v1201, 16
      %v1266 = vor.u32 %v1263, %v1264
      %v1268 = vshrl.u32 %v1202, 16
      %v1270 = vrot.slane %v1268, 7
      %v1271 = vshll.u32 %v1202, 16
      %v1273 = vor.u32 %v1270, %v1271
      %v1275 = vshrl.u32 %v1203, 16
      %v1277 = vrot.slane %v1275, 7
      %v1278 = vshll.u32 %v1203, 16
      %v1280 = vor.u32 %v1277, %v1278
      %v1282 = vshrl.u32 %v1204, 16
      %v1284 = vrot.slane %v1282, 7
      %v1285 = vshll.u32 %v1204, 16
      %v1287 = vor.u32 %v1284, %v1285
      %v1289 = vshrl.u32 %v1205, 16
      %v1291 = vrot.slane %v1289, 7
      %v1292 = vshll.u32 %v1205, 16
      %v1294 = vor.u32 %v1291, %v1292
      %v1296 = vshrl.u32 %v1206, 16
      %v1298 = vrot.slane %v1296, 7
      %v1299 = vshll.u32 %v1206, 16
      %v1301 = vor.u32 %v1298, %v1299
      %v1303 = vshrl.u32 %v1207, 16
      %v1305 = vrot.slane %v1303, 7
      %v1306 = vshll.u32 %v1207, 16
      %v1308 = vor.u32 %v1305, %v1306
      %v1310 = vshrl.u32 %v1208, 16
      %v1312 = vrot.slane %v1310, 7
      %v1313 = vshll.u32 %v1208, 16
      %v1315 = vor.u32 %v1312, %v1313
      %v1317 = vshrl.u32 %v1209, 16
      %v1319 = vrot.slane %v1317, 7
      %v1320 = vshll.u32 %v1209, 16
      %v1322 = vor.u32 %v1319, %v1320
      %v1324 = vshrl.u32 %v1210, 16
      %v1326 = vrot.slane %v1324, 7
      %v1327 = vshll.u32 %v1210, 16
      %v1329 = vor.u32 %v1326, %v1327
      %vm1364 = vcmask 1040384
      %vm1365 = vsmask.f32 256
      %vm1366 = vmand %vm1364, %vm1365
      %v1367 = vsel %vm1366, 0, %v1217
      %v1368 = vsel %vm1366, 0, %v1224
      %v1369 = vsel %vm1366, 0, %v1231
      %v1370 = vsel %vm1366, 0, %v1238
      %v1371 = vsel %vm1366, 0, %v1245
      %v1372 = vsel %vm1366, 0, %v1252
      %v1373 = vsel %vm1366, 0, %v1259
      %v1374 = vsel %vm1366, 0, %v1266
      %v1375 = vsel %vm1366, 0, %v1273
      %v1376 = vsel %vm1366, 0, %v1280
      %v1377 = vsel %vm1366, 0, %v1287
      %v1378 = vsel %vm1366, 0, %v1294
      %v1379 = vsel %vm1366, 0, %v1301
      %v1380 = vsel %vm1366, 0, %v1308
      %v1381 = vsel %vm1366, 0, %v1315
      %v1382 = vsel %vm1366, 0, %v1322
      %v1383 = vsel %vm1366, 0, %v1329
      %v1384 = vsel %vm1366, %v1214, 0
      %v1385 = vsel %vm1366, %v1221, 0
      %v1386 = vsel %vm1366, %v1228, 0
      %v1387 = vsel %vm1366, %v1235, 0
      %v1388 = vsel %vm1366, %v1242, 0
      %v1389 = vsel %vm1366, %v1249, 0
      %v1390 = vsel %vm1366, %v1256, 0
      %v1391 = vsel %vm1366, %v1263, 0
      %v1392 = vsel %vm1366, %v1270, 0
      %v1393 = vsel %vm1366, %v1277, 0
      %v1394 = vsel %vm1366, %v1284, 0
      %v1395 = vsel %vm1366, %v1291, 0
      %v1396 = vsel %vm1366, %v1298, 0
      %v1397 = vsel %vm1366, %v1305, 0
      %v1398 = vsel %vm1366, %v1312, 0
      %v1399 = vsel %vm1366, %v1319, 0
      %v1400 = vsel %vm1366, %v1326, 0
      %v1401 = vld [vmem:[%s303] sm:$0xf]
      %v1402 = vld [vmem:[%s303 + $0x4] sm:$0xf]
      %v1403 = vld [vmem:[%s303 + $0x8] sm:$0xf]
      %v1404 = vld [vmem:[%s303 + $0xc] sm:$0xf]
      %v1405 = vld [vmem:[%s303 + $0x10] sm:$0xf]
      %v1406 = vld [vmem:[%s303 + $0x14] sm:$0xf]
      %v1407 = vld [vmem:[%s303 + $0x18] sm:$0xf]
      %v1408 = vld [vmem:[%s303 + $0x1c] sm:$0xf]
      %v1409 = vld [vmem:[%s303 + $0x20] sm:$0xf]
      %v1410 = vld [vmem:[%s303 + $0x24] sm:$0xf]
      %v1411 = vld [vmem:[%s303 + $0x28] sm:$0xf]
      %v1412 = vld [vmem:[%s303 + $0x2c] sm:$0xf]
      %v1413 = vld [vmem:[%s303 + $0x30] sm:$0xf]
      %v1414 = vld [vmem:[%s303 + $0x34] sm:$0xf]
      %v1415 = vld [vmem:[%s303 + $0x38] sm:$0xf]
      %v1416 = vld [vmem:[%s303 + $0x3c] sm:$0xf]
      %vm1417 = vsmask.f32 7424
      %v1419 = vshrl.u32 %v1367, 16
      %v1421 = vshll.u32 %v1367, 16
      %v1423 = vrot.slane %v1421, 1
      %v1424 = vor.u32 %v1419, %v1423
      %v1426 = vshll.u32 %v1384, 16
      %v1428 = vrot.slane %v1426, 1
      %v1429 = vsel %vm1417, %v1424, %v1428
      %v1431 = vshrl.u32 %v1368, 16
      %v1433 = vshll.u32 %v1368, 16
      %v1435 = vrot.slane %v1433, 1
      %v1436 = vor.u32 %v1431, %v1435
      %v1438 = vshll.u32 %v1385, 16
      %v1440 = vrot.slane %v1438, 1
      %v1441 = vsel %vm1417, %v1436, %v1440
      %v1443 = vshrl.u32 %v1369, 16
      %v1445 = vshll.u32 %v1369, 16
      %v1447 = vrot.slane %v1445, 1
      %v1448 = vor.u32 %v1443, %v1447
      %v1450 = vshll.u32 %v1386, 16
      %v1452 = vrot.slane %v1450, 1
      %v1453 = vsel %vm1417, %v1448, %v1452
      %v1455 = vshrl.u32 %v1370, 16
      %v1457 = vshll.u32 %v1370, 16
      %v1459 = vrot.slane %v1457, 1
      %v1460 = vor.u32 %v1455, %v1459
      %v1462 = vshll.u32 %v1387, 16
      %v1464 = vrot.slane %v1462, 1
      %v1465 = vsel %vm1417, %v1460, %v1464
      %v1467 = vshrl.u32 %v1371, 16
      %v1469 = vshll.u32 %v1371, 16
      %v1471 = vrot.slane %v1469, 1
      %v1472 = vor.u32 %v1467, %v1471
      %v1474 = vshll.u32 %v1388, 16
      %v1476 = vrot.slane %v1474, 1
      %v1477 = vsel %vm1417, %v1472, %v1476
      %v1479 = vshrl.u32 %v1372, 16
      %v1481 = vshll.u32 %v1372, 16
      %v1483 = vrot.slane %v1481, 1
      %v1484 = vor.u32 %v1479, %v1483
      %v1486 = vshll.u32 %v1389, 16
      %v1488 = vrot.slane %v1486, 1
      %v1489 = vsel %vm1417, %v1484, %v1488
      %v1491 = vshrl.u32 %v1373, 16
      %v1493 = vshll.u32 %v1373, 16
      %v1495 = vrot.slane %v1493, 1
      %v1496 = vor.u32 %v1491, %v1495
      %v1498 = vshll.u32 %v1390, 16
      %v1500 = vrot.slane %v1498, 1
      %v1501 = vsel %vm1417, %v1496, %v1500
      %v1503 = vshrl.u32 %v1374, 16
      %v1505 = vshll.u32 %v1374, 16
      %v1507 = vrot.slane %v1505, 1
      %v1508 = vor.u32 %v1503, %v1507
      %v1510 = vshll.u32 %v1391, 16
      %v1512 = vrot.slane %v1510, 1
      %v1513 = vsel %vm1417, %v1508, %v1512
      %v1515 = vshrl.u32 %v1375, 16
      %v1517 = vshll.u32 %v1375, 16
      %v1519 = vrot.slane %v1517, 1
      %v1520 = vor.u32 %v1515, %v1519
      %v1522 = vshll.u32 %v1392, 16
      %v1524 = vrot.slane %v1522, 1
      %v1525 = vsel %vm1417, %v1520, %v1524
      %v1527 = vshrl.u32 %v1376, 16
      %v1529 = vshll.u32 %v1376, 16
      %v1531 = vrot.slane %v1529, 1
      %v1532 = vor.u32 %v1527, %v1531
      %v1534 = vshll.u32 %v1393, 16
      %v1536 = vrot.slane %v1534, 1
      %v1537 = vsel %vm1417, %v1532, %v1536
      %v1539 = vshrl.u32 %v1377, 16
      %v1541 = vshll.u32 %v1377, 16
      %v1543 = vrot.slane %v1541, 1
      %v1544 = vor.u32 %v1539, %v1543
      %v1546 = vshll.u32 %v1394, 16
      %v1548 = vrot.slane %v1546, 1
      %v1549 = vsel %vm1417, %v1544, %v1548
      %v1551 = vshrl.u32 %v1378, 16
      %v1553 = vshll.u32 %v1378, 16
      %v1555 = vrot.slane %v1553, 1
      %v1556 = vor.u32 %v1551, %v1555
      %v1558 = vshll.u32 %v1395, 16
      %v1560 = vrot.slane %v1558, 1
      %v1561 = vsel %vm1417, %v1556, %v1560
      %v1563 = vshrl.u32 %v1379, 16
      %v1565 = vshll.u32 %v1379, 16
      %v1567 = vrot.slane %v1565, 1
      %v1568 = vor.u32 %v1563, %v1567
      %v1570 = vshll.u32 %v1396, 16
      %v1572 = vrot.slane %v1570, 1
      %v1573 = vsel %vm1417, %v1568, %v1572
      %v1575 = vshrl.u32 %v1380, 16
      %v1577 = vshll.u32 %v1380, 16
      %v1579 = vrot.slane %v1577, 1
      %v1580 = vor.u32 %v1575, %v1579
      %v1582 = vshll.u32 %v1397, 16
      %v1584 = vrot.slane %v1582, 1
      %v1585 = vsel %vm1417, %v1580, %v1584
      %v1587 = vshrl.u32 %v1381, 16
      %v1589 = vshll.u32 %v1381, 16
      %v1591 = vrot.slane %v1589, 1
      %v1592 = vor.u32 %v1587, %v1591
      %v1594 = vshll.u32 %v1398, 16
      %v1596 = vrot.slane %v1594, 1
      %v1597 = vsel %vm1417, %v1592, %v1596
      %v1599 = vshrl.u32 %v1382, 16
      %v1601 = vshll.u32 %v1382, 16
      %v1603 = vrot.slane %v1601, 1
      %v1604 = vor.u32 %v1599, %v1603
      %v1606 = vshll.u32 %v1399, 16
      %v1608 = vrot.slane %v1606, 1
      %v1609 = vsel %vm1417, %v1604, %v1608
      %s1626 = scalar_lea.vmem %s303, 64
      %v1627 = vld [vmem:[%s1626] sm:$0xf]
      %v1628 = vld [vmem:[%s1626 + $0x4] sm:$0xf]
      %v1629 = vld [vmem:[%s1626 + $0x8] sm:$0xf]
      %v1630 = vld [vmem:[%s1626 + $0xc] sm:$0xf]
      %v1631 = vld [vmem:[%s1626 + $0x10] sm:$0xf]
      %v1632 = vld [vmem:[%s1626 + $0x14] sm:$0xf]
      %v1633 = vld [vmem:[%s1626 + $0x18] sm:$0xf]
      %v1634 = vld [vmem:[%s1626 + $0x1c] sm:$0xf]
      %v1635 = vld [vmem:[%s1626 + $0x20] sm:$0xf]
      %v1636 = vld [vmem:[%s1626 + $0x24] sm:$0xf]
      %v1637 = vld [vmem:[%s1626 + $0x28] sm:$0xf]
      %v1638 = vld [vmem:[%s1626 + $0x2c] sm:$0xf]
      %v1639 = vld [vmem:[%s1626 + $0x30] sm:$0xf]
      %v1640 = vld [vmem:[%s1626 + $0x34] sm:$0xf]
      %v1641 = vld [vmem:[%s1626 + $0x38] sm:$0xf]
      %v1642 = vld [vmem:[%s1626 + $0x3c] sm:$0xf]
      %v1659 = vunpack.c.l.b16 %v1627
      %v1660 = vunpack.c.l.b16 %v1628
      %v1661 = vunpack.c.l.b16 %v1629
      %v1662 = vunpack.c.l.b16 %v1630
      %v1663 = vunpack.c.l.b16 %v1631
      %v1664 = vunpack.c.l.b16 %v1632
      %v1665 = vunpack.c.l.b16 %v1633
      %v1666 = vunpack.c.l.b16 %v1634
      %v1667 = vunpack.c.l.b16 %v1635
      %v1668 = vunpack.c.l.b16 %v1636
      %v1669 = vunpack.c.l.b16 %v1637
      %v1670 = vunpack.c.l.b16 %v1638
      %v1671 = vunpack.c.l.b16 %v1639
      %v1672 = vunpack.c.l.b16 %v1640
      %v1673 = vunpack.c.l.b16 %v1641
      %v1674 = vunpack.c.l.b16 %v1642
      %v1675 = vpack.c.b16 %v1660, %v1659
      %v1676 = vpack.c.b16 %v1662, %v1661
      %v1677 = vpack.c.b16 %v1664, %v1663
      %v1678 = vpack.c.b16 %v1666, %v1665
      %v1679 = vpack.c.b16 %v1668, %v1667
      %v1680 = vpack.c.b16 %v1670, %v1669
      %v1681 = vpack.c.b16 %v1672, %v1671
      %v1682 = vpack.c.b16 %v1674, %v1673
      %1691 = vmatpush.bf16.msra.mxu0 %v1682
      %1692 = vmatpush.bf16.msra.mxu0 %v1681
      %1693 = vmatpush.bf16.msra.mxu0 %v1680
      %1694 = vmatpush.bf16.msra.mxu0 %v1679
      %1695 = vmatpush.bf16.msra.mxu0 %v1678
      %1696 = vmatpush.bf16.msra.mxu0 %v1677
      %1697 = vmatpush.bf16.msra.mxu0 %v1676
      %1698 = vmatpush.bf16.msra.mxu0 %v1675
      %1699 = vmatmul.bf16.gmra.mxu0 %v1429
      %v1700 = vpop.f32.mrf.mxu0
      %v1701 = vadd.f32 0.0, %v1700
      %v1702 = vpop.f32.mrf.mxu0
      %v1703 = vadd.f32 0.0, %v1702
      %1704 = vmatmul.bf16.gmra.mxu0 %v1441
      %v1705 = vpop.f32.mrf.mxu0
      %v1706 = vadd.f32 0.0, %v1705
      %v1707 = vpop.f32.mrf.mxu0
      %v1708 = vadd.f32 0.0, %v1707
      %1709 = vmatmul.bf16.gmra.mxu0 %v1453
      %v1710 = vpop.f32.mrf.mxu0
      %v1711 = vadd.f32 0.0, %v1710
      %v1712 = vpop.f32.mrf.mxu0
      %v1713 = vadd.f32 0.0, %v1712
      %1714 = vmatmul.bf16.gmra.mxu0 %v1465
      %v1715 = vpop.f32.mrf.mxu0
      %v1716 = vadd.f32 0.0, %v1715
      %v1717 = vpop.f32.mrf.mxu0
      %v1718 = vadd.f32 0.0, %v1717
      %1719 = vmatmul.bf16.gmra.mxu0 %v1477
      %v1720 = vpop.f32.mrf.mxu0
      %v1721 = vadd.f32 0.0, %v1720
      %v1722 = vpop.f32.mrf.mxu0
      %v1723 = vadd.f32 0.0, %v1722
      %1724 = vmatmul.bf16.gmra.mxu0 %v1489
      %v1725 = vpop.f32.mrf.mxu0
      %v1726 = vadd.f32 0.0, %v1725
      %v1727 = vpop.f32.mrf.mxu0
      %v1728 = vadd.f32 0.0, %v1727
      %1729 = vmatmul.bf16.gmra.mxu0 %v1501
      %v1730 = vpop.f32.mrf.mxu0
      %v1731 = vadd.f32 0.0, %v1730
      %v1732 = vpop.f32.mrf.mxu0
      %v1733 = vadd.f32 0.0, %v1732
      %1734 = vmatmul.bf16.gmra.mxu0 %v1513
      %v1735 = vpop.f32.mrf.mxu0
      %v1736 = vadd.f32 0.0, %v1735
      %v1737 = vpop.f32.mrf.mxu0
      %v1738 = vadd.f32 0.0, %v1737
      %1739 = vmatmul.bf16.gmra.mxu0 %v1525
      %v1740 = vpop.f32.mrf.mxu0
      %v1741 = vadd.f32 0.0, %v1740
      %v1742 = vpop.f32.mrf.mxu0
      %v1743 = vadd.f32 0.0, %v1742
      %1744 = vmatmul.bf16.gmra.mxu0 %v1537
      %v1745 = vpop.f32.mrf.mxu0
      %v1746 = vadd.f32 0.0, %v1745
      %v1747 = vpop.f32.mrf.mxu0
      %v1748 = vadd.f32 0.0, %v1747
      %1749 = vmatmul.bf16.gmra.mxu0 %v1549
      %v1750 = vpop.f32.mrf.mxu0
      %v1751 = vadd.f32 0.0, %v1750
      %v1752 = vpop.f32.mrf.mxu0
      %v1753 = vadd.f32 0.0, %v1752
      %1754 = vmatmul.bf16.gmra.mxu0 %v1561
      %v1755 = vpop.f32.mrf.mxu0
      %v1756 = vadd.f32 0.0, %v1755
      %v1757 = vpop.f32.mrf.mxu0
      %v1758 = vadd.f32 0.0, %v1757
      %1759 = vmatmul.bf16.gmra.mxu0 %v1573
      %v1760 = vpop.f32.mrf.mxu0
      %v1761 = vadd.f32 0.0, %v1760
      %v1762 = vpop.f32.mrf.mxu0
      %v1763 = vadd.f32 0.0, %v1762
      %1764 = vmatmul.bf16.gmra.mxu0 %v1585
      %v1765 = vpop.f32.mrf.mxu0
      %v1766 = vadd.f32 0.0, %v1765
      %v1767 = vpop.f32.mrf.mxu0
      %v1768 = vadd.f32 0.0, %v1767
      %1769 = vmatmul.bf16.gmra.mxu0 %v1597
      %v1770 = vpop.f32.mrf.mxu0
      %v1771 = vadd.f32 0.0, %v1770
      %v1772 = vpop.f32.mrf.mxu0
      %v1773 = vadd.f32 0.0, %v1772
      %1774 = vmatmul.bf16.gmra.mxu0 %v1609
      %v1775 = vpop.f32.mrf.mxu0
      %v1776 = vadd.f32 0.0, %v1775
      %v1777 = vpop.f32.mrf.mxu0
      %v1778 = vadd.f32 0.0, %v1777
      %1779 = vdwg.mxu0
      %v1796 = vunpack.c.l.b16 %v1401
      %v1797 = vunpack.c.l.b16 %v1402
      %v1798 = vunpack.c.l.b16 %v1403
      %v1799 = vunpack.c.l.b16 %v1404
      %v1800 = vunpack.c.l.b16 %v1405
      %v1801 = vunpack.c.l.b16 %v1406
      %v1802 = vunpack.c.l.b16 %v1407
      %v1803 = vunpack.c.l.b16 %v1408
      %v1804 = vunpack.c.l.b16 %v1409
      %v1805 = vunpack.c.l.b16 %v1410
      %v1806 = vunpack.c.l.b16 %v1411
      %v1807 = vunpack.c.l.b16 %v1412
      %v1808 = vunpack.c.l.b16 %v1413
      %v1809 = vunpack.c.l.b16 %v1414
      %v1810 = vunpack.c.l.b16 %v1415
      %v1811 = vunpack.c.l.b16 %v1416
      %v1812 = vpack.c.b16 %v1797, %v1796
      %v1813 = vpack.c.b16 %v1799, %v1798
      %v1814 = vpack.c.b16 %v1801, %v1800
      %v1815 = vpack.c.b16 %v1803, %v1802
      %v1816 = vpack.c.b16 %v1805, %v1804
      %v1817 = vpack.c.b16 %v1807, %v1806
      %v1818 = vpack.c.b16 %v1809, %v1808
      %v1819 = vpack.c.b16 %v1811, %v1810
      %1828 = vmatpush.bf16.msra.mxu0 %v1819
      %1829 = vmatpush.bf16.msra.mxu0 %v1818
      %1830 = vmatpush.bf16.msra.mxu0 %v1817
      %1831 = vmatpush.bf16.msra.mxu0 %v1816
      %1832 = vmatpush.bf16.msra.mxu0 %v1815
      %1833 = vmatpush.bf16.msra.mxu0 %v1814
      %1834 = vmatpush.bf16.msra.mxu0 %v1813
      %1835 = vmatpush.bf16.msra.mxu0 %v1812
      %1836 = vmatmul.bf16.gmra.mxu0 %v1367
      %v1837 = vpop.f32.mrf.mxu0
      %v1838 = vadd.f32 %v1701, %v1837
      %v1839 = vpop.f32.mrf.mxu0
      %v1840 = vadd.f32 %v1703, %v1839
      %1841 = vmatmul.bf16.gmra.mxu0 %v1368
      %v1842 = vpop.f32.mrf.mxu0
      %v1843 = vadd.f32 %v1706, %v1842
      %v1844 = vpop.f32.mrf.mxu0
      %v1845 = vadd.f32 %v1708, %v1844
      %1846 = vmatmul.bf16.gmra.mxu0 %v1369
      %v1847 = vpop.f32.mrf.mxu0
      %v1848 = vadd.f32 %v1711, %v1847
      %v1849 = vpop.f32.mrf.mxu0
      %v1850 = vadd.f32 %v1713, %v1849
      %1851 = vmatmul.bf16.gmra.mxu0 %v1370
      %v1852 = vpop.f32.mrf.mxu0
      %v1853 = vadd.f32 %v1716, %v1852
      %v1854 = vpop.f32.mrf.mxu0
      %v1855 = vadd.f32 %v1718, %v1854
      %1856 = vmatmul.bf16.gmra.mxu0 %v1371
      %v1857 = vpop.f32.mrf.mxu0
      %v1858 = vadd.f32 %v1721, %v1857
      %v1859 = vpop.f32.mrf.mxu0
      %v1860 = vadd.f32 %v1723, %v1859
      %1861 = vmatmul.bf16.gmra.mxu0 %v1372
      %v1862 = vpop.f32.mrf.mxu0
      %v1863 = vadd.f32 %v1726, %v1862
      %v1864 = vpop.f32.mrf.mxu0
      %v1865 = vadd.f32 %v1728, %v1864
      %1866 = vmatmul.bf16.gmra.mxu0 %v1373
      %v1867 = vpop.f32.mrf.mxu0
      %v1868 = vadd.f32 %v1731, %v1867
      %v1869 = vpop.f32.mrf.mxu0
      %v1870 = vadd.f32 %v1733, %v1869
      %1871 = vmatmul.bf16.gmra.mxu0 %v1374
      %v1872 = vpop.f32.mrf.mxu0
      %v1873 = vadd.f32 %v1736, %v1872
      %v1874 = vpop.f32.mrf.mxu0
      %v1875 = vadd.f32 %v1738, %v1874
      %1876 = vmatmul.bf16.gmra.mxu0 %v1375
      %v1877 = vpop.f32.mrf.mxu0
      %v1878 = vadd.f32 %v1741, %v1877
      %v1879 = vpop.f32.mrf.mxu0
      %v1880 = vadd.f32 %v1743, %v1879
      %1881 = vmatmul.bf16.gmra.mxu0 %v1376
      %v1882 = vpop.f32.mrf.mxu0
      %v1883 = vadd.f32 %v1746, %v1882
      %v1884 = vpop.f32.mrf.mxu0
      %v1885 = vadd.f32 %v1748, %v1884
      %1886 = vmatmul.bf16.gmra.mxu0 %v1377
      %v1887 = vpop.f32.mrf.mxu0
      %v1888 = vadd.f32 %v1751, %v1887
      %v1889 = vpop.f32.mrf.mxu0
      %v1890 = vadd.f32 %v1753, %v1889
      %1891 = vmatmul.bf16.gmra.mxu0 %v1378
      %v1892 = vpop.f32.mrf.mxu0
      %v1893 = vadd.f32 %v1756, %v1892
      %v1894 = vpop.f32.mrf.mxu0
      %v1895 = vadd.f32 %v1758, %v1894
      %1896 = vmatmul.bf16.gmra.mxu0 %v1379
      %v1897 = vpop.f32.mrf.mxu0
      %v1898 = vadd.f32 %v1761, %v1897
      %v1899 = vpop.f32.mrf.mxu0
      %v1900 = vadd.f32 %v1763, %v1899
      %1901 = vmatmul.bf16.gmra.mxu0 %v1380
      %v1902 = vpop.f32.mrf.mxu0
      %v1903 = vadd.f32 %v1766, %v1902
      %v1904 = vpop.f32.mrf.mxu0
      %v1905 = vadd.f32 %v1768, %v1904
      %1906 = vmatmul.bf16.gmra.mxu0 %v1381
      %v1907 = vpop.f32.mrf.mxu0
      %v1908 = vadd.f32 %v1771, %v1907
      %v1909 = vpop.f32.mrf.mxu0
      %v1910 = vadd.f32 %v1773, %v1909
      %1911 = vmatmul.bf16.gmra.mxu0 %v1382
      %v1912 = vpop.f32.mrf.mxu0
      %v1913 = vadd.f32 %v1776, %v1912
      %v1914 = vpop.f32.mrf.mxu0
      %v1915 = vadd.f32 %v1778, %v1914
      %1916 = vdwg.mxu0
      %vm1949 = vcmask 1046528
      %v1950 = vrot.slane %v1367, 1
      %v1951 = vrot.slane %v1384, 1
      %v1952 = vsel %vm1949, %v1950, %v1951
      %v1953 = vrot.slane %v1368, 1
      %v1954 = vrot.slane %v1385, 1
      %v1955 = vsel %vm1949, %v1953, %v1954
      %v1956 = vrot.slane %v1369, 1
      %v1957 = vrot.slane %v1386, 1
      %v1958 = vsel %vm1949, %v1956, %v1957
      %v1959 = vrot.slane %v1370, 1
      %v1960 = vrot.slane %v1387, 1
      %v1961 = vsel %vm1949, %v1959, %v1960
      %v1962 = vrot.slane %v1371, 1
      %v1963 = vrot.slane %v1388, 1
      %v1964 = vsel %vm1949, %v1962, %v1963
      %v1965 = vrot.slane %v1372, 1
      %v1966 = vrot.slane %v1389, 1
      %v1967 = vsel %vm1949, %v1965, %v1966
      %v1968 = vrot.slane %v1373, 1
      %v1969 = vrot.slane %v1390, 1
      %v1970 = vsel %vm1949, %v1968, %v1969
      %v1971 = vrot.slane %v1374, 1
      %v1972 = vrot.slane %v1391, 1
      %v1973 = vsel %vm1949, %v1971, %v1972
      %v1974 = vrot.slane %v1375, 1
      %v1975 = vrot.slane %v1392, 1
      %v1976 = vsel %vm1949, %v1974, %v1975
      %v1977 = vrot.slane %v1376, 1
      %v1978 = vrot.slane %v1393, 1
      %v1979 = vsel %vm1949, %v1977, %v1978
      %v1980 = vrot.slane %v1377, 1
      %v1981 = vrot.slane %v1394, 1
      %v1982 = vsel %vm1949, %v1980, %v1981
      %v1983 = vrot.slane %v1378, 1
      %v1984 = vrot.slane %v1395, 1
      %v1985 = vsel %vm1949, %v1983, %v1984
      %v1986 = vrot.slane %v1379, 1
      %v1987 = vrot.slane %v1396, 1
      %v1988 = vsel %vm1949, %v1986, %v1987
      %v1989 = vrot.slane %v1380, 1
      %v1990 = vrot.slane %v1397, 1
      %v1991 = vsel %vm1949, %v1989, %v1990
      %v1992 = vrot.slane %v1381, 1
      %v1993 = vrot.slane %v1398, 1
      %v1994 = vsel %vm1949, %v1992, %v1993
      %v1995 = vrot.slane %v1382, 1
      %v1996 = vrot.slane %v1399, 1
      %v1997 = vsel %vm1949, %v1995, %v1996
      %s2014 = scalar_lea.vmem %s303, 128
      %v2015 = vld [vmem:[%s2014] sm:$0xf]
      %v2016 = vld [vmem:[%s2014 + $0x4] sm:$0xf]
      %v2017 = vld [vmem:[%s2014 + $0x8] sm:$0xf]
      %v2018 = vld [vmem:[%s2014 + $0xc] sm:$0xf]
      %v2019 = vld [vmem:[%s2014 + $0x10] sm:$0xf]
      %v2020 = vld [vmem:[%s2014 + $0x14] sm:$0xf]
      %v2021 = vld [vmem:[%s2014 + $0x18] sm:$0xf]
      %v2022 = vld [vmem:[%s2014 + $0x1c] sm:$0xf]
      %v2023 = vld [vmem:[%s2014 + $0x20] sm:$0xf]
      %v2024 = vld [vmem:[%s2014 + $0x24] sm:$0xf]
      %v2025 = vld [vmem:[%s2014 + $0x28] sm:$0xf]
      %v2026 = vld [vmem:[%s2014 + $0x2c] sm:$0xf]
      %v2027 = vld [vmem:[%s2014 + $0x30] sm:$0xf]
      %v2028 = vld [vmem:[%s2014 + $0x34] sm:$0xf]
      %v2029 = vld [vmem:[%s2014 + $0x38] sm:$0xf]
      %v2030 = vld [vmem:[%s2014 + $0x3c] sm:$0xf]
      %v2047 = vunpack.c.l.b16 %v2015
      %v2048 = vunpack.c.l.b16 %v2016
      %v2049 = vunpack.c.l.b16 %v2017
      %v2050 = vunpack.c.l.b16 %v2018
      %v2051 = vunpack.c.l.b16 %v2019
      %v2052 = vunpack.c.l.b16 %v2020
      %v2053 = vunpack.c.l.b16 %v2021
      %v2054 = vunpack.c.l.b16 %v2022
      %v2055 = vunpack.c.l.b16 %v2023
      %v2056 = vunpack.c.l.b16 %v2024
      %v2057 = vunpack.c.l.b16 %v2025
      %v2058 = vunpack.c.l.b16 %v2026
      %v2059 = vunpack.c.l.b16 %v2027
      %v2060 = vunpack.c.l.b16 %v2028
      %v2061 = vunpack.c.l.b16 %v2029
      %v2062 = vunpack.c.l.b16 %v2030
      %v2063 = vpack.c.b16 %v2048, %v2047
      %v2064 = vpack.c.b16 %v2050, %v2049
      %v2065 = vpack.c.b16 %v2052, %v2051
      %v2066 = vpack.c.b16 %v2054, %v2053
      %v2067 = vpack.c.b16 %v2056, %v2055
      %v2068 = vpack.c.b16 %v2058, %v2057
      %v2069 = vpack.c.b16 %v2060, %v2059
      %v2070 = vpack.c.b16 %v2062, %v2061
      %2079 = vmatpush.bf16.msra.mxu0 %v2070
      %2080 = vmatpush.bf16.msra.mxu0 %v2069
      %2081 = vmatpush.bf16.msra.mxu0 %v2068
      %2082 = vmatpush.bf16.msra.mxu0 %v2067
      %2083 = vmatpush.bf16.msra.mxu0 %v2066
      %2084 = vmatpush.bf16.msra.mxu0 %v2065
      %2085 = vmatpush.bf16.msra.mxu0 %v2064
      %2086 = vmatpush.bf16.msra.mxu0 %v2063
      %2087 = vmatmul.bf16.gmra.mxu0 %v1952
      %v2088 = vpop.f32.mrf.mxu0
      %v2089 = vadd.f32 0.0, %v2088
      %v2090 = vpop.f32.mrf.mxu0
      %v2091 = vadd.f32 0.0, %v2090
      %2092 = vmatmul.bf16.gmra.mxu0 %v1955
      %v2093 = vpop.f32.mrf.mxu0
      %v2094 = vadd.f32 0.0, %v2093
      %v2095 = vpop.f32.mrf.mxu0
      %v2096 = vadd.f32 0.0, %v2095
      %2097 = vmatmul.bf16.gmra.mxu0 %v1958
      %v2098 = vpop.f32.mrf.mxu0
      %v2099 = vadd.f32 0.0, %v2098
      %v2100 = vpop.f32.mrf.mxu0
      %v2101 = vadd.f32 0.0, %v2100
      %2102 = vmatmul.bf16.gmra.mxu0 %v1961
      %v2103 = vpop.f32.mrf.mxu0
      %v2104 = vadd.f32 0.0, %v2103
      %v2105 = vpop.f32.mrf.mxu0
      %v2106 = vadd.f32 0.0, %v2105
      %2107 = vmatmul.bf16.gmra.mxu0 %v1964
      %v2108 = vpop.f32.mrf.mxu0
      %v2109 = vadd.f32 0.0, %v2108
      %v2110 = vpop.f32.mrf.mxu0
      %v2111 = vadd.f32 0.0, %v2110
      %2112 = vmatmul.bf16.gmra.mxu0 %v1967
      %v2113 = vpop.f32.mrf.mxu0
      %v2114 = vadd.f32 0.0, %v2113
      %v2115 = vpop.f32.mrf.mxu0
      %v2116 = vadd.f32 0.0, %v2115
      %2117 = vmatmul.bf16.gmra.mxu0 %v1970
      %v2118 = vpop.f32.mrf.mxu0
      %v2119 = vadd.f32 0.0, %v2118
      %v2120 = vpop.f32.mrf.mxu0
      %v2121 = vadd.f32 0.0, %v2120
      %2122 = vmatmul.bf16.gmra.mxu0 %v1973
      %v2123 = vpop.f32.mrf.mxu0
      %v2124 = vadd.f32 0.0, %v2123
      %v2125 = vpop.f32.mrf.mxu0
      %v2126 = vadd.f32 0.0, %v2125
      %2127 = vmatmul.bf16.gmra.mxu0 %v1976
      %v2128 = vpop.f32.mrf.mxu0
      %v2129 = vadd.f32 0.0, %v2128
      %v2130 = vpop.f32.mrf.mxu0
      %v2131 = vadd.f32 0.0, %v2130
      %2132 = vmatmul.bf16.gmra.mxu0 %v1979
      %v2133 = vpop.f32.mrf.mxu0
      %v2134 = vadd.f32 0.0, %v2133
      %v2135 = vpop.f32.mrf.mxu0
      %v2136 = vadd.f32 0.0, %v2135
      %2137 = vmatmul.bf16.gmra.mxu0 %v1982
      %v2138 = vpop.f32.mrf.mxu0
      %v2139 = vadd.f32 0.0, %v2138
      %v2140 = vpop.f32.mrf.mxu0
      %v2141 = vadd.f32 0.0, %v2140
      %2142 = vmatmul.bf16.gmra.mxu0 %v1985
      %v2143 = vpop.f32.mrf.mxu0
      %v2144 = vadd.f32 0.0, %v2143
      %v2145 = vpop.f32.mrf.mxu0
      %v2146 = vadd.f32 0.0, %v2145
      %2147 = vmatmul.bf16.gmra.mxu0 %v1988
      %v2148 = vpop.f32.mrf.mxu0
      %v2149 = vadd.f32 0.0, %v2148
      %v2150 = vpop.f32.mrf.mxu0
      %v2151 = vadd.f32 0.0, %v2150
      %2152 = vmatmul.bf16.gmra.mxu0 %v1991
      %v2153 = vpop.f32.mrf.mxu0
      %v2154 = vadd.f32 0.0, %v2153
      %v2155 = vpop.f32.mrf.mxu0
      %v2156 = vadd.f32 0.0, %v2155
      %2157 = vmatmul.bf16.gmra.mxu0 %v1994
      %v2158 = vpop.f32.mrf.mxu0
      %v2159 = vadd.f32 0.0, %v2158
      %v2160 = vpop.f32.mrf.mxu0
      %v2161 = vadd.f32 0.0, %v2160
      %2162 = vmatmul.bf16.gmra.mxu0 %v1997
      %v2163 = vpop.f32.mrf.mxu0
      %v2164 = vadd.f32 0.0, %v2163
      %v2165 = vpop.f32.mrf.mxu0
      %v2166 = vadd.f32 0.0, %v2165
      %2167 = vdwg.mxu0
      %v2168 = vadd.f32 %v1838, %v2089
      %v2169 = vadd.f32 %v1840, %v2091
      %v2170 = vadd.f32 %v1843, %v2094
      %v2171 = vadd.f32 %v1845, %v2096
      %v2172 = vadd.f32 %v1848, %v2099
      %v2173 = vadd.f32 %v1850, %v2101
      %v2174 = vadd.f32 %v1853, %v2104
      %v2175 = vadd.f32 %v1855, %v2106
      %v2176 = vadd.f32 %v1858, %v2109
      %v2177 = vadd.f32 %v1860, %v2111
      %v2178 = vadd.f32 %v1863, %v2114
      %v2179 = vadd.f32 %v1865, %v2116
      %v2180 = vadd.f32 %v1868, %v2119
      %v2181 = vadd.f32 %v1870, %v2121
      %v2182 = vadd.f32 %v1873, %v2124
      %v2183 = vadd.f32 %v1875, %v2126
      %v2184 = vadd.f32 %v1878, %v2129
      %v2185 = vadd.f32 %v1880, %v2131
      %v2186 = vadd.f32 %v1883, %v2134
      %v2187 = vadd.f32 %v1885, %v2136
      %v2188 = vadd.f32 %v1888, %v2139
      %v2189 = vadd.f32 %v1890, %v2141
      %v2190 = vadd.f32 %v1893, %v2144
      %v2191 = vadd.f32 %v1895, %v2146
      %v2192 = vadd.f32 %v1898, %v2149
      %v2193 = vadd.f32 %v1900, %v2151
      %v2194 = vadd.f32 %v1903, %v2154
      %v2195 = vadd.f32 %v1905, %v2156
      %v2196 = vadd.f32 %v1908, %v2159
      %v2197 = vadd.f32 %v1910, %v2161
      %v2198 = vadd.f32 %v1913, %v2164
      %v2199 = vadd.f32 %v1915, %v2166
      %s2200 = scalar_lea.vmem %s303, 192
      %v2201 = vld [vmem:[%s2200] sm:$0xf]
      %v2202 = vld [vmem:[%s2200 + $0x4] sm:$0xf]
      %v2203 = vld [vmem:[%s2200 + $0x8] sm:$0xf]
      %v2204 = vld [vmem:[%s2200 + $0xc] sm:$0xf]
      %v2205 = vld [vmem:[%s2200 + $0x10] sm:$0xf]
      %v2206 = vld [vmem:[%s2200 + $0x14] sm:$0xf]
      %v2207 = vld [vmem:[%s2200 + $0x18] sm:$0xf]
      %v2208 = vld [vmem:[%s2200 + $0x1c] sm:$0xf]
      %v2209 = vld [vmem:[%s2200 + $0x20] sm:$0xf]
      %v2210 = vld [vmem:[%s2200 + $0x24] sm:$0xf]
      %v2211 = vld [vmem:[%s2200 + $0x28] sm:$0xf]
      %v2212 = vld [vmem:[%s2200 + $0x2c] sm:$0xf]
      %v2213 = vld [vmem:[%s2200 + $0x30] sm:$0xf]
      %v2214 = vld [vmem:[%s2200 + $0x34] sm:$0xf]
      %v2215 = vld [vmem:[%s2200 + $0x38] sm:$0xf]
      %v2216 = vld [vmem:[%s2200 + $0x3c] sm:$0xf]
      %v2233 = vunpack.c.l.b16 %v2201
      %v2234 = vunpack.c.l.b16 %v2202
      %v2235 = vunpack.c.l.b16 %v2203
      %v2236 = vunpack.c.l.b16 %v2204
      %v2237 = vunpack.c.l.b16 %v2205
      %v2238 = vunpack.c.l.b16 %v2206
      %v2239 = vunpack.c.l.b16 %v2207
      %v2240 = vunpack.c.l.b16 %v2208
      %v2241 = vunpack.c.l.b16 %v2209
      %v2242 = vunpack.c.l.b16 %v2210
      %v2243 = vunpack.c.l.b16 %v2211
      %v2244 = vunpack.c.l.b16 %v2212
      %v2245 = vunpack.c.l.b16 %v2213
      %v2246 = vunpack.c.l.b16 %v2214
      %v2247 = vunpack.c.l.b16 %v2215
      %v2248 = vunpack.c.l.b16 %v2216
      %v2249 = vpack.c.b16 %v2234, %v2233
      %v2250 = vpack.c.b16 %v2236, %v2235
      %v2251 = vpack.c.b16 %v2238, %v2237
      %v2252 = vpack.c.b16 %v2240, %v2239
      %v2253 = vpack.c.b16 %v2242, %v2241
      %v2254 = vpack.c.b16 %v2244, %v2243
      %v2255 = vpack.c.b16 %v2246, %v2245
      %v2256 = vpack.c.b16 %v2248, %v2247
      %2265 = vmatpush.bf16.msra.mxu0 %v2256
      %2266 = vmatpush.bf16.msra.mxu0 %v2255
      %2267 = vmatpush.bf16.msra.mxu0 %v2254
      %2268 = vmatpush.bf16.msra.mxu0 %v2253
      %2269 = vmatpush.bf16.msra.mxu0 %v2252
      %2270 = vmatpush.bf16.msra.mxu0 %v2251
      %2271 = vmatpush.bf16.msra.mxu0 %v2250
      %2272 = vmatpush.bf16.msra.mxu0 %v2249
      %2273 = vmatmul.bf16.gmra.mxu0 %v1368
      %v2274 = vpop.f32.mrf.mxu0
      %v2275 = vadd.f32 0.0, %v2274
      %v2276 = vpop.f32.mrf.mxu0
      %v2277 = vadd.f32 0.0, %v2276
      %2278 = vmatmul.bf16.gmra.mxu0 %v1369
      %v2279 = vpop.f32.mrf.mxu0
      %v2280 = vadd.f32 0.0, %v2279
      %v2281 = vpop.f32.mrf.mxu0
      %v2282 = vadd.f32 0.0, %v2281
      %2283 = vmatmul.bf16.gmra.mxu0 %v1370
      %v2284 = vpop.f32.mrf.mxu0
      %v2285 = vadd.f32 0.0, %v2284
      %v2286 = vpop.f32.mrf.mxu0
      %v2287 = vadd.f32 0.0, %v2286
      %2288 = vmatmul.bf16.gmra.mxu0 %v1371
      %v2289 = vpop.f32.mrf.mxu0
      %v2290 = vadd.f32 0.0, %v2289
      %v2291 = vpop.f32.mrf.mxu0
      %v2292 = vadd.f32 0.0, %v2291
      %2293 = vmatmul.bf16.gmra.mxu0 %v1372
      %v2294 = vpop.f32.mrf.mxu0
      %v2295 = vadd.f32 0.0, %v2294
      %v2296 = vpop.f32.mrf.mxu0
      %v2297 = vadd.f32 0.0, %v2296
      %2298 = vmatmul.bf16.gmra.mxu0 %v1373
      %v2299 = vpop.f32.mrf.mxu0
      %v2300 = vadd.f32 0.0, %v2299
      %v2301 = vpop.f32.mrf.mxu0
      %v2302 = vadd.f32 0.0, %v2301
      %2303 = vmatmul.bf16.gmra.mxu0 %v1374
      %v2304 = vpop.f32.mrf.mxu0
      %v2305 = vadd.f32 0.0, %v2304
      %v2306 = vpop.f32.mrf.mxu0
      %v2307 = vadd.f32 0.0, %v2306
      %2308 = vmatmul.bf16.gmra.mxu0 %v1375
      %v2309 = vpop.f32.mrf.mxu0
      %v2310 = vadd.f32 0.0, %v2309
      %v2311 = vpop.f32.mrf.mxu0
      %v2312 = vadd.f32 0.0, %v2311
      %2313 = vmatmul.bf16.gmra.mxu0 %v1376
      %v2314 = vpop.f32.mrf.mxu0
      %v2315 = vadd.f32 0.0, %v2314
      %v2316 = vpop.f32.mrf.mxu0
      %v2317 = vadd.f32 0.0, %v2316
      %2318 = vmatmul.bf16.gmra.mxu0 %v1377
      %v2319 = vpop.f32.mrf.mxu0
      %v2320 = vadd.f32 0.0, %v2319
      %v2321 = vpop.f32.mrf.mxu0
      %v2322 = vadd.f32 0.0, %v2321
      %2323 = vmatmul.bf16.gmra.mxu0 %v1378
      %v2324 = vpop.f32.mrf.mxu0
      %v2325 = vadd.f32 0.0, %v2324
      %v2326 = vpop.f32.mrf.mxu0
      %v2327 = vadd.f32 0.0, %v2326
      %2328 = vmatmul.bf16.gmra.mxu0 %v1379
      %v2329 = vpop.f32.mrf.mxu0
      %v2330 = vadd.f32 0.0, %v2329
      %v2331 = vpop.f32.mrf.mxu0
      %v2332 = vadd.f32 0.0, %v2331
      %2333 = vmatmul.bf16.gmra.mxu0 %v1380
      %v2334 = vpop.f32.mrf.mxu0
      %v2335 = vadd.f32 0.0, %v2334
      %v2336 = vpop.f32.mrf.mxu0
      %v2337 = vadd.f32 0.0, %v2336
      %2338 = vmatmul.bf16.gmra.mxu0 %v1381
      %v2339 = vpop.f32.mrf.mxu0
      %v2340 = vadd.f32 0.0, %v2339
      %v2341 = vpop.f32.mrf.mxu0
      %v2342 = vadd.f32 0.0, %v2341
      %2343 = vmatmul.bf16.gmra.mxu0 %v1382
      %v2344 = vpop.f32.mrf.mxu0
      %v2345 = vadd.f32 0.0, %v2344
      %v2346 = vpop.f32.mrf.mxu0
      %v2347 = vadd.f32 0.0, %v2346
      %2348 = vmatmul.bf16.gmra.mxu0 %v1383
      %v2349 = vpop.f32.mrf.mxu0
      %v2350 = vadd.f32 0.0, %v2349
      %v2351 = vpop.f32.mrf.mxu0
      %v2352 = vadd.f32 0.0, %v2351
      %2353 = vdwg.mxu0
      %v2354 = vadd.f32 %v2168, %v2275
      %v2355 = vadd.f32 %v2169, %v2277
      %v2356 = vadd.f32 %v2170, %v2280
      %v2357 = vadd.f32 %v2171, %v2282
      %v2358 = vadd.f32 %v2172, %v2285
      %v2359 = vadd.f32 %v2173, %v2287
      %v2360 = vadd.f32 %v2174, %v2290
      %v2361 = vadd.f32 %v2175, %v2292
      %v2362 = vadd.f32 %v2176, %v2295
      %v2363 = vadd.f32 %v2177, %v2297
      %v2364 = vadd.f32 %v2178, %v2300
      %v2365 = vadd.f32 %v2179, %v2302
      %v2366 = vadd.f32 %v2180, %v2305
      %v2367 = vadd.f32 %v2181, %v2307
      %v2368 = vadd.f32 %v2182, %v2310
      %v2369 = vadd.f32 %v2183, %v2312
      %v2370 = vadd.f32 %v2184, %v2315
      %v2371 = vadd.f32 %v2185, %v2317
      %v2372 = vadd.f32 %v2186, %v2320
      %v2373 = vadd.f32 %v2187, %v2322
      %v2374 = vadd.f32 %v2188, %v2325
      %v2375 = vadd.f32 %v2189, %v2327
      %v2376 = vadd.f32 %v2190, %v2330
      %v2377 = vadd.f32 %v2191, %v2332
      %v2378 = vadd.f32 %v2192, %v2335
      %v2379 = vadd.f32 %v2193, %v2337
      %v2380 = vadd.f32 %v2194, %v2340
      %v2381 = vadd.f32 %v2195, %v2342
      %v2382 = vadd.f32 %v2196, %v2345
      %v2383 = vadd.f32 %v2197, %v2347
      %v2384 = vadd.f32 %v2198, %v2350
      %v2385 = vadd.f32 %v2199, %v2352
      %v2387 = vshrl.u32 %v1383, 16
      %v2389 = vshll.u32 %v1383, 16
      %v2391 = vrot.slane %v2389, 1
      %v2392 = vor.u32 %v2387, %v2391
      %v2394 = vshll.u32 %v1400, 16
      %v2396 = vrot.slane %v2394, 1
      %v2397 = vsel %vm1417, %v2392, %v2396
      %s2399 = scalar_lea.vmem %s303, 256
      %v2400 = vld [vmem:[%s2399] sm:$0xf]
      %v2401 = vld [vmem:[%s2399 + $0x4] sm:$0xf]
      %v2402 = vld [vmem:[%s2399 + $0x8] sm:$0xf]
      %v2403 = vld [vmem:[%s2399 + $0xc] sm:$0xf]
      %v2404 = vld [vmem:[%s2399 + $0x10] sm:$0xf]
      %v2405 = vld [vmem:[%s2399 + $0x14] sm:$0xf]
      %v2406 = vld [vmem:[%s2399 + $0x18] sm:$0xf]
      %v2407 = vld [vmem:[%s2399 + $0x1c] sm:$0xf]
      %v2408 = vld [vmem:[%s2399 + $0x20] sm:$0xf]
      %v2409 = vld [vmem:[%s2399 + $0x24] sm:$0xf]
      %v2410 = vld [vmem:[%s2399 + $0x28] sm:$0xf]
      %v2411 = vld [vmem:[%s2399 + $0x2c] sm:$0xf]
      %v2412 = vld [vmem:[%s2399 + $0x30] sm:$0xf]
      %v2413 = vld [vmem:[%s2399 + $0x34] sm:$0xf]
      %v2414 = vld [vmem:[%s2399 + $0x38] sm:$0xf]
      %v2415 = vld [vmem:[%s2399 + $0x3c] sm:$0xf]
      %v2432 = vunpack.c.l.b16 %v2400
      %v2433 = vunpack.c.l.b16 %v2401
      %v2434 = vunpack.c.l.b16 %v2402
      %v2435 = vunpack.c.l.b16 %v2403
      %v2436 = vunpack.c.l.b16 %v2404
      %v2437 = vunpack.c.l.b16 %v2405
      %v2438 = vunpack.c.l.b16 %v2406
      %v2439 = vunpack.c.l.b16 %v2407
      %v2440 = vunpack.c.l.b16 %v2408
      %v2441 = vunpack.c.l.b16 %v2409
      %v2442 = vunpack.c.l.b16 %v2410
      %v2443 = vunpack.c.l.b16 %v2411
      %v2444 = vunpack.c.l.b16 %v2412
      %v2445 = vunpack.c.l.b16 %v2413
      %v2446 = vunpack.c.l.b16 %v2414
      %v2447 = vunpack.c.l.b16 %v2415
      %v2448 = vpack.c.b16 %v2433, %v2432
      %v2449 = vpack.c.b16 %v2435, %v2434
      %v2450 = vpack.c.b16 %v2437, %v2436
      %v2451 = vpack.c.b16 %v2439, %v2438
      %v2452 = vpack.c.b16 %v2441, %v2440
      %v2453 = vpack.c.b16 %v2443, %v2442
      %v2454 = vpack.c.b16 %v2445, %v2444
      %v2455 = vpack.c.b16 %v2447, %v2446
      %2464 = vmatpush.bf16.msra.mxu0 %v2455
      %2465 = vmatpush.bf16.msra.mxu0 %v2454
      %2466 = vmatpush.bf16.msra.mxu0 %v2453
      %2467 = vmatpush.bf16.msra.mxu0 %v2452
      %2468 = vmatpush.bf16.msra.mxu0 %v2451
      %2469 = vmatpush.bf16.msra.mxu0 %v2450
      %2470 = vmatpush.bf16.msra.mxu0 %v2449
      %2471 = vmatpush.bf16.msra.mxu0 %v2448
      %2472 = vmatmul.bf16.gmra.mxu0 %v1441
      %v2473 = vpop.f32.mrf.mxu0
      %v2474 = vadd.f32 0.0, %v2473
      %v2475 = vpop.f32.mrf.mxu0
      %v2476 = vadd.f32 0.0, %v2475
      %2477 = vmatmul.bf16.gmra.mxu0 %v1453
      %v2478 = vpop.f32.mrf.mxu0
      %v2479 = vadd.f32 0.0, %v2478
      %v2480 = vpop.f32.mrf.mxu0
      %v2481 = vadd.f32 0.0, %v2480
      %2482 = vmatmul.bf16.gmra.mxu0 %v1465
      %v2483 = vpop.f32.mrf.mxu0
      %v2484 = vadd.f32 0.0, %v2483
      %v2485 = vpop.f32.mrf.mxu0
      %v2486 = vadd.f32 0.0, %v2485
      %2487 = vmatmul.bf16.gmra.mxu0 %v1477
      %v2488 = vpop.f32.mrf.mxu0
      %v2489 = vadd.f32 0.0, %v2488
      %v2490 = vpop.f32.mrf.mxu0
      %v2491 = vadd.f32 0.0, %v2490
      %2492 = vmatmul.bf16.gmra.mxu0 %v1489
      %v2493 = vpop.f32.mrf.mxu0
      %v2494 = vadd.f32 0.0, %v2493
      %v2495 = vpop.f32.mrf.mxu0
      %v2496 = vadd.f32 0.0, %v2495
      %2497 = vmatmul.bf16.gmra.mxu0 %v1501
      %v2498 = vpop.f32.mrf.mxu0
      %v2499 = vadd.f32 0.0, %v2498
      %v2500 = vpop.f32.mrf.mxu0
      %v2501 = vadd.f32 0.0, %v2500
      %2502 = vmatmul.bf16.gmra.mxu0 %v1513
      %v2503 = vpop.f32.mrf.mxu0
      %v2504 = vadd.f32 0.0, %v2503
      %v2505 = vpop.f32.mrf.mxu0
      %v2506 = vadd.f32 0.0, %v2505
      %2507 = vmatmul.bf16.gmra.mxu0 %v1525
      %v2508 = vpop.f32.mrf.mxu0
      %v2509 = vadd.f32 0.0, %v2508
      %v2510 = vpop.f32.mrf.mxu0
      %v2511 = vadd.f32 0.0, %v2510
      %2512 = vmatmul.bf16.gmra.mxu0 %v1537
      %v2513 = vpop.f32.mrf.mxu0
      %v2514 = vadd.f32 0.0, %v2513
      %v2515 = vpop.f32.mrf.mxu0
      %v2516 = vadd.f32 0.0, %v2515
      %2517 = vmatmul.bf16.gmra.mxu0 %v1549
      %v2518 = vpop.f32.mrf.mxu0
      %v2519 = vadd.f32 0.0, %v2518
      %v2520 = vpop.f32.mrf.mxu0
      %v2521 = vadd.f32 0.0, %v2520
      %2522 = vmatmul.bf16.gmra.mxu0 %v1561
      %v2523 = vpop.f32.mrf.mxu0
      %v2524 = vadd.f32 0.0, %v2523
      %v2525 = vpop.f32.mrf.mxu0
      %v2526 = vadd.f32 0.0, %v2525
      %2527 = vmatmul.bf16.gmra.mxu0 %v1573
      %v2528 = vpop.f32.mrf.mxu0
      %v2529 = vadd.f32 0.0, %v2528
      %v2530 = vpop.f32.mrf.mxu0
      %v2531 = vadd.f32 0.0, %v2530
      %2532 = vmatmul.bf16.gmra.mxu0 %v1585
      %v2533 = vpop.f32.mrf.mxu0
      %v2534 = vadd.f32 0.0, %v2533
      %v2535 = vpop.f32.mrf.mxu0
      %v2536 = vadd.f32 0.0, %v2535
      %2537 = vmatmul.bf16.gmra.mxu0 %v1597
      %v2538 = vpop.f32.mrf.mxu0
      %v2539 = vadd.f32 0.0, %v2538
      %v2540 = vpop.f32.mrf.mxu0
      %v2541 = vadd.f32 0.0, %v2540
      %2542 = vmatmul.bf16.gmra.mxu0 %v1609
      %v2543 = vpop.f32.mrf.mxu0
      %v2544 = vadd.f32 0.0, %v2543
      %v2545 = vpop.f32.mrf.mxu0
      %v2546 = vadd.f32 0.0, %v2545
      %2547 = vmatmul.bf16.gmra.mxu0 %v2397
      %v2548 = vpop.f32.mrf.mxu0
      %v2549 = vadd.f32 0.0, %v2548
      %v2550 = vpop.f32.mrf.mxu0
      %v2551 = vadd.f32 0.0, %v2550
      %2552 = vdwg.mxu0
      %v2553 = vadd.f32 %v2354, %v2474
      %v2554 = vadd.f32 %v2355, %v2476
      %v2555 = vadd.f32 %v2356, %v2479
      %v2556 = vadd.f32 %v2357, %v2481
      %v2557 = vadd.f32 %v2358, %v2484
      %v2558 = vadd.f32 %v2359, %v2486
      %v2559 = vadd.f32 %v2360, %v2489
      %v2560 = vadd.f32 %v2361, %v2491
      %v2561 = vadd.f32 %v2362, %v2494
      %v2562 = vadd.f32 %v2363, %v2496
      %v2563 = vadd.f32 %v2364, %v2499
      %v2564 = vadd.f32 %v2365, %v2501
      %v2565 = vadd.f32 %v2366, %v2504
      %v2566 = vadd.f32 %v2367, %v2506
      %v2567 = vadd.f32 %v2368, %v2509
      %v2568 = vadd.f32 %v2369, %v2511
      %v2569 = vadd.f32 %v2370, %v2514
      %v2570 = vadd.f32 %v2371, %v2516
      %v2571 = vadd.f32 %v2372, %v2519
      %v2572 = vadd.f32 %v2373, %v2521
      %v2573 = vadd.f32 %v2374, %v2524
      %v2574 = vadd.f32 %v2375, %v2526
      %v2575 = vadd.f32 %v2376, %v2529
      %v2576 = vadd.f32 %v2377, %v2531
      %v2577 = vadd.f32 %v2378, %v2534
      %v2578 = vadd.f32 %v2379, %v2536
      %v2579 = vadd.f32 %v2380, %v2539
      %v2580 = vadd.f32 %v2381, %v2541
      %v2581 = vadd.f32 %v2382, %v2544
      %v2582 = vadd.f32 %v2383, %v2546
      %v2583 = vadd.f32 %v2384, %v2549
      %v2584 = vadd.f32 %v2385, %v2551
      %v2587 = vrot.slane %v1383, 1
      %v2588 = vrot.slane %v1400, 1
      %v2589 = vsel %vm1949, %v2587, %v2588
      %s2591 = scalar_lea.vmem %s303, 320
      %v2592 = vld [vmem:[%s2591] sm:$0xf]
      %v2593 = vld [vmem:[%s2591 + $0x4] sm:$0xf]
      %v2594 = vld [vmem:[%s2591 + $0x8] sm:$0xf]
      %v2595 = vld [vmem:[%s2591 + $0xc] sm:$0xf]
      %v2596 = vld [vmem:[%s2591 + $0x10] sm:$0xf]
      %v2597 = vld [vmem:[%s2591 + $0x14] sm:$0xf]
      %v2598 = vld [vmem:[%s2591 + $0x18] sm:$0xf]
      %v2599 = vld [vmem:[%s2591 + $0x1c] sm:$0xf]
      %v2600 = vld [vmem:[%s2591 + $0x20] sm:$0xf]
      %v2601 = vld [vmem:[%s2591 + $0x24] sm:$0xf]
      %v2602 = vld [vmem:[%s2591 + $0x28] sm:$0xf]
      %v2603 = vld [vmem:[%s2591 + $0x2c] sm:$0xf]
      %v2604 = vld [vmem:[%s2591 + $0x30] sm:$0xf]
      %v2605 = vld [vmem:[%s2591 + $0x34] sm:$0xf]
      %v2606 = vld [vmem:[%s2591 + $0x38] sm:$0xf]
      %v2607 = vld [vmem:[%s2591 + $0x3c] sm:$0xf]
      %v2624 = vunpack.c.l.b16 %v2592
      %v2625 = vunpack.c.l.b16 %v2593
      %v2626 = vunpack.c.l.b16 %v2594
      %v2627 = vunpack.c.l.b16 %v2595
      %v2628 = vunpack.c.l.b16 %v2596
      %v2629 = vunpack.c.l.b16 %v2597
      %v2630 = vunpack.c.l.b16 %v2598
      %v2631 = vunpack.c.l.b16 %v2599
      %v2632 = vunpack.c.l.b16 %v2600
      %v2633 = vunpack.c.l.b16 %v2601
      %v2634 = vunpack.c.l.b16 %v2602
      %v2635 = vunpack.c.l.b16 %v2603
      %v2636 = vunpack.c.l.b16 %v2604
      %v2637 = vunpack.c.l.b16 %v2605
      %v2638 = vunpack.c.l.b16 %v2606
      %v2639 = vunpack.c.l.b16 %v2607
      %v2640 = vpack.c.b16 %v2625, %v2624
      %v2641 = vpack.c.b16 %v2627, %v2626
      %v2642 = vpack.c.b16 %v2629, %v2628
      %v2643 = vpack.c.b16 %v2631, %v2630
      %v2644 = vpack.c.b16 %v2633, %v2632
      %v2645 = vpack.c.b16 %v2635, %v2634
      %v2646 = vpack.c.b16 %v2637, %v2636
      %v2647 = vpack.c.b16 %v2639, %v2638
      %2656 = vmatpush.bf16.msra.mxu0 %v2647
      %2657 = vmatpush.bf16.msra.mxu0 %v2646
      %2658 = vmatpush.bf16.msra.mxu0 %v2645
      %2659 = vmatpush.bf16.msra.mxu0 %v2644
      %2660 = vmatpush.bf16.msra.mxu0 %v2643
      %2661 = vmatpush.bf16.msra.mxu0 %v2642
      %2662 = vmatpush.bf16.msra.mxu0 %v2641
      %2663 = vmatpush.bf16.msra.mxu0 %v2640
      %2664 = vmatmul.bf16.gmra.mxu0 %v1955
      %v2665 = vpop.f32.mrf.mxu0
      %v2666 = vadd.f32 0.0, %v2665
      %v2667 = vpop.f32.mrf.mxu0
      %v2668 = vadd.f32 0.0, %v2667
      %2669 = vmatmul.bf16.gmra.mxu0 %v1958
      %v2670 = vpop.f32.mrf.mxu0
      %v2671 = vadd.f32 0.0, %v2670
      %v2672 = vpop.f32.mrf.mxu0
      %v2673 = vadd.f32 0.0, %v2672
      %2674 = vmatmul.bf16.gmra.mxu0 %v1961
      %v2675 = vpop.f32.mrf.mxu0
      %v2676 = vadd.f32 0.0, %v2675
      %v2677 = vpop.f32.mrf.mxu0
      %v2678 = vadd.f32 0.0, %v2677
      %2679 = vmatmul.bf16.gmra.mxu0 %v1964
      %v2680 = vpop.f32.mrf.mxu0
      %v2681 = vadd.f32 0.0, %v2680
      %v2682 = vpop.f32.mrf.mxu0
      %v2683 = vadd.f32 0.0, %v2682
      %2684 = vmatmul.bf16.gmra.mxu0 %v1967
      %v2685 = vpop.f32.mrf.mxu0
      %v2686 = vadd.f32 0.0, %v2685
      %v2687 = vpop.f32.mrf.mxu0
      %v2688 = vadd.f32 0.0, %v2687
      %2689 = vmatmul.bf16.gmra.mxu0 %v1970
      %v2690 = vpop.f32.mrf.mxu0
      %v2691 = vadd.f32 0.0, %v2690
      %v2692 = vpop.f32.mrf.mxu0
      %v2693 = vadd.f32 0.0, %v2692
      %2694 = vmatmul.bf16.gmra.mxu0 %v1973
      %v2695 = vpop.f32.mrf.mxu0
      %v2696 = vadd.f32 0.0, %v2695
      %v2697 = vpop.f32.mrf.mxu0
      %v2698 = vadd.f32 0.0, %v2697
      %2699 = vmatmul.bf16.gmra.mxu0 %v1976
      %v2700 = vpop.f32.mrf.mxu0
      %v2701 = vadd.f32 0.0, %v2700
      %v2702 = vpop.f32.mrf.mxu0
      %v2703 = vadd.f32 0.0, %v2702
      %2704 = vmatmul.bf16.gmra.mxu0 %v1979
      %v2705 = vpop.f32.mrf.mxu0
      %v2706 = vadd.f32 0.0, %v2705
      %v2707 = vpop.f32.mrf.mxu0
      %v2708 = vadd.f32 0.0, %v2707
      %2709 = vmatmul.bf16.gmra.mxu0 %v1982
      %v2710 = vpop.f32.mrf.mxu0
      %v2711 = vadd.f32 0.0, %v2710
      %v2712 = vpop.f32.mrf.mxu0
      %v2713 = vadd.f32 0.0, %v2712
      %2714 = vmatmul.bf16.gmra.mxu0 %v1985
      %v2715 = vpop.f32.mrf.mxu0
      %v2716 = vadd.f32 0.0, %v2715
      %v2717 = vpop.f32.mrf.mxu0
      %v2718 = vadd.f32 0.0, %v2717
      %2719 = vmatmul.bf16.gmra.mxu0 %v1988
      %v2720 = vpop.f32.mrf.mxu0
      %v2721 = vadd.f32 0.0, %v2720
      %v2722 = vpop.f32.mrf.mxu0
      %v2723 = vadd.f32 0.0, %v2722
      %2724 = vmatmul.bf16.gmra.mxu0 %v1991
      %v2725 = vpop.f32.mrf.mxu0
      %v2726 = vadd.f32 0.0, %v2725
      %v2727 = vpop.f32.mrf.mxu0
      %v2728 = vadd.f32 0.0, %v2727
      %2729 = vmatmul.bf16.gmra.mxu0 %v1994
      %v2730 = vpop.f32.mrf.mxu0
      %v2731 = vadd.f32 0.0, %v2730
      %v2732 = vpop.f32.mrf.mxu0
      %v2733 = vadd.f32 0.0, %v2732
      %2734 = vmatmul.bf16.gmra.mxu0 %v1997
      %v2735 = vpop.f32.mrf.mxu0
      %v2736 = vadd.f32 0.0, %v2735
      %v2737 = vpop.f32.mrf.mxu0
      %v2738 = vadd.f32 0.0, %v2737
      %2739 = vmatmul.bf16.gmra.mxu0 %v2589
      %v2740 = vpop.f32.mrf.mxu0
      %v2741 = vadd.f32 0.0, %v2740
      %v2742 = vpop.f32.mrf.mxu0
      %v2743 = vadd.f32 0.0, %v2742
      %2744 = vdwg.mxu0
      %v2745 = vadd.f32 %v2553, %v2666
      %v2746 = vadd.f32 %v2554, %v2668
      %v2747 = vadd.f32 %v2555, %v2671
      %v2748 = vadd.f32 %v2556, %v2673
      %v2749 = vadd.f32 %v2557, %v2676
      %v2750 = vadd.f32 %v2558, %v2678
      %v2751 = vadd.f32 %v2559, %v2681
      %v2752 = vadd.f32 %v2560, %v2683
      %v2753 = vadd.f32 %v2561, %v2686
      %v2754 = vadd.f32 %v2562, %v2688
      %v2755 = vadd.f32 %v2563, %v2691
      %v2756 = vadd.f32 %v2564, %v2693
      %v2757 = vadd.f32 %v2565, %v2696
      %v2758 = vadd.f32 %v2566, %v2698
      %v2759 = vadd.f32 %v2567, %v2701
      %v2760 = vadd.f32 %v2568, %v2703
      %v2761 = vadd.f32 %v2569, %v2706
      %v2762 = vadd.f32 %v2570, %v2708
      %v2763 = vadd.f32 %v2571, %v2711
      %v2764 = vadd.f32 %v2572, %v2713
      %v2765 = vadd.f32 %v2573, %v2716
      %v2766 = vadd.f32 %v2574, %v2718
      %v2767 = vadd.f32 %v2575, %v2721
      %v2768 = vadd.f32 %v2576, %v2723
      %v2769 = vadd.f32 %v2577, %v2726
      %v2770 = vadd.f32 %v2578, %v2728
      %v2771 = vadd.f32 %v2579, %v2731
      %v2772 = vadd.f32 %v2580, %v2733
      %v2773 = vadd.f32 %v2581, %v2736
      %v2774 = vadd.f32 %v2582, %v2738
      %v2775 = vadd.f32 %v2583, %v2741
      %v2776 = vadd.f32 %v2584, %v2743
      %s2777 = scalar_lea.vmem %s303, 384
      %v2778 = vld [vmem:[%s2777] sm:$0xf]
      %v2779 = vld [vmem:[%s2777 + $0x4] sm:$0xf]
      %v2780 = vld [vmem:[%s2777 + $0x8] sm:$0xf]
      %v2781 = vld [vmem:[%s2777 + $0xc] sm:$0xf]
      %v2782 = vld [vmem:[%s2777 + $0x10] sm:$0xf]
      %v2783 = vld [vmem:[%s2777 + $0x14] sm:$0xf]
      %v2784 = vld [vmem:[%s2777 + $0x18] sm:$0xf]
      %v2785 = vld [vmem:[%s2777 + $0x1c] sm:$0xf]
      %v2786 = vld [vmem:[%s2777 + $0x20] sm:$0xf]
      %v2787 = vld [vmem:[%s2777 + $0x24] sm:$0xf]
      %v2788 = vld [vmem:[%s2777 + $0x28] sm:$0xf]
      %v2789 = vld [vmem:[%s2777 + $0x2c] sm:$0xf]
      %v2790 = vld [vmem:[%s2777 + $0x30] sm:$0xf]
      %v2791 = vld [vmem:[%s2777 + $0x34] sm:$0xf]
      %v2792 = vld [vmem:[%s2777 + $0x38] sm:$0xf]
      %v2793 = vld [vmem:[%s2777 + $0x3c] sm:$0xf]
      %v2810 = vunpack.c.l.b16 %v2778
      %v2811 = vunpack.c.l.b16 %v2779
      %v2812 = vunpack.c.l.b16 %v2780
      %v2813 = vunpack.c.l.b16 %v2781
      %v2814 = vunpack.c.l.b16 %v2782
      %v2815 = vunpack.c.l.b16 %v2783
      %v2816 = vunpack.c.l.b16 %v2784
      %v2817 = vunpack.c.l.b16 %v2785
      %v2818 = vunpack.c.l.b16 %v2786
      %v2819 = vunpack.c.l.b16 %v2787
      %v2820 = vunpack.c.l.b16 %v2788
      %v2821 = vunpack.c.l.b16 %v2789
      %v2822 = vunpack.c.l.b16 %v2790
      %v2823 = vunpack.c.l.b16 %v2791
      %v2824 = vunpack.c.l.b16 %v2792
      %v2825 = vunpack.c.l.b16 %v2793
      %v2826 = vpack.c.b16 %v2811, %v2810
      %v2827 = vpack.c.b16 %v2813, %v2812
      %v2828 = vpack.c.b16 %v2815, %v2814
      %v2829 = vpack.c.b16 %v2817, %v2816
      %v2830 = vpack.c.b16 %v2819, %v2818
      %v2831 = vpack.c.b16 %v2821, %v2820
      %v2832 = vpack.c.b16 %v2823, %v2822
      %v2833 = vpack.c.b16 %v2825, %v2824
      %2842 = vmatpush.bf16.msra.mxu0 %v2833
      %2843 = vmatpush.bf16.msra.mxu0 %v2832
      %2844 = vmatpush.bf16.msra.mxu0 %v2831
      %2845 = vmatpush.bf16.msra.mxu0 %v2830
      %2846 = vmatpush.bf16.msra.mxu0 %v2829
      %2847 = vmatpush.bf16.msra.mxu0 %v2828
      %2848 = vmatpush.bf16.msra.mxu0 %v2827
      %2849 = vmatpush.bf16.msra.mxu0 %v2826
      %2850 = vmatmul.bf16.gmra.mxu0 %v1369
      %v2851 = vpop.f32.mrf.mxu0
      %v2852 = vadd.f32 0.0, %v2851
      %v2853 = vpop.f32.mrf.mxu0
      %v2854 = vadd.f32 0.0, %v2853
      %2855 = vmatmul.bf16.gmra.mxu0 %v1370
      %v2856 = vpop.f32.mrf.mxu0
      %v2857 = vadd.f32 0.0, %v2856
      %v2858 = vpop.f32.mrf.mxu0
      %v2859 = vadd.f32 0.0, %v2858
      %2860 = vmatmul.bf16.gmra.mxu0 %v1371
      %v2861 = vpop.f32.mrf.mxu0
      %v2862 = vadd.f32 0.0, %v2861
      %v2863 = vpop.f32.mrf.mxu0
      %v2864 = vadd.f32 0.0, %v2863
      %2865 = vmatmul.bf16.gmra.mxu0 %v1372
      %v2866 = vpop.f32.mrf.mxu0
      %v2867 = vadd.f32 0.0, %v2866
      %v2868 = vpop.f32.mrf.mxu0
      %v2869 = vadd.f32 0.0, %v2868
      %2870 = vmatmul.bf16.gmra.mxu0 %v1373
      %v2871 = vpop.f32.mrf.mxu0
      %v2872 = vadd.f32 0.0, %v2871
      %v2873 = vpop.f32.mrf.mxu0
      %v2874 = vadd.f32 0.0, %v2873
      %2875 = vmatmul.bf16.gmra.mxu0 %v1374
      %v2876 = vpop.f32.mrf.mxu0
      %v2877 = vadd.f32 0.0, %v2876
      %v2878 = vpop.f32.mrf.mxu0
      %v2879 = vadd.f32 0.0, %v2878
      %2880 = vmatmul.bf16.gmra.mxu0 %v1375
      %v2881 = vpop.f32.mrf.mxu0
      %v2882 = vadd.f32 0.0, %v2881
      %v2883 = vpop.f32.mrf.mxu0
      %v2884 = vadd.f32 0.0, %v2883
      %2885 = vmatmul.bf16.gmra.mxu0 %v1376
      %v2886 = vpop.f32.mrf.mxu0
      %v2887 = vadd.f32 0.0, %v2886
      %v2888 = vpop.f32.mrf.mxu0
      %v2889 = vadd.f32 0.0, %v2888
      %2890 = vmatmul.bf16.gmra.mxu0 %v1377
      %v2891 = vpop.f32.mrf.mxu0
      %v2892 = vadd.f32 0.0, %v2891
      %v2893 = vpop.f32.mrf.mxu0
      %v2894 = vadd.f32 0.0, %v2893
      %2895 = vmatmul.bf16.gmra.mxu0 %v1378
      %v2896 = vpop.f32.mrf.mxu0
      %v2897 = vadd.f32 0.0, %v2896
      %v2898 = vpop.f32.mrf.mxu0
      %v2899 = vadd.f32 0.0, %v2898
      %2900 = vmatmul.bf16.gmra.mxu0 %v1379
      %v2901 = vpop.f32.mrf.mxu0
      %v2902 = vadd.f32 0.0, %v2901
      %v2903 = vpop.f32.mrf.mxu0
      %v2904 = vadd.f32 0.0, %v2903
      %2905 = vmatmul.bf16.gmra.mxu0 %v1380
      %v2906 = vpop.f32.mrf.mxu0
      %v2907 = vadd.f32 0.0, %v2906
      %v2908 = vpop.f32.mrf.mxu0
      %v2909 = vadd.f32 0.0, %v2908
      %2910 = vmatmul.bf16.gmra.mxu0 %v1381
      %v2911 = vpop.f32.mrf.mxu0
      %v2912 = vadd.f32 0.0, %v2911
      %v2913 = vpop.f32.mrf.mxu0
      %v2914 = vadd.f32 0.0, %v2913
      %2915 = vmatmul.bf16.gmra.mxu0 %v1382
      %v2916 = vpop.f32.mrf.mxu0
      %v2917 = vadd.f32 0.0, %v2916
      %v2918 = vpop.f32.mrf.mxu0
      %v2919 = vadd.f32 0.0, %v2918
      %2920 = vmatmul.bf16.gmra.mxu0 %v1383
      %v2921 = vpop.f32.mrf.mxu0
      %v2922 = vadd.f32 0.0, %v2921
      %v2923 = vpop.f32.mrf.mxu0
      %v2924 = vadd.f32 0.0, %v2923
      %2925 = vmatmul.bf16.gmra.mxu0 %v1367
      %v2926 = vpop.f32.mrf.mxu0
      %v2927 = vadd.f32 0.0, %v2926
      %v2928 = vpop.f32.mrf.mxu0
      %v2929 = vadd.f32 0.0, %v2928
      %2930 = vdwg.mxu0
      %v2931 = vadd.f32 %v2745, %v2852
      %v2932 = vadd.f32 %v2746, %v2854
      %v2933 = vadd.f32 %v2747, %v2857
      %v2934 = vadd.f32 %v2748, %v2859
      %v2935 = vadd.f32 %v2749, %v2862
      %v2936 = vadd.f32 %v2750, %v2864
      %v2937 = vadd.f32 %v2751, %v2867
      %v2938 = vadd.f32 %v2752, %v2869
      %v2939 = vadd.f32 %v2753, %v2872
      %v2940 = vadd.f32 %v2754, %v2874
      %v2941 = vadd.f32 %v2755, %v2877
      %v2942 = vadd.f32 %v2756, %v2879
      %v2943 = vadd.f32 %v2757, %v2882
      %v2944 = vadd.f32 %v2758, %v2884
      %v2945 = vadd.f32 %v2759, %v2887
      %v2946 = vadd.f32 %v2760, %v2889
      %v2947 = vadd.f32 %v2761, %v2892
      %v2948 = vadd.f32 %v2762, %v2894
      %v2949 = vadd.f32 %v2763, %v2897
      %v2950 = vadd.f32 %v2764, %v2899
      %v2951 = vadd.f32 %v2765, %v2902
      %v2952 = vadd.f32 %v2766, %v2904
      %v2953 = vadd.f32 %v2767, %v2907
      %v2954 = vadd.f32 %v2768, %v2909
      %v2955 = vadd.f32 %v2769, %v2912
      %v2956 = vadd.f32 %v2770, %v2914
      %v2957 = vadd.f32 %v2771, %v2917
      %v2958 = vadd.f32 %v2772, %v2919
      %v2959 = vadd.f32 %v2773, %v2922
      %v2960 = vadd.f32 %v2774, %v2924
      %v2961 = vadd.f32 %v2775, %v2927
      %v2962 = vadd.f32 %v2776, %v2929
      %s2963 = scalar_lea.vmem %s303, 448
      %v2964 = vld [vmem:[%s2963] sm:$0xf]
      %v2965 = vld [vmem:[%s2963 + $0x4] sm:$0xf]
      %v2966 = vld [vmem:[%s2963 + $0x8] sm:$0xf]
      %v2967 = vld [vmem:[%s2963 + $0xc] sm:$0xf]
      %v2968 = vld [vmem:[%s2963 + $0x10] sm:$0xf]
      %v2969 = vld [vmem:[%s2963 + $0x14] sm:$0xf]
      %v2970 = vld [vmem:[%s2963 + $0x18] sm:$0xf]
      %v2971 = vld [vmem:[%s2963 + $0x1c] sm:$0xf]
      %v2972 = vld [vmem:[%s2963 + $0x20] sm:$0xf]
      %v2973 = vld [vmem:[%s2963 + $0x24] sm:$0xf]
      %v2974 = vld [vmem:[%s2963 + $0x28] sm:$0xf]
      %v2975 = vld [vmem:[%s2963 + $0x2c] sm:$0xf]
      %v2976 = vld [vmem:[%s2963 + $0x30] sm:$0xf]
      %v2977 = vld [vmem:[%s2963 + $0x34] sm:$0xf]
      %v2978 = vld [vmem:[%s2963 + $0x38] sm:$0xf]
      %v2979 = vld [vmem:[%s2963 + $0x3c] sm:$0xf]
      %v2996 = vunpack.c.l.b16 %v2964
      %v2997 = vunpack.c.l.b16 %v2965
      %v2998 = vunpack.c.l.b16 %v2966
      %v2999 = vunpack.c.l.b16 %v2967
      %v3000 = vunpack.c.l.b16 %v2968
      %v3001 = vunpack.c.l.b16 %v2969
      %v3002 = vunpack.c.l.b16 %v2970
      %v3003 = vunpack.c.l.b16 %v2971
      %v3004 = vunpack.c.l.b16 %v2972
      %v3005 = vunpack.c.l.b16 %v2973
      %v3006 = vunpack.c.l.b16 %v2974
      %v3007 = vunpack.c.l.b16 %v2975
      %v3008 = vunpack.c.l.b16 %v2976
      %v3009 = vunpack.c.l.b16 %v2977
      %v3010 = vunpack.c.l.b16 %v2978
      %v3011 = vunpack.c.l.b16 %v2979
      %v3012 = vpack.c.b16 %v2997, %v2996
      %v3013 = vpack.c.b16 %v2999, %v2998
      %v3014 = vpack.c.b16 %v3001, %v3000
      %v3015 = vpack.c.b16 %v3003, %v3002
      %v3016 = vpack.c.b16 %v3005, %v3004
      %v3017 = vpack.c.b16 %v3007, %v3006
      %v3018 = vpack.c.b16 %v3009, %v3008
      %v3019 = vpack.c.b16 %v3011, %v3010
      %3028 = vmatpush.bf16.msra.mxu0 %v3019
      %3029 = vmatpush.bf16.msra.mxu0 %v3018
      %3030 = vmatpush.bf16.msra.mxu0 %v3017
      %3031 = vmatpush.bf16.msra.mxu0 %v3016
      %3032 = vmatpush.bf16.msra.mxu0 %v3015
      %3033 = vmatpush.bf16.msra.mxu0 %v3014
      %3034 = vmatpush.bf16.msra.mxu0 %v3013
      %3035 = vmatpush.bf16.msra.mxu0 %v3012
      %3036 = vmatmul.bf16.gmra.mxu0 %v1453
      %v3037 = vpop.f32.mrf.mxu0
      %v3038 = vadd.f32 0.0, %v3037
      %v3039 = vpop.f32.mrf.mxu0
      %v3040 = vadd.f32 0.0, %v3039
      %3041 = vmatmul.bf16.gmra.mxu0 %v1465
      %v3042 = vpop.f32.mrf.mxu0
      %v3043 = vadd.f32 0.0, %v3042
      %v3044 = vpop.f32.mrf.mxu0
      %v3045 = vadd.f32 0.0, %v3044
      %3046 = vmatmul.bf16.gmra.mxu0 %v1477
      %v3047 = vpop.f32.mrf.mxu0
      %v3048 = vadd.f32 0.0, %v3047
      %v3049 = vpop.f32.mrf.mxu0
      %v3050 = vadd.f32 0.0, %v3049
      %3051 = vmatmul.bf16.gmra.mxu0 %v1489
      %v3052 = vpop.f32.mrf.mxu0
      %v3053 = vadd.f32 0.0, %v3052
      %v3054 = vpop.f32.mrf.mxu0
      %v3055 = vadd.f32 0.0, %v3054
      %3056 = vmatmul.bf16.gmra.mxu0 %v1501
      %v3057 = vpop.f32.mrf.mxu0
      %v3058 = vadd.f32 0.0, %v3057
      %v3059 = vpop.f32.mrf.mxu0
      %v3060 = vadd.f32 0.0, %v3059
      %3061 = vmatmul.bf16.gmra.mxu0 %v1513
      %v3062 = vpop.f32.mrf.mxu0
      %v3063 = vadd.f32 0.0, %v3062
      %v3064 = vpop.f32.mrf.mxu0
      %v3065 = vadd.f32 0.0, %v3064
      %3066 = vmatmul.bf16.gmra.mxu0 %v1525
      %v3067 = vpop.f32.mrf.mxu0
      %v3068 = vadd.f32 0.0, %v3067
      %v3069 = vpop.f32.mrf.mxu0
      %v3070 = vadd.f32 0.0, %v3069
      %3071 = vmatmul.bf16.gmra.mxu0 %v1537
      %v3072 = vpop.f32.mrf.mxu0
      %v3073 = vadd.f32 0.0, %v3072
      %v3074 = vpop.f32.mrf.mxu0
      %v3075 = vadd.f32 0.0, %v3074
      %3076 = vmatmul.bf16.gmra.mxu0 %v1549
      %v3077 = vpop.f32.mrf.mxu0
      %v3078 = vadd.f32 0.0, %v3077
      %v3079 = vpop.f32.mrf.mxu0
      %v3080 = vadd.f32 0.0, %v3079
      %3081 = vmatmul.bf16.gmra.mxu0 %v1561
      %v3082 = vpop.f32.mrf.mxu0
      %v3083 = vadd.f32 0.0, %v3082
      %v3084 = vpop.f32.mrf.mxu0
      %v3085 = vadd.f32 0.0, %v3084
      %3086 = vmatmul.bf16.gmra.mxu0 %v1573
      %v3087 = vpop.f32.mrf.mxu0
      %v3088 = vadd.f32 0.0, %v3087
      %v3089 = vpop.f32.mrf.mxu0
      %v3090 = vadd.f32 0.0, %v3089
      %3091 = vmatmul.bf16.gmra.mxu0 %v1585
      %v3092 = vpop.f32.mrf.mxu0
      %v3093 = vadd.f32 0.0, %v3092
      %v3094 = vpop.f32.mrf.mxu0
      %v3095 = vadd.f32 0.0, %v3094
      %3096 = vmatmul.bf16.gmra.mxu0 %v1597
      %v3097 = vpop.f32.mrf.mxu0
      %v3098 = vadd.f32 0.0, %v3097
      %v3099 = vpop.f32.mrf.mxu0
      %v3100 = vadd.f32 0.0, %v3099
      %3101 = vmatmul.bf16.gmra.mxu0 %v1609
      %v3102 = vpop.f32.mrf.mxu0
      %v3103 = vadd.f32 0.0, %v3102
      %v3104 = vpop.f32.mrf.mxu0
      %v3105 = vadd.f32 0.0, %v3104
      %3106 = vmatmul.bf16.gmra.mxu0 %v2397
      %v3107 = vpop.f32.mrf.mxu0
      %v3108 = vadd.f32 0.0, %v3107
      %v3109 = vpop.f32.mrf.mxu0
      %v3110 = vadd.f32 0.0, %v3109
      %3111 = vmatmul.bf16.gmra.mxu0 %v1429
      %v3112 = vpop.f32.mrf.mxu0
      %v3113 = vadd.f32 0.0, %v3112
      %v3114 = vpop.f32.mrf.mxu0
      %v3115 = vadd.f32 0.0, %v3114
      %3116 = vdwg.mxu0
      %v3117 = vadd.f32 %v2931, %v3038
      %v3118 = vadd.f32 %v2932, %v3040
      %v3119 = vadd.f32 %v2933, %v3043
      %v3120 = vadd.f32 %v2934, %v3045
      %v3121 = vadd.f32 %v2935, %v3048
      %v3122 = vadd.f32 %v2936, %v3050
      %v3123 = vadd.f32 %v2937, %v3053
      %v3124 = vadd.f32 %v2938, %v3055
      %v3125 = vadd.f32 %v2939, %v3058
      %v3126 = vadd.f32 %v2940, %v3060
      %v3127 = vadd.f32 %v2941, %v3063
      %v3128 = vadd.f32 %v2942, %v3065
      %v3129 = vadd.f32 %v2943, %v3068
      %v3130 = vadd.f32 %v2944, %v3070
      %v3131 = vadd.f32 %v2945, %v3073
      %v3132 = vadd.f32 %v2946, %v3075
      %v3133 = vadd.f32 %v2947, %v3078
      %v3134 = vadd.f32 %v2948, %v3080
      %v3135 = vadd.f32 %v2949, %v3083
      %v3136 = vadd.f32 %v2950, %v3085
      %v3137 = vadd.f32 %v2951, %v3088
      %v3138 = vadd.f32 %v2952, %v3090
      %v3139 = vadd.f32 %v2953, %v3093
      %v3140 = vadd.f32 %v2954, %v3095
      %v3141 = vadd.f32 %v2955, %v3098
      %v3142 = vadd.f32 %v2956, %v3100
      %v3143 = vadd.f32 %v2957, %v3103
      %v3144 = vadd.f32 %v2958, %v3105
      %v3145 = vadd.f32 %v2959, %v3108
      %v3146 = vadd.f32 %v2960, %v3110
      %v3147 = vadd.f32 %v2961, %v3113
      %v3148 = vadd.f32 %v2962, %v3115
      %s3149 = scalar_lea.vmem %s303, 512
      %v3150 = vld [vmem:[%s3149] sm:$0xf]
      %v3151 = vld [vmem:[%s3149 + $0x4] sm:$0xf]
      %v3152 = vld [vmem:[%s3149 + $0x8] sm:$0xf]
      %v3153 = vld [vmem:[%s3149 + $0xc] sm:$0xf]
      %v3154 = vld [vmem:[%s3149 + $0x10] sm:$0xf]
      %v3155 = vld [vmem:[%s3149 + $0x14] sm:$0xf]
      %v3156 = vld [vmem:[%s3149 + $0x18] sm:$0xf]
      %v3157 = vld [vmem:[%s3149 + $0x1c] sm:$0xf]
      %v3158 = vld [vmem:[%s3149 + $0x20] sm:$0xf]
      %v3159 = vld [vmem:[%s3149 + $0x24] sm:$0xf]
      %v3160 = vld [vmem:[%s3149 + $0x28] sm:$0xf]
      %v3161 = vld [vmem:[%s3149 + $0x2c] sm:$0xf]
      %v3162 = vld [vmem:[%s3149 + $0x30] sm:$0xf]
      %v3163 = vld [vmem:[%s3149 + $0x34] sm:$0xf]
      %v3164 = vld [vmem:[%s3149 + $0x38] sm:$0xf]
      %v3165 = vld [vmem:[%s3149 + $0x3c] sm:$0xf]
      %v3182 = vunpack.c.l.b16 %v3150
      %v3183 = vunpack.c.l.b16 %v3151
      %v3184 = vunpack.c.l.b16 %v3152
      %v3185 = vunpack.c.l.b16 %v3153
      %v3186 = vunpack.c.l.b16 %v3154
      %v3187 = vunpack.c.l.b16 %v3155
      %v3188 = vunpack.c.l.b16 %v3156
      %v3189 = vunpack.c.l.b16 %v3157
      %v3190 = vunpack.c.l.b16 %v3158
      %v3191 = vunpack.c.l.b16 %v3159
      %v3192 = vunpack.c.l.b16 %v3160
      %v3193 = vunpack.c.l.b16 %v3161
      %v3194 = vunpack.c.l.b16 %v3162
      %v3195 = vunpack.c.l.b16 %v3163
      %v3196 = vunpack.c.l.b16 %v3164
      %v3197 = vunpack.c.l.b16 %v3165
      %v3198 = vpack.c.b16 %v3183, %v3182
      %v3199 = vpack.c.b16 %v3185, %v3184
      %v3200 = vpack.c.b16 %v3187, %v3186
      %v3201 = vpack.c.b16 %v3189, %v3188
      %v3202 = vpack.c.b16 %v3191, %v3190
      %v3203 = vpack.c.b16 %v3193, %v3192
      %v3204 = vpack.c.b16 %v3195, %v3194
      %v3205 = vpack.c.b16 %v3197, %v3196
      %3214 = vmatpush.bf16.msra.mxu0 %v3205
      %3215 = vmatpush.bf16.msra.mxu0 %v3204
      %3216 = vmatpush.bf16.msra.mxu0 %v3203
      %3217 = vmatpush.bf16.msra.mxu0 %v3202
      %3218 = vmatpush.bf16.msra.mxu0 %v3201
      %3219 = vmatpush.bf16.msra.mxu0 %v3200
      %3220 = vmatpush.bf16.msra.mxu0 %v3199
      %3221 = vmatpush.bf16.msra.mxu0 %v3198
      %3222 = vmatmul.bf16.gmra.mxu0 %v1958
      %v3223 = vpop.f32.mrf.mxu0
      %v3224 = vadd.f32 0.0, %v3223
      %v3225 = vpop.f32.mrf.mxu0
      %v3226 = vadd.f32 0.0, %v3225
      %3227 = vmatmul.bf16.gmra.mxu0 %v1961
      %v3228 = vpop.f32.mrf.mxu0
      %v3229 = vadd.f32 0.0, %v3228
      %v3230 = vpop.f32.mrf.mxu0
      %v3231 = vadd.f32 0.0, %v3230
      %3232 = vmatmul.bf16.gmra.mxu0 %v1964
      %v3233 = vpop.f32.mrf.mxu0
      %v3234 = vadd.f32 0.0, %v3233
      %v3235 = vpop.f32.mrf.mxu0
      %v3236 = vadd.f32 0.0, %v3235
      %3237 = vmatmul.bf16.gmra.mxu0 %v1967
      %v3238 = vpop.f32.mrf.mxu0
      %v3239 = vadd.f32 0.0, %v3238
      %v3240 = vpop.f32.mrf.mxu0
      %v3241 = vadd.f32 0.0, %v3240
      %3242 = vmatmul.bf16.gmra.mxu0 %v1970
      %v3243 = vpop.f32.mrf.mxu0
      %v3244 = vadd.f32 0.0, %v3243
      %v3245 = vpop.f32.mrf.mxu0
      %v3246 = vadd.f32 0.0, %v3245
      %3247 = vmatmul.bf16.gmra.mxu0 %v1973
      %v3248 = vpop.f32.mrf.mxu0
      %v3249 = vadd.f32 0.0, %v3248
      %v3250 = vpop.f32.mrf.mxu0
      %v3251 = vadd.f32 0.0, %v3250
      %3252 = vmatmul.bf16.gmra.mxu0 %v1976
      %v3253 = vpop.f32.mrf.mxu0
      %v3254 = vadd.f32 0.0, %v3253
      %v3255 = vpop.f32.mrf.mxu0
      %v3256 = vadd.f32 0.0, %v3255
      %3257 = vmatmul.bf16.gmra.mxu0 %v1979
      %v3258 = vpop.f32.mrf.mxu0
      %v3259 = vadd.f32 0.0, %v3258
      %v3260 = vpop.f32.mrf.mxu0
      %v3261 = vadd.f32 0.0, %v3260
      %3262 = vmatmul.bf16.gmra.mxu0 %v1982
      %v3263 = vpop.f32.mrf.mxu0
      %v3264 = vadd.f32 0.0, %v3263
      %v3265 = vpop.f32.mrf.mxu0
      %v3266 = vadd.f32 0.0, %v3265
      %3267 = vmatmul.bf16.gmra.mxu0 %v1985
      %v3268 = vpop.f32.mrf.mxu0
      %v3269 = vadd.f32 0.0, %v3268
      %v3270 = vpop.f32.mrf.mxu0
      %v3271 = vadd.f32 0.0, %v3270
      %3272 = vmatmul.bf16.gmra.mxu0 %v1988
      %v3273 = vpop.f32.mrf.mxu0
      %v3274 = vadd.f32 0.0, %v3273
      %v3275 = vpop.f32.mrf.mxu0
      %v3276 = vadd.f32 0.0, %v3275
      %3277 = vmatmul.bf16.gmra.mxu0 %v1991
      %v3278 = vpop.f32.mrf.mxu0
      %v3279 = vadd.f32 0.0, %v3278
      %v3280 = vpop.f32.mrf.mxu0
      %v3281 = vadd.f32 0.0, %v3280
      %3282 = vmatmul.bf16.gmra.mxu0 %v1994
      %v3283 = vpop.f32.mrf.mxu0
      %v3284 = vadd.f32 0.0, %v3283
      %v3285 = vpop.f32.mrf.mxu0
      %v3286 = vadd.f32 0.0, %v3285
      %3287 = vmatmul.bf16.gmra.mxu0 %v1997
      %v3288 = vpop.f32.mrf.mxu0
      %v3289 = vadd.f32 0.0, %v3288
      %v3290 = vpop.f32.mrf.mxu0
      %v3291 = vadd.f32 0.0, %v3290
      %3292 = vmatmul.bf16.gmra.mxu0 %v2589
      %v3293 = vpop.f32.mrf.mxu0
      %v3294 = vadd.f32 0.0, %v3293
      %v3295 = vpop.f32.mrf.mxu0
      %v3296 = vadd.f32 0.0, %v3295
      %3297 = vmatmul.bf16.gmra.mxu0 %v1952
      %v3298 = vpop.f32.mrf.mxu0
      %v3299 = vadd.f32 0.0, %v3298
      %v3300 = vpop.f32.mrf.mxu0
      %v3301 = vadd.f32 0.0, %v3300
      %3302 = vdwg.mxu0
      %v3303 = vadd.f32 %v3117, %v3224
      %v3304 = vadd.f32 %v3118, %v3226
      %v3305 = vadd.f32 %v3119, %v3229
      %v3306 = vadd.f32 %v3120, %v3231
      %v3307 = vadd.f32 %v3121, %v3234
      %v3308 = vadd.f32 %v3122, %v3236
      %v3309 = vadd.f32 %v3123, %v3239
      %v3310 = vadd.f32 %v3124, %v3241
      %v3311 = vadd.f32 %v3125, %v3244
      %v3312 = vadd.f32 %v3126, %v3246
      %v3313 = vadd.f32 %v3127, %v3249
      %v3314 = vadd.f32 %v3128, %v3251
      %v3315 = vadd.f32 %v3129, %v3254
      %v3316 = vadd.f32 %v3130, %v3256
      %v3317 = vadd.f32 %v3131, %v3259
      %v3318 = vadd.f32 %v3132, %v3261
      %v3319 = vadd.f32 %v3133, %v3264
      %v3320 = vadd.f32 %v3134, %v3266
      %v3321 = vadd.f32 %v3135, %v3269
      %v3322 = vadd.f32 %v3136, %v3271
      %v3323 = vadd.f32 %v3137, %v3274
      %v3324 = vadd.f32 %v3138, %v3276
      %v3325 = vadd.f32 %v3139, %v3279
      %v3326 = vadd.f32 %v3140, %v3281
      %v3327 = vadd.f32 %v3141, %v3284
      %v3328 = vadd.f32 %v3142, %v3286
      %v3329 = vadd.f32 %v3143, %v3289
      %v3330 = vadd.f32 %v3144, %v3291
      %v3331 = vadd.f32 %v3145, %v3294
      %v3332 = vadd.f32 %v3146, %v3296
      %v3333 = vadd.f32 %v3147, %v3299
      %v3334 = vadd.f32 %v3148, %v3301
      %v3335 = vld [vmem:[%s306] sm:$0x1]
      %v3337 = vperm.slane %v3335, 0
      %v3339 = vadd.f32 %v3303, %v3337
      %v3340 = vadd.f32 %v3304, %v3337
      %v3341 = vadd.f32 %v3305, %v3337
      %v3342 = vadd.f32 %v3306, %v3337
      %v3343 = vadd.f32 %v3307, %v3337
      %v3344 = vadd.f32 %v3308, %v3337
      %v3345 = vadd.f32 %v3309, %v3337
      %v3346 = vadd.f32 %v3310, %v3337
      %v3347 = vadd.f32 %v3311, %v3337
      %v3348 = vadd.f32 %v3312, %v3337
      %v3349 = vadd.f32 %v3313, %v3337
      %v3350 = vadd.f32 %v3314, %v3337
      %v3351 = vadd.f32 %v3315, %v3337
      %v3352 = vadd.f32 %v3316, %v3337
      %v3353 = vadd.f32 %v3317, %v3337
      %v3354 = vadd.f32 %v3318, %v3337
      %v3355 = vadd.f32 %v3319, %v3337
      %v3356 = vadd.f32 %v3320, %v3337
      %v3357 = vadd.f32 %v3321, %v3337
      %v3358 = vadd.f32 %v3322, %v3337
      %v3359 = vadd.f32 %v3323, %v3337
      %v3360 = vadd.f32 %v3324, %v3337
      %v3361 = vadd.f32 %v3325, %v3337
      %v3362 = vadd.f32 %v3326, %v3337
      %v3363 = vadd.f32 %v3327, %v3337
      %v3364 = vadd.f32 %v3328, %v3337
      %v3365 = vadd.f32 %v3329, %v3337
      %v3366 = vadd.f32 %v3330, %v3337
      %v3367 = vadd.f32 %v3331, %v3337
      %v3368 = vadd.f32 %v3332, %v3337
      %v3369 = vadd.f32 %v3333, %v3337
      %v3370 = vadd.f32 %v3334, %v3337
      %v3371 = vadd.f32 %v3339, %v3340
      %v3372 = vadd.f32 %v3371, %v3341
      %v3373 = vadd.f32 %v3372, %v3342
      %v3374 = vadd.f32 %v3373, %v3343
      %v3375 = vadd.f32 %v3374, %v3344
      %v3376 = vadd.f32 %v3375, %v3345
      %v3377 = vadd.f32 %v3376, %v3346
      %v3378 = vadd.f32 %v3377, %v3347
      %v3379 = vadd.f32 %v3378, %v3348
      %v3380 = vadd.f32 %v3379, %v3349
      %v3381 = vadd.f32 %v3380, %v3350
      %v3382 = vadd.f32 %v3381, %v3351
      %v3383 = vadd.f32 %v3382, %v3352
      %v3384 = vadd.f32 %v3383, %v3353
      %v3385 = vadd.f32 %v3384, %v3354
      %v3386 = vadd.f32 %v3385, %v3355
      %v3387 = vadd.f32 %v3386, %v3356
      %v3388 = vadd.f32 %v3387, %v3357
      %v3389 = vadd.f32 %v3388, %v3358
      %v3390 = vadd.f32 %v3389, %v3359
      %v3391 = vadd.f32 %v3390, %v3360
      %v3392 = vadd.f32 %v3391, %v3361
      %v3393 = vadd.f32 %v3392, %v3362
      %v3394 = vadd.f32 %v3393, %v3363
      %v3395 = vadd.f32 %v3394, %v3364
      %v3396 = vadd.f32 %v3395, %v3365
      %v3397 = vadd.f32 %v3396, %v3366
      %v3398 = vadd.f32 %v3397, %v3367
      %v3399 = vadd.f32 %v3398, %v3368
      %v3400 = vadd.f32 %v3399, %v3369
      %v3401 = vadd.f32 %v3400, %v3370
      %v3402 = vrot.slane %v3401, 4
      %v3403 = vadd.f32 %v3401, %v3402
      %v3404 = vrot.slane %v3403, 2
      %v3405 = vadd.f32 %v3403, %v3404
      %v3406 = vrot.slane %v3405, 1
      %v3407 = vadd.f32 %v3405, %v3406
      %v3408 = vmul.f32 %v3339, %v3339
      %v3409 = vmul.f32 %v3340, %v3340
      %v3410 = vmul.f32 %v3341, %v3341
      %v3411 = vmul.f32 %v3342, %v3342
      %v3412 = vmul.f32 %v3343, %v3343
      %v3413 = vmul.f32 %v3344, %v3344
      %v3414 = vmul.f32 %v3345, %v3345
      %v3415 = vmul.f32 %v3346, %v3346
      %v3416 = vmul.f32 %v3347, %v3347
      %v3417 = vmul.f32 %v3348, %v3348
      %v3418 = vmul.f32 %v3349, %v3349
      %v3419 = vmul.f32 %v3350, %v3350
      %v3420 = vmul.f32 %v3351, %v3351
      %v3421 = vmul.f32 %v3352, %v3352
      %v3422 = vmul.f32 %v3353, %v3353
      %v3423 = vmul.f32 %v3354, %v3354
      %v3424 = vmul.f32 %v3355, %v3355
      %v3425 = vmul.f32 %v3356, %v3356
      %v3426 = vmul.f32 %v3357, %v3357
      %v3427 = vmul.f32 %v3358, %v3358
      %v3428 = vmul.f32 %v3359, %v3359
      %v3429 = vmul.f32 %v3360, %v3360
      %v3430 = vmul.f32 %v3361, %v3361
      %v3431 = vmul.f32 %v3362, %v3362
      %v3432 = vmul.f32 %v3363, %v3363
      %v3433 = vmul.f32 %v3364, %v3364
      %v3434 = vmul.f32 %v3365, %v3365
      %v3435 = vmul.f32 %v3366, %v3366
      %v3436 = vmul.f32 %v3367, %v3367
      %v3437 = vmul.f32 %v3368, %v3368
      %v3438 = vmul.f32 %v3369, %v3369
      %v3439 = vmul.f32 %v3370, %v3370
      %v3440 = vadd.f32 %v3408, %v3409
      %v3441 = vadd.f32 %v3440, %v3410
      %v3442 = vadd.f32 %v3441, %v3411
      %v3443 = vadd.f32 %v3442, %v3412
      %v3444 = vadd.f32 %v3443, %v3413
      %v3445 = vadd.f32 %v3444, %v3414
      %v3446 = vadd.f32 %v3445, %v3415
      %v3447 = vadd.f32 %v3446, %v3416
      %v3448 = vadd.f32 %v3447, %v3417
      %v3449 = vadd.f32 %v3448, %v3418
      %v3450 = vadd.f32 %v3449, %v3419
      %v3451 = vadd.f32 %v3450, %v3420
      %v3452 = vadd.f32 %v3451, %v3421
      %v3453 = vadd.f32 %v3452, %v3422
      %v3454 = vadd.f32 %v3453, %v3423
      %v3455 = vadd.f32 %v3454, %v3424
      %v3456 = vadd.f32 %v3455, %v3425
      %v3457 = vadd.f32 %v3456, %v3426
      %v3458 = vadd.f32 %v3457, %v3427
      %v3459 = vadd.f32 %v3458, %v3428
      %v3460 = vadd.f32 %v3459, %v3429
      %v3461 = vadd.f32 %v3460, %v3430
      %v3462 = vadd.f32 %v3461, %v3431
      %v3463 = vadd.f32 %v3462, %v3432
      %v3464 = vadd.f32 %v3463, %v3433
      %v3465 = vadd.f32 %v3464, %v3434
      %v3466 = vadd.f32 %v3465, %v3435
      %v3467 = vadd.f32 %v3466, %v3436
      %v3468 = vadd.f32 %v3467, %v3437
      %v3469 = vadd.f32 %v3468, %v3438
      %v3470 = vadd.f32 %v3469, %v3439
      %v3471 = vrot.slane %v3470, 4
      %v3472 = vadd.f32 %v3470, %v3471
      %v3473 = vrot.slane %v3472, 2
      %v3474 = vadd.f32 %v3472, %v3473
      %v3475 = vrot.slane %v3474, 1
      %v3476 = vadd.f32 %v3474, %v3475
      %vm3477 = vcmask 1040384
      %v3478 = vsel %vm3477, %v3407, %v3476
      %vm3479 = vcmask 1041408
      %v3480 = vsel %vm3479, %v3478, 0.0
      %3481 = vst [vmem:[%s321] sm:$0xff] %v3480
      %v3482 = vpack.c.bf16 %v3339, %v3339
      %v3483 = vpack.c.bf16 %v3340, %v3340
      %v3484 = vpack.c.bf16 %v3341, %v3341
      %v3485 = vpack.c.bf16 %v3342, %v3342
      %v3486 = vpack.c.bf16 %v3343, %v3343
      %v3487 = vpack.c.bf16 %v3344, %v3344
      %v3488 = vpack.c.bf16 %v3345, %v3345
      %v3489 = vpack.c.bf16 %v3346, %v3346
      %v3490 = vpack.c.bf16 %v3347, %v3347
      %v3491 = vpack.c.bf16 %v3348, %v3348
      %v3492 = vpack.c.bf16 %v3349, %v3349
      %v3493 = vpack.c.bf16 %v3350, %v3350
      %v3494 = vpack.c.bf16 %v3351, %v3351
      %v3495 = vpack.c.bf16 %v3352, %v3352
      %v3496 = vpack.c.bf16 %v3353, %v3353
      %v3497 = vpack.c.bf16 %v3354, %v3354
      %v3498 = vpack.c.bf16 %v3355, %v3355
      %v3499 = vpack.c.bf16 %v3356, %v3356
      %v3500 = vpack.c.bf16 %v3357, %v3357
      %v3501 = vpack.c.bf16 %v3358, %v3358
      %v3502 = vpack.c.bf16 %v3359, %v3359
      %v3503 = vpack.c.bf16 %v3360, %v3360
      %v3504 = vpack.c.bf16 %v3361, %v3361
      %v3505 = vpack.c.bf16 %v3362, %v3362
      %v3506 = vpack.c.bf16 %v3363, %v3363
      %v3507 = vpack.c.bf16 %v3364, %v3364
      %v3508 = vpack.c.bf16 %v3365, %v3365
      %v3509 = vpack.c.bf16 %v3366, %v3366
      %v3510 = vpack.c.bf16 %v3367, %v3367
      %v3511 = vpack.c.bf16 %v3368, %v3368
      %v3512 = vpack.c.bf16 %v3369, %v3369
      %v3513 = vpack.c.bf16 %v3370, %v3370
      %3514 = vst [vmem:[%s314] sm:$0xf] %v3482
      %3515 = vst [vmem:[%s314 + $0x4] sm:$0xf] %v3483
      %3516 = vst [vmem:[%s314 + $0x8] sm:$0xf] %v3484
      %3517 = vst [vmem:[%s314 + $0xc] sm:$0xf] %v3485
      %3518 = vst [vmem:[%s314 + $0x10] sm:$0xf] %v3486
      %3519 = vst [vmem:[%s314 + $0x14] sm:$0xf] %v3487
      %3520 = vst [vmem:[%s314 + $0x18] sm:$0xf] %v3488
      %3521 = vst [vmem:[%s314 + $0x1c] sm:$0xf] %v3489
      %3522 = vst [vmem:[%s314 + $0x20] sm:$0xf] %v3490
      %3523 = vst [vmem:[%s314 + $0x24] sm:$0xf] %v3491
      %3524 = vst [vmem:[%s314 + $0x28] sm:$0xf] %v3492
      %3525 = vst [vmem:[%s314 + $0x2c] sm:$0xf] %v3493
      %3526 = vst [vmem:[%s314 + $0x30] sm:$0xf] %v3494
      %3527 = vst [vmem:[%s314 + $0x34] sm:$0xf] %v3495
      %3528 = vst [vmem:[%s314 + $0x38] sm:$0xf] %v3496
      %3529 = vst [vmem:[%s314 + $0x3c] sm:$0xf] %v3497
      %3530 = vst [vmem:[%s314 + $0x40] sm:$0xf] %v3498
      %3531 = vst [vmem:[%s314 + $0x44] sm:$0xf] %v3499
      %3532 = vst [vmem:[%s314 + $0x48] sm:$0xf] %v3500
      %3533 = vst [vmem:[%s314 + $0x4c] sm:$0xf] %v3501
      %3534 = vst [vmem:[%s314 + $0x50] sm:$0xf] %v3502
      %3535 = vst [vmem:[%s314 + $0x54] sm:$0xf] %v3503
      %3536 = vst [vmem:[%s314 + $0x58] sm:$0xf] %v3504
      %3537 = vst [vmem:[%s314 + $0x5c] sm:$0xf] %v3505
      %3538 = vst [vmem:[%s314 + $0x60] sm:$0xf] %v3506
      %3539 = vst [vmem:[%s314 + $0x64] sm:$0xf] %v3507
      %3540 = vst [vmem:[%s314 + $0x68] sm:$0xf] %v3508
      %3541 = vst [vmem:[%s314 + $0x6c] sm:$0xf] %v3509
      %3542 = vst [vmem:[%s314 + $0x70] sm:$0xf] %v3510
      %3543 = vst [vmem:[%s314 + $0x74] sm:$0xf] %v3511
      %3544 = vst [vmem:[%s314 + $0x78] sm:$0xf] %v3512
      %3545 = vst [vmem:[%s314 + $0x7c] sm:$0xf] %v3513
      %p3546 = scmp.lt.s32.totalorder %s22, 1
      %s3547 = scalar_select %p3546, %s22, 1
      %p3548 = scmp.lt.s32.totalorder %s23, 0
      %s3549 = scalar_select %p3548, %s23, 0
      %s3550 = smul.addr %s3547, 32
      %s3551 = sadd.s32 %s3549, %s3550
      %s3552 = smul.addr %s3551, 4
      %s3553 = scalar_lea.vmem %s5, %s3552
      %p3554 = scmp.lt.s32.totalorder %s22, 1
      %s3555 = scalar_select %p3554, %s22, 1
      %p3556 = scmp.lt.s32.totalorder %s23, 0
      %s3557 = scalar_select %p3556, %s23, 0
      %s3558 = sadd.s32 %s3557, %s3555
      %s3559 = smul.addr %s3558, 8
      %s3560 = scalar_lea.vmem %s6, %s3559
      // Predicated region
      $region41: #{resnet_block_forward.4} parent=39 // pred_check
        %p3561 = pneg %p170
      $region42: #{resnet_block_forward.4} parent=39 // pred_check_branch
        %3563 = sbr.rel (%p3561) target = $region44
      $region43: #{resnet_block_forward.4} parent=39 // pred_region
        _
      $region44: #{resnet_block_forward.4} parent=39 // pred_fallthru
        _
      // Predicated region
      $region45: #{resnet_block_forward.4} parent=39 // pred_check
        %p3564 = pneg %p198
      $region46: #{resnet_block_forward.4} parent=39 // pred_check_branch
        %3566 = sbr.rel (%p3564) target = $region48
      $region47: #{resnet_block_forward.4} parent=39 // pred_region
        _
      $region48: #{resnet_block_forward.4} parent=39 // pred_fallthru
        _
    $region40: #{resnet_block_forward.4} parent=5 // pred_fallthru
      _
    %p3567 = scmp.le.s32.totalorder 2, %s13
    // Predicated region
    $region49: #{resnet_block_forward.4} parent=5 // pred_check
      %p3568 = pneg %p3567
    $region50: #{resnet_block_forward.4} parent=5 // pred_check_branch
      %3570 = sbr.rel (%p3568) target = $region52
    $region51: #{resnet_block_forward.4} parent=5 // pred_region
      %s3571 = ssub.s32 %s13, 2
      // Predicated region
      $region53: #{resnet_block_forward.4} parent=51 // pred_check
        %p3572 = pneg %p176
      $region54: #{resnet_block_forward.4} parent=51 // pred_check_branch
        %3574 = sbr.rel (%p3572) target = $region56
      $region55: #{resnet_block_forward.4} parent=51 // pred_region
        %p3575 = scmp.lt.s32.totalorder %s24, 1
        %s3576 = scalar_select %p3575, %s24, 1
        %p3577 = scmp.lt.s32.totalorder %s25, 0
        %s3578 = scalar_select %p3577, %s25, 0
        %s3579 = smul.addr %s3576, 32
        %s3580 = sadd.s32 %s3578, %s3579
        %s3581 = smul.addr %s3580, 4
        %s3582 = scalar_lea.vmem %s5, %s3581
      $region56: #{resnet_block_forward.4} parent=51 // pred_fallthru
        _
      // Predicated region
      $region57: #{resnet_block_forward.4} parent=51 // pred_check
        %p3583 = pneg %p204
      $region58: #{resnet_block_forward.4} parent=51 // pred_check_branch
        %3585 = sbr.rel (%p3583) target = $region60
      $region59: #{resnet_block_forward.4} parent=51 // pred_region
        %p3586 = scmp.lt.s32.totalorder %s24, 1
        %s3587 = scalar_select %p3586, %s24, 1
        %p3588 = scmp.lt.s32.totalorder %s25, 0
        %s3589 = scalar_select %p3588, %s25, 0
        %s3590 = sadd.s32 %s3589, %s3587
        %s3591 = smul.addr %s3590, 8
        %s3592 = scalar_lea.vmem %s6, %s3591
      $region60: #{resnet_block_forward.4} parent=51 // pred_fallthru
        _
    $region52: #{resnet_block_forward.4} parent=5 // pred_fallthru
      _
  $region6: #{resnet_block_forward.4} parent=0 // loop_footer
    %s17 = sadd.s32 1, %s13
  $region7: #{resnet_block_forward.4} parent=0 // loop_footer_branch
    %12 = sbr.rel target = $region3
  $region8: #{resnet_block_forward.4} parent=0 // loop_exit
    _

// kernel: resnet_block_forward.5
$region0: #{resnet_block_forward.5}
  #allocation0 [shape = 'u32[]', space=smem, size = 0x4, offset = 0x4, fixed_abs, tag = 'smem constant byte address 0x4 - core index']
  #allocation1 [shape = 'u32[72,128]{1,0:T(1,128)}', space=vmem, size = 0x9000, scoped, tag = 'internal scratch']
  %s0 = inlined_call_operand.vmem [shape: bf16[2,16,16,128], index: 0, kind: input, shape index: {}]
  %s1 = inlined_call_operand.vmem [shape: f32[1,1,128], index: 1, kind: input, shape index: {}]
  %s2 = inlined_call_operand.vmem [shape: f32[1,1,128], index: 2, kind: input, shape index: {}]
  %s3 = inlined_call_operand.vmem [shape: bf16[9,128,128], index: 3, kind: input, shape index: {}]
  %s4 = inlined_call_operand.vmem [shape: f32[1,128], index: 4, kind: input, shape index: {}]
  %s5 = inlined_call_operand.vmem [shape: bf16[2,16,16,128], index: 5, kind: input, shape index: {}]
  %s6 = inlined_call_operand.vmem [shape: f32[2,16,16,128], index: 6, kind: output, shape index: {}]
  %s7 = sld [smem:[#allocation0]]
  $region57: #{resnet_block_forward.5} parent=0
    _
  %s9 = ssub.s32 1, %s7
  %s10 = scalar_select 0, %s9, %s7
  loop: start=0, step=1, limit=4
  $region2: #{resnet_block_forward.5} parent=0 // loop_pre_header
    _
  $region3: #{resnet_block_forward.5} parent=0 // loop_header
    %s12 = sphi 0, %s16
    %p13 = scmp.ge.s32.totalorder %s12, 4
    %s19 = sphi 0, %s31
    %s20 = sphi 0, %s27
    %s21 = sphi 0, %s19
    %s22 = sphi 0, %s20
    %s23 = sphi 0, %s21
    %s24 = sphi 0, %s22
    %s34 = sphi 0, %s36
    %s37 = sphi 0, %s34
    %s38 = sphi 0, %s37
    %s54 = sphi 0, %s38
    %s58 = sphi 0, %s58
    %s60 = sphi 0, %s58
    %s61 = sphi 0, %s60
    %s75 = sphi 0, %s61
    %s79 = sphi 0, %s79
    %s81 = sphi 0, %s79
    %s82 = sphi 0, %s81
    %s96 = sphi 0, %s82
    %s102 = sphi 0, %s104
    %s105 = sphi 0, %s102
    %s106 = sphi 0, %s105
    %s122 = sphi 0, %s106
    %s128 = sphi 0, %s130
    %s131 = sphi 0, %s128
    %s132 = sphi 0, %s131
    %s148 = sphi 0, %s132
    %s156 = sphi 0, %s158
    %s159 = sphi 0, %s156
    %s160 = sphi 0, %s159
    %s176 = sphi 0, %s160
    %s184 = sphi 0, %s186
    %s187 = sphi 0, %s184
    %s188 = sphi 0, %s187
    %s204 = sphi 0, %s188
  $region4: #{resnet_block_forward.5} parent=0 // loop_header_branch
    %15 = sbr.rel (%p13) target = $region8
  $region5: #{resnet_block_forward.5} parent=0 // loop_body
    %s17 = ssub.s32 %s12, 1
    %s18 = ssub.s32 %s12, 2
    %s25 = sadd.s32 1, %s20
    %p26 = scmp.ge.s32.totalorder %s25, 1
    %s27 = scalar_select %p26, 0, %s25
    %s28 = sadd.s32 1, %s19
    %s29 = scalar_select %p26, %s28, %s19
    %p30 = scmp.ge.s32.totalorder %s29, 2
    %s31 = scalar_select %p30, 0, %s29
    %s32 = ssub.s32 %s19, %s31
    %p33 = scmp.eq.s32.totalorder %s32, 0
    %s35 = sadd.s32 %s34, 1
    %s36 = scalar_select %p33, %s34, %s35
    %p39 = pneg %p33
    %p40 = scmp.eq.s32.totalorder %s12, 1
    %p41 = por %p39, %p40
    %p42 = scmp.ne.s32.totalorder %s34, %s37
    %p43 = scmp.eq.s32.totalorder %s12, 0
    %p44 = por %p42, %p43
    %p45 = scmp.ne.s32.totalorder %s34, %s37
    %p46 = scmp.eq.s32.totalorder %s17, 1
    %p47 = por %p45, %p46
    %p48 = scmp.ne.s32.totalorder %s37, %s38
    %p49 = scmp.eq.s32.totalorder %s17, 0
    %p50 = por %p48, %p49
    %p51 = scmp.ne.s32.totalorder %s37, %s38
    %p52 = scmp.eq.s32.totalorder %s18, 1
    %p53 = por %p51, %p52
    %p55 = scmp.ne.s32.totalorder %s38, %s54
    %p56 = scmp.eq.s32.totalorder %s18, 0
    %p57 = por %p55, %p56
    %s59 = sadd.s32 %s58, 1
    %p62 = scmp.eq.s32.totalorder %s12, 1
    %p63 = scmp.ne.s32.totalorder %s58, %s60
    %p64 = scmp.eq.s32.totalorder %s12, 0
    %p65 = por %p63, %p64
    %p66 = scmp.ne.s32.totalorder %s58, %s60
    %p67 = scmp.eq.s32.totalorder %s17, 1
    %p68 = por %p66, %p67
    %p69 = scmp.ne.s32.totalorder %s60, %s61
    %p70 = scmp.eq.s32.totalorder %s17, 0
    %p71 = por %p69, %p70
    %p72 = scmp.ne.s32.totalorder %s60, %s61
    %p73 = scmp.eq.s32.totalorder %s18, 1
    %p74 = por %p72, %p73
    %p76 = scmp.ne.s32.totalorder %s61, %s75
    %p77 = scmp.eq.s32.totalorder %s18, 0
    %p78 = por %p76, %p77
    %s80 = sadd.s32 %s79, 1
    %p83 = scmp.eq.s32.totalorder %s12, 1
    %p84 = scmp.ne.s32.totalorder %s79, %s81
    %p85 = scmp.eq.s32.totalorder %s12, 0
    %p86 = por %p84, %p85
    %p87 = scmp.ne.s32.totalorder %s79, %s81
    %p88 = scmp.eq.s32.totalorder %s17, 1
    %p89 = por %p87, %p88
    %p90 = scmp.ne.s32.totalorder %s81, %s82
    %p91 = scmp.eq.s32.totalorder %s17, 0
    %p92 = por %p90, %p91
    %p93 = scmp.ne.s32.totalorder %s81, %s82
    %p94 = scmp.eq.s32.totalorder %s18, 1
    %p95 = por %p93, %p94
    %p97 = scmp.ne.s32.totalorder %s82, %s96
    %p98 = scmp.eq.s32.totalorder %s18, 0
    %p99 = por %p97, %p98
    %s100 = ssub.s32 %s20, %s27
    %p101 = scmp.eq.s32.totalorder %s100, 0
    %s103 = sadd.s32 %s102, 1
    %s104 = scalar_select %p101, %s102, %s103
    %p107 = pneg %p101
    %p108 = scmp.eq.s32.totalorder %s12, 1
    %p109 = por %p107, %p108
    %p110 = scmp.ne.s32.totalorder %s102, %s105
    %p111 = scmp.eq.s32.totalorder %s12, 0
    %p112 = por %p110, %p111
    %p113 = scmp.ne.s32.totalorder %s102, %s105
    %p114 = scmp.eq.s32.totalorder %s17, 1
    %p115 = por %p113, %p114
    %p116 = scmp.ne.s32.totalorder %s105, %s106
    %p117 = scmp.eq.s32.totalorder %s17, 0
    %p118 = por %p116, %p117
    %p119 = scmp.ne.s32.totalorder %s105, %s106
    %p120 = scmp.eq.s32.totalorder %s18, 1
    %p121 = por %p119, %p120
    %p123 = scmp.ne.s32.totalorder %s106, %s122
    %p124 = scmp.eq.s32.totalorder %s18, 0
    %p125 = por %p123, %p124
    %s126 = ssub.s32 %s20, %s27
    %p127 = scmp.eq.s32.totalorder %s126, 0
    %s129 = sadd.s32 %s128, 1
    %s130 = scalar_select %p127, %s128, %s129
    %p133 = pneg %p127
    %p134 = scmp.eq.s32.totalorder %s12, 1
    %p135 = por %p133, %p134
    %p136 = scmp.ne.s32.totalorder %s128, %s131
    %p137 = scmp.eq.s32.totalorder %s12, 0
    %p138 = por %p136, %p137
    %p139 = scmp.ne.s32.totalorder %s128, %s131
    %p140 = scmp.eq.s32.totalorder %s17, 1
    %p141 = por %p139, %p140
    %p142 = scmp.ne.s32.totalorder %s131, %s132
    %p143 = scmp.eq.s32.totalorder %s17, 0
    %p144 = por %p142, %p143
    %p145 = scmp.ne.s32.totalorder %s131, %s132
    %p146 = scmp.eq.s32.totalorder %s18, 1
    %p147 = por %p145, %p146
    %p149 = scmp.ne.s32.totalorder %s132, %s148
    %p150 = scmp.eq.s32.totalorder %s18, 0
    %p151 = por %p149, %p150
    %s152 = ssub.s32 %s19, %s31
    %s153 = ssub.s32 %s20, %s27
    %s154 = sor.u32 %s152, %s153
    %p155 = scmp.eq.s32.totalorder %s154, 0
    %s157 = sadd.s32 %s156, 1
    %s158 = scalar_select %p155, %s156, %s157
    %p161 = pneg %p155
    %p162 = scmp.eq.s32.totalorder %s12, 1
    %p163 = por %p161, %p162
    %p164 = scmp.ne.s32.totalorder %s156, %s159
    %p165 = scmp.eq.s32.totalorder %s12, 0
    %p166 = por %p164, %p165
    %p167 = scmp.ne.s32.totalorder %s156, %s159
    %p168 = scmp.eq.s32.totalorder %s17, 1
    %p169 = por %p167, %p168
    %p170 = scmp.ne.s32.totalorder %s159, %s160
    %p171 = scmp.eq.s32.totalorder %s17, 0
    %p172 = por %p170, %p171
    %p173 = scmp.ne.s32.totalorder %s159, %s160
    %p174 = scmp.eq.s32.totalorder %s18, 1
    %p175 = por %p173, %p174
    %p177 = scmp.ne.s32.totalorder %s160, %s176
    %p178 = scmp.eq.s32.totalorder %s18, 0
    %p179 = por %p177, %p178
    %s180 = ssub.s32 %s19, %s31
    %s181 = ssub.s32 %s20, %s27
    %s182 = sor.u32 %s180, %s181
    %p183 = scmp.eq.s32.totalorder %s182, 0
    %s185 = sadd.s32 %s184, 1
    %s186 = scalar_select %p183, %s184, %s185
    %p189 = pneg %p183
    %p190 = scmp.eq.s32.totalorder %s12, 1
    %p191 = por %p189, %p190
    %p192 = scmp.ne.s32.totalorder %s184, %s187
    %p193 = scmp.eq.s32.totalorder %s12, 0
    %p194 = por %p192, %p193
    %p195 = scmp.ne.s32.totalorder %s184, %s187
    %p196 = scmp.eq.s32.totalorder %s17, 1
    %p197 = por %p195, %p196
    %p198 = scmp.ne.s32.totalorder %s187, %s188
    %p199 = scmp.eq.s32.totalorder %s17, 0
    %p200 = por %p198, %p199
    %p201 = scmp.ne.s32.totalorder %s187, %s188
    %p202 = scmp.eq.s32.totalorder %s18, 1
    %p203 = por %p201, %p202
    %p205 = scmp.ne.s32.totalorder %s188, %s204
    %p206 = scmp.eq.s32.totalorder %s18, 0
    %p207 = por %p205, %p206
    %p208 = scmp.le.s32.totalorder 1, %s12
    %p209 = scmp.lt.s32.totalorder %s12, 3
    %p210 = pnand %p208, %p209
    %p211 = pneg %p210
    // Predicated region
    $region9: #{resnet_block_forward.5} parent=5 // pred_check
      _
    $region10: #{resnet_block_forward.5} parent=5 // pred_check_branch
      %213 = sbr.rel (%p210) target = $region12
    $region11: #{resnet_block_forward.5} parent=5 // pred_region
      %s214 = ssub.s32 %s12, 1
      // Predicated region
      $region13: #{resnet_block_forward.5} parent=11 // pred_check
        %p215 = pneg %p71
      $region14: #{resnet_block_forward.5} parent=11 // pred_check_branch
        %217 = sbr.rel (%p215) target = $region16
      $region15: #{resnet_block_forward.5} parent=11 // pred_region
        _
      $region16: #{resnet_block_forward.5} parent=11 // pred_fallthru
        _
      // Predicated region
      $region17: #{resnet_block_forward.5} parent=11 // pred_check
        %p218 = pneg %p92
      $region18: #{resnet_block_forward.5} parent=11 // pred_check_branch
        %220 = sbr.rel (%p218) target = $region20
      $region19: #{resnet_block_forward.5} parent=11 // pred_region
        _
      $region20: #{resnet_block_forward.5} parent=11 // pred_fallthru
        _
      // Predicated region
      $region21: #{resnet_block_forward.5} parent=11 // pred_check
        %p221 = pneg %p118
      $region22: #{resnet_block_forward.5} parent=11 // pred_check_branch
        %223 = sbr.rel (%p221) target = $region24
      $region23: #{resnet_block_forward.5} parent=11 // pred_region
        %p224 = scmp.lt.s32.totalorder %s22, 0
        %s225 = scalar_select %p224, %s22, 0
        %s226 = smul.addr %s225, 4
        %s227 = scalar_lea.vmem %s3, %s226
      $region24: #{resnet_block_forward.5} parent=11 // pred_fallthru
        _
      // Predicated region
      $region25: #{resnet_block_forward.5} parent=11 // pred_check
        %p228 = pneg %p144
      $region26: #{resnet_block_forward.5} parent=11 // pred_check_branch
        %230 = sbr.rel (%p228) target = $region28
      $region27: #{resnet_block_forward.5} parent=11 // pred_region
        %p231 = scmp.lt.s32.totalorder %s22, 0
        %s232 = scalar_select %p231, %s22, 0
        %s233 = scalar_lea.vmem %s4, %s232
      $region28: #{resnet_block_forward.5} parent=11 // pred_fallthru
        _
    $region12: #{resnet_block_forward.5} parent=5 // pred_fallthru
      _
    %p234 = scmp.lt.s32.totalorder %s12, 2
    // Predicated region
    $region29: #{resnet_block_forward.5} parent=5 // pred_check
      %p235 = pneg %p234
    $region30: #{resnet_block_forward.5} parent=5 // pred_check_branch
      %237 = sbr.rel (%p235) target = $region32
    $region31: #{resnet_block_forward.5} parent=5 // pred_region
      // Predicated region
      $region33: #{resnet_block_forward.5} parent=31 // pred_check
        %p238 = pneg %p44
      $region34: #{resnet_block_forward.5} parent=31 // pred_check_branch
        %240 = sbr.rel (%p238) target = $region36
      $region35: #{resnet_block_forward.5} parent=31 // pred_region
        %p241 = scmp.lt.s32.totalorder %s19, 1
        %s242 = scalar_select %p241, %s19, 1
        %s243 = smul.addr %s242, 32
        %s244 = smul.addr %s243, 4
        %s245 = scalar_lea.vmem %s0, %s244
      $region36: #{resnet_block_forward.5} parent=31 // pred_fallthru
        _
      // Predicated region
      $region37: #{resnet_block_forward.5} parent=31 // pred_check
        %p246 = pneg %p166
      $region38: #{resnet_block_forward.5} parent=31 // pred_check_branch
        %248 = sbr.rel (%p246) target = $region40
      $region39: #{resnet_block_forward.5} parent=31 // pred_region
        %p249 = scmp.lt.s32.totalorder %s19, 1
        %s250 = scalar_select %p249, %s19, 1
        %p251 = scmp.lt.s32.totalorder %s20, 0
        %s252 = scalar_select %p251, %s20, 0
        %s253 = smul.addr %s250, 32
        %s254 = sadd.s32 %s252, %s253
        %s255 = smul.addr %s254, 4
        %s256 = scalar_lea.vmem %s5, %s255
      $region40: #{resnet_block_forward.5} parent=31 // pred_fallthru
        _
    $region32: #{resnet_block_forward.5} parent=5 // pred_fallthru
      _
    %p257 = scmp.le.s32.totalorder 1, %s12
    %p258 = scmp.lt.s32.totalorder %s12, 3
    %p259 = pnand %p257, %p258
    %p260 = pneg %p259
    // Predicated region
    $region41: #{resnet_block_forward.5} parent=5 // pred_check
      _
    $region42: #{resnet_block_forward.5} parent=5 // pred_check_branch
      %262 = sbr.rel (%p259) target = $region44
    $region43: #{resnet_block_forward.5} parent=5 // pred_region
      %s263 = ssub.s32 %s12, 1
      %p264 = scmp.lt.s32.totalorder %s21, 1
      %s265 = scalar_select %p264, %s21, 1
      %s266 = smul.addr %s265, 32
      %s267 = smul.addr %s266, 4
      %s268 = scalar_lea.vmem %s0, %s267
      %p269 = pneg %p50
      %p270 = pneg %p47
      %p271 = pneg %p71
      %p272 = pneg %p68
      %p273 = pneg %p92
      %p274 = pneg %p89
      %p275 = scmp.lt.s32.totalorder %s22, 0
      %s276 = scalar_select %p275, %s22, 0
      %s277 = smul.addr %s276, 4
      %s278 = scalar_lea.vmem %s3, %s277
      %p279 = pneg %p118
      %p280 = pneg %p115
      %p281 = scmp.lt.s32.totalorder %s22, 0
      %s282 = scalar_select %p281, %s22, 0
      %s283 = scalar_lea.vmem %s4, %s282
      %p284 = pneg %p144
      %p285 = pneg %p141
      %p286 = scmp.lt.s32.totalorder %s21, 1
      %s287 = scalar_select %p286, %s21, 1
      %p288 = scmp.lt.s32.totalorder %s22, 0
      %s289 = scalar_select %p288, %s22, 0
      %s290 = smul.addr %s287, 32
      %s291 = sadd.s32 %s289, %s290
      %s292 = smul.addr %s291, 4
      %s293 = scalar_lea.vmem %s5, %s292
      %p294 = pneg %p172
      %p295 = pneg %p169
      %p296 = pneg %p200
      %p297 = pneg %p197
      %p298 = scmp.lt.s32.totalorder %s21, 1
      %s299 = scalar_select %p298, %s21, 1
      %p300 = scmp.lt.s32.totalorder %s22, 0
      %s301 = scalar_select %p300, %s22, 0
      %s302 = smul.addr %s299, 32
      %s303 = sadd.s32 %s301, %s302
      %s304 = smul.addr %s303, 8
      %s305 = scalar_lea.vmem %s6, %s304
      %p306 = scmp.lt.s32.totalorder %s21, 1
      %s307 = scalar_select %p306, %s21, 1
      %s308 = smul.addr %s307, 32
      %s309 = smul.addr %s308, 4
      %s310 = scalar_lea.vmem %s0, %s309
      %p311 = scmp.lt.s32.totalorder %s22, 0
      %s312 = scalar_select %p311, %s22, 0
      %s313 = smul.addr %s312, 4
      %s314 = scalar_lea.vmem %s3, %s313
      %p315 = scmp.lt.s32.totalorder %s22, 0
      %s316 = scalar_select %p315, %s22, 0
      %s317 = scalar_lea.vmem %s4, %s316
      %p318 = scmp.lt.s32.totalorder %s21, 1
      %s319 = scalar_select %p318, %s21, 1
      %p320 = scmp.lt.s32.totalorder %s22, 0
      %s321 = scalar_select %p320, %s22, 0
      %s322 = smul.addr %s319, 32
      %s323 = sadd.s32 %s321, %s322
      %s324 = smul.addr %s323, 4
      %s325 = scalar_lea.vmem %s5, %s324
      %p326 = scmp.lt.s32.totalorder %s21, 1
      %s327 = scalar_select %p326, %s21, 1
      %p328 = scmp.lt.s32.totalorder %s22, 0
      %s329 = scalar_select %p328, %s22, 0
      %s330 = smul.addr %s327, 32
      %s331 = sadd.s32 %s329, %s330
      %s332 = smul.addr %s331, 8
      %s333 = scalar_lea.vmem %s6, %s332
      %v335 = vld [vmem:[%s310] sm:$0xf]
      %v336 = vld [vmem:[%s310 + $0x4] sm:$0xf]
      %v337 = vld [vmem:[%s310 + $0x8] sm:$0xf]
      %v338 = vld [vmem:[%s310 + $0xc] sm:$0xf]
      %v339 = vld [vmem:[%s310 + $0x10] sm:$0xf]
      %v340 = vld [vmem:[%s310 + $0x14] sm:$0xf]
      %v341 = vld [vmem:[%s310 + $0x18] sm:$0xf]
      %v342 = vld [vmem:[%s310 + $0x1c] sm:$0xf]
      %v343 = vld [vmem:[%s310 + $0x20] sm:$0xf]
      %v344 = vld [vmem:[%s310 + $0x24] sm:$0xf]
      %v345 = vld [vmem:[%s310 + $0x28] sm:$0xf]
      %v346 = vld [vmem:[%s310 + $0x2c] sm:$0xf]
      %v347 = vld [vmem:[%s310 + $0x30] sm:$0xf]
      %v348 = vld [vmem:[%s310 + $0x34] sm:$0xf]
      %v349 = vld [vmem:[%s310 + $0x38] sm:$0xf]
      %v350 = vld [vmem:[%s310 + $0x3c] sm:$0xf]
      %v351 = vld [vmem:[%s310 + $0x40] sm:$0xf]
      %v352 = vld [vmem:[%s310 + $0x44] sm:$0xf]
      %v353 = vld [vmem:[%s310 + $0x48] sm:$0xf]
      %v354 = vld [vmem:[%s310 + $0x4c] sm:$0xf]
      %v355 = vld [vmem:[%s310 + $0x50] sm:$0xf]
      %v356 = vld [vmem:[%s310 + $0x54] sm:$0xf]
      %v357 = vld [vmem:[%s310 + $0x58] sm:$0xf]
      %v358 = vld [vmem:[%s310 + $0x5c] sm:$0xf]
      %v359 = vld [vmem:[%s310 + $0x60] sm:$0xf]
      %v360 = vld [vmem:[%s310 + $0x64] sm:$0xf]
      %v361 = vld [vmem:[%s310 + $0x68] sm:$0xf]
      %v362 = vld [vmem:[%s310 + $0x6c] sm:$0xf]
      %v363 = vld [vmem:[%s310 + $0x70] sm:$0xf]
      %v364 = vld [vmem:[%s310 + $0x74] sm:$0xf]
      %v365 = vld [vmem:[%s310 + $0x78] sm:$0xf]
      %v366 = vld [vmem:[%s310 + $0x7c] sm:$0xf]
      %v367 = vunpack.c.l.bf16 %v335
      %v368 = vunpack.c.l.bf16 %v336
      %v369 = vunpack.c.l.bf16 %v337
      %v370 = vunpack.c.l.bf16 %v338
      %v371 = vunpack.c.l.bf16 %v339
      %v372 = vunpack.c.l.bf16 %v340
      %v373 = vunpack.c.l.bf16 %v341
      %v374 = vunpack.c.l.bf16 %v342
      %v375 = vunpack.c.l.bf16 %v343
      %v376 = vunpack.c.l.bf16 %v344
      %v377 = vunpack.c.l.bf16 %v345
      %v378 = vunpack.c.l.bf16 %v346
      %v379 = vunpack.c.l.bf16 %v347
      %v380 = vunpack.c.l.bf16 %v348
      %v381 = vunpack.c.l.bf16 %v349
      %v382 = vunpack.c.l.bf16 %v350
      %v383 = vunpack.c.l.bf16 %v351
      %v384 = vunpack.c.l.bf16 %v352
      %v385 = vunpack.c.l.bf16 %v353
      %v386 = vunpack.c.l.bf16 %v354
      %v387 = vunpack.c.l.bf16 %v355
      %v388 = vunpack.c.l.bf16 %v356
      %v389 = vunpack.c.l.bf16 %v357
      %v390 = vunpack.c.l.bf16 %v358
      %v391 = vunpack.c.l.bf16 %v359
      %v392 = vunpack.c.l.bf16 %v360
      %v393 = vunpack.c.l.bf16 %v361
      %v394 = vunpack.c.l.bf16 %v362
      %v395 = vunpack.c.l.bf16 %v363
      %v396 = vunpack.c.l.bf16 %v364
      %v397 = vunpack.c.l.bf16 %v365
      %v398 = vunpack.c.l.bf16 %v366
      %v399 = vld [vmem:[%s1] sm:$0x1]
      %v401 = vperm.slane %v399, 0
      %v403 = vmul.f32 %v367, %v401
      %v404 = vmul.f32 %v368, %v401
      %v405 = vmul.f32 %v369, %v401
      %v406 = vmul.f32 %v370, %v401
      %v407 = vmul.f32 %v371, %v401
      %v408 = vmul.f32 %v372, %v401
      %v409 = vmul.f32 %v373, %v401
      %v410 = vmul.f32 %v374, %v401
      %v411 = vmul.f32 %v375, %v401
      %v412 = vmul.f32 %v376, %v401
      %v413 = vmul.f32 %v377, %v401
      %v414 = vmul.f32 %v378, %v401
      %v415 = vmul.f32 %v379, %v401
      %v416 = vmul.f32 %v380, %v401
      %v417 = vmul.f32 %v381, %v401
      %v418 = vmul.f32 %v382, %v401
      %v419 = vmul.f32 %v383, %v401
      %v420 = vmul.f32 %v384, %v401
      %v421 = vmul.f32 %v385, %v401
      %v422 = vmul.f32 %v386, %v401
      %v423 = vmul.f32 %v387, %v401
      %v424 = vmul.f32 %v388, %v401
      %v425 = vmul.f32 %v389, %v401
      %v426 = vmul.f32 %v390, %v401
      %v427 = vmul.f32 %v391, %v401
      %v428 = vmul.f32 %v392, %v401
      %v429 = vmul.f32 %v393, %v401
      %v430 = vmul.f32 %v394, %v401
      %v431 = vmul.f32 %v395, %v401
      %v432 = vmul.f32 %v396, %v401
      %v433 = vmul.f32 %v397, %v401
      %v434 = vmul.f32 %v398, %v401
      %v435 = vld [vmem:[%s2] sm:$0x1]
      %v437 = vperm.slane %v435, 0
      %v439 = vadd.f32 %v403, %v437
      %v440 = vadd.f32 %v404, %v437
      %v441 = vadd.f32 %v405, %v437
      %v442 = vadd.f32 %v406, %v437
      %v443 = vadd.f32 %v407, %v437
      %v444 = vadd.f32 %v408, %v437
      %v445 = vadd.f32 %v409, %v437
      %v446 = vadd.f32 %v410, %v437
      %v447 = vadd.f32 %v411, %v437
      %v448 = vadd.f32 %v412, %v437
      %v449 = vadd.f32 %v413, %v437
      %v450 = vadd.f32 %v414, %v437
      %v451 = vadd.f32 %v415, %v437
      %v452 = vadd.f32 %v416, %v437
      %v453 = vadd.f32 %v417, %v437
      %v454 = vadd.f32 %v418, %v437
      %v455 = vadd.f32 %v419, %v437
      %v456 = vadd.f32 %v420, %v437
      %v457 = vadd.f32 %v421, %v437
      %v458 = vadd.f32 %v422, %v437
      %v459 = vadd.f32 %v423, %v437
      %v460 = vadd.f32 %v424, %v437
      %v461 = vadd.f32 %v425, %v437
      %v462 = vadd.f32 %v426, %v437
      %v463 = vadd.f32 %v427, %v437
      %v464 = vadd.f32 %v428, %v437
      %v465 = vadd.f32 %v429, %v437
      %v466 = vadd.f32 %v430, %v437
      %v467 = vadd.f32 %v431, %v437
      %v468 = vadd.f32 %v432, %v437
      %v469 = vadd.f32 %v433, %v437
      %v470 = vadd.f32 %v434, %v437
      %v471 = vxor.u32 %v439, 2147483648
      %v472 = vxor.u32 %v440, 2147483648
      %v473 = vxor.u32 %v441, 2147483648
      %v474 = vxor.u32 %v442, 2147483648
      %v475 = vxor.u32 %v443, 2147483648
      %v476 = vxor.u32 %v444, 2147483648
      %v477 = vxor.u32 %v445, 2147483648
      %v478 = vxor.u32 %v446, 2147483648
      %v479 = vxor.u32 %v447, 2147483648
      %v480 = vxor.u32 %v448, 2147483648
      %v481 = vxor.u32 %v449, 2147483648
      %v482 = vxor.u32 %v450, 2147483648
      %v483 = vxor.u32 %v451, 2147483648
      %v484 = vxor.u32 %v452, 2147483648
      %v485 = vxor.u32 %v453, 2147483648
      %v486 = vxor.u32 %v454, 2147483648
      %v487 = vxor.u32 %v455, 2147483648
      %v488 = vxor.u32 %v456, 2147483648
      %v489 = vxor.u32 %v457, 2147483648
      %v490 = vxor.u32 %v458, 2147483648
      %v491 = vxor.u32 %v459, 2147483648
      %v492 = vxor.u32 %v460, 2147483648
      %v493 = vxor.u32 %v461, 2147483648
      %v494 = vxor.u32 %v462, 2147483648
      %v495 = vxor.u32 %v463, 2147483648
      %v496 = vxor.u32 %v464, 2147483648
      %v497 = vxor.u32 %v465, 2147483648
      %v498 = vxor.u32 %v466, 2147483648
      %v499 = vxor.u32 %v467, 2147483648
      %v500 = vxor.u32 %v468, 2147483648
      %v501 = vxor.u32 %v469, 2147483648
      %v502 = vxor.u32 %v470, 2147483648
      %v503 = vmul.f32 %v471, 1.442695
      %v504 = vpow.pop %v503
      %v505 = vmul.f32 %v472, 1.442695
      %v506 = vpow.pop %v505
      %v507 = vmul.f32 %v473, 1.442695
      %v508 = vpow.pop %v507
      %v509 = vmul.f32 %v474, 1.442695
      %v510 = vpow.pop %v509
      %v511 = vmul.f32 %v475, 1.442695
      %v512 = vpow.pop %v511
      %v513 = vmul.f32 %v476, 1.442695
      %v514 = vpow.pop %v513
      %v515 = vmul.f32 %v477, 1.442695
      %v516 = vpow.pop %v515
      %v517 = vmul.f32 %v478, 1.442695
      %v518 = vpow.pop %v517
      %v519 = vmul.f32 %v479, 1.442695
      %v520 = vpow.pop %v519
      %v521 = vmul.f32 %v480, 1.442695
      %v522 = vpow.pop %v521
      %v523 = vmul.f32 %v481, 1.442695
      %v524 = vpow.pop %v523
      %v525 = vmul.f32 %v482, 1.442695
      %v526 = vpow.pop %v525
      %v527 = vmul.f32 %v483, 1.442695
      %v528 = vpow.pop %v527
      %v529 = vmul.f32 %v484, 1.442695
      %v530 = vpow.pop %v529
      %v531 = vmul.f32 %v485, 1.442695
      %v532 = vpow.pop %v531
      %v533 = vmul.f32 %v486, 1.442695
      %v534 = vpow.pop %v533
      %v535 = vmul.f32 %v487, 1.442695
      %v536 = vpow.pop %v535
      %v537 = vmul.f32 %v488, 1.442695
      %v538 = vpow.pop %v537
      %v539 = vmul.f32 %v489, 1.442695
      %v540 = vpow.pop %v539
      %v541 = vmul.f32 %v490, 1.442695
      %v542 = vpow.pop %v541
      %v543 = vmul.f32 %v491, 1.442695
      %v544 = vpow.pop %v543
      %v545 = vmul.f32 %v492, 1.442695
      %v546 = vpow.pop %v545
      %v547 = vmul.f32 %v493, 1.442695
      %v548 = vpow.pop %v547
      %v549 = vmul.f32 %v494, 1.442695
      %v550 = vpow.pop %v549
      %v551 = vmul.f32 %v495, 1.442695
      %v552 = vpow.pop %v551
      %v553 = vmul.f32 %v496, 1.442695
      %v554 = vpow.pop %v553
      %v555 = vmul.f32 %v497, 1.442695
      %v556 = vpow.pop %v555
      %v557 = vmul.f32 %v498, 1.442695
      %v558 = vpow.pop %v557
      %v559 = vmul.f32 %v499, 1.442695
      %v560 = vpow.pop %v559
      %v561 = vmul.f32 %v500, 1.442695
      %v562 = vpow.pop %v561
      %v563 = vmul.f32 %v501, 1.442695
      %v564 = vpow.pop %v563
      %v565 = vmul.f32 %v502, 1.442695
      %v566 = vpow.pop %v565
      %v567 = vadd.f32 %v504, 1.0
      %v568 = vadd.f32 %v506, 1.0
      %v569 = vadd.f32 %v508, 1.0
      %v570 = vadd.f32 %v510, 1.0
      %v571 = vadd.f32 %v512, 1.0
      %v572 = vadd.f32 %v514, 1.0
      %v573 = vadd.f32 %v516, 1.0
      %v574 = vadd.f32 %v518, 1.0
      %v575 = vadd.f32 %v520, 1.0
      %v576 = vadd.f32 %v522, 1.0
      %v577 = vadd.f32 %v524, 1.0
      %v578 = vadd.f32 %v526, 1.0
      %v579 = vadd.f32 %v528, 1.0
      %v580 = vadd.f32 %v530, 1.0
      %v581 = vadd.f32 %v532, 1.0
      %v582 = vadd.f32 %v534, 1.0
      %v583 = vadd.f32 %v536, 1.0
      %v584 = vadd.f32 %v538, 1.0
      %v585 = vadd.f32 %v540, 1.0
      %v586 = vadd.f32 %v542, 1.0
      %v587 = vadd.f32 %v544, 1.0
      %v588 = vadd.f32 %v546, 1.0
      %v589 = vadd.f32 %v548, 1.0
      %v590 = vadd.f32 %v550, 1.0
      %v591 = vadd.f32 %v552, 1.0
      %v592 = vadd.f32 %v554, 1.0
      %v593 = vadd.f32 %v556, 1.0
      %v594 = vadd.f32 %v558, 1.0
      %v595 = vadd.f32 %v560, 1.0
      %v596 = vadd.f32 %v562, 1.0
      %v597 = vadd.f32 %v564, 1.0
      %v598 = vadd.f32 %v566, 1.0
      %v599 = vrcp.pop %v567
      %v600 = vmul.f32 %v567, %v599
      %v601 = vsub.f32 1.0, %v600
      %v602 = vmul.f32 %v599, %v601
      %v603 = vadd.f32 %v599, %v602
      %vm604 = vweird.f32 %v567
      %vm605 = vweird.f32 %v599
      %vm606 = vmor %vm604, %vm605
      %v607 = vsel %vm606, %v599, %v603
      %v608 = vand.u32 2147483647, %v567
      %vm609 = vcmp.eq.f32.partialorder %v608, 8.507059e+37
      %v610 = vand.u32 %v567, 2147483648
      %v611 = vor.u32 1.1754944e-38, %v610
      %v612 = vsel %vm609, %v611, %v607
      %v613 = vmul.f32 1.0, %v612
      %v614 = vrcp.pop %v568
      %v615 = vmul.f32 %v568, %v614
      %v616 = vsub.f32 1.0, %v615
      %v617 = vmul.f32 %v614, %v616
      %v618 = vadd.f32 %v614, %v617
      %vm619 = vweird.f32 %v568
      %vm620 = vweird.f32 %v614
      %vm621 = vmor %vm619, %vm620
      %v622 = vsel %vm621, %v614, %v618
      %v623 = vand.u32 2147483647, %v568
      %vm624 = vcmp.eq.f32.partialorder %v623, 8.507059e+37
      %v625 = vand.u32 %v568, 2147483648
      %v626 = vor.u32 1.1754944e-38, %v625
      %v627 = vsel %vm624, %v626, %v622
      %v628 = vmul.f32 1.0, %v627
      %v629 = vrcp.pop %v569
      %v630 = vmul.f32 %v569, %v629
      %v631 = vsub.f32 1.0, %v630
      %v632 = vmul.f32 %v629, %v631
      %v633 = vadd.f32 %v629, %v632
      %vm634 = vweird.f32 %v569
      %vm635 = vweird.f32 %v629
      %vm636 = vmor %vm634, %vm635
      %v637 = vsel %vm636, %v629, %v633
      %v638 = vand.u32 2147483647, %v569
      %vm639 = vcmp.eq.f32.partialorder %v638, 8.507059e+37
      %v640 = vand.u32 %v569, 2147483648
      %v641 = vor.u32 1.1754944e-38, %v640
      %v642 = vsel %vm639, %v641, %v637
      %v643 = vmul.f32 1.0, %v642
      %v644 = vrcp.pop %v570
      %v645 = vmul.f32 %v570, %v644
      %v646 = vsub.f32 1.0, %v645
      %v647 = vmul.f32 %v644, %v646
      %v648 = vadd.f32 %v644, %v647
      %vm649 = vweird.f32 %v570
      %vm650 = vweird.f32 %v644
      %vm651 = vmor %vm649, %vm650
      %v652 = vsel %vm651, %v644, %v648
      %v653 = vand.u32 2147483647, %v570
      %vm654 = vcmp.eq.f32.partialorder %v653, 8.507059e+37
      %v655 = vand.u32 %v570, 2147483648
      %v656 = vor.u32 1.1754944e-38, %v655
      %v657 = vsel %vm654, %v656, %v652
      %v658 = vmul.f32 1.0, %v657
      %v659 = vrcp.pop %v571
      %v660 = vmul.f32 %v571, %v659
      %v661 = vsub.f32 1.0, %v660
      %v662 = vmul.f32 %v659, %v661
      %v663 = vadd.f32 %v659, %v662
      %vm664 = vweird.f32 %v571
      %vm665 = vweird.f32 %v659
      %vm666 = vmor %vm664, %vm665
      %v667 = vsel %vm666, %v659, %v663
      %v668 = vand.u32 2147483647, %v571
      %vm669 = vcmp.eq.f32.partialorder %v668, 8.507059e+37
      %v670 = vand.u32 %v571, 2147483648
      %v671 = vor.u32 1.1754944e-38, %v670
      %v672 = vsel %vm669, %v671, %v667
      %v673 = vmul.f32 1.0, %v672
      %v674 = vrcp.pop %v572
      %v675 = vmul.f32 %v572, %v674
      %v676 = vsub.f32 1.0, %v675
      %v677 = vmul.f32 %v674, %v676
      %v678 = vadd.f32 %v674, %v677
      %vm679 = vweird.f32 %v572
      %vm680 = vweird.f32 %v674
      %vm681 = vmor %vm679, %vm680
      %v682 = vsel %vm681, %v674, %v678
      %v683 = vand.u32 2147483647, %v572
      %vm684 = vcmp.eq.f32.partialorder %v683, 8.507059e+37
      %v685 = vand.u32 %v572, 2147483648
      %v686 = vor.u32 1.1754944e-38, %v685
      %v687 = vsel %vm684, %v686, %v682
      %v688 = vmul.f32 1.0, %v687
      %v689 = vrcp.pop %v573
      %v690 = vmul.f32 %v573, %v689
      %v691 = vsub.f32 1.0, %v690
      %v692 = vmul.f32 %v689, %v691
      %v693 = vadd.f32 %v689, %v692
      %vm694 = vweird.f32 %v573
      %vm695 = vweird.f32 %v689
      %vm696 = vmor %vm694, %vm695
      %v697 = vsel %vm696, %v689, %v693
      %v698 = vand.u32 2147483647, %v573
      %vm699 = vcmp.eq.f32.partialorder %v698, 8.507059e+37
      %v700 = vand.u32 %v573, 2147483648
      %v701 = vor.u32 1.1754944e-38, %v700
      %v702 = vsel %vm699, %v701, %v697
      %v703 = vmul.f32 1.0, %v702
      %v704 = vrcp.pop %v574
      %v705 = vmul.f32 %v574, %v704
      %v706 = vsub.f32 1.0, %v705
      %v707 = vmul.f32 %v704, %v706
      %v708 = vadd.f32 %v704, %v707
      %vm709 = vweird.f32 %v574
      %vm710 = vweird.f32 %v704
      %vm711 = vmor %vm709, %vm710
      %v712 = vsel %vm711, %v704, %v708
      %v713 = vand.u32 2147483647, %v574
      %vm714 = vcmp.eq.f32.partialorder %v713, 8.507059e+37
      %v715 = vand.u32 %v574, 2147483648
      %v716 = vor.u32 1.1754944e-38, %v715
      %v717 = vsel %vm714, %v716, %v712
      %v718 = vmul.f32 1.0, %v717
      %v719 = vrcp.pop %v575
      %v720 = vmul.f32 %v575, %v719
      %v721 = vsub.f32 1.0, %v720
      %v722 = vmul.f32 %v719, %v721
      %v723 = vadd.f32 %v719, %v722
      %vm724 = vweird.f32 %v575
      %vm725 = vweird.f32 %v719
      %vm726 = vmor %vm724, %vm725
      %v727 = vsel %vm726, %v719, %v723
      %v728 = vand.u32 2147483647, %v575
      %vm729 = vcmp.eq.f32.partialorder %v728, 8.507059e+37
      %v730 = vand.u32 %v575, 2147483648
      %v731 = vor.u32 1.1754944e-38, %v730
      %v732 = vsel %vm729, %v731, %v727
      %v733 = vmul.f32 1.0, %v732
      %v734 = vrcp.pop %v576
      %v735 = vmul.f32 %v576, %v734
      %v736 = vsub.f32 1.0, %v735
      %v737 = vmul.f32 %v734, %v736
      %v738 = vadd.f32 %v734, %v737
      %vm739 = vweird.f32 %v576
      %vm740 = vweird.f32 %v734
      %vm741 = vmor %vm739, %vm740
      %v742 = vsel %vm741, %v734, %v738
      %v743 = vand.u32 2147483647, %v576
      %vm744 = vcmp.eq.f32.partialorder %v743, 8.507059e+37
      %v745 = vand.u32 %v576, 2147483648
      %v746 = vor.u32 1.1754944e-38, %v745
      %v747 = vsel %vm744, %v746, %v742
      %v748 = vmul.f32 1.0, %v747
      %v749 = vrcp.pop %v577
      %v750 = vmul.f32 %v577, %v749
      %v751 = vsub.f32 1.0, %v750
      %v752 = vmul.f32 %v749, %v751
      %v753 = vadd.f32 %v749, %v752
      %vm754 = vweird.f32 %v577
      %vm755 = vweird.f32 %v749
      %vm756 = vmor %vm754, %vm755
      %v757 = vsel %vm756, %v749, %v753
      %v758 = vand.u32 2147483647, %v577
      %vm759 = vcmp.eq.f32.partialorder %v758, 8.507059e+37
      %v760 = vand.u32 %v577, 2147483648
      %v761 = vor.u32 1.1754944e-38, %v760
      %v762 = vsel %vm759, %v761, %v757
      %v763 = vmul.f32 1.0, %v762
      %v764 = vrcp.pop %v578
      %v765 = vmul.f32 %v578, %v764
      %v766 = vsub.f32 1.0, %v765
      %v767 = vmul.f32 %v764, %v766
      %v768 = vadd.f32 %v764, %v767
      %vm769 = vweird.f32 %v578
      %vm770 = vweird.f32 %v764
      %vm771 = vmor %vm769, %vm770
      %v772 = vsel %vm771, %v764, %v768
      %v773 = vand.u32 2147483647, %v578
      %vm774 = vcmp.eq.f32.partialorder %v773, 8.507059e+37
      %v775 = vand.u32 %v578, 2147483648
      %v776 = vor.u32 1.1754944e-38, %v775
      %v777 = vsel %vm774, %v776, %v772
      %v778 = vmul.f32 1.0, %v777
      %v779 = vrcp.pop %v579
      %v780 = vmul.f32 %v579, %v779
      %v781 = vsub.f32 1.0, %v780
      %v782 = vmul.f32 %v779, %v781
      %v783 = vadd.f32 %v779, %v782
      %vm784 = vweird.f32 %v579
      %vm785 = vweird.f32 %v779
      %vm786 = vmor %vm784, %vm785
      %v787 = vsel %vm786, %v779, %v783
      %v788 = vand.u32 2147483647, %v579
      %vm789 = vcmp.eq.f32.partialorder %v788, 8.507059e+37
      %v790 = vand.u32 %v579, 2147483648
      %v791 = vor.u32 1.1754944e-38, %v790
      %v792 = vsel %vm789, %v791, %v787
      %v793 = vmul.f32 1.0, %v792
      %v794 = vrcp.pop %v580
      %v795 = vmul.f32 %v580, %v794
      %v796 = vsub.f32 1.0, %v795
      %v797 = vmul.f32 %v794, %v796
      %v798 = vadd.f32 %v794, %v797
      %vm799 = vweird.f32 %v580
      %vm800 = vweird.f32 %v794
      %vm801 = vmor %vm799, %vm800
      %v802 = vsel %vm801, %v794, %v798
      %v803 = vand.u32 2147483647, %v580
      %vm804 = vcmp.eq.f32.partialorder %v803, 8.507059e+37
      %v805 = vand.u32 %v580, 2147483648
      %v806 = vor.u32 1.1754944e-38, %v805
      %v807 = vsel %vm804, %v806, %v802
      %v808 = vmul.f32 1.0, %v807
      %v809 = vrcp.pop %v581
      %v810 = vmul.f32 %v581, %v809
      %v811 = vsub.f32 1.0, %v810
      %v812 = vmul.f32 %v809, %v811
      %v813 = vadd.f32 %v809, %v812
      %vm814 = vweird.f32 %v581
      %vm815 = vweird.f32 %v809
      %vm816 = vmor %vm814, %vm815
      %v817 = vsel %vm816, %v809, %v813
      %v818 = vand.u32 2147483647, %v581
      %vm819 = vcmp.eq.f32.partialorder %v818, 8.507059e+37
      %v820 = vand.u32 %v581, 2147483648
      %v821 = vor.u32 1.1754944e-38, %v820
      %v822 = vsel %vm819, %v821, %v817
      %v823 = vmul.f32 1.0, %v822
      %v824 = vrcp.pop %v582
      %v825 = vmul.f32 %v582, %v824
      %v826 = vsub.f32 1.0, %v825
      %v827 = vmul.f32 %v824, %v826
      %v828 = vadd.f32 %v824, %v827
      %vm829 = vweird.f32 %v582
      %vm830 = vweird.f32 %v824
      %vm831 = vmor %vm829, %vm830
      %v832 = vsel %vm831, %v824, %v828
      %v833 = vand.u32 2147483647, %v582
      %vm834 = vcmp.eq.f32.partialorder %v833, 8.507059e+37
      %v835 = vand.u32 %v582, 2147483648
      %v836 = vor.u32 1.1754944e-38, %v835
      %v837 = vsel %vm834, %v836, %v832
      %v838 = vmul.f32 1.0, %v837
      %v839 = vrcp.pop %v583
      %v840 = vmul.f32 %v583, %v839
      %v841 = vsub.f32 1.0, %v840
      %v842 = vmul.f32 %v839, %v841
      %v843 = vadd.f32 %v839, %v842
      %vm844 = vweird.f32 %v583
      %vm845 = vweird.f32 %v839
      %vm846 = vmor %vm844, %vm845
      %v847 = vsel %vm846, %v839, %v843
      %v848 = vand.u32 2147483647, %v583
      %vm849 = vcmp.eq.f32.partialorder %v848, 8.507059e+37
      %v850 = vand.u32 %v583, 2147483648
      %v851 = vor.u32 1.1754944e-38, %v850
      %v852 = vsel %vm849, %v851, %v847
      %v853 = vmul.f32 1.0, %v852
      %v854 = vrcp.pop %v584
      %v855 = vmul.f32 %v584, %v854
      %v856 = vsub.f32 1.0, %v855
      %v857 = vmul.f32 %v854, %v856
      %v858 = vadd.f32 %v854, %v857
      %vm859 = vweird.f32 %v584
      %vm860 = vweird.f32 %v854
      %vm861 = vmor %vm859, %vm860
      %v862 = vsel %vm861, %v854, %v858
      %v863 = vand.u32 2147483647, %v584
      %vm864 = vcmp.eq.f32.partialorder %v863, 8.507059e+37
      %v865 = vand.u32 %v584, 2147483648
      %v866 = vor.u32 1.1754944e-38, %v865
      %v867 = vsel %vm864, %v866, %v862
      %v868 = vmul.f32 1.0, %v867
      %v869 = vrcp.pop %v585
      %v870 = vmul.f32 %v585, %v869
      %v871 = vsub.f32 1.0, %v870
      %v872 = vmul.f32 %v869, %v871
      %v873 = vadd.f32 %v869, %v872
      %vm874 = vweird.f32 %v585
      %vm875 = vweird.f32 %v869
      %vm876 = vmor %vm874, %vm875
      %v877 = vsel %vm876, %v869, %v873
      %v878 = vand.u32 2147483647, %v585
      %vm879 = vcmp.eq.f32.partialorder %v878, 8.507059e+37
      %v880 = vand.u32 %v585, 2147483648
      %v881 = vor.u32 1.1754944e-38, %v880
      %v882 = vsel %vm879, %v881, %v877
      %v883 = vmul.f32 1.0, %v882
      %v884 = vrcp.pop %v586
      %v885 = vmul.f32 %v586, %v884
      %v886 = vsub.f32 1.0, %v885
      %v887 = vmul.f32 %v884, %v886
      %v888 = vadd.f32 %v884, %v887
      %vm889 = vweird.f32 %v586
      %vm890 = vweird.f32 %v884
      %vm891 = vmor %vm889, %vm890
      %v892 = vsel %vm891, %v884, %v888
      %v893 = vand.u32 2147483647, %v586
      %vm894 = vcmp.eq.f32.partialorder %v893, 8.507059e+37
      %v895 = vand.u32 %v586, 2147483648
      %v896 = vor.u32 1.1754944e-38, %v895
      %v897 = vsel %vm894, %v896, %v892
      %v898 = vmul.f32 1.0, %v897
      %v899 = vrcp.pop %v587
      %v900 = vmul.f32 %v587, %v899
      %v901 = vsub.f32 1.0, %v900
      %v902 = vmul.f32 %v899, %v901
      %v903 = vadd.f32 %v899, %v902
      %vm904 = vweird.f32 %v587
      %vm905 = vweird.f32 %v899
      %vm906 = vmor %vm904, %vm905
      %v907 = vsel %vm906, %v899, %v903
      %v908 = vand.u32 2147483647, %v587
      %vm909 = vcmp.eq.f32.partialorder %v908, 8.507059e+37
      %v910 = vand.u32 %v587, 2147483648
      %v911 = vor.u32 1.1754944e-38, %v910
      %v912 = vsel %vm909, %v911, %v907
      %v913 = vmul.f32 1.0, %v912
      %v914 = vrcp.pop %v588
      %v915 = vmul.f32 %v588, %v914
      %v916 = vsub.f32 1.0, %v915
      %v917 = vmul.f32 %v914, %v916
      %v918 = vadd.f32 %v914, %v917
      %vm919 = vweird.f32 %v588
      %vm920 = vweird.f32 %v914
      %vm921 = vmor %vm919, %vm920
      %v922 = vsel %vm921, %v914, %v918
      %v923 = vand.u32 2147483647, %v588
      %vm924 = vcmp.eq.f32.partialorder %v923, 8.507059e+37
      %v925 = vand.u32 %v588, 2147483648
      %v926 = vor.u32 1.1754944e-38, %v925
      %v927 = vsel %vm924, %v926, %v922
      %v928 = vmul.f32 1.0, %v927
      %v929 = vrcp.pop %v589
      %v930 = vmul.f32 %v589, %v929
      %v931 = vsub.f32 1.0, %v930
      %v932 = vmul.f32 %v929, %v931
      %v933 = vadd.f32 %v929, %v932
      %vm934 = vweird.f32 %v589
      %vm935 = vweird.f32 %v929
      %vm936 = vmor %vm934, %vm935
      %v937 = vsel %vm936, %v929, %v933
      %v938 = vand.u32 2147483647, %v589
      %vm939 = vcmp.eq.f32.partialorder %v938, 8.507059e+37
      %v940 = vand.u32 %v589, 2147483648
      %v941 = vor.u32 1.1754944e-38, %v940
      %v942 = vsel %vm939, %v941, %v937
      %v943 = vmul.f32 1.0, %v942
      %v944 = vrcp.pop %v590
      %v945 = vmul.f32 %v590, %v944
      %v946 = vsub.f32 1.0, %v945
      %v947 = vmul.f32 %v944, %v946
      %v948 = vadd.f32 %v944, %v947
      %vm949 = vweird.f32 %v590
      %vm950 = vweird.f32 %v944
      %vm951 = vmor %vm949, %vm950
      %v952 = vsel %vm951, %v944, %v948
      %v953 = vand.u32 2147483647, %v590
      %vm954 = vcmp.eq.f32.partialorder %v953, 8.507059e+37
      %v955 = vand.u32 %v590, 2147483648
      %v956 = vor.u32 1.1754944e-38, %v955
      %v957 = vsel %vm954, %v956, %v952
      %v958 = vmul.f32 1.0, %v957
      %v959 = vrcp.pop %v591
      %v960 = vmul.f32 %v591, %v959
      %v961 = vsub.f32 1.0, %v960
      %v962 = vmul.f32 %v959, %v961
      %v963 = vadd.f32 %v959, %v962
      %vm964 = vweird.f32 %v591
      %vm965 = vweird.f32 %v959
      %vm966 = vmor %vm964, %vm965
      %v967 = vsel %vm966, %v959, %v963
      %v968 = vand.u32 2147483647, %v591
      %vm969 = vcmp.eq.f32.partialorder %v968, 8.507059e+37
      %v970 = vand.u32 %v591, 2147483648
      %v971 = vor.u32 1.1754944e-38, %v970
      %v972 = vsel %vm969, %v971, %v967
      %v973 = vmul.f32 1.0, %v972
      %v974 = vrcp.pop %v592
      %v975 = vmul.f32 %v592, %v974
      %v976 = vsub.f32 1.0, %v975
      %v977 = vmul.f32 %v974, %v976
      %v978 = vadd.f32 %v974, %v977
      %vm979 = vweird.f32 %v592
      %vm980 = vweird.f32 %v974
      %vm981 = vmor %vm979, %vm980
      %v982 = vsel %vm981, %v974, %v978
      %v983 = vand.u32 2147483647, %v592
      %vm984 = vcmp.eq.f32.partialorder %v983, 8.507059e+37
      %v985 = vand.u32 %v592, 2147483648
      %v986 = vor.u32 1.1754944e-38, %v985
      %v987 = vsel %vm984, %v986, %v982
      %v988 = vmul.f32 1.0, %v987
      %v989 = vrcp.pop %v593
      %v990 = vmul.f32 %v593, %v989
      %v991 = vsub.f32 1.0, %v990
      %v992 = vmul.f32 %v989, %v991
      %v993 = vadd.f32 %v989, %v992
      %vm994 = vweird.f32 %v593
      %vm995 = vweird.f32 %v989
      %vm996 = vmor %vm994, %vm995
      %v997 = vsel %vm996, %v989, %v993
      %v998 = vand.u32 2147483647, %v593
      %vm999 = vcmp.eq.f32.partialorder %v998, 8.507059e+37
      %v1000 = vand.u32 %v593, 2147483648
      %v1001 = vor.u32 1.1754944e-38, %v1000
      %v1002 = vsel %vm999, %v1001, %v997
      %v1003 = vmul.f32 1.0, %v1002
      %v1004 = vrcp.pop %v594
      %v1005 = vmul.f32 %v594, %v1004
      %v1006 = vsub.f32 1.0, %v1005
      %v1007 = vmul.f32 %v1004, %v1006
      %v1008 = vadd.f32 %v1004, %v1007
      %vm1009 = vweird.f32 %v594
      %vm1010 = vweird.f32 %v1004
      %vm1011 = vmor %vm1009, %vm1010
      %v1012 = vsel %vm1011, %v1004, %v1008
      %v1013 = vand.u32 2147483647, %v594
      %vm1014 = vcmp.eq.f32.partialorder %v1013, 8.507059e+37
      %v1015 = vand.u32 %v594, 2147483648
      %v1016 = vor.u32 1.1754944e-38, %v1015
      %v1017 = vsel %vm1014, %v1016, %v1012
      %v1018 = vmul.f32 1.0, %v1017
      %v1019 = vrcp.pop %v595
      %v1020 = vmul.f32 %v595, %v1019
      %v1021 = vsub.f32 1.0, %v1020
      %v1022 = vmul.f32 %v1019, %v1021
      %v1023 = vadd.f32 %v1019, %v1022
      %vm1024 = vweird.f32 %v595
      %vm1025 = vweird.f32 %v1019
      %vm1026 = vmor %vm1024, %vm1025
      %v1027 = vsel %vm1026, %v1019, %v1023
      %v1028 = vand.u32 2147483647, %v595
      %vm1029 = vcmp.eq.f32.partialorder %v1028, 8.507059e+37
      %v1030 = vand.u32 %v595, 2147483648
      %v1031 = vor.u32 1.1754944e-38, %v1030
      %v1032 = vsel %vm1029, %v1031, %v1027
      %v1033 = vmul.f32 1.0, %v1032
      %v1034 = vrcp.pop %v596
      %v1035 = vmul.f32 %v596, %v1034
      %v1036 = vsub.f32 1.0, %v1035
      %v1037 = vmul.f32 %v1034, %v1036
      %v1038 = vadd.f32 %v1034, %v1037
      %vm1039 = vweird.f32 %v596
      %vm1040 = vweird.f32 %v1034
      %vm1041 = vmor %vm1039, %vm1040
      %v1042 = vsel %vm1041, %v1034, %v1038
      %v1043 = vand.u32 2147483647, %v596
      %vm1044 = vcmp.eq.f32.partialorder %v1043, 8.507059e+37
      %v1045 = vand.u32 %v596, 2147483648
      %v1046 = vor.u32 1.1754944e-38, %v1045
      %v1047 = vsel %vm1044, %v1046, %v1042
      %v1048 = vmul.f32 1.0, %v1047
      %v1049 = vrcp.pop %v597
      %v1050 = vmul.f32 %v597, %v1049
      %v1051 = vsub.f32 1.0, %v1050
      %v1052 = vmul.f32 %v1049, %v1051
      %v1053 = vadd.f32 %v1049, %v1052
      %vm1054 = vweird.f32 %v597
      %vm1055 = vweird.f32 %v1049
      %vm1056 = vmor %vm1054, %vm1055
      %v1057 = vsel %vm1056, %v1049, %v1053
      %v1058 = vand.u32 2147483647, %v597
      %vm1059 = vcmp.eq.f32.partialorder %v1058, 8.507059e+37
      %v1060 = vand.u32 %v597, 2147483648
      %v1061 = vor.u32 1.1754944e-38, %v1060
      %v1062 = vsel %vm1059, %v1061, %v1057
      %v1063 = vmul.f32 1.0, %v1062
      %v1064 = vrcp.pop %v598
      %v1065 = vmul.f32 %v598, %v1064
      %v1066 = vsub.f32 1.0, %v1065
      %v1067 = vmul.f32 %v1064, %v1066
      %v1068 = vadd.f32 %v1064, %v1067
      %vm1069 = vweird.f32 %v598
      %vm1070 = vweird.f32 %v1064
      %vm1071 = vmor %vm1069, %vm1070
      %v1072 = vsel %vm1071, %v1064, %v1068
      %v1073 = vand.u32 2147483647, %v598
      %vm1074 = vcmp.eq.f32.partialorder %v1073, 8.507059e+37
      %v1075 = vand.u32 %v598, 2147483648
      %v1076 = vor.u32 1.1754944e-38, %v1075
      %v1077 = vsel %vm1074, %v1076, %v1072
      %v1078 = vmul.f32 1.0, %v1077
      %v1079 = vmul.f32 %v439, %v613
      %v1080 = vmul.f32 %v440, %v628
      %v1081 = vmul.f32 %v441, %v643
      %v1082 = vmul.f32 %v442, %v658
      %v1083 = vmul.f32 %v443, %v673
      %v1084 = vmul.f32 %v444, %v688
      %v1085 = vmul.f32 %v445, %v703
      %v1086 = vmul.f32 %v446, %v718
      %v1087 = vmul.f32 %v447, %v733
      %v1088 = vmul.f32 %v448, %v748
      %v1089 = vmul.f32 %v449, %v763
      %v1090 = vmul.f32 %v450, %v778
      %v1091 = vmul.f32 %v451, %v793
      %v1092 = vmul.f32 %v452, %v808
      %v1093 = vmul.f32 %v453, %v823
      %v1094 = vmul.f32 %v454, %v838
      %v1095 = vmul.f32 %v455, %v853
      %v1096 = vmul.f32 %v456, %v868
      %v1097 = vmul.f32 %v457, %v883
      %v1098 = vmul.f32 %v458, %v898
      %v1099 = vmul.f32 %v459, %v913
      %v1100 = vmul.f32 %v460, %v928
      %v1101 = vmul.f32 %v461, %v943
      %v1102 = vmul.f32 %v462, %v958
      %v1103 = vmul.f32 %v463, %v973
      %v1104 = vmul.f32 %v464, %v988
      %v1105 = vmul.f32 %v465, %v1003
      %v1106 = vmul.f32 %v466, %v1018
      %v1107 = vmul.f32 %v467, %v1033
      %v1108 = vmul.f32 %v468, %v1048
      %v1109 = vmul.f32 %v469, %v1063
      %v1110 = vmul.f32 %v470, %v1078
      %v1111 = vpack.c.bf16 %v1079, %v1079
      %v1112 = vpack.c.bf16 %v1080, %v1080
      %v1113 = vpack.c.bf16 %v1081, %v1081
      %v1114 = vpack.c.bf16 %v1082, %v1082
      %v1115 = vpack.c.bf16 %v1083, %v1083
      %v1116 = vpack.c.bf16 %v1084, %v1084
      %v1117 = vpack.c.bf16 %v1085, %v1085
      %v1118 = vpack.c.bf16 %v1086, %v1086
      %v1119 = vpack.c.bf16 %v1087, %v1087
      %v1120 = vpack.c.bf16 %v1088, %v1088
      %v1121 = vpack.c.bf16 %v1089, %v1089
      %v1122 = vpack.c.bf16 %v1090, %v1090
      %v1123 = vpack.c.bf16 %v1091, %v1091
      %v1124 = vpack.c.bf16 %v1092, %v1092
      %v1125 = vpack.c.bf16 %v1093, %v1093
      %v1126 = vpack.c.bf16 %v1094, %v1094
      %v1127 = vpack.c.bf16 %v1095, %v1095
      %v1128 = vpack.c.bf16 %v1096, %v1096
      %v1129 = vpack.c.bf16 %v1097, %v1097
      %v1130 = vpack.c.bf16 %v1098, %v1098
      %v1131 = vpack.c.bf16 %v1099, %v1099
      %v1132 = vpack.c.bf16 %v1100, %v1100
      %v1133 = vpack.c.bf16 %v1101, %v1101
      %v1134 = vpack.c.bf16 %v1102, %v1102
      %v1135 = vpack.c.bf16 %v1103, %v1103
      %v1136 = vpack.c.bf16 %v1104, %v1104
      %v1137 = vpack.c.bf16 %v1105, %v1105
      %v1138 = vpack.c.bf16 %v1106, %v1106
      %v1139 = vpack.c.bf16 %v1107, %v1107
      %v1140 = vpack.c.bf16 %v1108, %v1108
      %v1141 = vpack.c.bf16 %v1109, %v1109
      %v1142 = vpack.c.bf16 %v1110, %v1110
      %v1175 = vunpack.c.l.b16 %v1111
      %v1176 = vunpack.c.l.b16 %v1112
      %v1177 = vunpack.c.l.b16 %v1113
      %v1178 = vunpack.c.l.b16 %v1114
      %v1179 = vunpack.c.l.b16 %v1115
      %v1180 = vunpack.c.l.b16 %v1116
      %v1181 = vunpack.c.l.b16 %v1117
      %v1182 = vunpack.c.l.b16 %v1118
      %v1183 = vunpack.c.l.b16 %v1119
      %v1184 = vunpack.c.l.b16 %v1120
      %v1185 = vunpack.c.l.b16 %v1121
      %v1186 = vunpack.c.l.b16 %v1122
      %v1187 = vunpack.c.l.b16 %v1123
      %v1188 = vunpack.c.l.b16 %v1124
      %v1189 = vunpack.c.l.b16 %v1125
      %v1190 = vunpack.c.l.b16 %v1126
      %v1191 = vunpack.c.l.b16 %v1127
      %v1192 = vunpack.c.l.b16 %v1128
      %v1193 = vunpack.c.l.b16 %v1129
      %v1194 = vunpack.c.l.b16 %v1130
      %v1195 = vunpack.c.l.b16 %v1131
      %v1196 = vunpack.c.l.b16 %v1132
      %v1197 = vunpack.c.l.b16 %v1133
      %v1198 = vunpack.c.l.b16 %v1134
      %v1199 = vunpack.c.l.b16 %v1135
      %v1200 = vunpack.c.l.b16 %v1136
      %v1201 = vunpack.c.l.b16 %v1137
      %v1202 = vunpack.c.l.b16 %v1138
      %v1203 = vunpack.c.l.b16 %v1139
      %v1204 = vunpack.c.l.b16 %v1140
      %v1205 = vunpack.c.l.b16 %v1141
      %v1206 = vunpack.c.l.b16 %v1142
      %v1207 = vpack.c.b16 %v1176, %v1175
      %v1208 = vpack.c.b16 %v1178, %v1177
      %v1209 = vpack.c.b16 %v1180, %v1179
      %v1210 = vpack.c.b16 %v1182, %v1181
      %v1211 = vpack.c.b16 %v1184, %v1183
      %v1212 = vpack.c.b16 %v1186, %v1185
      %v1213 = vpack.c.b16 %v1188, %v1187
      %v1214 = vpack.c.b16 %v1190, %v1189
      %v1215 = vpack.c.b16 %v1192, %v1191
      %v1216 = vpack.c.b16 %v1194, %v1193
      %v1217 = vpack.c.b16 %v1196, %v1195
      %v1218 = vpack.c.b16 %v1198, %v1197
      %v1219 = vpack.c.b16 %v1200, %v1199
      %v1220 = vpack.c.b16 %v1202, %v1201
      %v1221 = vpack.c.b16 %v1204, %v1203
      %v1222 = vpack.c.b16 %v1206, %v1205
      %v1224 = vshrl.u32 0, 16
      %v1226 = vrot.slane %v1224, 7
      %v1227 = vshll.u32 0, 16
      %v1229 = vor.u32 %v1226, %v1227
      %v1231 = vshrl.u32 %v1207, 16
      %v1233 = vrot.slane %v1231, 7
      %v1234 = vshll.u32 %v1207, 16
      %v1236 = vor.u32 %v1233, %v1234
      %v1238 = vshrl.u32 %v1208, 16
      %v1240 = vrot.slane %v1238, 7
      %v1241 = vshll.u32 %v1208, 16
      %v1243 = vor.u32 %v1240, %v1241
      %v1245 = vshrl.u32 %v1209, 16
      %v1247 = vrot.slane %v1245, 7
      %v1248 = vshll.u32 %v1209, 16
      %v1250 = vor.u32 %v1247, %v1248
      %v1252 = vshrl.u32 %v1210, 16
      %v1254 = vrot.slane %v1252, 7
      %v1255 = vshll.u32 %v1210, 16
      %v1257 = vor.u32 %v1254, %v1255
      %v1259 = vshrl.u32 %v1211, 16
      %v1261 = vrot.slane %v1259, 7
      %v1262 = vshll.u32 %v1211, 16
      %v1264 = vor.u32 %v1261, %v1262
      %v1266 = vshrl.u32 %v1212, 16
      %v1268 = vrot.slane %v1266, 7
      %v1269 = vshll.u32 %v1212, 16
      %v1271 = vor.u32 %v1268, %v1269
      %v1273 = vshrl.u32 %v1213, 16
      %v1275 = vrot.slane %v1273, 7
      %v1276 = vshll.u32 %v1213, 16
      %v1278 = vor.u32 %v1275, %v1276
      %v1280 = vshrl.u32 %v1214, 16
      %v1282 = vrot.slane %v1280, 7
      %v1283 = vshll.u32 %v1214, 16
      %v1285 = vor.u32 %v1282, %v1283
      %v1287 = vshrl.u32 %v1215, 16
      %v1289 = vrot.slane %v1287, 7
      %v1290 = vshll.u32 %v1215, 16
      %v1292 = vor.u32 %v1289, %v1290
      %v1294 = vshrl.u32 %v1216, 16
      %v1296 = vrot.slane %v1294, 7
      %v1297 = vshll.u32 %v1216, 16
      %v1299 = vor.u32 %v1296, %v1297
      %v1301 = vshrl.u32 %v1217, 16
      %v1303 = vrot.slane %v1301, 7
      %v1304 = vshll.u32 %v1217, 16
      %v1306 = vor.u32 %v1303, %v1304
      %v1308 = vshrl.u32 %v1218, 16
      %v1310 = vrot.slane %v1308, 7
      %v1311 = vshll.u32 %v1218, 16
      %v1313 = vor.u32 %v1310, %v1311
      %v1315 = vshrl.u32 %v1219, 16
      %v1317 = vrot.slane %v1315, 7
      %v1318 = vshll.u32 %v1219, 16
      %v1320 = vor.u32 %v1317, %v1318
      %v1322 = vshrl.u32 %v1220, 16
      %v1324 = vrot.slane %v1322, 7
      %v1325 = vshll.u32 %v1220, 16
      %v1327 = vor.u32 %v1324, %v1325
      %v1329 = vshrl.u32 %v1221, 16
      %v1331 = vrot.slane %v1329, 7
      %v1332 = vshll.u32 %v1221, 16
      %v1334 = vor.u32 %v1331, %v1332
      %v1336 = vshrl.u32 %v1222, 16
      %v1338 = vrot.slane %v1336, 7
      %v1339 = vshll.u32 %v1222, 16
      %v1341 = vor.u32 %v1338, %v1339
      %vm1376 = vcmask 1040384
      %vm1377 = vsmask.f32 256
      %vm1378 = vmand %vm1376, %vm1377
      %v1379 = vsel %vm1378, 0, %v1229
      %v1380 = vsel %vm1378, 0, %v1236
      %v1381 = vsel %vm1378, 0, %v1243
      %v1382 = vsel %vm1378, 0, %v1250
      %v1383 = vsel %vm1378, 0, %v1257
      %v1384 = vsel %vm1378, 0, %v1264
      %v1385 = vsel %vm1378, 0, %v1271
      %v1386 = vsel %vm1378, 0, %v1278
      %v1387 = vsel %vm1378, 0, %v1285
      %v1388 = vsel %vm1378, 0, %v1292
      %v1389 = vsel %vm1378, 0, %v1299
      %v1390 = vsel %vm1378, 0, %v1306
      %v1391 = vsel %vm1378, 0, %v1313
      %v1392 = vsel %vm1378, 0, %v1320
      %v1393 = vsel %vm1378, 0, %v1327
      %v1394 = vsel %vm1378, 0, %v1334
      %v1395 = vsel %vm1378, 0, %v1341
      %v1396 = vsel %vm1378, %v1226, 0
      %v1397 = vsel %vm1378, %v1233, 0
      %v1398 = vsel %vm1378, %v1240, 0
      %v1399 = vsel %vm1378, %v1247, 0
      %v1400 = vsel %vm1378, %v1254, 0
      %v1401 = vsel %vm1378, %v1261, 0
      %v1402 = vsel %vm1378, %v1268, 0
      %v1403 = vsel %vm1378, %v1275, 0
      %v1404 = vsel %vm1378, %v1282, 0
      %v1405 = vsel %vm1378, %v1289, 0
      %v1406 = vsel %vm1378, %v1296, 0
      %v1407 = vsel %vm1378, %v1303, 0
      %v1408 = vsel %vm1378, %v1310, 0
      %v1409 = vsel %vm1378, %v1317, 0
      %v1410 = vsel %vm1378, %v1324, 0
      %v1411 = vsel %vm1378, %v1331, 0
      %v1412 = vsel %vm1378, %v1338, 0
      %v1413 = vld [vmem:[%s314] sm:$0xf]
      %v1414 = vld [vmem:[%s314 + $0x4] sm:$0xf]
      %v1415 = vld [vmem:[%s314 + $0x8] sm:$0xf]
      %v1416 = vld [vmem:[%s314 + $0xc] sm:$0xf]
      %v1417 = vld [vmem:[%s314 + $0x10] sm:$0xf]
      %v1418 = vld [vmem:[%s314 + $0x14] sm:$0xf]
      %v1419 = vld [vmem:[%s314 + $0x18] sm:$0xf]
      %v1420 = vld [vmem:[%s314 + $0x1c] sm:$0xf]
      %v1421 = vld [vmem:[%s314 + $0x20] sm:$0xf]
      %v1422 = vld [vmem:[%s314 + $0x24] sm:$0xf]
      %v1423 = vld [vmem:[%s314 + $0x28] sm:$0xf]
      %v1424 = vld [vmem:[%s314 + $0x2c] sm:$0xf]
      %v1425 = vld [vmem:[%s314 + $0x30] sm:$0xf]
      %v1426 = vld [vmem:[%s314 + $0x34] sm:$0xf]
      %v1427 = vld [vmem:[%s314 + $0x38] sm:$0xf]
      %v1428 = vld [vmem:[%s314 + $0x3c] sm:$0xf]
      %vm1429 = vsmask.f32 7424
      %v1431 = vshrl.u32 %v1379, 16
      %v1433 = vshll.u32 %v1379, 16
      %v1435 = vrot.slane %v1433, 1
      %v1436 = vor.u32 %v1431, %v1435
      %v1438 = vshll.u32 %v1396, 16
      %v1440 = vrot.slane %v1438, 1
      %v1441 = vsel %vm1429, %v1436, %v1440
      %v1443 = vshrl.u32 %v1380, 16
      %v1445 = vshll.u32 %v1380, 16
      %v1447 = vrot.slane %v1445, 1
      %v1448 = vor.u32 %v1443, %v1447
      %v1450 = vshll.u32 %v1397, 16
      %v1452 = vrot.slane %v1450, 1
      %v1453 = vsel %vm1429, %v1448, %v1452
      %v1455 = vshrl.u32 %v1381, 16
      %v1457 = vshll.u32 %v1381, 16
      %v1459 = vrot.slane %v1457, 1
      %v1460 = vor.u32 %v1455, %v1459
      %v1462 = vshll.u32 %v1398, 16
      %v1464 = vrot.slane %v1462, 1
      %v1465 = vsel %vm1429, %v1460, %v1464
      %v1467 = vshrl.u32 %v1382, 16
      %v1469 = vshll.u32 %v1382, 16
      %v1471 = vrot.slane %v1469, 1
      %v1472 = vor.u32 %v1467, %v1471
      %v1474 = vshll.u32 %v1399, 16
      %v1476 = vrot.slane %v1474, 1
      %v1477 = vsel %vm1429, %v1472, %v1476
      %v1479 = vshrl.u32 %v1383, 16
      %v1481 = vshll.u32 %v1383, 16
      %v1483 = vrot.slane %v1481, 1
      %v1484 = vor.u32 %v1479, %v1483
      %v1486 = vshll.u32 %v1400, 16
      %v1488 = vrot.slane %v1486, 1
      %v1489 = vsel %vm1429, %v1484, %v1488
      %v1491 = vshrl.u32 %v1384, 16
      %v1493 = vshll.u32 %v1384, 16
      %v1495 = vrot.slane %v1493, 1
      %v1496 = vor.u32 %v1491, %v1495
      %v1498 = vshll.u32 %v1401, 16
      %v1500 = vrot.slane %v1498, 1
      %v1501 = vsel %vm1429, %v1496, %v1500
      %v1503 = vshrl.u32 %v1385, 16
      %v1505 = vshll.u32 %v1385, 16
      %v1507 = vrot.slane %v1505, 1
      %v1508 = vor.u32 %v1503, %v1507
      %v1510 = vshll.u32 %v1402, 16
      %v1512 = vrot.slane %v1510, 1
      %v1513 = vsel %vm1429, %v1508, %v1512
      %v1515 = vshrl.u32 %v1386, 16
      %v1517 = vshll.u32 %v1386, 16
      %v1519 = vrot.slane %v1517, 1
      %v1520 = vor.u32 %v1515, %v1519
      %v1522 = vshll.u32 %v1403, 16
      %v1524 = vrot.slane %v1522, 1
      %v1525 = vsel %vm1429, %v1520, %v1524
      %v1527 = vshrl.u32 %v1387, 16
      %v1529 = vshll.u32 %v1387, 16
      %v1531 = vrot.slane %v1529, 1
      %v1532 = vor.u32 %v1527, %v1531
      %v1534 = vshll.u32 %v1404, 16
      %v1536 = vrot.slane %v1534, 1
      %v1537 = vsel %vm1429, %v1532, %v1536
      %v1539 = vshrl.u32 %v1388, 16
      %v1541 = vshll.u32 %v1388, 16
      %v1543 = vrot.slane %v1541, 1
      %v1544 = vor.u32 %v1539, %v1543
      %v1546 = vshll.u32 %v1405, 16
      %v1548 = vrot.slane %v1546, 1
      %v1549 = vsel %vm1429, %v1544, %v1548
      %v1551 = vshrl.u32 %v1389, 16
      %v1553 = vshll.u32 %v1389, 16
      %v1555 = vrot.slane %v1553, 1
      %v1556 = vor.u32 %v1551, %v1555
      %v1558 = vshll.u32 %v1406, 16
      %v1560 = vrot.slane %v1558, 1
      %v1561 = vsel %vm1429, %v1556, %v1560
      %v1563 = vshrl.u32 %v1390, 16
      %v1565 = vshll.u32 %v1390, 16
      %v1567 = vrot.slane %v1565, 1
      %v1568 = vor.u32 %v1563, %v1567
      %v1570 = vshll.u32 %v1407, 16
      %v1572 = vrot.slane %v1570, 1
      %v1573 = vsel %vm1429, %v1568, %v1572
      %v1575 = vshrl.u32 %v1391, 16
      %v1577 = vshll.u32 %v1391, 16
      %v1579 = vrot.slane %v1577, 1
      %v1580 = vor.u32 %v1575, %v1579
      %v1582 = vshll.u32 %v1408, 16
      %v1584 = vrot.slane %v1582, 1
      %v1585 = vsel %vm1429, %v1580, %v1584
      %v1587 = vshrl.u32 %v1392, 16
      %v1589 = vshll.u32 %v1392, 16
      %v1591 = vrot.slane %v1589, 1
      %v1592 = vor.u32 %v1587, %v1591
      %v1594 = vshll.u32 %v1409, 16
      %v1596 = vrot.slane %v1594, 1
      %v1597 = vsel %vm1429, %v1592, %v1596
      %v1599 = vshrl.u32 %v1393, 16
      %v1601 = vshll.u32 %v1393, 16
      %v1603 = vrot.slane %v1601, 1
      %v1604 = vor.u32 %v1599, %v1603
      %v1606 = vshll.u32 %v1410, 16
      %v1608 = vrot.slane %v1606, 1
      %v1609 = vsel %vm1429, %v1604, %v1608
      %v1611 = vshrl.u32 %v1394, 16
      %v1613 = vshll.u32 %v1394, 16
      %v1615 = vrot.slane %v1613, 1
      %v1616 = vor.u32 %v1611, %v1615
      %v1618 = vshll.u32 %v1411, 16
      %v1620 = vrot.slane %v1618, 1
      %v1621 = vsel %vm1429, %v1616, %v1620
      %s1638 = scalar_lea.vmem %s314, 64
      %v1639 = vld [vmem:[%s1638] sm:$0xf]
      %v1640 = vld [vmem:[%s1638 + $0x4] sm:$0xf]
      %v1641 = vld [vmem:[%s1638 + $0x8] sm:$0xf]
      %v1642 = vld [vmem:[%s1638 + $0xc] sm:$0xf]
      %v1643 = vld [vmem:[%s1638 + $0x10] sm:$0xf]
      %v1644 = vld [vmem:[%s1638 + $0x14] sm:$0xf]
      %v1645 = vld [vmem:[%s1638 + $0x18] sm:$0xf]
      %v1646 = vld [vmem:[%s1638 + $0x1c] sm:$0xf]
      %v1647 = vld [vmem:[%s1638 + $0x20] sm:$0xf]
      %v1648 = vld [vmem:[%s1638 + $0x24] sm:$0xf]
      %v1649 = vld [vmem:[%s1638 + $0x28] sm:$0xf]
      %v1650 = vld [vmem:[%s1638 + $0x2c] sm:$0xf]
      %v1651 = vld [vmem:[%s1638 + $0x30] sm:$0xf]
      %v1652 = vld [vmem:[%s1638 + $0x34] sm:$0xf]
      %v1653 = vld [vmem:[%s1638 + $0x38] sm:$0xf]
      %v1654 = vld [vmem:[%s1638 + $0x3c] sm:$0xf]
      %v1671 = vunpack.c.l.b16 %v1639
      %v1672 = vunpack.c.l.b16 %v1640
      %v1673 = vunpack.c.l.b16 %v1641
      %v1674 = vunpack.c.l.b16 %v1642
      %v1675 = vunpack.c.l.b16 %v1643
      %v1676 = vunpack.c.l.b16 %v1644
      %v1677 = vunpack.c.l.b16 %v1645
      %v1678 = vunpack.c.l.b16 %v1646
      %v1679 = vunpack.c.l.b16 %v1647
      %v1680 = vunpack.c.l.b16 %v1648
      %v1681 = vunpack.c.l.b16 %v1649
      %v1682 = vunpack.c.l.b16 %v1650
      %v1683 = vunpack.c.l.b16 %v1651
      %v1684 = vunpack.c.l.b16 %v1652
      %v1685 = vunpack.c.l.b16 %v1653
      %v1686 = vunpack.c.l.b16 %v1654
      %v1687 = vpack.c.b16 %v1672, %v1671
      %v1688 = vpack.c.b16 %v1674, %v1673
      %v1689 = vpack.c.b16 %v1676, %v1675
      %v1690 = vpack.c.b16 %v1678, %v1677
      %v1691 = vpack.c.b16 %v1680, %v1679
      %v1692 = vpack.c.b16 %v1682, %v1681
      %v1693 = vpack.c.b16 %v1684, %v1683
      %v1694 = vpack.c.b16 %v1686, %v1685
      %1703 = vmatpush.bf16.msra.mxu0 %v1694
      %1704 = vmatpush.bf16.msra.mxu0 %v1693
      %1705 = vmatpush.bf16.msra.mxu0 %v1692
      %1706 = vmatpush.bf16.msra.mxu0 %v1691
      %1707 = vmatpush.bf16.msra.mxu0 %v1690
      %1708 = vmatpush.bf16.msra.mxu0 %v1689
      %1709 = vmatpush.bf16.msra.mxu0 %v1688
      %1710 = vmatpush.bf16.msra.mxu0 %v1687
      %1711 = vmatmul.bf16.gmra.mxu0 %v1441
      %v1712 = vpop.f32.mrf.mxu0
      %v1713 = vadd.f32 0.0, %v1712
      %v1714 = vpop.f32.mrf.mxu0
      %v1715 = vadd.f32 0.0, %v1714
      %1716 = vmatmul.bf16.gmra.mxu0 %v1453
      %v1717 = vpop.f32.mrf.mxu0
      %v1718 = vadd.f32 0.0, %v1717
      %v1719 = vpop.f32.mrf.mxu0
      %v1720 = vadd.f32 0.0, %v1719
      %1721 = vmatmul.bf16.gmra.mxu0 %v1465
      %v1722 = vpop.f32.mrf.mxu0
      %v1723 = vadd.f32 0.0, %v1722
      %v1724 = vpop.f32.mrf.mxu0
      %v1725 = vadd.f32 0.0, %v1724
      %1726 = vmatmul.bf16.gmra.mxu0 %v1477
      %v1727 = vpop.f32.mrf.mxu0
      %v1728 = vadd.f32 0.0, %v1727
      %v1729 = vpop.f32.mrf.mxu0
      %v1730 = vadd.f32 0.0, %v1729
      %1731 = vmatmul.bf16.gmra.mxu0 %v1489
      %v1732 = vpop.f32.mrf.mxu0
      %v1733 = vadd.f32 0.0, %v1732
      %v1734 = vpop.f32.mrf.mxu0
      %v1735 = vadd.f32 0.0, %v1734
      %1736 = vmatmul.bf16.gmra.mxu0 %v1501
      %v1737 = vpop.f32.mrf.mxu0
      %v1738 = vadd.f32 0.0, %v1737
      %v1739 = vpop.f32.mrf.mxu0
      %v1740 = vadd.f32 0.0, %v1739
      %1741 = vmatmul.bf16.gmra.mxu0 %v1513
      %v1742 = vpop.f32.mrf.mxu0
      %v1743 = vadd.f32 0.0, %v1742
      %v1744 = vpop.f32.mrf.mxu0
      %v1745 = vadd.f32 0.0, %v1744
      %1746 = vmatmul.bf16.gmra.mxu0 %v1525
      %v1747 = vpop.f32.mrf.mxu0
      %v1748 = vadd.f32 0.0, %v1747
      %v1749 = vpop.f32.mrf.mxu0
      %v1750 = vadd.f32 0.0, %v1749
      %1751 = vmatmul.bf16.gmra.mxu0 %v1537
      %v1752 = vpop.f32.mrf.mxu0
      %v1753 = vadd.f32 0.0, %v1752
      %v1754 = vpop.f32.mrf.mxu0
      %v1755 = vadd.f32 0.0, %v1754
      %1756 = vmatmul.bf16.gmra.mxu0 %v1549
      %v1757 = vpop.f32.mrf.mxu0
      %v1758 = vadd.f32 0.0, %v1757
      %v1759 = vpop.f32.mrf.mxu0
      %v1760 = vadd.f32 0.0, %v1759
      %1761 = vmatmul.bf16.gmra.mxu0 %v1561
      %v1762 = vpop.f32.mrf.mxu0
      %v1763 = vadd.f32 0.0, %v1762
      %v1764 = vpop.f32.mrf.mxu0
      %v1765 = vadd.f32 0.0, %v1764
      %1766 = vmatmul.bf16.gmra.mxu0 %v1573
      %v1767 = vpop.f32.mrf.mxu0
      %v1768 = vadd.f32 0.0, %v1767
      %v1769 = vpop.f32.mrf.mxu0
      %v1770 = vadd.f32 0.0, %v1769
      %1771 = vmatmul.bf16.gmra.mxu0 %v1585
      %v1772 = vpop.f32.mrf.mxu0
      %v1773 = vadd.f32 0.0, %v1772
      %v1774 = vpop.f32.mrf.mxu0
      %v1775 = vadd.f32 0.0, %v1774
      %1776 = vmatmul.bf16.gmra.mxu0 %v1597
      %v1777 = vpop.f32.mrf.mxu0
      %v1778 = vadd.f32 0.0, %v1777
      %v1779 = vpop.f32.mrf.mxu0
      %v1780 = vadd.f32 0.0, %v1779
      %1781 = vmatmul.bf16.gmra.mxu0 %v1609
      %v1782 = vpop.f32.mrf.mxu0
      %v1783 = vadd.f32 0.0, %v1782
      %v1784 = vpop.f32.mrf.mxu0
      %v1785 = vadd.f32 0.0, %v1784
      %1786 = vmatmul.bf16.gmra.mxu0 %v1621
      %v1787 = vpop.f32.mrf.mxu0
      %v1788 = vadd.f32 0.0, %v1787
      %v1789 = vpop.f32.mrf.mxu0
      %v1790 = vadd.f32 0.0, %v1789
      %1791 = vdwg.mxu0
      %v1808 = vunpack.c.l.b16 %v1413
      %v1809 = vunpack.c.l.b16 %v1414
      %v1810 = vunpack.c.l.b16 %v1415
      %v1811 = vunpack.c.l.b16 %v1416
      %v1812 = vunpack.c.l.b16 %v1417
      %v1813 = vunpack.c.l.b16 %v1418
      %v1814 = vunpack.c.l.b16 %v1419
      %v1815 = vunpack.c.l.b16 %v1420
      %v1816 = vunpack.c.l.b16 %v1421
      %v1817 = vunpack.c.l.b16 %v1422
      %v1818 = vunpack.c.l.b16 %v1423
      %v1819 = vunpack.c.l.b16 %v1424
      %v1820 = vunpack.c.l.b16 %v1425
      %v1821 = vunpack.c.l.b16 %v1426
      %v1822 = vunpack.c.l.b16 %v1427
      %v1823 = vunpack.c.l.b16 %v1428
      %v1824 = vpack.c.b16 %v1809, %v1808
      %v1825 = vpack.c.b16 %v1811, %v1810
      %v1826 = vpack.c.b16 %v1813, %v1812
      %v1827 = vpack.c.b16 %v1815, %v1814
      %v1828 = vpack.c.b16 %v1817, %v1816
      %v1829 = vpack.c.b16 %v1819, %v1818
      %v1830 = vpack.c.b16 %v1821, %v1820
      %v1831 = vpack.c.b16 %v1823, %v1822
      %1840 = vmatpush.bf16.msra.mxu0 %v1831
      %1841 = vmatpush.bf16.msra.mxu0 %v1830
      %1842 = vmatpush.bf16.msra.mxu0 %v1829
      %1843 = vmatpush.bf16.msra.mxu0 %v1828
      %1844 = vmatpush.bf16.msra.mxu0 %v1827
      %1845 = vmatpush.bf16.msra.mxu0 %v1826
      %1846 = vmatpush.bf16.msra.mxu0 %v1825
      %1847 = vmatpush.bf16.msra.mxu0 %v1824
      %1848 = vmatmul.bf16.gmra.mxu0 %v1379
      %v1849 = vpop.f32.mrf.mxu0
      %v1850 = vadd.f32 %v1713, %v1849
      %v1851 = vpop.f32.mrf.mxu0
      %v1852 = vadd.f32 %v1715, %v1851
      %1853 = vmatmul.bf16.gmra.mxu0 %v1380
      %v1854 = vpop.f32.mrf.mxu0
      %v1855 = vadd.f32 %v1718, %v1854
      %v1856 = vpop.f32.mrf.mxu0
      %v1857 = vadd.f32 %v1720, %v1856
      %1858 = vmatmul.bf16.gmra.mxu0 %v1381
      %v1859 = vpop.f32.mrf.mxu0
      %v1860 = vadd.f32 %v1723, %v1859
      %v1861 = vpop.f32.mrf.mxu0
      %v1862 = vadd.f32 %v1725, %v1861
      %1863 = vmatmul.bf16.gmra.mxu0 %v1382
      %v1864 = vpop.f32.mrf.mxu0
      %v1865 = vadd.f32 %v1728, %v1864
      %v1866 = vpop.f32.mrf.mxu0
      %v1867 = vadd.f32 %v1730, %v1866
      %1868 = vmatmul.bf16.gmra.mxu0 %v1383
      %v1869 = vpop.f32.mrf.mxu0
      %v1870 = vadd.f32 %v1733, %v1869
      %v1871 = vpop.f32.mrf.mxu0
      %v1872 = vadd.f32 %v1735, %v1871
      %1873 = vmatmul.bf16.gmra.mxu0 %v1384
      %v1874 = vpop.f32.mrf.mxu0
      %v1875 = vadd.f32 %v1738, %v1874
      %v1876 = vpop.f32.mrf.mxu0
      %v1877 = vadd.f32 %v1740, %v1876
      %1878 = vmatmul.bf16.gmra.mxu0 %v1385
      %v1879 = vpop.f32.mrf.mxu0
      %v1880 = vadd.f32 %v1743, %v1879
      %v1881 = vpop.f32.mrf.mxu0
      %v1882 = vadd.f32 %v1745, %v1881
      %1883 = vmatmul.bf16.gmra.mxu0 %v1386
      %v1884 = vpop.f32.mrf.mxu0
      %v1885 = vadd.f32 %v1748, %v1884
      %v1886 = vpop.f32.mrf.mxu0
      %v1887 = vadd.f32 %v1750, %v1886
      %1888 = vmatmul.bf16.gmra.mxu0 %v1387
      %v1889 = vpop.f32.mrf.mxu0
      %v1890 = vadd.f32 %v1753, %v1889
      %v1891 = vpop.f32.mrf.mxu0
      %v1892 = vadd.f32 %v1755, %v1891
      %1893 = vmatmul.bf16.gmra.mxu0 %v1388
      %v1894 = vpop.f32.mrf.mxu0
      %v1895 = vadd.f32 %v1758, %v1894
      %v1896 = vpop.f32.mrf.mxu0
      %v1897 = vadd.f32 %v1760, %v1896
      %1898 = vmatmul.bf16.gmra.mxu0 %v1389
      %v1899 = vpop.f32.mrf.mxu0
      %v1900 = vadd.f32 %v1763, %v1899
      %v1901 = vpop.f32.mrf.mxu0
      %v1902 = vadd.f32 %v1765, %v1901
      %1903 = vmatmul.bf16.gmra.mxu0 %v1390
      %v1904 = vpop.f32.mrf.mxu0
      %v1905 = vadd.f32 %v1768, %v1904
      %v1906 = vpop.f32.mrf.mxu0
      %v1907 = vadd.f32 %v1770, %v1906
      %1908 = vmatmul.bf16.gmra.mxu0 %v1391
      %v1909 = vpop.f32.mrf.mxu0
      %v1910 = vadd.f32 %v1773, %v1909
      %v1911 = vpop.f32.mrf.mxu0
      %v1912 = vadd.f32 %v1775, %v1911
      %1913 = vmatmul.bf16.gmra.mxu0 %v1392
      %v1914 = vpop.f32.mrf.mxu0
      %v1915 = vadd.f32 %v1778, %v1914
      %v1916 = vpop.f32.mrf.mxu0
      %v1917 = vadd.f32 %v1780, %v1916
      %1918 = vmatmul.bf16.gmra.mxu0 %v1393
      %v1919 = vpop.f32.mrf.mxu0
      %v1920 = vadd.f32 %v1783, %v1919
      %v1921 = vpop.f32.mrf.mxu0
      %v1922 = vadd.f32 %v1785, %v1921
      %1923 = vmatmul.bf16.gmra.mxu0 %v1394
      %v1924 = vpop.f32.mrf.mxu0
      %v1925 = vadd.f32 %v1788, %v1924
      %v1926 = vpop.f32.mrf.mxu0
      %v1927 = vadd.f32 %v1790, %v1926
      %1928 = vdwg.mxu0
      %vm1961 = vcmask 1046528
      %v1962 = vrot.slane %v1379, 1
      %v1963 = vrot.slane %v1396, 1
      %v1964 = vsel %vm1961, %v1962, %v1963
      %v1965 = vrot.slane %v1380, 1
      %v1966 = vrot.slane %v1397, 1
      %v1967 = vsel %vm1961, %v1965, %v1966
      %v1968 = vrot.slane %v1381, 1
      %v1969 = vrot.slane %v1398, 1
      %v1970 = vsel %vm1961, %v1968, %v1969
      %v1971 = vrot.slane %v1382, 1
      %v1972 = vrot.slane %v1399, 1
      %v1973 = vsel %vm1961, %v1971, %v1972
      %v1974 = vrot.slane %v1383, 1
      %v1975 = vrot.slane %v1400, 1
      %v1976 = vsel %vm1961, %v1974, %v1975
      %v1977 = vrot.slane %v1384, 1
      %v1978 = vrot.slane %v1401, 1
      %v1979 = vsel %vm1961, %v1977, %v1978
      %v1980 = vrot.slane %v1385, 1
      %v1981 = vrot.slane %v1402, 1
      %v1982 = vsel %vm1961, %v1980, %v1981
      %v1983 = vrot.slane %v1386, 1
      %v1984 = vrot.slane %v1403, 1
      %v1985 = vsel %vm1961, %v1983, %v1984
      %v1986 = vrot.slane %v1387, 1
      %v1987 = vrot.slane %v1404, 1
      %v1988 = vsel %vm1961, %v1986, %v1987
      %v1989 = vrot.slane %v1388, 1
      %v1990 = vrot.slane %v1405, 1
      %v1991 = vsel %vm1961, %v1989, %v1990
      %v1992 = vrot.slane %v1389, 1
      %v1993 = vrot.slane %v1406, 1
      %v1994 = vsel %vm1961, %v1992, %v1993
      %v1995 = vrot.slane %v1390, 1
      %v1996 = vrot.slane %v1407, 1
      %v1997 = vsel %vm1961, %v1995, %v1996
      %v1998 = vrot.slane %v1391, 1
      %v1999 = vrot.slane %v1408, 1
      %v2000 = vsel %vm1961, %v1998, %v1999
      %v2001 = vrot.slane %v1392, 1
      %v2002 = vrot.slane %v1409, 1
      %v2003 = vsel %vm1961, %v2001, %v2002
      %v2004 = vrot.slane %v1393, 1
      %v2005 = vrot.slane %v1410, 1
      %v2006 = vsel %vm1961, %v2004, %v2005
      %v2007 = vrot.slane %v1394, 1
      %v2008 = vrot.slane %v1411, 1
      %v2009 = vsel %vm1961, %v2007, %v2008
      %s2026 = scalar_lea.vmem %s314, 128
      %v2027 = vld [vmem:[%s2026] sm:$0xf]
      %v2028 = vld [vmem:[%s2026 + $0x4] sm:$0xf]
      %v2029 = vld [vmem:[%s2026 + $0x8] sm:$0xf]
      %v2030 = vld [vmem:[%s2026 + $0xc] sm:$0xf]
      %v2031 = vld [vmem:[%s2026 + $0x10] sm:$0xf]
      %v2032 = vld [vmem:[%s2026 + $0x14] sm:$0xf]
      %v2033 = vld [vmem:[%s2026 + $0x18] sm:$0xf]
      %v2034 = vld [vmem:[%s2026 + $0x1c] sm:$0xf]
      %v2035 = vld [vmem:[%s2026 + $0x20] sm:$0xf]
      %v2036 = vld [vmem:[%s2026 + $0x24] sm:$0xf]
      %v2037 = vld [vmem:[%s2026 + $0x28] sm:$0xf]
      %v2038 = vld [vmem:[%s2026 + $0x2c] sm:$0xf]
      %v2039 = vld [vmem:[%s2026 + $0x30] sm:$0xf]
      %v2040 = vld [vmem:[%s2026 + $0x34] sm:$0xf]
      %v2041 = vld [vmem:[%s2026 + $0x38] sm:$0xf]
      %v2042 = vld [vmem:[%s2026 + $0x3c] sm:$0xf]
      %v2059 = vunpack.c.l.b16 %v2027
      %v2060 = vunpack.c.l.b16 %v2028
      %v2061 = vunpack.c.l.b16 %v2029
      %v2062 = vunpack.c.l.b16 %v2030
      %v2063 = vunpack.c.l.b16 %v2031
      %v2064 = vunpack.c.l.b16 %v2032
      %v2065 = vunpack.c.l.b16 %v2033
      %v2066 = vunpack.c.l.b16 %v2034
      %v2067 = vunpack.c.l.b16 %v2035
      %v2068 = vunpack.c.l.b16 %v2036
      %v2069 = vunpack.c.l.b16 %v2037
      %v2070 = vunpack.c.l.b16 %v2038
      %v2071 = vunpack.c.l.b16 %v2039
      %v2072 = vunpack.c.l.b16 %v2040
      %v2073 = vunpack.c.l.b16 %v2041
      %v2074 = vunpack.c.l.b16 %v2042
      %v2075 = vpack.c.b16 %v2060, %v2059
      %v2076 = vpack.c.b16 %v2062, %v2061
      %v2077 = vpack.c.b16 %v2064, %v2063
      %v2078 = vpack.c.b16 %v2066, %v2065
      %v2079 = vpack.c.b16 %v2068, %v2067
      %v2080 = vpack.c.b16 %v2070, %v2069
      %v2081 = vpack.c.b16 %v2072, %v2071
      %v2082 = vpack.c.b16 %v2074, %v2073
      %2091 = vmatpush.bf16.msra.mxu0 %v2082
      %2092 = vmatpush.bf16.msra.mxu0 %v2081
      %2093 = vmatpush.bf16.msra.mxu0 %v2080
      %2094 = vmatpush.bf16.msra.mxu0 %v2079
      %2095 = vmatpush.bf16.msra.mxu0 %v2078
      %2096 = vmatpush.bf16.msra.mxu0 %v2077
      %2097 = vmatpush.bf16.msra.mxu0 %v2076
      %2098 = vmatpush.bf16.msra.mxu0 %v2075
      %2099 = vmatmul.bf16.gmra.mxu0 %v1964
      %v2100 = vpop.f32.mrf.mxu0
      %v2101 = vadd.f32 0.0, %v2100
      %v2102 = vpop.f32.mrf.mxu0
      %v2103 = vadd.f32 0.0, %v2102
      %2104 = vmatmul.bf16.gmra.mxu0 %v1967
      %v2105 = vpop.f32.mrf.mxu0
      %v2106 = vadd.f32 0.0, %v2105
      %v2107 = vpop.f32.mrf.mxu0
      %v2108 = vadd.f32 0.0, %v2107
      %2109 = vmatmul.bf16.gmra.mxu0 %v1970
      %v2110 = vpop.f32.mrf.mxu0
      %v2111 = vadd.f32 0.0, %v2110
      %v2112 = vpop.f32.mrf.mxu0
      %v2113 = vadd.f32 0.0, %v2112
      %2114 = vmatmul.bf16.gmra.mxu0 %v1973
      %v2115 = vpop.f32.mrf.mxu0
      %v2116 = vadd.f32 0.0, %v2115
      %v2117 = vpop.f32.mrf.mxu0
      %v2118 = vadd.f32 0.0, %v2117
      %2119 = vmatmul.bf16.gmra.mxu0 %v1976
      %v2120 = vpop.f32.mrf.mxu0
      %v2121 = vadd.f32 0.0, %v2120
      %v2122 = vpop.f32.mrf.mxu0
      %v2123 = vadd.f32 0.0, %v2122
      %2124 = vmatmul.bf16.gmra.mxu0 %v1979
      %v2125 = vpop.f32.mrf.mxu0
      %v2126 = vadd.f32 0.0, %v2125
      %v2127 = vpop.f32.mrf.mxu0
      %v2128 = vadd.f32 0.0, %v2127
      %2129 = vmatmul.bf16.gmra.mxu0 %v1982
      %v2130 = vpop.f32.mrf.mxu0
      %v2131 = vadd.f32 0.0, %v2130
      %v2132 = vpop.f32.mrf.mxu0
      %v2133 = vadd.f32 0.0, %v2132
      %2134 = vmatmul.bf16.gmra.mxu0 %v1985
      %v2135 = vpop.f32.mrf.mxu0
      %v2136 = vadd.f32 0.0, %v2135
      %v2137 = vpop.f32.mrf.mxu0
      %v2138 = vadd.f32 0.0, %v2137
      %2139 = vmatmul.bf16.gmra.mxu0 %v1988
      %v2140 = vpop.f32.mrf.mxu0
      %v2141 = vadd.f32 0.0, %v2140
      %v2142 = vpop.f32.mrf.mxu0
      %v2143 = vadd.f32 0.0, %v2142
      %2144 = vmatmul.bf16.gmra.mxu0 %v1991
      %v2145 = vpop.f32.mrf.mxu0
      %v2146 = vadd.f32 0.0, %v2145
      %v2147 = vpop.f32.mrf.mxu0
      %v2148 = vadd.f32 0.0, %v2147
      %2149 = vmatmul.bf16.gmra.mxu0 %v1994
      %v2150 = vpop.f32.mrf.mxu0
      %v2151 = vadd.f32 0.0, %v2150
      %v2152 = vpop.f32.mrf.mxu0
      %v2153 = vadd.f32 0.0, %v2152
      %2154 = vmatmul.bf16.gmra.mxu0 %v1997
      %v2155 = vpop.f32.mrf.mxu0
      %v2156 = vadd.f32 0.0, %v2155
      %v2157 = vpop.f32.mrf.mxu0
      %v2158 = vadd.f32 0.0, %v2157
      %2159 = vmatmul.bf16.gmra.mxu0 %v2000
      %v2160 = vpop.f32.mrf.mxu0
      %v2161 = vadd.f32 0.0, %v2160
      %v2162 = vpop.f32.mrf.mxu0
      %v2163 = vadd.f32 0.0, %v2162
      %2164 = vmatmul.bf16.gmra.mxu0 %v2003
      %v2165 = vpop.f32.mrf.mxu0
      %v2166 = vadd.f32 0.0, %v2165
      %v2167 = vpop.f32.mrf.mxu0
      %v2168 = vadd.f32 0.0, %v2167
      %2169 = vmatmul.bf16.gmra.mxu0 %v2006
      %v2170 = vpop.f32.mrf.mxu0
      %v2171 = vadd.f32 0.0, %v2170
      %v2172 = vpop.f32.mrf.mxu0
      %v2173 = vadd.f32 0.0, %v2172
      %2174 = vmatmul.bf16.gmra.mxu0 %v2009
      %v2175 = vpop.f32.mrf.mxu0
      %v2176 = vadd.f32 0.0, %v2175
      %v2177 = vpop.f32.mrf.mxu0
      %v2178 = vadd.f32 0.0, %v2177
      %2179 = vdwg.mxu0
      %v2180 = vadd.f32 %v1850, %v2101
      %v2181 = vadd.f32 %v1852, %v2103
      %v2182 = vadd.f32 %v1855, %v2106
      %v2183 = vadd.f32 %v1857, %v2108
      %v2184 = vadd.f32 %v1860, %v2111
      %v2185 = vadd.f32 %v1862, %v2113
      %v2186 = vadd.f32 %v1865, %v2116
      %v2187 = vadd.f32 %v1867, %v2118
      %v2188 = vadd.f32 %v1870, %v2121
      %v2189 = vadd.f32 %v1872, %v2123
      %v2190 = vadd.f32 %v1875, %v2126
      %v2191 = vadd.f32 %v1877, %v2128
      %v2192 = vadd.f32 %v1880, %v2131
      %v2193 = vadd.f32 %v1882, %v2133
      %v2194 = vadd.f32 %v1885, %v2136
      %v2195 = vadd.f32 %v1887, %v2138
      %v2196 = vadd.f32 %v1890, %v2141
      %v2197 = vadd.f32 %v1892, %v2143
      %v2198 = vadd.f32 %v1895, %v2146
      %v2199 = vadd.f32 %v1897, %v2148
      %v2200 = vadd.f32 %v1900, %v2151
      %v2201 = vadd.f32 %v1902, %v2153
      %v2202 = vadd.f32 %v1905, %v2156
      %v2203 = vadd.f32 %v1907, %v2158
      %v2204 = vadd.f32 %v1910, %v2161
      %v2205 = vadd.f32 %v1912, %v2163
      %v2206 = vadd.f32 %v1915, %v2166
      %v2207 = vadd.f32 %v1917, %v2168
      %v2208 = vadd.f32 %v1920, %v2171
      %v2209 = vadd.f32 %v1922, %v2173
      %v2210 = vadd.f32 %v1925, %v2176
      %v2211 = vadd.f32 %v1927, %v2178
      %s2212 = scalar_lea.vmem %s314, 192
      %v2213 = vld [vmem:[%s2212] sm:$0xf]
      %v2214 = vld [vmem:[%s2212 + $0x4] sm:$0xf]
      %v2215 = vld [vmem:[%s2212 + $0x8] sm:$0xf]
      %v2216 = vld [vmem:[%s2212 + $0xc] sm:$0xf]
      %v2217 = vld [vmem:[%s2212 + $0x10] sm:$0xf]
      %v2218 = vld [vmem:[%s2212 + $0x14] sm:$0xf]
      %v2219 = vld [vmem:[%s2212 + $0x18] sm:$0xf]
      %v2220 = vld [vmem:[%s2212 + $0x1c] sm:$0xf]
      %v2221 = vld [vmem:[%s2212 + $0x20] sm:$0xf]
      %v2222 = vld [vmem:[%s2212 + $0x24] sm:$0xf]
      %v2223 = vld [vmem:[%s2212 + $0x28] sm:$0xf]
      %v2224 = vld [vmem:[%s2212 + $0x2c] sm:$0xf]
      %v2225 = vld [vmem:[%s2212 + $0x30] sm:$0xf]
      %v2226 = vld [vmem:[%s2212 + $0x34] sm:$0xf]
      %v2227 = vld [vmem:[%s2212 + $0x38] sm:$0xf]
      %v2228 = vld [vmem:[%s2212 + $0x3c] sm:$0xf]
      %v2245 = vunpack.c.l.b16 %v2213
      %v2246 = vunpack.c.l.b16 %v2214
      %v2247 = vunpack.c.l.b16 %v2215
      %v2248 = vunpack.c.l.b16 %v2216
      %v2249 = vunpack.c.l.b16 %v2217
      %v2250 = vunpack.c.l.b16 %v2218
      %v2251 = vunpack.c.l.b16 %v2219
      %v2252 = vunpack.c.l.b16 %v2220
      %v2253 = vunpack.c.l.b16 %v2221
      %v2254 = vunpack.c.l.b16 %v2222
      %v2255 = vunpack.c.l.b16 %v2223
      %v2256 = vunpack.c.l.b16 %v2224
      %v2257 = vunpack.c.l.b16 %v2225
      %v2258 = vunpack.c.l.b16 %v2226
      %v2259 = vunpack.c.l.b16 %v2227
      %v2260 = vunpack.c.l.b16 %v2228
      %v2261 = vpack.c.b16 %v2246, %v2245
      %v2262 = vpack.c.b16 %v2248, %v2247
      %v2263 = vpack.c.b16 %v2250, %v2249
      %v2264 = vpack.c.b16 %v2252, %v2251
      %v2265 = vpack.c.b16 %v2254, %v2253
      %v2266 = vpack.c.b16 %v2256, %v2255
      %v2267 = vpack.c.b16 %v2258, %v2257
      %v2268 = vpack.c.b16 %v2260, %v2259
      %2277 = vmatpush.bf16.msra.mxu0 %v2268
      %2278 = vmatpush.bf16.msra.mxu0 %v2267
      %2279 = vmatpush.bf16.msra.mxu0 %v2266
      %2280 = vmatpush.bf16.msra.mxu0 %v2265
      %2281 = vmatpush.bf16.msra.mxu0 %v2264
      %2282 = vmatpush.bf16.msra.mxu0 %v2263
      %2283 = vmatpush.bf16.msra.mxu0 %v2262
      %2284 = vmatpush.bf16.msra.mxu0 %v2261
      %2285 = vmatmul.bf16.gmra.mxu0 %v1380
      %v2286 = vpop.f32.mrf.mxu0
      %v2287 = vadd.f32 0.0, %v2286
      %v2288 = vpop.f32.mrf.mxu0
      %v2289 = vadd.f32 0.0, %v2288
      %2290 = vmatmul.bf16.gmra.mxu0 %v1381
      %v2291 = vpop.f32.mrf.mxu0
      %v2292 = vadd.f32 0.0, %v2291
      %v2293 = vpop.f32.mrf.mxu0
      %v2294 = vadd.f32 0.0, %v2293
      %2295 = vmatmul.bf16.gmra.mxu0 %v1382
      %v2296 = vpop.f32.mrf.mxu0
      %v2297 = vadd.f32 0.0, %v2296
      %v2298 = vpop.f32.mrf.mxu0
      %v2299 = vadd.f32 0.0, %v2298
      %2300 = vmatmul.bf16.gmra.mxu0 %v1383
      %v2301 = vpop.f32.mrf.mxu0
      %v2302 = vadd.f32 0.0, %v2301
      %v2303 = vpop.f32.mrf.mxu0
      %v2304 = vadd.f32 0.0, %v2303
      %2305 = vmatmul.bf16.gmra.mxu0 %v1384
      %v2306 = vpop.f32.mrf.mxu0
      %v2307 = vadd.f32 0.0, %v2306
      %v2308 = vpop.f32.mrf.mxu0
      %v2309 = vadd.f32 0.0, %v2308
      %2310 = vmatmul.bf16.gmra.mxu0 %v1385
      %v2311 = vpop.f32.mrf.mxu0
      %v2312 = vadd.f32 0.0, %v2311
      %v2313 = vpop.f32.mrf.mxu0
      %v2314 = vadd.f32 0.0, %v2313
      %2315 = vmatmul.bf16.gmra.mxu0 %v1386
      %v2316 = vpop.f32.mrf.mxu0
      %v2317 = vadd.f32 0.0, %v2316
      %v2318 = vpop.f32.mrf.mxu0
      %v2319 = vadd.f32 0.0, %v2318
      %2320 = vmatmul.bf16.gmra.mxu0 %v1387
      %v2321 = vpop.f32.mrf.mxu0
      %v2322 = vadd.f32 0.0, %v2321
      %v2323 = vpop.f32.mrf.mxu0
      %v2324 = vadd.f32 0.0, %v2323
      %2325 = vmatmul.bf16.gmra.mxu0 %v1388
      %v2326 = vpop.f32.mrf.mxu0
      %v2327 = vadd.f32 0.0, %v2326
      %v2328 = vpop.f32.mrf.mxu0
      %v2329 = vadd.f32 0.0, %v2328
      %2330 = vmatmul.bf16.gmra.mxu0 %v1389
      %v2331 = vpop.f32.mrf.mxu0
      %v2332 = vadd.f32 0.0, %v2331
      %v2333 = vpop.f32.mrf.mxu0
      %v2334 = vadd.f32 0.0, %v2333
      %2335 = vmatmul.bf16.gmra.mxu0 %v1390
      %v2336 = vpop.f32.mrf.mxu0
      %v2337 = vadd.f32 0.0, %v2336
      %v2338 = vpop.f32.mrf.mxu0
      %v2339 = vadd.f32 0.0, %v2338
      %2340 = vmatmul.bf16.gmra.mxu0 %v1391
      %v2341 = vpop.f32.mrf.mxu0
      %v2342 = vadd.f32 0.0, %v2341
      %v2343 = vpop.f32.mrf.mxu0
      %v2344 = vadd.f32 0.0, %v2343
      %2345 = vmatmul.bf16.gmra.mxu0 %v1392
      %v2346 = vpop.f32.mrf.mxu0
      %v2347 = vadd.f32 0.0, %v2346
      %v2348 = vpop.f32.mrf.mxu0
      %v2349 = vadd.f32 0.0, %v2348
      %2350 = vmatmul.bf16.gmra.mxu0 %v1393
      %v2351 = vpop.f32.mrf.mxu0
      %v2352 = vadd.f32 0.0, %v2351
      %v2353 = vpop.f32.mrf.mxu0
      %v2354 = vadd.f32 0.0, %v2353
      %2355 = vmatmul.bf16.gmra.mxu0 %v1394
      %v2356 = vpop.f32.mrf.mxu0
      %v2357 = vadd.f32 0.0, %v2356
      %v2358 = vpop.f32.mrf.mxu0
      %v2359 = vadd.f32 0.0, %v2358
      %2360 = vmatmul.bf16.gmra.mxu0 %v1395
      %v2361 = vpop.f32.mrf.mxu0
      %v2362 = vadd.f32 0.0, %v2361
      %v2363 = vpop.f32.mrf.mxu0
      %v2364 = vadd.f32 0.0, %v2363
      %2365 = vdwg.mxu0
      %v2366 = vadd.f32 %v2180, %v2287
      %v2367 = vadd.f32 %v2181, %v2289
      %v2368 = vadd.f32 %v2182, %v2292
      %v2369 = vadd.f32 %v2183, %v2294
      %v2370 = vadd.f32 %v2184, %v2297
      %v2371 = vadd.f32 %v2185, %v2299
      %v2372 = vadd.f32 %v2186, %v2302
      %v2373 = vadd.f32 %v2187, %v2304
      %v2374 = vadd.f32 %v2188, %v2307
      %v2375 = vadd.f32 %v2189, %v2309
      %v2376 = vadd.f32 %v2190, %v2312
      %v2377 = vadd.f32 %v2191, %v2314
      %v2378 = vadd.f32 %v2192, %v2317
      %v2379 = vadd.f32 %v2193, %v2319
      %v2380 = vadd.f32 %v2194, %v2322
      %v2381 = vadd.f32 %v2195, %v2324
      %v2382 = vadd.f32 %v2196, %v2327
      %v2383 = vadd.f32 %v2197, %v2329
      %v2384 = vadd.f32 %v2198, %v2332
      %v2385 = vadd.f32 %v2199, %v2334
      %v2386 = vadd.f32 %v2200, %v2337
      %v2387 = vadd.f32 %v2201, %v2339
      %v2388 = vadd.f32 %v2202, %v2342
      %v2389 = vadd.f32 %v2203, %v2344
      %v2390 = vadd.f32 %v2204, %v2347
      %v2391 = vadd.f32 %v2205, %v2349
      %v2392 = vadd.f32 %v2206, %v2352
      %v2393 = vadd.f32 %v2207, %v2354
      %v2394 = vadd.f32 %v2208, %v2357
      %v2395 = vadd.f32 %v2209, %v2359
      %v2396 = vadd.f32 %v2210, %v2362
      %v2397 = vadd.f32 %v2211, %v2364
      %v2399 = vshrl.u32 %v1395, 16
      %v2401 = vshll.u32 %v1395, 16
      %v2403 = vrot.slane %v2401, 1
      %v2404 = vor.u32 %v2399, %v2403
      %v2406 = vshll.u32 %v1412, 16
      %v2408 = vrot.slane %v2406, 1
      %v2409 = vsel %vm1429, %v2404, %v2408
      %s2411 = scalar_lea.vmem %s314, 256
      %v2412 = vld [vmem:[%s2411] sm:$0xf]
      %v2413 = vld [vmem:[%s2411 + $0x4] sm:$0xf]
      %v2414 = vld [vmem:[%s2411 + $0x8] sm:$0xf]
      %v2415 = vld [vmem:[%s2411 + $0xc] sm:$0xf]
      %v2416 = vld [vmem:[%s2411 + $0x10] sm:$0xf]
      %v2417 = vld [vmem:[%s2411 + $0x14] sm:$0xf]
      %v2418 = vld [vmem:[%s2411 + $0x18] sm:$0xf]
      %v2419 = vld [vmem:[%s2411 + $0x1c] sm:$0xf]
      %v2420 = vld [vmem:[%s2411 + $0x20] sm:$0xf]
      %v2421 = vld [vmem:[%s2411 + $0x24] sm:$0xf]
      %v2422 = vld [vmem:[%s2411 + $0x28] sm:$0xf]
      %v2423 = vld [vmem:[%s2411 + $0x2c] sm:$0xf]
      %v2424 = vld [vmem:[%s2411 + $0x30] sm:$0xf]
      %v2425 = vld [vmem:[%s2411 + $0x34] sm:$0xf]
      %v2426 = vld [vmem:[%s2411 + $0x38] sm:$0xf]
      %v2427 = vld [vmem:[%s2411 + $0x3c] sm:$0xf]
      %v2444 = vunpack.c.l.b16 %v2412
      %v2445 = vunpack.c.l.b16 %v2413
      %v2446 = vunpack.c.l.b16 %v2414
      %v2447 = vunpack.c.l.b16 %v2415
      %v2448 = vunpack.c.l.b16 %v2416
      %v2449 = vunpack.c.l.b16 %v2417
      %v2450 = vunpack.c.l.b16 %v2418
      %v2451 = vunpack.c.l.b16 %v2419
      %v2452 = vunpack.c.l.b16 %v2420
      %v2453 = vunpack.c.l.b16 %v2421
      %v2454 = vunpack.c.l.b16 %v2422
      %v2455 = vunpack.c.l.b16 %v2423
      %v2456 = vunpack.c.l.b16 %v2424
      %v2457 = vunpack.c.l.b16 %v2425
      %v2458 = vunpack.c.l.b16 %v2426
      %v2459 = vunpack.c.l.b16 %v2427
      %v2460 = vpack.c.b16 %v2445, %v2444
      %v2461 = vpack.c.b16 %v2447, %v2446
      %v2462 = vpack.c.b16 %v2449, %v2448
      %v2463 = vpack.c.b16 %v2451, %v2450
      %v2464 = vpack.c.b16 %v2453, %v2452
      %v2465 = vpack.c.b16 %v2455, %v2454
      %v2466 = vpack.c.b16 %v2457, %v2456
      %v2467 = vpack.c.b16 %v2459, %v2458
      %2476 = vmatpush.bf16.msra.mxu0 %v2467
      %2477 = vmatpush.bf16.msra.mxu0 %v2466
      %2478 = vmatpush.bf16.msra.mxu0 %v2465
      %2479 = vmatpush.bf16.msra.mxu0 %v2464
      %2480 = vmatpush.bf16.msra.mxu0 %v2463
      %2481 = vmatpush.bf16.msra.mxu0 %v2462
      %2482 = vmatpush.bf16.msra.mxu0 %v2461
      %2483 = vmatpush.bf16.msra.mxu0 %v2460
      %2484 = vmatmul.bf16.gmra.mxu0 %v1453
      %v2485 = vpop.f32.mrf.mxu0
      %v2486 = vadd.f32 0.0, %v2485
      %v2487 = vpop.f32.mrf.mxu0
      %v2488 = vadd.f32 0.0, %v2487
      %2489 = vmatmul.bf16.gmra.mxu0 %v1465
      %v2490 = vpop.f32.mrf.mxu0
      %v2491 = vadd.f32 0.0, %v2490
      %v2492 = vpop.f32.mrf.mxu0
      %v2493 = vadd.f32 0.0, %v2492
      %2494 = vmatmul.bf16.gmra.mxu0 %v1477
      %v2495 = vpop.f32.mrf.mxu0
      %v2496 = vadd.f32 0.0, %v2495
      %v2497 = vpop.f32.mrf.mxu0
      %v2498 = vadd.f32 0.0, %v2497
      %2499 = vmatmul.bf16.gmra.mxu0 %v1489
      %v2500 = vpop.f32.mrf.mxu0
      %v2501 = vadd.f32 0.0, %v2500
      %v2502 = vpop.f32.mrf.mxu0
      %v2503 = vadd.f32 0.0, %v2502
      %2504 = vmatmul.bf16.gmra.mxu0 %v1501
      %v2505 = vpop.f32.mrf.mxu0
      %v2506 = vadd.f32 0.0, %v2505
      %v2507 = vpop.f32.mrf.mxu0
      %v2508 = vadd.f32 0.0, %v2507
      %2509 = vmatmul.bf16.gmra.mxu0 %v1513
      %v2510 = vpop.f32.mrf.mxu0
      %v2511 = vadd.f32 0.0, %v2510
      %v2512 = vpop.f32.mrf.mxu0
      %v2513 = vadd.f32 0.0, %v2512
      %2514 = vmatmul.bf16.gmra.mxu0 %v1525
      %v2515 = vpop.f32.mrf.mxu0
      %v2516 = vadd.f32 0.0, %v2515
      %v2517 = vpop.f32.mrf.mxu0
      %v2518 = vadd.f32 0.0, %v2517
      %2519 = vmatmul.bf16.gmra.mxu0 %v1537
      %v2520 = vpop.f32.mrf.mxu0
      %v2521 = vadd.f32 0.0, %v2520
      %v2522 = vpop.f32.mrf.mxu0
      %v2523 = vadd.f32 0.0, %v2522
      %2524 = vmatmul.bf16.gmra.mxu0 %v1549
      %v2525 = vpop.f32.mrf.mxu0
      %v2526 = vadd.f32 0.0, %v2525
      %v2527 = vpop.f32.mrf.mxu0
      %v2528 = vadd.f32 0.0, %v2527
      %2529 = vmatmul.bf16.gmra.mxu0 %v1561
      %v2530 = vpop.f32.mrf.mxu0
      %v2531 = vadd.f32 0.0, %v2530
      %v2532 = vpop.f32.mrf.mxu0
      %v2533 = vadd.f32 0.0, %v2532
      %2534 = vmatmul.bf16.gmra.mxu0 %v1573
      %v2535 = vpop.f32.mrf.mxu0
      %v2536 = vadd.f32 0.0, %v2535
      %v2537 = vpop.f32.mrf.mxu0
      %v2538 = vadd.f32 0.0, %v2537
      %2539 = vmatmul.bf16.gmra.mxu0 %v1585
      %v2540 = vpop.f32.mrf.mxu0
      %v2541 = vadd.f32 0.0, %v2540
      %v2542 = vpop.f32.mrf.mxu0
      %v2543 = vadd.f32 0.0, %v2542
      %2544 = vmatmul.bf16.gmra.mxu0 %v1597
      %v2545 = vpop.f32.mrf.mxu0
      %v2546 = vadd.f32 0.0, %v2545
      %v2547 = vpop.f32.mrf.mxu0
      %v2548 = vadd.f32 0.0, %v2547
      %2549 = vmatmul.bf16.gmra.mxu0 %v1609
      %v2550 = vpop.f32.mrf.mxu0
      %v2551 = vadd.f32 0.0, %v2550
      %v2552 = vpop.f32.mrf.mxu0
      %v2553 = vadd.f32 0.0, %v2552
      %2554 = vmatmul.bf16.gmra.mxu0 %v1621
      %v2555 = vpop.f32.mrf.mxu0
      %v2556 = vadd.f32 0.0, %v2555
      %v2557 = vpop.f32.mrf.mxu0
      %v2558 = vadd.f32 0.0, %v2557
      %2559 = vmatmul.bf16.gmra.mxu0 %v2409
      %v2560 = vpop.f32.mrf.mxu0
      %v2561 = vadd.f32 0.0, %v2560
      %v2562 = vpop.f32.mrf.mxu0
      %v2563 = vadd.f32 0.0, %v2562
      %2564 = vdwg.mxu0
      %v2565 = vadd.f32 %v2366, %v2486
      %v2566 = vadd.f32 %v2367, %v2488
      %v2567 = vadd.f32 %v2368, %v2491
      %v2568 = vadd.f32 %v2369, %v2493
      %v2569 = vadd.f32 %v2370, %v2496
      %v2570 = vadd.f32 %v2371, %v2498
      %v2571 = vadd.f32 %v2372, %v2501
      %v2572 = vadd.f32 %v2373, %v2503
      %v2573 = vadd.f32 %v2374, %v2506
      %v2574 = vadd.f32 %v2375, %v2508
      %v2575 = vadd.f32 %v2376, %v2511
      %v2576 = vadd.f32 %v2377, %v2513
      %v2577 = vadd.f32 %v2378, %v2516
      %v2578 = vadd.f32 %v2379, %v2518
      %v2579 = vadd.f32 %v2380, %v2521
      %v2580 = vadd.f32 %v2381, %v2523
      %v2581 = vadd.f32 %v2382, %v2526
      %v2582 = vadd.f32 %v2383, %v2528
      %v2583 = vadd.f32 %v2384, %v2531
      %v2584 = vadd.f32 %v2385, %v2533
      %v2585 = vadd.f32 %v2386, %v2536
      %v2586 = vadd.f32 %v2387, %v2538
      %v2587 = vadd.f32 %v2388, %v2541
      %v2588 = vadd.f32 %v2389, %v2543
      %v2589 = vadd.f32 %v2390, %v2546
      %v2590 = vadd.f32 %v2391, %v2548
      %v2591 = vadd.f32 %v2392, %v2551
      %v2592 = vadd.f32 %v2393, %v2553
      %v2593 = vadd.f32 %v2394, %v2556
      %v2594 = vadd.f32 %v2395, %v2558
      %v2595 = vadd.f32 %v2396, %v2561
      %v2596 = vadd.f32 %v2397, %v2563
      %v2599 = vrot.slane %v1395, 1
      %v2600 = vrot.slane %v1412, 1
      %v2601 = vsel %vm1961, %v2599, %v2600
      %s2603 = scalar_lea.vmem %s314, 320
      %v2604 = vld [vmem:[%s2603] sm:$0xf]
      %v2605 = vld [vmem:[%s2603 + $0x4] sm:$0xf]
      %v2606 = vld [vmem:[%s2603 + $0x8] sm:$0xf]
      %v2607 = vld [vmem:[%s2603 + $0xc] sm:$0xf]
      %v2608 = vld [vmem:[%s2603 + $0x10] sm:$0xf]
      %v2609 = vld [vmem:[%s2603 + $0x14] sm:$0xf]
      %v2610 = vld [vmem:[%s2603 + $0x18] sm:$0xf]
      %v2611 = vld [vmem:[%s2603 + $0x1c] sm:$0xf]
      %v2612 = vld [vmem:[%s2603 + $0x20] sm:$0xf]
      %v2613 = vld [vmem:[%s2603 + $0x24] sm:$0xf]
      %v2614 = vld [vmem:[%s2603 + $0x28] sm:$0xf]
      %v2615 = vld [vmem:[%s2603 + $0x2c] sm:$0xf]
      %v2616 = vld [vmem:[%s2603 + $0x30] sm:$0xf]
      %v2617 = vld [vmem:[%s2603 + $0x34] sm:$0xf]
      %v2618 = vld [vmem:[%s2603 + $0x38] sm:$0xf]
      %v2619 = vld [vmem:[%s2603 + $0x3c] sm:$0xf]
      %v2636 = vunpack.c.l.b16 %v2604
      %v2637 = vunpack.c.l.b16 %v2605
      %v2638 = vunpack.c.l.b16 %v2606
      %v2639 = vunpack.c.l.b16 %v2607
      %v2640 = vunpack.c.l.b16 %v2608
      %v2641 = vunpack.c.l.b16 %v2609
      %v2642 = vunpack.c.l.b16 %v2610
      %v2643 = vunpack.c.l.b16 %v2611
      %v2644 = vunpack.c.l.b16 %v2612
      %v2645 = vunpack.c.l.b16 %v2613
      %v2646 = vunpack.c.l.b16 %v2614
      %v2647 = vunpack.c.l.b16 %v2615
      %v2648 = vunpack.c.l.b16 %v2616
      %v2649 = vunpack.c.l.b16 %v2617
      %v2650 = vunpack.c.l.b16 %v2618
      %v2651 = vunpack.c.l.b16 %v2619
      %v2652 = vpack.c.b16 %v2637, %v2636
      %v2653 = vpack.c.b16 %v2639, %v2638
      %v2654 = vpack.c.b16 %v2641, %v2640
      %v2655 = vpack.c.b16 %v2643, %v2642
      %v2656 = vpack.c.b16 %v2645, %v2644
      %v2657 = vpack.c.b16 %v2647, %v2646
      %v2658 = vpack.c.b16 %v2649, %v2648
      %v2659 = vpack.c.b16 %v2651, %v2650
      %2668 = vmatpush.bf16.msra.mxu0 %v2659
      %2669 = vmatpush.bf16.msra.mxu0 %v2658
      %2670 = vmatpush.bf16.msra.mxu0 %v2657
      %2671 = vmatpush.bf16.msra.mxu0 %v2656
      %2672 = vmatpush.bf16.msra.mxu0 %v2655
      %2673 = vmatpush.bf16.msra.mxu0 %v2654
      %2674 = vmatpush.bf16.msra.mxu0 %v2653
      %2675 = vmatpush.bf16.msra.mxu0 %v2652
      %2676 = vmatmul.bf16.gmra.mxu0 %v1967
      %v2677 = vpop.f32.mrf.mxu0
      %v2678 = vadd.f32 0.0, %v2677
      %v2679 = vpop.f32.mrf.mxu0
      %v2680 = vadd.f32 0.0, %v2679
      %2681 = vmatmul.bf16.gmra.mxu0 %v1970
      %v2682 = vpop.f32.mrf.mxu0
      %v2683 = vadd.f32 0.0, %v2682
      %v2684 = vpop.f32.mrf.mxu0
      %v2685 = vadd.f32 0.0, %v2684
      %2686 = vmatmul.bf16.gmra.mxu0 %v1973
      %v2687 = vpop.f32.mrf.mxu0
      %v2688 = vadd.f32 0.0, %v2687
      %v2689 = vpop.f32.mrf.mxu0
      %v2690 = vadd.f32 0.0, %v2689
      %2691 = vmatmul.bf16.gmra.mxu0 %v1976
      %v2692 = vpop.f32.mrf.mxu0
      %v2693 = vadd.f32 0.0, %v2692
      %v2694 = vpop.f32.mrf.mxu0
      %v2695 = vadd.f32 0.0, %v2694
      %2696 = vmatmul.bf16.gmra.mxu0 %v1979
      %v2697 = vpop.f32.mrf.mxu0
      %v2698 = vadd.f32 0.0, %v2697
      %v2699 = vpop.f32.mrf.mxu0
      %v2700 = vadd.f32 0.0, %v2699
      %2701 = vmatmul.bf16.gmra.mxu0 %v1982
      %v2702 = vpop.f32.mrf.mxu0
      %v2703 = vadd.f32 0.0, %v2702
      %v2704 = vpop.f32.mrf.mxu0
      %v2705 = vadd.f32 0.0, %v2704
      %2706 = vmatmul.bf16.gmra.mxu0 %v1985
      %v2707 = vpop.f32.mrf.mxu0
      %v2708 = vadd.f32 0.0, %v2707
      %v2709 = vpop.f32.mrf.mxu0
      %v2710 = vadd.f32 0.0, %v2709
      %2711 = vmatmul.bf16.gmra.mxu0 %v1988
      %v2712 = vpop.f32.mrf.mxu0
      %v2713 = vadd.f32 0.0, %v2712
      %v2714 = vpop.f32.mrf.mxu0
      %v2715 = vadd.f32 0.0, %v2714
      %2716 = vmatmul.bf16.gmra.mxu0 %v1991
      %v2717 = vpop.f32.mrf.mxu0
      %v2718 = vadd.f32 0.0, %v2717
      %v2719 = vpop.f32.mrf.mxu0
      %v2720 = vadd.f32 0.0, %v2719
      %2721 = vmatmul.bf16.gmra.mxu0 %v1994
      %v2722 = vpop.f32.mrf.mxu0
      %v2723 = vadd.f32 0.0, %v2722
      %v2724 = vpop.f32.mrf.mxu0
      %v2725 = vadd.f32 0.0, %v2724
      %2726 = vmatmul.bf16.gmra.mxu0 %v1997
      %v2727 = vpop.f32.mrf.mxu0
      %v2728 = vadd.f32 0.0, %v2727
      %v2729 = vpop.f32.mrf.mxu0
      %v2730 = vadd.f32 0.0, %v2729
      %2731 = vmatmul.bf16.gmra.mxu0 %v2000
      %v2732 = vpop.f32.mrf.mxu0
      %v2733 = vadd.f32 0.0, %v2732
      %v2734 = vpop.f32.mrf.mxu0
      %v2735 = vadd.f32 0.0, %v2734
      %2736 = vmatmul.bf16.gmra.mxu0 %v2003
      %v2737 = vpop.f32.mrf.mxu0
      %v2738 = vadd.f32 0.0, %v2737
      %v2739 = vpop.f32.mrf.mxu0
      %v2740 = vadd.f32 0.0, %v2739
      %2741 = vmatmul.bf16.gmra.mxu0 %v2006
      %v2742 = vpop.f32.mrf.mxu0
      %v2743 = vadd.f32 0.0, %v2742
      %v2744 = vpop.f32.mrf.mxu0
      %v2745 = vadd.f32 0.0, %v2744
      %2746 = vmatmul.bf16.gmra.mxu0 %v2009
      %v2747 = vpop.f32.mrf.mxu0
      %v2748 = vadd.f32 0.0, %v2747
      %v2749 = vpop.f32.mrf.mxu0
      %v2750 = vadd.f32 0.0, %v2749
      %2751 = vmatmul.bf16.gmra.mxu0 %v2601
      %v2752 = vpop.f32.mrf.mxu0
      %v2753 = vadd.f32 0.0, %v2752
      %v2754 = vpop.f32.mrf.mxu0
      %v2755 = vadd.f32 0.0, %v2754
      %2756 = vdwg.mxu0
      %v2757 = vadd.f32 %v2565, %v2678
      %v2758 = vadd.f32 %v2566, %v2680
      %v2759 = vadd.f32 %v2567, %v2683
      %v2760 = vadd.f32 %v2568, %v2685
      %v2761 = vadd.f32 %v2569, %v2688
      %v2762 = vadd.f32 %v2570, %v2690
      %v2763 = vadd.f32 %v2571, %v2693
      %v2764 = vadd.f32 %v2572, %v2695
      %v2765 = vadd.f32 %v2573, %v2698
      %v2766 = vadd.f32 %v2574, %v2700
      %v2767 = vadd.f32 %v2575, %v2703
      %v2768 = vadd.f32 %v2576, %v2705
      %v2769 = vadd.f32 %v2577, %v2708
      %v2770 = vadd.f32 %v2578, %v2710
      %v2771 = vadd.f32 %v2579, %v2713
      %v2772 = vadd.f32 %v2580, %v2715
      %v2773 = vadd.f32 %v2581, %v2718
      %v2774 = vadd.f32 %v2582, %v2720
      %v2775 = vadd.f32 %v2583, %v2723
      %v2776 = vadd.f32 %v2584, %v2725
      %v2777 = vadd.f32 %v2585, %v2728
      %v2778 = vadd.f32 %v2586, %v2730
      %v2779 = vadd.f32 %v2587, %v2733
      %v2780 = vadd.f32 %v2588, %v2735
      %v2781 = vadd.f32 %v2589, %v2738
      %v2782 = vadd.f32 %v2590, %v2740
      %v2783 = vadd.f32 %v2591, %v2743
      %v2784 = vadd.f32 %v2592, %v2745
      %v2785 = vadd.f32 %v2593, %v2748
      %v2786 = vadd.f32 %v2594, %v2750
      %v2787 = vadd.f32 %v2595, %v2753
      %v2788 = vadd.f32 %v2596, %v2755
      %s2789 = scalar_lea.vmem %s314, 384
      %v2790 = vld [vmem:[%s2789] sm:$0xf]
      %v2791 = vld [vmem:[%s2789 + $0x4] sm:$0xf]
      %v2792 = vld [vmem:[%s2789 + $0x8] sm:$0xf]
      %v2793 = vld [vmem:[%s2789 + $0xc] sm:$0xf]
      %v2794 = vld [vmem:[%s2789 + $0x10] sm:$0xf]
      %v2795 = vld [vmem:[%s2789 + $0x14] sm:$0xf]
      %v2796 = vld [vmem:[%s2789 + $0x18] sm:$0xf]
      %v2797 = vld [vmem:[%s2789 + $0x1c] sm:$0xf]
      %v2798 = vld [vmem:[%s2789 + $0x20] sm:$0xf]
      %v2799 = vld [vmem:[%s2789 + $0x24] sm:$0xf]
      %v2800 = vld [vmem:[%s2789 + $0x28] sm:$0xf]
      %v2801 = vld [vmem:[%s2789 + $0x2c] sm:$0xf]
      %v2802 = vld [vmem:[%s2789 + $0x30] sm:$0xf]
      %v2803 = vld [vmem:[%s2789 + $0x34] sm:$0xf]
      %v2804 = vld [vmem:[%s2789 + $0x38] sm:$0xf]
      %v2805 = vld [vmem:[%s2789 + $0x3c] sm:$0xf]
      %v2822 = vunpack.c.l.b16 %v2790
      %v2823 = vunpack.c.l.b16 %v2791
      %v2824 = vunpack.c.l.b16 %v2792
      %v2825 = vunpack.c.l.b16 %v2793
      %v2826 = vunpack.c.l.b16 %v2794
      %v2827 = vunpack.c.l.b16 %v2795
      %v2828 = vunpack.c.l.b16 %v2796
      %v2829 = vunpack.c.l.b16 %v2797
      %v2830 = vunpack.c.l.b16 %v2798
      %v2831 = vunpack.c.l.b16 %v2799
      %v2832 = vunpack.c.l.b16 %v2800
      %v2833 = vunpack.c.l.b16 %v2801
      %v2834 = vunpack.c.l.b16 %v2802
      %v2835 = vunpack.c.l.b16 %v2803
      %v2836 = vunpack.c.l.b16 %v2804
      %v2837 = vunpack.c.l.b16 %v2805
      %v2838 = vpack.c.b16 %v2823, %v2822
      %v2839 = vpack.c.b16 %v2825, %v2824
      %v2840 = vpack.c.b16 %v2827, %v2826
      %v2841 = vpack.c.b16 %v2829, %v2828
      %v2842 = vpack.c.b16 %v2831, %v2830
      %v2843 = vpack.c.b16 %v2833, %v2832
      %v2844 = vpack.c.b16 %v2835, %v2834
      %v2845 = vpack.c.b16 %v2837, %v2836
      %2854 = vmatpush.bf16.msra.mxu0 %v2845
      %2855 = vmatpush.bf16.msra.mxu0 %v2844
      %2856 = vmatpush.bf16.msra.mxu0 %v2843
      %2857 = vmatpush.bf16.msra.mxu0 %v2842
      %2858 = vmatpush.bf16.msra.mxu0 %v2841
      %2859 = vmatpush.bf16.msra.mxu0 %v2840
      %2860 = vmatpush.bf16.msra.mxu0 %v2839
      %2861 = vmatpush.bf16.msra.mxu0 %v2838
      %2862 = vmatmul.bf16.gmra.mxu0 %v1381
      %v2863 = vpop.f32.mrf.mxu0
      %v2864 = vadd.f32 0.0, %v2863
      %v2865 = vpop.f32.mrf.mxu0
      %v2866 = vadd.f32 0.0, %v2865
      %2867 = vmatmul.bf16.gmra.mxu0 %v1382
      %v2868 = vpop.f32.mrf.mxu0
      %v2869 = vadd.f32 0.0, %v2868
      %v2870 = vpop.f32.mrf.mxu0
      %v2871 = vadd.f32 0.0, %v2870
      %2872 = vmatmul.bf16.gmra.mxu0 %v1383
      %v2873 = vpop.f32.mrf.mxu0
      %v2874 = vadd.f32 0.0, %v2873
      %v2875 = vpop.f32.mrf.mxu0
      %v2876 = vadd.f32 0.0, %v2875
      %2877 = vmatmul.bf16.gmra.mxu0 %v1384
      %v2878 = vpop.f32.mrf.mxu0
      %v2879 = vadd.f32 0.0, %v2878
      %v2880 = vpop.f32.mrf.mxu0
      %v2881 = vadd.f32 0.0, %v2880
      %2882 = vmatmul.bf16.gmra.mxu0 %v1385
      %v2883 = vpop.f32.mrf.mxu0
      %v2884 = vadd.f32 0.0, %v2883
      %v2885 = vpop.f32.mrf.mxu0
      %v2886 = vadd.f32 0.0, %v2885
      %2887 = vmatmul.bf16.gmra.mxu0 %v1386
      %v2888 = vpop.f32.mrf.mxu0
      %v2889 = vadd.f32 0.0, %v2888
      %v2890 = vpop.f32.mrf.mxu0
      %v2891 = vadd.f32 0.0, %v2890
      %2892 = vmatmul.bf16.gmra.mxu0 %v1387
      %v2893 = vpop.f32.mrf.mxu0
      %v2894 = vadd.f32 0.0, %v2893
      %v2895 = vpop.f32.mrf.mxu0
      %v2896 = vadd.f32 0.0, %v2895
      %2897 = vmatmul.bf16.gmra.mxu0 %v1388
      %v2898 = vpop.f32.mrf.mxu0
      %v2899 = vadd.f32 0.0, %v2898
      %v2900 = vpop.f32.mrf.mxu0
      %v2901 = vadd.f32 0.0, %v2900
      %2902 = vmatmul.bf16.gmra.mxu0 %v1389
      %v2903 = vpop.f32.mrf.mxu0
      %v2904 = vadd.f32 0.0, %v2903
      %v2905 = vpop.f32.mrf.mxu0
      %v2906 = vadd.f32 0.0, %v2905
      %2907 = vmatmul.bf16.gmra.mxu0 %v1390
      %v2908 = vpop.f32.mrf.mxu0
      %v2909 = vadd.f32 0.0, %v2908
      %v2910 = vpop.f32.mrf.mxu0
      %v2911 = vadd.f32 0.0, %v2910
      %2912 = vmatmul.bf16.gmra.mxu0 %v1391
      %v2913 = vpop.f32.mrf.mxu0
      %v2914 = vadd.f32 0.0, %v2913
      %v2915 = vpop.f32.mrf.mxu0
      %v2916 = vadd.f32 0.0, %v2915
      %2917 = vmatmul.bf16.gmra.mxu0 %v1392
      %v2918 = vpop.f32.mrf.mxu0
      %v2919 = vadd.f32 0.0, %v2918
      %v2920 = vpop.f32.mrf.mxu0
      %v2921 = vadd.f32 0.0, %v2920
      %2922 = vmatmul.bf16.gmra.mxu0 %v1393
      %v2923 = vpop.f32.mrf.mxu0
      %v2924 = vadd.f32 0.0, %v2923
      %v2925 = vpop.f32.mrf.mxu0
      %v2926 = vadd.f32 0.0, %v2925
      %2927 = vmatmul.bf16.gmra.mxu0 %v1394
      %v2928 = vpop.f32.mrf.mxu0
      %v2929 = vadd.f32 0.0, %v2928
      %v2930 = vpop.f32.mrf.mxu0
      %v2931 = vadd.f32 0.0, %v2930
      %2932 = vmatmul.bf16.gmra.mxu0 %v1395
      %v2933 = vpop.f32.mrf.mxu0
      %v2934 = vadd.f32 0.0, %v2933
      %v2935 = vpop.f32.mrf.mxu0
      %v2936 = vadd.f32 0.0, %v2935
      %2937 = vmatmul.bf16.gmra.mxu0 %v1379
      %v2938 = vpop.f32.mrf.mxu0
      %v2939 = vadd.f32 0.0, %v2938
      %v2940 = vpop.f32.mrf.mxu0
      %v2941 = vadd.f32 0.0, %v2940
      %2942 = vdwg.mxu0
      %v2943 = vadd.f32 %v2757, %v2864
      %v2944 = vadd.f32 %v2758, %v2866
      %v2945 = vadd.f32 %v2759, %v2869
      %v2946 = vadd.f32 %v2760, %v2871
      %v2947 = vadd.f32 %v2761, %v2874
      %v2948 = vadd.f32 %v2762, %v2876
      %v2949 = vadd.f32 %v2763, %v2879
      %v2950 = vadd.f32 %v2764, %v2881
      %v2951 = vadd.f32 %v2765, %v2884
      %v2952 = vadd.f32 %v2766, %v2886
      %v2953 = vadd.f32 %v2767, %v2889
      %v2954 = vadd.f32 %v2768, %v2891
      %v2955 = vadd.f32 %v2769, %v2894
      %v2956 = vadd.f32 %v2770, %v2896
      %v2957 = vadd.f32 %v2771, %v2899
      %v2958 = vadd.f32 %v2772, %v2901
      %v2959 = vadd.f32 %v2773, %v2904
      %v2960 = vadd.f32 %v2774, %v2906
      %v2961 = vadd.f32 %v2775, %v2909
      %v2962 = vadd.f32 %v2776, %v2911
      %v2963 = vadd.f32 %v2777, %v2914
      %v2964 = vadd.f32 %v2778, %v2916
      %v2965 = vadd.f32 %v2779, %v2919
      %v2966 = vadd.f32 %v2780, %v2921
      %v2967 = vadd.f32 %v2781, %v2924
      %v2968 = vadd.f32 %v2782, %v2926
      %v2969 = vadd.f32 %v2783, %v2929
      %v2970 = vadd.f32 %v2784, %v2931
      %v2971 = vadd.f32 %v2785, %v2934
      %v2972 = vadd.f32 %v2786, %v2936
      %v2973 = vadd.f32 %v2787, %v2939
      %v2974 = vadd.f32 %v2788, %v2941
      %s2975 = scalar_lea.vmem %s314, 448
      %v2976 = vld [vmem:[%s2975] sm:$0xf]
      %v2977 = vld [vmem:[%s2975 + $0x4] sm:$0xf]
      %v2978 = vld [vmem:[%s2975 + $0x8] sm:$0xf]
      %v2979 = vld [vmem:[%s2975 + $0xc] sm:$0xf]
      %v2980 = vld [vmem:[%s2975 + $0x10] sm:$0xf]
      %v2981 = vld [vmem:[%s2975 + $0x14] sm:$0xf]
      %v2982 = vld [vmem:[%s2975 + $0x18] sm:$0xf]
      %v2983 = vld [vmem:[%s2975 + $0x1c] sm:$0xf]
      %v2984 = vld [vmem:[%s2975 + $0x20] sm:$0xf]
      %v2985 = vld [vmem:[%s2975 + $0x24] sm:$0xf]
      %v2986 = vld [vmem:[%s2975 + $0x28] sm:$0xf]
      %v2987 = vld [vmem:[%s2975 + $0x2c] sm:$0xf]
      %v2988 = vld [vmem:[%s2975 + $0x30] sm:$0xf]
      %v2989 = vld [vmem:[%s2975 + $0x34] sm:$0xf]
      %v2990 = vld [vmem:[%s2975 + $0x38] sm:$0xf]
      %v2991 = vld [vmem:[%s2975 + $0x3c] sm:$0xf]
      %v3008 = vunpack.c.l.b16 %v2976
      %v3009 = vunpack.c.l.b16 %v2977
      %v3010 = vunpack.c.l.b16 %v2978
      %v3011 = vunpack.c.l.b16 %v2979
      %v3012 = vunpack.c.l.b16 %v2980
      %v3013 = vunpack.c.l.b16 %v2981
      %v3014 = vunpack.c.l.b16 %v2982
      %v3015 = vunpack.c.l.b16 %v2983
      %v3016 = vunpack.c.l.b16 %v2984
      %v3017 = vunpack.c.l.b16 %v2985
      %v3018 = vunpack.c.l.b16 %v2986
      %v3019 = vunpack.c.l.b16 %v2987
      %v3020 = vunpack.c.l.b16 %v2988
      %v3021 = vunpack.c.l.b16 %v2989
      %v3022 = vunpack.c.l.b16 %v2990
      %v3023 = vunpack.c.l.b16 %v2991
      %v3024 = vpack.c.b16 %v3009, %v3008
      %v3025 = vpack.c.b16 %v3011, %v3010
      %v3026 = vpack.c.b16 %v3013, %v3012
      %v3027 = vpack.c.b16 %v3015, %v3014
      %v3028 = vpack.c.b16 %v3017, %v3016
      %v3029 = vpack.c.b16 %v3019, %v3018
      %v3030 = vpack.c.b16 %v3021, %v3020
      %v3031 = vpack.c.b16 %v3023, %v3022
      %3040 = vmatpush.bf16.msra.mxu0 %v3031
      %3041 = vmatpush.bf16.msra.mxu0 %v3030
      %3042 = vmatpush.bf16.msra.mxu0 %v3029
      %3043 = vmatpush.bf16.msra.mxu0 %v3028
      %3044 = vmatpush.bf16.msra.mxu0 %v3027
      %3045 = vmatpush.bf16.msra.mxu0 %v3026
      %3046 = vmatpush.bf16.msra.mxu0 %v3025
      %3047 = vmatpush.bf16.msra.mxu0 %v3024
      %3048 = vmatmul.bf16.gmra.mxu0 %v1465
      %v3049 = vpop.f32.mrf.mxu0
      %v3050 = vadd.f32 0.0, %v3049
      %v3051 = vpop.f32.mrf.mxu0
      %v3052 = vadd.f32 0.0, %v3051
      %3053 = vmatmul.bf16.gmra.mxu0 %v1477
      %v3054 = vpop.f32.mrf.mxu0
      %v3055 = vadd.f32 0.0, %v3054
      %v3056 = vpop.f32.mrf.mxu0
      %v3057 = vadd.f32 0.0, %v3056
      %3058 = vmatmul.bf16.gmra.mxu0 %v1489
      %v3059 = vpop.f32.mrf.mxu0
      %v3060 = vadd.f32 0.0, %v3059
      %v3061 = vpop.f32.mrf.mxu0
      %v3062 = vadd.f32 0.0, %v3061
      %3063 = vmatmul.bf16.gmra.mxu0 %v1501
      %v3064 = vpop.f32.mrf.mxu0
      %v3065 = vadd.f32 0.0, %v3064
      %v3066 = vpop.f32.mrf.mxu0
      %v3067 = vadd.f32 0.0, %v3066
      %3068 = vmatmul.bf16.gmra.mxu0 %v1513
      %v3069 = vpop.f32.mrf.mxu0
      %v3070 = vadd.f32 0.0, %v3069
      %v3071 = vpop.f32.mrf.mxu0
      %v3072 = vadd.f32 0.0, %v3071
      %3073 = vmatmul.bf16.gmra.mxu0 %v1525
      %v3074 = vpop.f32.mrf.mxu0
      %v3075 = vadd.f32 0.0, %v3074
      %v3076 = vpop.f32.mrf.mxu0
      %v3077 = vadd.f32 0.0, %v3076
      %3078 = vmatmul.bf16.gmra.mxu0 %v1537
      %v3079 = vpop.f32.mrf.mxu0
      %v3080 = vadd.f32 0.0, %v3079
      %v3081 = vpop.f32.mrf.mxu0
      %v3082 = vadd.f32 0.0, %v3081
      %3083 = vmatmul.bf16.gmra.mxu0 %v1549
      %v3084 = vpop.f32.mrf.mxu0
      %v3085 = vadd.f32 0.0, %v3084
      %v3086 = vpop.f32.mrf.mxu0
      %v3087 = vadd.f32 0.0, %v3086
      %3088 = vmatmul.bf16.gmra.mxu0 %v1561
      %v3089 = vpop.f32.mrf.mxu0
      %v3090 = vadd.f32 0.0, %v3089
      %v3091 = vpop.f32.mrf.mxu0
      %v3092 = vadd.f32 0.0, %v3091
      %3093 = vmatmul.bf16.gmra.mxu0 %v1573
      %v3094 = vpop.f32.mrf.mxu0
      %v3095 = vadd.f32 0.0, %v3094
      %v3096 = vpop.f32.mrf.mxu0
      %v3097 = vadd.f32 0.0, %v3096
      %3098 = vmatmul.bf16.gmra.mxu0 %v1585
      %v3099 = vpop.f32.mrf.mxu0
      %v3100 = vadd.f32 0.0, %v3099
      %v3101 = vpop.f32.mrf.mxu0
      %v3102 = vadd.f32 0.0, %v3101
      %3103 = vmatmul.bf16.gmra.mxu0 %v1597
      %v3104 = vpop.f32.mrf.mxu0
      %v3105 = vadd.f32 0.0, %v3104
      %v3106 = vpop.f32.mrf.mxu0
      %v3107 = vadd.f32 0.0, %v3106
      %3108 = vmatmul.bf16.gmra.mxu0 %v1609
      %v3109 = vpop.f32.mrf.mxu0
      %v3110 = vadd.f32 0.0, %v3109
      %v3111 = vpop.f32.mrf.mxu0
      %v3112 = vadd.f32 0.0, %v3111
      %3113 = vmatmul.bf16.gmra.mxu0 %v1621
      %v3114 = vpop.f32.mrf.mxu0
      %v3115 = vadd.f32 0.0, %v3114
      %v3116 = vpop.f32.mrf.mxu0
      %v3117 = vadd.f32 0.0, %v3116
      %3118 = vmatmul.bf16.gmra.mxu0 %v2409
      %v3119 = vpop.f32.mrf.mxu0
      %v3120 = vadd.f32 0.0, %v3119
      %v3121 = vpop.f32.mrf.mxu0
      %v3122 = vadd.f32 0.0, %v3121
      %3123 = vmatmul.bf16.gmra.mxu0 %v1441
      %v3124 = vpop.f32.mrf.mxu0
      %v3125 = vadd.f32 0.0, %v3124
      %v3126 = vpop.f32.mrf.mxu0
      %v3127 = vadd.f32 0.0, %v3126
      %3128 = vdwg.mxu0
      %v3129 = vadd.f32 %v2943, %v3050
      %v3130 = vadd.f32 %v2944, %v3052
      %v3131 = vadd.f32 %v2945, %v3055
      %v3132 = vadd.f32 %v2946, %v3057
      %v3133 = vadd.f32 %v2947, %v3060
      %v3134 = vadd.f32 %v2948, %v3062
      %v3135 = vadd.f32 %v2949, %v3065
      %v3136 = vadd.f32 %v2950, %v3067
      %v3137 = vadd.f32 %v2951, %v3070
      %v3138 = vadd.f32 %v2952, %v3072
      %v3139 = vadd.f32 %v2953, %v3075
      %v3140 = vadd.f32 %v2954, %v3077
      %v3141 = vadd.f32 %v2955, %v3080
      %v3142 = vadd.f32 %v2956, %v3082
      %v3143 = vadd.f32 %v2957, %v3085
      %v3144 = vadd.f32 %v2958, %v3087
      %v3145 = vadd.f32 %v2959, %v3090
      %v3146 = vadd.f32 %v2960, %v3092
      %v3147 = vadd.f32 %v2961, %v3095
      %v3148 = vadd.f32 %v2962, %v3097
      %v3149 = vadd.f32 %v2963, %v3100
      %v3150 = vadd.f32 %v2964, %v3102
      %v3151 = vadd.f32 %v2965, %v3105
      %v3152 = vadd.f32 %v2966, %v3107
      %v3153 = vadd.f32 %v2967, %v3110
      %v3154 = vadd.f32 %v2968, %v3112
      %v3155 = vadd.f32 %v2969, %v3115
      %v3156 = vadd.f32 %v2970, %v3117
      %v3157 = vadd.f32 %v2971, %v3120
      %v3158 = vadd.f32 %v2972, %v3122
      %v3159 = vadd.f32 %v2973, %v3125
      %v3160 = vadd.f32 %v2974, %v3127
      %s3161 = scalar_lea.vmem %s314, 512
      %v3162 = vld [vmem:[%s3161] sm:$0xf]
      %v3163 = vld [vmem:[%s3161 + $0x4] sm:$0xf]
      %v3164 = vld [vmem:[%s3161 + $0x8] sm:$0xf]
      %v3165 = vld [vmem:[%s3161 + $0xc] sm:$0xf]
      %v3166 = vld [vmem:[%s3161 + $0x10] sm:$0xf]
      %v3167 = vld [vmem:[%s3161 + $0x14] sm:$0xf]
      %v3168 = vld [vmem:[%s3161 + $0x18] sm:$0xf]
      %v3169 = vld [vmem:[%s3161 + $0x1c] sm:$0xf]
      %v3170 = vld [vmem:[%s3161 + $0x20] sm:$0xf]
      %v3171 = vld [vmem:[%s3161 + $0x24] sm:$0xf]
      %v3172 = vld [vmem:[%s3161 + $0x28] sm:$0xf]
      %v3173 = vld [vmem:[%s3161 + $0x2c] sm:$0xf]
      %v3174 = vld [vmem:[%s3161 + $0x30] sm:$0xf]
      %v3175 = vld [vmem:[%s3161 + $0x34] sm:$0xf]
      %v3176 = vld [vmem:[%s3161 + $0x38] sm:$0xf]
      %v3177 = vld [vmem:[%s3161 + $0x3c] sm:$0xf]
      %v3194 = vunpack.c.l.b16 %v3162
      %v3195 = vunpack.c.l.b16 %v3163
      %v3196 = vunpack.c.l.b16 %v3164
      %v3197 = vunpack.c.l.b16 %v3165
      %v3198 = vunpack.c.l.b16 %v3166
      %v3199 = vunpack.c.l.b16 %v3167
      %v3200 = vunpack.c.l.b16 %v3168
      %v3201 = vunpack.c.l.b16 %v3169
      %v3202 = vunpack.c.l.b16 %v3170
      %v3203 = vunpack.c.l.b16 %v3171
      %v3204 = vunpack.c.l.b16 %v3172
      %v3205 = vunpack.c.l.b16 %v3173
      %v3206 = vunpack.c.l.b16 %v3174
      %v3207 = vunpack.c.l.b16 %v3175
      %v3208 = vunpack.c.l.b16 %v3176
      %v3209 = vunpack.c.l.b16 %v3177
      %v3210 = vpack.c.b16 %v3195, %v3194
      %v3211 = vpack.c.b16 %v3197, %v3196
      %v3212 = vpack.c.b16 %v3199, %v3198
      %v3213 = vpack.c.b16 %v3201, %v3200
      %v3214 = vpack.c.b16 %v3203, %v3202
      %v3215 = vpack.c.b16 %v3205, %v3204
      %v3216 = vpack.c.b16 %v3207, %v3206
      %v3217 = vpack.c.b16 %v3209, %v3208
      %3226 = vmatpush.bf16.msra.mxu0 %v3217
      %3227 = vmatpush.bf16.msra.mxu0 %v3216
      %3228 = vmatpush.bf16.msra.mxu0 %v3215
      %3229 = vmatpush.bf16.msra.mxu0 %v3214
      %3230 = vmatpush.bf16.msra.mxu0 %v3213
      %3231 = vmatpush.bf16.msra.mxu0 %v3212
      %3232 = vmatpush.bf16.msra.mxu0 %v3211
      %3233 = vmatpush.bf16.msra.mxu0 %v3210
      %3234 = vmatmul.bf16.gmra.mxu0 %v1970
      %v3235 = vpop.f32.mrf.mxu0
      %v3236 = vadd.f32 0.0, %v3235
      %v3237 = vpop.f32.mrf.mxu0
      %v3238 = vadd.f32 0.0, %v3237
      %3239 = vmatmul.bf16.gmra.mxu0 %v1973
      %v3240 = vpop.f32.mrf.mxu0
      %v3241 = vadd.f32 0.0, %v3240
      %v3242 = vpop.f32.mrf.mxu0
      %v3243 = vadd.f32 0.0, %v3242
      %3244 = vmatmul.bf16.gmra.mxu0 %v1976
      %v3245 = vpop.f32.mrf.mxu0
      %v3246 = vadd.f32 0.0, %v3245
      %v3247 = vpop.f32.mrf.mxu0
      %v3248 = vadd.f32 0.0, %v3247
      %3249 = vmatmul.bf16.gmra.mxu0 %v1979
      %v3250 = vpop.f32.mrf.mxu0
      %v3251 = vadd.f32 0.0, %v3250
      %v3252 = vpop.f32.mrf.mxu0
      %v3253 = vadd.f32 0.0, %v3252
      %3254 = vmatmul.bf16.gmra.mxu0 %v1982
      %v3255 = vpop.f32.mrf.mxu0
      %v3256 = vadd.f32 0.0, %v3255
      %v3257 = vpop.f32.mrf.mxu0
      %v3258 = vadd.f32 0.0, %v3257
      %3259 = vmatmul.bf16.gmra.mxu0 %v1985
      %v3260 = vpop.f32.mrf.mxu0
      %v3261 = vadd.f32 0.0, %v3260
      %v3262 = vpop.f32.mrf.mxu0
      %v3263 = vadd.f32 0.0, %v3262
      %3264 = vmatmul.bf16.gmra.mxu0 %v1988
      %v3265 = vpop.f32.mrf.mxu0
      %v3266 = vadd.f32 0.0, %v3265
      %v3267 = vpop.f32.mrf.mxu0
      %v3268 = vadd.f32 0.0, %v3267
      %3269 = vmatmul.bf16.gmra.mxu0 %v1991
      %v3270 = vpop.f32.mrf.mxu0
      %v3271 = vadd.f32 0.0, %v3270
      %v3272 = vpop.f32.mrf.mxu0
      %v3273 = vadd.f32 0.0, %v3272
      %3274 = vmatmul.bf16.gmra.mxu0 %v1994
      %v3275 = vpop.f32.mrf.mxu0
      %v3276 = vadd.f32 0.0, %v3275
      %v3277 = vpop.f32.mrf.mxu0
      %v3278 = vadd.f32 0.0, %v3277
      %3279 = vmatmul.bf16.gmra.mxu0 %v1997
      %v3280 = vpop.f32.mrf.mxu0
      %v3281 = vadd.f32 0.0, %v3280
      %v3282 = vpop.f32.mrf.mxu0
      %v3283 = vadd.f32 0.0, %v3282
      %3284 = vmatmul.bf16.gmra.mxu0 %v2000
      %v3285 = vpop.f32.mrf.mxu0
      %v3286 = vadd.f32 0.0, %v3285
      %v3287 = vpop.f32.mrf.mxu0
      %v3288 = vadd.f32 0.0, %v3287
      %3289 = vmatmul.bf16.gmra.mxu0 %v2003
      %v3290 = vpop.f32.mrf.mxu0
      %v3291 = vadd.f32 0.0, %v3290
      %v3292 = vpop.f32.mrf.mxu0
      %v3293 = vadd.f32 0.0, %v3292
      %3294 = vmatmul.bf16.gmra.mxu0 %v2006
      %v3295 = vpop.f32.mrf.mxu0
      %v3296 = vadd.f32 0.0, %v3295
      %v3297 = vpop.f32.mrf.mxu0
      %v3298 = vadd.f32 0.0, %v3297
      %3299 = vmatmul.bf16.gmra.mxu0 %v2009
      %v3300 = vpop.f32.mrf.mxu0
      %v3301 = vadd.f32 0.0, %v3300
      %v3302 = vpop.f32.mrf.mxu0
      %v3303 = vadd.f32 0.0, %v3302
      %3304 = vmatmul.bf16.gmra.mxu0 %v2601
      %v3305 = vpop.f32.mrf.mxu0
      %v3306 = vadd.f32 0.0, %v3305
      %v3307 = vpop.f32.mrf.mxu0
      %v3308 = vadd.f32 0.0, %v3307
      %3309 = vmatmul.bf16.gmra.mxu0 %v1964
      %v3310 = vpop.f32.mrf.mxu0
      %v3311 = vadd.f32 0.0, %v3310
      %v3312 = vpop.f32.mrf.mxu0
      %v3313 = vadd.f32 0.0, %v3312
      %3314 = vdwg.mxu0
      %v3315 = vadd.f32 %v3129, %v3236
      %v3316 = vadd.f32 %v3130, %v3238
      %v3317 = vadd.f32 %v3131, %v3241
      %v3318 = vadd.f32 %v3132, %v3243
      %v3319 = vadd.f32 %v3133, %v3246
      %v3320 = vadd.f32 %v3134, %v3248
      %v3321 = vadd.f32 %v3135, %v3251
      %v3322 = vadd.f32 %v3136, %v3253
      %v3323 = vadd.f32 %v3137, %v3256
      %v3324 = vadd.f32 %v3138, %v3258
      %v3325 = vadd.f32 %v3139, %v3261
      %v3326 = vadd.f32 %v3140, %v3263
      %v3327 = vadd.f32 %v3141, %v3266
      %v3328 = vadd.f32 %v3142, %v3268
      %v3329 = vadd.f32 %v3143, %v3271
      %v3330 = vadd.f32 %v3144, %v3273
      %v3331 = vadd.f32 %v3145, %v3276
      %v3332 = vadd.f32 %v3146, %v3278
      %v3333 = vadd.f32 %v3147, %v3281
      %v3334 = vadd.f32 %v3148, %v3283
      %v3335 = vadd.f32 %v3149, %v3286
      %v3336 = vadd.f32 %v3150, %v3288
      %v3337 = vadd.f32 %v3151, %v3291
      %v3338 = vadd.f32 %v3152, %v3293
      %v3339 = vadd.f32 %v3153, %v3296
      %v3340 = vadd.f32 %v3154, %v3298
      %v3341 = vadd.f32 %v3155, %v3301
      %v3342 = vadd.f32 %v3156, %v3303
      %v3343 = vadd.f32 %v3157, %v3306
      %v3344 = vadd.f32 %v3158, %v3308
      %v3345 = vadd.f32 %v3159, %v3311
      %v3346 = vadd.f32 %v3160, %v3313
      %v3347 = vld [vmem:[%s317] sm:$0x1]
      %v3349 = vperm.slane %v3347, 0
      %v3351 = vadd.f32 %v3315, %v3349
      %v3352 = vadd.f32 %v3316, %v3349
      %v3353 = vadd.f32 %v3317, %v3349
      %v3354 = vadd.f32 %v3318, %v3349
      %v3355 = vadd.f32 %v3319, %v3349
      %v3356 = vadd.f32 %v3320, %v3349
      %v3357 = vadd.f32 %v3321, %v3349
      %v3358 = vadd.f32 %v3322, %v3349
      %v3359 = vadd.f32 %v3323, %v3349
      %v3360 = vadd.f32 %v3324, %v3349
      %v3361 = vadd.f32 %v3325, %v3349
      %v3362 = vadd.f32 %v3326, %v3349
      %v3363 = vadd.f32 %v3327, %v3349
      %v3364 = vadd.f32 %v3328, %v3349
      %v3365 = vadd.f32 %v3329, %v3349
      %v3366 = vadd.f32 %v3330, %v3349
      %v3367 = vadd.f32 %v3331, %v3349
      %v3368 = vadd.f32 %v3332, %v3349
      %v3369 = vadd.f32 %v3333, %v3349
      %v3370 = vadd.f32 %v3334, %v3349
      %v3371 = vadd.f32 %v3335, %v3349
      %v3372 = vadd.f32 %v3336, %v3349
      %v3373 = vadd.f32 %v3337, %v3349
      %v3374 = vadd.f32 %v3338, %v3349
      %v3375 = vadd.f32 %v3339, %v3349
      %v3376 = vadd.f32 %v3340, %v3349
      %v3377 = vadd.f32 %v3341, %v3349
      %v3378 = vadd.f32 %v3342, %v3349
      %v3379 = vadd.f32 %v3343, %v3349
      %v3380 = vadd.f32 %v3344, %v3349
      %v3381 = vadd.f32 %v3345, %v3349
      %v3382 = vadd.f32 %v3346, %v3349
      %v3383 = vld [vmem:[%s325] sm:$0xf]
      %v3384 = vld [vmem:[%s325 + $0x4] sm:$0xf]
      %v3385 = vld [vmem:[%s325 + $0x8] sm:$0xf]
      %v3386 = vld [vmem:[%s325 + $0xc] sm:$0xf]
      %v3387 = vld [vmem:[%s325 + $0x10] sm:$0xf]
      %v3388 = vld [vmem:[%s325 + $0x14] sm:$0xf]
      %v3389 = vld [vmem:[%s325 + $0x18] sm:$0xf]
      %v3390 = vld [vmem:[%s325 + $0x1c] sm:$0xf]
      %v3391 = vld [vmem:[%s325 + $0x20] sm:$0xf]
      %v3392 = vld [vmem:[%s325 + $0x24] sm:$0xf]
      %v3393 = vld [vmem:[%s325 + $0x28] sm:$0xf]
      %v3394 = vld [vmem:[%s325 + $0x2c] sm:$0xf]
      %v3395 = vld [vmem:[%s325 + $0x30] sm:$0xf]
      %v3396 = vld [vmem:[%s325 + $0x34] sm:$0xf]
      %v3397 = vld [vmem:[%s325 + $0x38] sm:$0xf]
      %v3398 = vld [vmem:[%s325 + $0x3c] sm:$0xf]
      %v3399 = vld [vmem:[%s325 + $0x40] sm:$0xf]
      %v3400 = vld [vmem:[%s325 + $0x44] sm:$0xf]
      %v3401 = vld [vmem:[%s325 + $0x48] sm:$0xf]
      %v3402 = vld [vmem:[%s325 + $0x4c] sm:$0xf]
      %v3403 = vld [vmem:[%s325 + $0x50] sm:$0xf]
      %v3404 = vld [vmem:[%s325 + $0x54] sm:$0xf]
      %v3405 = vld [vmem:[%s325 + $0x58] sm:$0xf]
      %v3406 = vld [vmem:[%s325 + $0x5c] sm:$0xf]
      %v3407 = vld [vmem:[%s325 + $0x60] sm:$0xf]
      %v3408 = vld [vmem:[%s325 + $0x64] sm:$0xf]
      %v3409 = vld [vmem:[%s325 + $0x68] sm:$0xf]
      %v3410 = vld [vmem:[%s325 + $0x6c] sm:$0xf]
      %v3411 = vld [vmem:[%s325 + $0x70] sm:$0xf]
      %v3412 = vld [vmem:[%s325 + $0x74] sm:$0xf]
      %v3413 = vld [vmem:[%s325 + $0x78] sm:$0xf]
      %v3414 = vld [vmem:[%s325 + $0x7c] sm:$0xf]
      %v3415 = vunpack.c.l.bf16 %v3383
      %v3416 = vunpack.c.l.bf16 %v3384
      %v3417 = vunpack.c.l.bf16 %v3385
      %v3418 = vunpack.c.l.bf16 %v3386
      %v3419 = vunpack.c.l.bf16 %v3387
      %v3420 = vunpack.c.l.bf16 %v3388
      %v3421 = vunpack.c.l.bf16 %v3389
      %v3422 = vunpack.c.l.bf16 %v3390
      %v3423 = vunpack.c.l.bf16 %v3391
      %v3424 = vunpack.c.l.bf16 %v3392
      %v3425 = vunpack.c.l.bf16 %v3393
      %v3426 = vunpack.c.l.bf16 %v3394
      %v3427 = vunpack.c.l.bf16 %v3395
      %v3428 = vunpack.c.l.bf16 %v3396
      %v3429 = vunpack.c.l.bf16 %v3397
      %v3430 = vunpack.c.l.bf16 %v3398
      %v3431 = vunpack.c.l.bf16 %v3399
      %v3432 = vunpack.c.l.bf16 %v3400
      %v3433 = vunpack.c.l.bf16 %v3401
      %v3434 = vunpack.c.l.bf16 %v3402
      %v3435 = vunpack.c.l.bf16 %v3403
      %v3436 = vunpack.c.l.bf16 %v3404
      %v3437 = vunpack.c.l.bf16 %v3405
      %v3438 = vunpack.c.l.bf16 %v3406
      %v3439 = vunpack.c.l.bf16 %v3407
      %v3440 = vunpack.c.l.bf16 %v3408
      %v3441 = vunpack.c.l.bf16 %v3409
      %v3442 = vunpack.c.l.bf16 %v3410
      %v3443 = vunpack.c.l.bf16 %v3411
      %v3444 = vunpack.c.l.bf16 %v3412
      %v3445 = vunpack.c.l.bf16 %v3413
      %v3446 = vunpack.c.l.bf16 %v3414
      %v3447 = vadd.f32 %v3351, %v3415
      %v3448 = vadd.f32 %v3352, %v3416
      %v3449 = vadd.f32 %v3353, %v3417
      %v3450 = vadd.f32 %v3354, %v3418
      %v3451 = vadd.f32 %v3355, %v3419
      %v3452 = vadd.f32 %v3356, %v3420
      %v3453 = vadd.f32 %v3357, %v3421
      %v3454 = vadd.f32 %v3358, %v3422
      %v3455 = vadd.f32 %v3359, %v3423
      %v3456 = vadd.f32 %v3360, %v3424
      %v3457 = vadd.f32 %v3361, %v3425
      %v3458 = vadd.f32 %v3362, %v3426
      %v3459 = vadd.f32 %v3363, %v3427
      %v3460 = vadd.f32 %v3364, %v3428
      %v3461 = vadd.f32 %v3365, %v3429
      %v3462 = vadd.f32 %v3366, %v3430
      %v3463 = vadd.f32 %v3367, %v3431
      %v3464 = vadd.f32 %v3368, %v3432
      %v3465 = vadd.f32 %v3369, %v3433
      %v3466 = vadd.f32 %v3370, %v3434
      %v3467 = vadd.f32 %v3371, %v3435
      %v3468 = vadd.f32 %v3372, %v3436
      %v3469 = vadd.f32 %v3373, %v3437
      %v3470 = vadd.f32 %v3374, %v3438
      %v3471 = vadd.f32 %v3375, %v3439
      %v3472 = vadd.f32 %v3376, %v3440
      %v3473 = vadd.f32 %v3377, %v3441
      %v3474 = vadd.f32 %v3378, %v3442
      %v3475 = vadd.f32 %v3379, %v3443
      %v3476 = vadd.f32 %v3380, %v3444
      %v3477 = vadd.f32 %v3381, %v3445
      %v3478 = vadd.f32 %v3382, %v3446
      %3479 = vst [vmem:[%s333] sm:$0xff] %v3447
      %3480 = vst [vmem:[%s333 + $0x8] sm:$0xff] %v3448
      %3481 = vst [vmem:[%s333 + $0x10] sm:$0xff] %v3449
      %3482 = vst [vmem:[%s333 + $0x18] sm:$0xff] %v3450
      %3483 = vst [vmem:[%s333 + $0x20] sm:$0xff] %v3451
      %3484 = vst [vmem:[%s333 + $0x28] sm:$0xff] %v3452
      %3485 = vst [vmem:[%s333 + $0x30] sm:$0xff] %v3453
      %3486 = vst [vmem:[%s333 + $0x38] sm:$0xff] %v3454
      %3487 = vst [vmem:[%s333 + $0x40] sm:$0xff] %v3455
      %3488 = vst [vmem:[%s333 + $0x48] sm:$0xff] %v3456
      %3489 = vst [vmem:[%s333 + $0x50] sm:$0xff] %v3457
      %3490 = vst [vmem:[%s333 + $0x58] sm:$0xff] %v3458
      %3491 = vst [vmem:[%s333 + $0x60] sm:$0xff] %v3459
      %3492 = vst [vmem:[%s333 + $0x68] sm:$0xff] %v3460
      %3493 = vst [vmem:[%s333 + $0x70] sm:$0xff] %v3461
      %3494 = vst [vmem:[%s333 + $0x78] sm:$0xff] %v3462
      %3495 = vst [vmem:[%s333 + $0x80] sm:$0xff] %v3463
      %3496 = vst [vmem:[%s333 + $0x88] sm:$0xff] %v3464
      %3497 = vst [vmem:[%s333 + $0x90] sm:$0xff] %v3465
      %3498 = vst [vmem:[%s333 + $0x98] sm:$0xff] %v3466
      %3499 = vst [vmem:[%s333 + $0xa0] sm:$0xff] %v3467
      %3500 = vst [vmem:[%s333 + $0xa8] sm:$0xff] %v3468
      %3501 = vst [vmem:[%s333 + $0xb0] sm:$0xff] %v3469
      %3502 = vst [vmem:[%s333 + $0xb8] sm:$0xff] %v3470
      %3503 = vst [vmem:[%s333 + $0xc0] sm:$0xff] %v3471
      %3504 = vst [vmem:[%s333 + $0xc8] sm:$0xff] %v3472
      %3505 = vst [vmem:[%s333 + $0xd0] sm:$0xff] %v3473
      %3506 = vst [vmem:[%s333 + $0xd8] sm:$0xff] %v3474
      %3507 = vst [vmem:[%s333 + $0xe0] sm:$0xff] %v3475
      %3508 = vst [vmem:[%s333 + $0xe8] sm:$0xff] %v3476
      %3509 = vst [vmem:[%s333 + $0xf0] sm:$0xff] %v3477
      %3510 = vst [vmem:[%s333 + $0xf8] sm:$0xff] %v3478
      %p3511 = scmp.lt.s32.totalorder %s21, 1
      %s3512 = scalar_select %p3511, %s21, 1
      %p3513 = scmp.lt.s32.totalorder %s22, 0
      %s3514 = scalar_select %p3513, %s22, 0
      %s3515 = smul.addr %s3512, 32
      %s3516 = sadd.s32 %s3514, %s3515
      %s3517 = smul.addr %s3516, 8
      %s3518 = scalar_lea.vmem %s6, %s3517
      // Predicated region
      $region45: #{resnet_block_forward.5} parent=43 // pred_check
        %p3519 = pneg %p197
      $region46: #{resnet_block_forward.5} parent=43 // pred_check_branch
        %3521 = sbr.rel (%p3519) target = $region48
      $region47: #{resnet_block_forward.5} parent=43 // pred_region
        _
      $region48: #{resnet_block_forward.5} parent=43 // pred_fallthru
        _
    $region44: #{resnet_block_forward.5} parent=5 // pred_fallthru
      _
    %p3522 = scmp.le.s32.totalorder 2, %s12
    // Predicated region
    $region49: #{resnet_block_forward.5} parent=5 // pred_check
      %p3523 = pneg %p3522
    $region50: #{resnet_block_forward.5} parent=5 // pred_check_branch
      %3525 = sbr.rel (%p3523) target = $region52
    $region51: #{resnet_block_forward.5} parent=5 // pred_region
      %s3526 = ssub.s32 %s12, 2
      // Predicated region
      $region53: #{resnet_block_forward.5} parent=51 // pred_check
        %p3527 = pneg %p203
      $region54: #{resnet_block_forward.5} parent=51 // pred_check_branch
        %3529 = sbr.rel (%p3527) target = $region56
      $region55: #{resnet_block_forward.5} parent=51 // pred_region
        %p3530 = scmp.lt.s32.totalorder %s23, 1
        %s3531 = scalar_select %p3530, %s23, 1
        %p3532 = scmp.lt.s32.totalorder %s24, 0
        %s3533 = scalar_select %p3532, %s24, 0
        %s3534 = smul.addr %s3531, 32
        %s3535 = sadd.s32 %s3533, %s3534
        %s3536 = smul.addr %s3535, 8
        %s3537 = scalar_lea.vmem %s6, %s3536
      $region56: #{resnet_block_forward.5} parent=51 // pred_fallthru
        _
    $region52: #{resnet_block_forward.5} parent=5 // pred_fallthru
      _
  $region6: #{resnet_block_forward.5} parent=0 // loop_footer
    %s16 = sadd.s32 1, %s12
  $region7: #{resnet_block_forward.5} parent=0 // loop_footer_branch
    %11 = sbr.rel target = $region3
  $region8: #{resnet_block_forward.5} parent=0 // loop_exit
    _

</llo_original>
